<compile_context>
chip_gen: v5e
topology: v5e:2x2
jax: 0.10.0
libtpu: 0.0.40
codegen_flags: <defaults>
</compile_context>

<pallas_src>
import functools

import jax
import jax.numpy as jnp
from jax.experimental import pallas as pl
from jax.experimental.pallas import tpu as pltpu


# ----------------------------- glue (plain JAX) -----------------------------

def fixed_padding(x, kernel_size, dilation=1):
    k_eff = kernel_size + (kernel_size - 1) * (dilation - 1)
    pad_total = k_eff - 1
    pad_beg = pad_total // 2
    pad_end = pad_total - pad_beg
    return jnp.pad(x, ((0, 0), (0, 0), (pad_beg, pad_end), (pad_beg, pad_end)))


# ------------------------------- Pallas kernel ------------------------------

def _morphology_kernel(x_ref, w_ref, o_ref, *, op_type, soft_max, beta):
    # x_ref: (C, Hp, Wp)   full zero-padded image for one batch element (VMEM,
    #                      fetched once per batch element, reused over row tiles)
    # w_ref: (Cout, P)     flattened morphological weights, P = C*K*K
    # o_ref: (Cout, TH, W) one row-tile of the output
    Cout, TH, W = o_ref.shape
    C, Hp, Wp = x_ref.shape
    K = Wp - W + 1
    THp = TH + K - 1

    # Row window of the padded input for this tile (TH is a multiple of 8).
    row0 = pl.multiple_of(pl.program_id(1) * TH, 8)
    xt = x_ref[:, pl.ds(row0, THp), :].astype(jnp.float32)      # (C, THp, Wp)
    w = w_ref[...].astype(jnp.float32)                          # (Cout, P)

    sign_x = 1.0 if op_type == "dilation2d" else -1.0
    xs = sign_x * xt                                            # (C, THp, Wp)

    if soft_max:
        t = beta * xs                                           # (C, THp, Wp)

        # Per-output-column windowed max of t over (c, kh, kw): separable
        # max-pool (K-1 + K-1 + C-1 VPU max ops per element).
        m1 = t[:, :, 0:W]
        for kw in range(1, K):
            m1 = jnp.maximum(m1, t[:, :, kw:kw + W])            # (C, THp, W)
        m2 = m1[:, 0:TH, :]
        for kh in range(1, K):
            m2 = jnp.maximum(m2, m1[:, kh:kh + TH, :])          # (C, TH, W)
        mx = m2[0]
        for c in range(1, C):
            mx = jnp.maximum(mx, m2[c])                         # (TH, W)

        # Weight-side shift (exact per-row max) and exponentials.
        bw = beta * w                                           # (Cout, P)
        mw = jnp.max(bw, axis=1, keepdims=True)                 # (Cout, 1)
        ew = jnp.exp(bw - mw)                                   # (Cout, P), <= 1

        # Streaming (online) weighted-exp accumulation over p = (c, kh, kw).
        # Only a (Cout, TH, W) accumulator is live; exp is computed once per p
        # and shared across all Cout channels.
        acc = jnp.zeros((Cout, TH, W), jnp.float32)
        for c in range(C):
            for kh in range(K):
                base = c * K * K + kh * K
                for kw in range(K):
                    e = jnp.exp(t[c, kh:kh + TH, kw:kw + W] - mx)        # (TH, W)
                    acc = acc + ew[:, base + kw][:, None, None] * e[None, :, :]

        out = (mw[:, :, None] + mx[None, :, :] + jnp.log(acc)) * (1.0 / beta)
    else:
        # Hard max: streaming running-max over p with a (Cout, TH, W) accumulator.
        out = jnp.full((Cout, TH, W), -jnp.inf, jnp.float32)
        for c in range(C):
            for kh in range(K):
                base = c * K * K + kh * K
                for kw in range(K):
                    cand = (w[:, base + kw][:, None, None]
                            + xs[c, kh:kh + TH, kw:kw + W][None, :, :])
                    out = jnp.maximum(out, cand)

    if op_type == "erosion2d":
        out = -out
    o_ref[...] = out.astype(o_ref.dtype)


def morphology_forward(x, weight, *, kernel_size, op_type, soft_max=True,
                       beta=15.0, row_tile=32):
    """x: (B, C, H, W), weight: (Cout, C, K, K). Returns (B, Cout, H, W)."""
    if op_type not in ("dilation2d", "erosion2d"):
        raise ValueError(op_type)
    B, C, H, W = x.shape
    Cout = weight.shape[0]
    K = kernel_size
    P = C * K * K

    # Row tile: multiple of 8 (sublane alignment); pad H up so tiles divide it.
    row_tile = max(8, (int(row_tile) // 8) * 8)
    TH = min(row_tile, 8 * pl.cdiv(H, 8))
    R = pl.cdiv(H, TH)
    H_pad = R * TH
    Hp = H_pad + K - 1
    Wp = W + K - 1

    xp = fixed_padding(x, K, 1)                    # (B, C, H+K-1, W+K-1)
    if H_pad != H:
        xp = jnp.pad(xp, ((0, 0), (0, 0), (0, H_pad - H), (0, 0)))
    w_flat = weight.reshape(Cout, P)               # nn.Unfold / view ordering

    kernel = functools.partial(_morphology_kernel, op_type=op_type,
                               soft_max=bool(soft_max), beta=float(beta))

    itemsize = jnp.dtype(x.dtype).itemsize
    x_block_bytes = C * Hp * Wp * itemsize
    o_block_bytes = Cout * TH * W * itemsize
    w_bytes = Cout * P * itemsize
    vmem_limit = int(min(2 * (x_block_bytes + o_block_bytes + w_bytes)
                         + 32 * 1024 * 1024, 128 * 1024 * 1024))

    cost = pl.CostEstimate(
        flops=int(2 * B * Cout * P * H_pad * W),
        transcendentals=int(B * P * H_pad * W) if soft_max else 0,
        bytes_accessed=int((x.size + w_flat.size + B * Cout * H * W) * itemsize),
    )

    out = pl.pallas_call(
        kernel,
        out_shape=jax.ShapeDtypeStruct((B, Cout, H_pad, W), x.dtype),
        grid_spec=pltpu.PrefetchScalarGridSpec(
            num_scalar_prefetch=0,
            grid=(B, R),                                   # R is the fast axis
            in_specs=[
                # Full padded image per batch element; block index depends only
                # on b, so it is DMA'd once per image and reused over row tiles.
                pl.BlockSpec((None, C, Hp, Wp), lambda b, r: (b, 0, 0, 0)),
                # Weights: constant block, fetched once.
                pl.BlockSpec((Cout, P), lambda b, r: (0, 0)),
            ],
            out_specs=pl.BlockSpec((None, Cout, TH, W), lambda b, r: (b, 0, r, 0)),
        ),
        compiler_params=pltpu.CompilerParams(
            dimension_semantics=("parallel", "parallel"),
            vmem_limit_bytes=vmem_limit,
        ),
        cost_estimate=cost,
    )(xp, w_flat)

    return out[:, :, :H, :]


# ------------------------------- reference ----------------------------------

def _unfold(x, K):
    # nn.Unfold ordering: index = c*K*K + kh*K + kw
    B, C, Hp, Wp = x.shape
    H, W = Hp - K + 1, Wp - K + 1
    cols = []
    for c in range(C):
        for kh in range(K):
            for kw in range(K):
                cols.append(x[:, c, kh:kh + H, kw:kw + W].reshape(B, H * W))
    return jnp.stack(cols, axis=1)


def morphology_ref(x, weight, *, kernel_size, op_type, soft_max=True, beta=15.0):
    B, C, H, W = x.shape
    Cout = weight.shape[0]
    patches = _unfold(fixed_padding(x, kernel_size, 1), kernel_size)  # (B, P, L)
    wf = weight.reshape(Cout, -1)[None, :, :, None]                   # (1,Cout,P,1)
    if op_type == "erosion2d":
        s = wf - patches[:, None, :, :]
    else:
        s = wf + patches[:, None, :, :]
    if soft_max:
        out = jax.scipy.special.logsumexp(s * beta, axis=2) / beta
    else:
        out = jnp.max(s, axis=2)
    if op_type == "erosion2d":
        out = -out
    return out.reshape(B, Cout, H, W)


# --------------------------------- main --------------------------------------

if __name__ == "__main__":
    key = jax.random.PRNGKey(0)
    kx, kw1, kx2, kw2 = jax.random.split(key, 4)

    B, Cin, H, W = 2, 4, 16, 16
    Cout, K = 8, 5
    beta = 15.0

    x = jax.random.normal(kx, (B, Cin, H, W), dtype=jnp.float32)
    # Module __init__ uses torch.zeros for the weight; use a small deterministic
    # random init instead so the weight actually participates in the check.
    weight = 0.1 * jax.random.normal(kw1, (Cout, Cin, K, K), dtype=jnp.float32)

    ok = True
    for op_type, soft in (("dilation2d", True), ("erosion2d", True),
                          ("erosion2d", False)):
        y = morphology_forward(x, weight, kernel_size=K, op_type=op_type,
                               soft_max=soft, beta=beta, row_tile=8)
        y = jax.block_until_ready(y)
        ok = ok and (y.shape == (B, Cout, H, W))
        y_ref = morphology_ref(x, weight, kernel_size=K, op_type=op_type,
                               soft_max=soft, beta=beta)
        ok = ok and bool(jnp.allclose(y, y_ref, rtol=1e-4, atol=1e-4))

    # Non-square spatial input (original torch reshape assumed square images).
    x2 = jax.random.normal(kx2, (1, 2, 16, 24), dtype=jnp.float32)
    w2 = 0.1 * jax.random.normal(kw2, (4, 2, 3, 3), dtype=jnp.float32)
    y2 = jax.block_until_ready(
        morphology_forward(x2, w2, kernel_size=3, op_type="dilation2d",
                           soft_max=True, beta=beta, row_tile=8))
    y2_ref = morphology_ref(x2, w2, kernel_size=3, op_type="dilation2d",
                            soft_max=True, beta=beta)
    ok = ok and (y2.shape == (1, 4, 16, 24))
    ok = ok and bool(jnp.allclose(y2, y2_ref, rtol=1e-4, atol=1e-4))

    if ok:
        print("KERNEL_OK")
    else:
        print("MISMATCH")
</pallas_src>

<mosaic_0001>
module attributes {stable_mosaic.version = 11 : i64} {
  func.func @_morphology_kernel(%arg0: i32, %arg1: i32, %arg2: memref<1x4x20x20xf32, #tpu.memory_space<vmem>>, %arg3: memref<8x100xf32, #tpu.memory_space<vmem>>, %arg4: memref<1x8x8x16xf32, #tpu.memory_space<vmem>>) attributes {dimension_semantics = [#tpu.dimension_semantics<parallel>, #tpu.dimension_semantics<parallel>], iteration_bounds = array<i64: 2, 2>, scalar_prefetch = 0 : i64, scratch_operands = 0 : i64, tpu.core_type = #tpu.core_type<tc>, window_params = [{transform_indices = @transform_0, window_bounds = array<i64: 1, 4, 20, 20>}, {pipeline_mode = #tpu.pipeline_mode<synchronous>, transform_indices = @transform_1, window_bounds = array<i64: 8, 100>}, {transform_indices = @transform_2, window_bounds = array<i64: 1, 8, 8, 16>}]} {
    %c8_i32 = arith.constant 8 : i32
    %0 = arith.muli %arg1, %c8_i32 : i32
    %1 = tpu.assume_multiple %0, 8 : i32
    %c0 = arith.constant 0 : index
    %c0_0 = arith.constant 0 : index
    %2 = arith.index_cast %1 : i32 to index
    %c0_1 = arith.constant 0 : index
    %3 = vector.load %arg2[%c0, %c0_0, %2, %c0_1] : memref<1x4x20x20xf32, #tpu.memory_space<vmem>>, vector<1x4x12x20xf32>
    %4 = vector.shape_cast %3 : vector<1x4x12x20xf32> to vector<4x12x20xf32>
    %c0_2 = arith.constant 0 : index
    %c0_3 = arith.constant 0 : index
    %5 = vector.load %arg3[%c0_2, %c0_3] : memref<8x100xf32, #tpu.memory_space<vmem>>, vector<8x100xf32>
    %cst = arith.constant 1.000000e+00 : f32
    %6 = vector.broadcast %cst : f32 to vector<4x12x20xf32>
    %7 = arith.mulf %6, %4 : vector<4x12x20xf32>
    %cst_4 = arith.constant 1.500000e+01 : f32
    %8 = vector.broadcast %cst_4 : f32 to vector<4x12x20xf32>
    %9 = arith.mulf %8, %7 : vector<4x12x20xf32>
    %10 = vector.extract_strided_slice %9 {offsets = [0, 0, 0], sizes = [4, 12, 16], strides = [1, 1, 1]} : vector<4x12x20xf32> to vector<4x12x16xf32>
    %11 = vector.extract_strided_slice %9 {offsets = [0, 0, 1], sizes = [4, 12, 16], strides = [1, 1, 1]} : vector<4x12x20xf32> to vector<4x12x16xf32>
    %12 = arith.maximumf %10, %11 : vector<4x12x16xf32>
    %13 = vector.extract_strided_slice %9 {offsets = [0, 0, 2], sizes = [4, 12, 16], strides = [1, 1, 1]} : vector<4x12x20xf32> to vector<4x12x16xf32>
    %14 = arith.maximumf %12, %13 : vector<4x12x16xf32>
    %15 = vector.extract_strided_slice %9 {offsets = [0, 0, 3], sizes = [4, 12, 16], strides = [1, 1, 1]} : vector<4x12x20xf32> to vector<4x12x16xf32>
    %16 = arith.maximumf %14, %15 : vector<4x12x16xf32>
    %17 = vector.extract_strided_slice %9 {offsets = [0, 0, 4], sizes = [4, 12, 16], strides = [1, 1, 1]} : vector<4x12x20xf32> to vector<4x12x16xf32>
    %18 = arith.maximumf %16, %17 : vector<4x12x16xf32>
    %19 = vector.extract_strided_slice %18 {offsets = [0, 0, 0], sizes = [4, 8, 16], strides = [1, 1, 1]} : vector<4x12x16xf32> to vector<4x8x16xf32>
    %20 = vector.extract_strided_slice %18 {offsets = [0, 1, 0], sizes = [4, 8, 16], strides = [1, 1, 1]} : vector<4x12x16xf32> to vector<4x8x16xf32>
    %21 = arith.maximumf %19, %20 : vector<4x8x16xf32>
    %22 = vector.extract_strided_slice %18 {offsets = [0, 2, 0], sizes = [4, 8, 16], strides = [1, 1, 1]} : vector<4x12x16xf32> to vector<4x8x16xf32>
    %23 = arith.maximumf %21, %22 : vector<4x8x16xf32>
    %24 = vector.extract_strided_slice %18 {offsets = [0, 3, 0], sizes = [4, 8, 16], strides = [1, 1, 1]} : vector<4x12x16xf32> to vector<4x8x16xf32>
    %25 = arith.maximumf %23, %24 : vector<4x8x16xf32>
    %26 = vector.extract_strided_slice %18 {offsets = [0, 4, 0], sizes = [4, 8, 16], strides = [1, 1, 1]} : vector<4x12x16xf32> to vector<4x8x16xf32>
    %27 = arith.maximumf %25, %26 : vector<4x8x16xf32>
    %28 = vector.extract_strided_slice %27 {offsets = [0, 0, 0], sizes = [1, 8, 16], strides = [1, 1, 1]} : vector<4x8x16xf32> to vector<1x8x16xf32>
    %29 = vector.shape_cast %28 : vector<1x8x16xf32> to vector<8x16xf32>
    %30 = vector.extract_strided_slice %27 {offsets = [1, 0, 0], sizes = [1, 8, 16], strides = [1, 1, 1]} : vector<4x8x16xf32> to vector<1x8x16xf32>
    %31 = vector.shape_cast %30 : vector<1x8x16xf32> to vector<8x16xf32>
    %32 = arith.maximumf %29, %31 : vector<8x16xf32>
    %33 = vector.extract_strided_slice %27 {offsets = [2, 0, 0], sizes = [1, 8, 16], strides = [1, 1, 1]} : vector<4x8x16xf32> to vector<1x8x16xf32>
    %34 = vector.shape_cast %33 : vector<1x8x16xf32> to vector<8x16xf32>
    %35 = arith.maximumf %32, %34 : vector<8x16xf32>
    %36 = vector.extract_strided_slice %27 {offsets = [3, 0, 0], sizes = [1, 8, 16], strides = [1, 1, 1]} : vector<4x8x16xf32> to vector<1x8x16xf32>
    %37 = vector.shape_cast %36 : vector<1x8x16xf32> to vector<8x16xf32>
    %38 = arith.maximumf %35, %37 : vector<8x16xf32>
    %cst_5 = arith.constant 1.500000e+01 : f32
    %39 = vector.broadcast %cst_5 : f32 to vector<8x100xf32>
    %40 = arith.mulf %39, %5 : vector<8x100xf32>
    %cst_6 = arith.constant dense<0xFF800000> : vector<8xf32>
    %41 = vector.multi_reduction <maximumf>, %40, %cst_6 [1] : vector<8x100xf32> to vector<8xf32>
    %42 = vector.shape_cast %41 : vector<8xf32> to vector<8x1xf32>
    %43 = vector.broadcast %42 : vector<8x1xf32> to vector<8x100xf32>
    %44 = arith.subf %40, %43 : vector<8x100xf32>
    %45 = math.exp %44 : vector<8x100xf32>
    %cst_7 = arith.constant 0.000000e+00 : f32
    %46 = vector.broadcast %cst_7 : f32 to vector<8x8x16xf32>
    %47 = vector.extract_strided_slice %9 {offsets = [0, 0, 0], sizes = [1, 8, 16], strides = [1, 1, 1]} : vector<4x12x20xf32> to vector<1x8x16xf32>
    %48 = vector.shape_cast %47 : vector<1x8x16xf32> to vector<8x16xf32>
    %49 = arith.subf %48, %38 : vector<8x16xf32>
    %50 = math.exp %49 : vector<8x16xf32>
    %51 = vector.extract_strided_slice %45 {offsets = [0, 0], sizes = [8, 1], strides = [1, 1]} : vector<8x100xf32> to vector<8x1xf32>
    %52 = vector.shape_cast %51 : vector<8x1xf32> to vector<8xf32>
    %53 = vector.shape_cast %52 : vector<8xf32> to vector<8x1x1xf32>
    %54 = vector.shape_cast %50 : vector<8x16xf32> to vector<1x8x16xf32>
    %55 = vector.broadcast %53 : vector<8x1x1xf32> to vector<8x8x16xf32>
    %56 = vector.broadcast %54 : vector<1x8x16xf32> to vector<8x8x16xf32>
    %57 = arith.mulf %55, %56 : vector<8x8x16xf32>
    %58 = arith.addf %46, %57 : vector<8x8x16xf32>
    %59 = vector.extract_strided_slice %9 {offsets = [0, 0, 1], sizes = [1, 8, 16], strides = [1, 1, 1]} : vector<4x12x20xf32> to vector<1x8x16xf32>
    %60 = vector.shape_cast %59 : vector<1x8x16xf32> to vector<8x16xf32>
    %61 = arith.subf %60, %38 : vector<8x16xf32>
    %62 = math.exp %61 : vector<8x16xf32>
    %63 = vector.extract_strided_slice %45 {offsets = [0, 1], sizes = [8, 1], strides = [1, 1]} : vector<8x100xf32> to vector<8x1xf32>
    %64 = vector.shape_cast %63 : vector<8x1xf32> to vector<8xf32>
    %65 = vector.shape_cast %64 : vector<8xf32> to vector<8x1x1xf32>
    %66 = vector.shape_cast %62 : vector<8x16xf32> to vector<1x8x16xf32>
    %67 = vector.broadcast %65 : vector<8x1x1xf32> to vector<8x8x16xf32>
    %68 = vector.broadcast %66 : vector<1x8x16xf32> to vector<8x8x16xf32>
    %69 = arith.mulf %67, %68 : vector<8x8x16xf32>
    %70 = arith.addf %58, %69 : vector<8x8x16xf32>
    %71 = vector.extract_strided_slice %9 {offsets = [0, 0, 2], sizes = [1, 8, 16], strides = [1, 1, 1]} : vector<4x12x20xf32> to vector<1x8x16xf32>
    %72 = vector.shape_cast %71 : vector<1x8x16xf32> to vector<8x16xf32>
    %73 = arith.subf %72, %38 : vector<8x16xf32>
    %74 = math.exp %73 : vector<8x16xf32>
    %75 = vector.extract_strided_slice %45 {offsets = [0, 2], sizes = [8, 1], strides = [1, 1]} : vector<8x100xf32> to vector<8x1xf32>
    %76 = vector.shape_cast %75 : vector<8x1xf32> to vector<8xf32>
    %77 = vector.shape_cast %76 : vector<8xf32> to vector<8x1x1xf32>
    %78 = vector.shape_cast %74 : vector<8x16xf32> to vector<1x8x16xf32>
    %79 = vector.broadcast %77 : vector<8x1x1xf32> to vector<8x8x16xf32>
    %80 = vector.broadcast %78 : vector<1x8x16xf32> to vector<8x8x16xf32>
    %81 = arith.mulf %79, %80 : vector<8x8x16xf32>
    %82 = arith.addf %70, %81 : vector<8x8x16xf32>
    %83 = vector.extract_strided_slice %9 {offsets = [0, 0, 3], sizes = [1, 8, 16], strides = [1, 1, 1]} : vector<4x12x20xf32> to vector<1x8x16xf32>
    %84 = vector.shape_cast %83 : vector<1x8x16xf32> to vector<8x16xf32>
    %85 = arith.subf %84, %38 : vector<8x16xf32>
    %86 = math.exp %85 : vector<8x16xf32>
    %87 = vector.extract_strided_slice %45 {offsets = [0, 3], sizes = [8, 1], strides = [1, 1]} : vector<8x100xf32> to vector<8x1xf32>
    %88 = vector.shape_cast %87 : vector<8x1xf32> to vector<8xf32>
    %89 = vector.shape_cast %88 : vector<8xf32> to vector<8x1x1xf32>
    %90 = vector.shape_cast %86 : vector<8x16xf32> to vector<1x8x16xf32>
    %91 = vector.broadcast %89 : vector<8x1x1xf32> to vector<8x8x16xf32>
    %92 = vector.broadcast %90 : vector<1x8x16xf32> to vector<8x8x16xf32>
    %93 = arith.mulf %91, %92 : vector<8x8x16xf32>
    %94 = arith.addf %82, %93 : vector<8x8x16xf32>
    %95 = vector.extract_strided_slice %9 {offsets = [0, 0, 4], sizes = [1, 8, 16], strides = [1, 1, 1]} : vector<4x12x20xf32> to vector<1x8x16xf32>
    %96 = vector.shape_cast %95 : vector<1x8x16xf32> to vector<8x16xf32>
    %97 = arith.subf %96, %38 : vector<8x16xf32>
    %98 = math.exp %97 : vector<8x16xf32>
    %99 = vector.extract_strided_slice %45 {offsets = [0, 4], sizes = [8, 1], strides = [1, 1]} : vector<8x100xf32> to vector<8x1xf32>
    %100 = vector.shape_cast %99 : vector<8x1xf32> to vector<8xf32>
    %101 = vector.shape_cast %100 : vector<8xf32> to vector<8x1x1xf32>
    %102 = vector.shape_cast %98 : vector<8x16xf32> to vector<1x8x16xf32>
    %103 = vector.broadcast %101 : vector<8x1x1xf32> to vector<8x8x16xf32>
    %104 = vector.broadcast %102 : vector<1x8x16xf32> to vector<8x8x16xf32>
    %105 = arith.mulf %103, %104 : vector<8x8x16xf32>
    %106 = arith.addf %94, %105 : vector<8x8x16xf32>
    %107 = vector.extract_strided_slice %9 {offsets = [0, 1, 0], sizes = [1, 8, 16], strides = [1, 1, 1]} : vector<4x12x20xf32> to vector<1x8x16xf32>
    %108 = vector.shape_cast %107 : vector<1x8x16xf32> to vector<8x16xf32>
    %109 = arith.subf %108, %38 : vector<8x16xf32>
    %110 = math.exp %109 : vector<8x16xf32>
    %111 = vector.extract_strided_slice %45 {offsets = [0, 5], sizes = [8, 1], strides = [1, 1]} : vector<8x100xf32> to vector<8x1xf32>
    %112 = vector.shape_cast %111 : vector<8x1xf32> to vector<8xf32>
    %113 = vector.shape_cast %112 : vector<8xf32> to vector<8x1x1xf32>
    %114 = vector.shape_cast %110 : vector<8x16xf32> to vector<1x8x16xf32>
    %115 = vector.broadcast %113 : vector<8x1x1xf32> to vector<8x8x16xf32>
    %116 = vector.broadcast %114 : vector<1x8x16xf32> to vector<8x8x16xf32>
    %117 = arith.mulf %115, %116 : vector<8x8x16xf32>
    %118 = arith.addf %106, %117 : vector<8x8x16xf32>
    %119 = vector.extract_strided_slice %9 {offsets = [0, 1, 1], sizes = [1, 8, 16], strides = [1, 1, 1]} : vector<4x12x20xf32> to vector<1x8x16xf32>
    %120 = vector.shape_cast %119 : vector<1x8x16xf32> to vector<8x16xf32>
    %121 = arith.subf %120, %38 : vector<8x16xf32>
    %122 = math.exp %121 : vector<8x16xf32>
    %123 = vector.extract_strided_slice %45 {offsets = [0, 6], sizes = [8, 1], strides = [1, 1]} : vector<8x100xf32> to vector<8x1xf32>
    %124 = vector.shape_cast %123 : vector<8x1xf32> to vector<8xf32>
    %125 = vector.shape_cast %124 : vector<8xf32> to vector<8x1x1xf32>
    %126 = vector.shape_cast %122 : vector<8x16xf32> to vector<1x8x16xf32>
    %127 = vector.broadcast %125 : vector<8x1x1xf32> to vector<8x8x16xf32>
    %128 = vector.broadcast %126 : vector<1x8x16xf32> to vector<8x8x16xf32>
    %129 = arith.mulf %127, %128 : vector<8x8x16xf32>
    %130 = arith.addf %118, %129 : vector<8x8x16xf32>
    %131 = vector.extract_strided_slice %9 {offsets = [0, 1, 2], sizes = [1, 8, 16], strides = [1, 1, 1]} : vector<4x12x20xf32> to vector<1x8x16xf32>
    %132 = vector.shape_cast %131 : vector<1x8x16xf32> to vector<8x16xf32>
    %133 = arith.subf %132, %38 : vector<8x16xf32>
    %134 = math.exp %133 : vector<8x16xf32>
    %135 = vector.extract_strided_slice %45 {offsets = [0, 7], sizes = [8, 1], strides = [1, 1]} : vector<8x100xf32> to vector<8x1xf32>
    %136 = vector.shape_cast %135 : vector<8x1xf32> to vector<8xf32>
    %137 = vector.shape_cast %136 : vector<8xf32> to vector<8x1x1xf32>
    %138 = vector.shape_cast %134 : vector<8x16xf32> to vector<1x8x16xf32>
    %139 = vector.broadcast %137 : vector<8x1x1xf32> to vector<8x8x16xf32>
    %140 = vector.broadcast %138 : vector<1x8x16xf32> to vector<8x8x16xf32>
    %141 = arith.mulf %139, %140 : vector<8x8x16xf32>
    %142 = arith.addf %130, %141 : vector<8x8x16xf32>
    %143 = vector.extract_strided_slice %9 {offsets = [0, 1, 3], sizes = [1, 8, 16], strides = [1, 1, 1]} : vector<4x12x20xf32> to vector<1x8x16xf32>
    %144 = vector.shape_cast %143 : vector<1x8x16xf32> to vector<8x16xf32>
    %145 = arith.subf %144, %38 : vector<8x16xf32>
    %146 = math.exp %145 : vector<8x16xf32>
    %147 = vector.extract_strided_slice %45 {offsets = [0, 8], sizes = [8, 1], strides = [1, 1]} : vector<8x100xf32> to vector<8x1xf32>
    %148 = vector.shape_cast %147 : vector<8x1xf32> to vector<8xf32>
    %149 = vector.shape_cast %148 : vector<8xf32> to vector<8x1x1xf32>
    %150 = vector.shape_cast %146 : vector<8x16xf32> to vector<1x8x16xf32>
    %151 = vector.broadcast %149 : vector<8x1x1xf32> to vector<8x8x16xf32>
    %152 = vector.broadcast %150 : vector<1x8x16xf32> to vector<8x8x16xf32>
    %153 = arith.mulf %151, %152 : vector<8x8x16xf32>
    %154 = arith.addf %142, %153 : vector<8x8x16xf32>
    %155 = vector.extract_strided_slice %9 {offsets = [0, 1, 4], sizes = [1, 8, 16], strides = [1, 1, 1]} : vector<4x12x20xf32> to vector<1x8x16xf32>
    %156 = vector.shape_cast %155 : vector<1x8x16xf32> to vector<8x16xf32>
    %157 = arith.subf %156, %38 : vector<8x16xf32>
    %158 = math.exp %157 : vector<8x16xf32>
    %159 = vector.extract_strided_slice %45 {offsets = [0, 9], sizes = [8, 1], strides = [1, 1]} : vector<8x100xf32> to vector<8x1xf32>
    %160 = vector.shape_cast %159 : vector<8x1xf32> to vector<8xf32>
    %161 = vector.shape_cast %160 : vector<8xf32> to vector<8x1x1xf32>
    %162 = vector.shape_cast %158 : vector<8x16xf32> to vector<1x8x16xf32>
    %163 = vector.broadcast %161 : vector<8x1x1xf32> to vector<8x8x16xf32>
    %164 = vector.broadcast %162 : vector<1x8x16xf32> to vector<8x8x16xf32>
    %165 = arith.mulf %163, %164 : vector<8x8x16xf32>
    %166 = arith.addf %154, %165 : vector<8x8x16xf32>
    %167 = vector.extract_strided_slice %9 {offsets = [0, 2, 0], sizes = [1, 8, 16], strides = [1, 1, 1]} : vector<4x12x20xf32> to vector<1x8x16xf32>
    %168 = vector.shape_cast %167 : vector<1x8x16xf32> to vector<8x16xf32>
    %169 = arith.subf %168, %38 : vector<8x16xf32>
    %170 = math.exp %169 : vector<8x16xf32>
    %171 = vector.extract_strided_slice %45 {offsets = [0, 10], sizes = [8, 1], strides = [1, 1]} : vector<8x100xf32> to vector<8x1xf32>
    %172 = vector.shape_cast %171 : vector<8x1xf32> to vector<8xf32>
    %173 = vector.shape_cast %172 : vector<8xf32> to vector<8x1x1xf32>
    %174 = vector.shape_cast %170 : vector<8x16xf32> to vector<1x8x16xf32>
    %175 = vector.broadcast %173 : vector<8x1x1xf32> to vector<8x8x16xf32>
    %176 = vector.broadcast %174 : vector<1x8x16xf32> to vector<8x8x16xf32>
    %177 = arith.mulf %175, %176 : vector<8x8x16xf32>
    %178 = arith.addf %166, %177 : vector<8x8x16xf32>
    %179 = vector.extract_strided_slice %9 {offsets = [0, 2, 1], sizes = [1, 8, 16], strides = [1, 1, 1]} : vector<4x12x20xf32> to vector<1x8x16xf32>
    %180 = vector.shape_cast %179 : vector<1x8x16xf32> to vector<8x16xf32>
    %181 = arith.subf %180, %38 : vector<8x16xf32>
    %182 = math.exp %181 : vector<8x16xf32>
    %183 = vector.extract_strided_slice %45 {offsets = [0, 11], sizes = [8, 1], strides = [1, 1]} : vector<8x100xf32> to vector<8x1xf32>
    %184 = vector.shape_cast %183 : vector<8x1xf32> to vector<8xf32>
    %185 = vector.shape_cast %184 : vector<8xf32> to vector<8x1x1xf32>
    %186 = vector.shape_cast %182 : vector<8x16xf32> to vector<1x8x16xf32>
    %187 = vector.broadcast %185 : vector<8x1x1xf32> to vector<8x8x16xf32>
    %188 = vector.broadcast %186 : vector<1x8x16xf32> to vector<8x8x16xf32>
    %189 = arith.mulf %187, %188 : vector<8x8x16xf32>
    %190 = arith.addf %178, %189 : vector<8x8x16xf32>
    %191 = vector.extract_strided_slice %9 {offsets = [0, 2, 2], sizes = [1, 8, 16], strides = [1, 1, 1]} : vector<4x12x20xf32> to vector<1x8x16xf32>
    %192 = vector.shape_cast %191 : vector<1x8x16xf32> to vector<8x16xf32>
    %193 = arith.subf %192, %38 : vector<8x16xf32>
    %194 = math.exp %193 : vector<8x16xf32>
    %195 = vector.extract_strided_slice %45 {offsets = [0, 12], sizes = [8, 1], strides = [1, 1]} : vector<8x100xf32> to vector<8x1xf32>
    %196 = vector.shape_cast %195 : vector<8x1xf32> to vector<8xf32>
    %197 = vector.shape_cast %196 : vector<8xf32> to vector<8x1x1xf32>
    %198 = vector.shape_cast %194 : vector<8x16xf32> to vector<1x8x16xf32>
    %199 = vector.broadcast %197 : vector<8x1x1xf32> to vector<8x8x16xf32>
    %200 = vector.broadcast %198 : vector<1x8x16xf32> to vector<8x8x16xf32>
    %201 = arith.mulf %199, %200 : vector<8x8x16xf32>
    %202 = arith.addf %190, %201 : vector<8x8x16xf32>
    %203 = vector.extract_strided_slice %9 {offsets = [0, 2, 3], sizes = [1, 8, 16], strides = [1, 1, 1]} : vector<4x12x20xf32> to vector<1x8x16xf32>
    %204 = vector.shape_cast %203 : vector<1x8x16xf32> to vector<8x16xf32>
    %205 = arith.subf %204, %38 : vector<8x16xf32>
    %206 = math.exp %205 : vector<8x16xf32>
    %207 = vector.extract_strided_slice %45 {offsets = [0, 13], sizes = [8, 1], strides = [1, 1]} : vector<8x100xf32> to vector<8x1xf32>
    %208 = vector.shape_cast %207 : vector<8x1xf32> to vector<8xf32>
    %209 = vector.shape_cast %208 : vector<8xf32> to vector<8x1x1xf32>
    %210 = vector.shape_cast %206 : vector<8x16xf32> to vector<1x8x16xf32>
    %211 = vector.broadcast %209 : vector<8x1x1xf32> to vector<8x8x16xf32>
    %212 = vector.broadcast %210 : vector<1x8x16xf32> to vector<8x8x16xf32>
    %213 = arith.mulf %211, %212 : vector<8x8x16xf32>
    %214 = arith.addf %202, %213 : vector<8x8x16xf32>
    %215 = vector.extract_strided_slice %9 {offsets = [0, 2, 4], sizes = [1, 8, 16], strides = [1, 1, 1]} : vector<4x12x20xf32> to vector<1x8x16xf32>
    %216 = vector.shape_cast %215 : vector<1x8x16xf32> to vector<8x16xf32>
    %217 = arith.subf %216, %38 : vector<8x16xf32>
    %218 = math.exp %217 : vector<8x16xf32>
    %219 = vector.extract_strided_slice %45 {offsets = [0, 14], sizes = [8, 1], strides = [1, 1]} : vector<8x100xf32> to vector<8x1xf32>
    %220 = vector.shape_cast %219 : vector<8x1xf32> to vector<8xf32>
    %221 = vector.shape_cast %220 : vector<8xf32> to vector<8x1x1xf32>
    %222 = vector.shape_cast %218 : vector<8x16xf32> to vector<1x8x16xf32>
    %223 = vector.broadcast %221 : vector<8x1x1xf32> to vector<8x8x16xf32>
    %224 = vector.broadcast %222 : vector<1x8x16xf32> to vector<8x8x16xf32>
    %225 = arith.mulf %223, %224 : vector<8x8x16xf32>
    %226 = arith.addf %214, %225 : vector<8x8x16xf32>
    %227 = vector.extract_strided_slice %9 {offsets = [0, 3, 0], sizes = [1, 8, 16], strides = [1, 1, 1]} : vector<4x12x20xf32> to vector<1x8x16xf32>
    %228 = vector.shape_cast %227 : vector<1x8x16xf32> to vector<8x16xf32>
    %229 = arith.subf %228, %38 : vector<8x16xf32>
    %230 = math.exp %229 : vector<8x16xf32>
    %231 = vector.extract_strided_slice %45 {offsets = [0, 15], sizes = [8, 1], strides = [1, 1]} : vector<8x100xf32> to vector<8x1xf32>
    %232 = vector.shape_cast %231 : vector<8x1xf32> to vector<8xf32>
    %233 = vector.shape_cast %232 : vector<8xf32> to vector<8x1x1xf32>
    %234 = vector.shape_cast %230 : vector<8x16xf32> to vector<1x8x16xf32>
    %235 = vector.broadcast %233 : vector<8x1x1xf32> to vector<8x8x16xf32>
    %236 = vector.broadcast %234 : vector<1x8x16xf32> to vector<8x8x16xf32>
    %237 = arith.mulf %235, %236 : vector<8x8x16xf32>
    %238 = arith.addf %226, %237 : vector<8x8x16xf32>
    %239 = vector.extract_strided_slice %9 {offsets = [0, 3, 1], sizes = [1, 8, 16], strides = [1, 1, 1]} : vector<4x12x20xf32> to vector<1x8x16xf32>
    %240 = vector.shape_cast %239 : vector<1x8x16xf32> to vector<8x16xf32>
    %241 = arith.subf %240, %38 : vector<8x16xf32>
    %242 = math.exp %241 : vector<8x16xf32>
    %243 = vector.extract_strided_slice %45 {offsets = [0, 16], sizes = [8, 1], strides = [1, 1]} : vector<8x100xf32> to vector<8x1xf32>
    %244 = vector.shape_cast %243 : vector<8x1xf32> to vector<8xf32>
    %245 = vector.shape_cast %244 : vector<8xf32> to vector<8x1x1xf32>
    %246 = vector.shape_cast %242 : vector<8x16xf32> to vector<1x8x16xf32>
    %247 = vector.broadcast %245 : vector<8x1x1xf32> to vector<8x8x16xf32>
    %248 = vector.broadcast %246 : vector<1x8x16xf32> to vector<8x8x16xf32>
    %249 = arith.mulf %247, %248 : vector<8x8x16xf32>
    %250 = arith.addf %238, %249 : vector<8x8x16xf32>
    %251 = vector.extract_strided_slice %9 {offsets = [0, 3, 2], sizes = [1, 8, 16], strides = [1, 1, 1]} : vector<4x12x20xf32> to vector<1x8x16xf32>
    %252 = vector.shape_cast %251 : vector<1x8x16xf32> to vector<8x16xf32>
    %253 = arith.subf %252, %38 : vector<8x16xf32>
    %254 = math.exp %253 : vector<8x16xf32>
    %255 = vector.extract_strided_slice %45 {offsets = [0, 17], sizes = [8, 1], strides = [1, 1]} : vector<8x100xf32> to vector<8x1xf32>
    %256 = vector.shape_cast %255 : vector<8x1xf32> to vector<8xf32>
    %257 = vector.shape_cast %256 : vector<8xf32> to vector<8x1x1xf32>
    %258 = vector.shape_cast %254 : vector<8x16xf32> to vector<1x8x16xf32>
    %259 = vector.broadcast %257 : vector<8x1x1xf32> to vector<8x8x16xf32>
    %260 = vector.broadcast %258 : vector<1x8x16xf32> to vector<8x8x16xf32>
    %261 = arith.mulf %259, %260 : vector<8x8x16xf32>
    %262 = arith.addf %250, %261 : vector<8x8x16xf32>
    %263 = vector.extract_strided_slice %9 {offsets = [0, 3, 3], sizes = [1, 8, 16], strides = [1, 1, 1]} : vector<4x12x20xf32> to vector<1x8x16xf32>
    %264 = vector.shape_cast %263 : vector<1x8x16xf32> to vector<8x16xf32>
    %265 = arith.subf %264, %38 : vector<8x16xf32>
    %266 = math.exp %265 : vector<8x16xf32>
    %267 = vector.extract_strided_slice %45 {offsets = [0, 18], sizes = [8, 1], strides = [1, 1]} : vector<8x100xf32> to vector<8x1xf32>
    %268 = vector.shape_cast %267 : vector<8x1xf32> to vector<8xf32>
    %269 = vector.shape_cast %268 : vector<8xf32> to vector<8x1x1xf32>
    %270 = vector.shape_cast %266 : vector<8x16xf32> to vector<1x8x16xf32>
    %271 = vector.broadcast %269 : vector<8x1x1xf32> to vector<8x8x16xf32>
    %272 = vector.broadcast %270 : vector<1x8x16xf32> to vector<8x8x16xf32>
    %273 = arith.mulf %271, %272 : vector<8x8x16xf32>
    %274 = arith.addf %262, %273 : vector<8x8x16xf32>
    %275 = vector.extract_strided_slice %9 {offsets = [0, 3, 4], sizes = [1, 8, 16], strides = [1, 1, 1]} : vector<4x12x20xf32> to vector<1x8x16xf32>
    %276 = vector.shape_cast %275 : vector<1x8x16xf32> to vector<8x16xf32>
    %277 = arith.subf %276, %38 : vector<8x16xf32>
    %278 = math.exp %277 : vector<8x16xf32>
    %279 = vector.extract_strided_slice %45 {offsets = [0, 19], sizes = [8, 1], strides = [1, 1]} : vector<8x100xf32> to vector<8x1xf32>
    %280 = vector.shape_cast %279 : vector<8x1xf32> to vector<8xf32>
    %281 = vector.shape_cast %280 : vector<8xf32> to vector<8x1x1xf32>
    %282 = vector.shape_cast %278 : vector<8x16xf32> to vector<1x8x16xf32>
    %283 = vector.broadcast %281 : vector<8x1x1xf32> to vector<8x8x16xf32>
    %284 = vector.broadcast %282 : vector<1x8x16xf32> to vector<8x8x16xf32>
    %285 = arith.mulf %283, %284 : vector<8x8x16xf32>
    %286 = arith.addf %274, %285 : vector<8x8x16xf32>
    %287 = vector.extract_strided_slice %9 {offsets = [0, 4, 0], sizes = [1, 8, 16], strides = [1, 1, 1]} : vector<4x12x20xf32> to vector<1x8x16xf32>
    %288 = vector.shape_cast %287 : vector<1x8x16xf32> to vector<8x16xf32>
    %289 = arith.subf %288, %38 : vector<8x16xf32>
    %290 = math.exp %289 : vector<8x16xf32>
    %291 = vector.extract_strided_slice %45 {offsets = [0, 20], sizes = [8, 1], strides = [1, 1]} : vector<8x100xf32> to vector<8x1xf32>
    %292 = vector.shape_cast %291 : vector<8x1xf32> to vector<8xf32>
    %293 = vector.shape_cast %292 : vector<8xf32> to vector<8x1x1xf32>
    %294 = vector.shape_cast %290 : vector<8x16xf32> to vector<1x8x16xf32>
    %295 = vector.broadcast %293 : vector<8x1x1xf32> to vector<8x8x16xf32>
    %296 = vector.broadcast %294 : vector<1x8x16xf32> to vector<8x8x16xf32>
    %297 = arith.mulf %295, %296 : vector<8x8x16xf32>
    %298 = arith.addf %286, %297 : vector<8x8x16xf32>
    %299 = vector.extract_strided_slice %9 {offsets = [0, 4, 1], sizes = [1, 8, 16], strides = [1, 1, 1]} : vector<4x12x20xf32> to vector<1x8x16xf32>
    %300 = vector.shape_cast %299 : vector<1x8x16xf32> to vector<8x16xf32>
    %301 = arith.subf %300, %38 : vector<8x16xf32>
    %302 = math.exp %301 : vector<8x16xf32>
    %303 = vector.extract_strided_slice %45 {offsets = [0, 21], sizes = [8, 1], strides = [1, 1]} : vector<8x100xf32> to vector<8x1xf32>
    %304 = vector.shape_cast %303 : vector<8x1xf32> to vector<8xf32>
    %305 = vector.shape_cast %304 : vector<8xf32> to vector<8x1x1xf32>
    %306 = vector.shape_cast %302 : vector<8x16xf32> to vector<1x8x16xf32>
    %307 = vector.broadcast %305 : vector<8x1x1xf32> to vector<8x8x16xf32>
    %308 = vector.broadcast %306 : vector<1x8x16xf32> to vector<8x8x16xf32>
    %309 = arith.mulf %307, %308 : vector<8x8x16xf32>
    %310 = arith.addf %298, %309 : vector<8x8x16xf32>
    %311 = vector.extract_strided_slice %9 {offsets = [0, 4, 2], sizes = [1, 8, 16], strides = [1, 1, 1]} : vector<4x12x20xf32> to vector<1x8x16xf32>
    %312 = vector.shape_cast %311 : vector<1x8x16xf32> to vector<8x16xf32>
    %313 = arith.subf %312, %38 : vector<8x16xf32>
    %314 = math.exp %313 : vector<8x16xf32>
    %315 = vector.extract_strided_slice %45 {offsets = [0, 22], sizes = [8, 1], strides = [1, 1]} : vector<8x100xf32> to vector<8x1xf32>
    %316 = vector.shape_cast %315 : vector<8x1xf32> to vector<8xf32>
    %317 = vector.shape_cast %316 : vector<8xf32> to vector<8x1x1xf32>
    %318 = vector.shape_cast %314 : vector<8x16xf32> to vector<1x8x16xf32>
    %319 = vector.broadcast %317 : vector<8x1x1xf32> to vector<8x8x16xf32>
    %320 = vector.broadcast %318 : vector<1x8x16xf32> to vector<8x8x16xf32>
    %321 = arith.mulf %319, %320 : vector<8x8x16xf32>
    %322 = arith.addf %310, %321 : vector<8x8x16xf32>
    %323 = vector.extract_strided_slice %9 {offsets = [0, 4, 3], sizes = [1, 8, 16], strides = [1, 1, 1]} : vector<4x12x20xf32> to vector<1x8x16xf32>
    %324 = vector.shape_cast %323 : vector<1x8x16xf32> to vector<8x16xf32>
    %325 = arith.subf %324, %38 : vector<8x16xf32>
    %326 = math.exp %325 : vector<8x16xf32>
    %327 = vector.extract_strided_slice %45 {offsets = [0, 23], sizes = [8, 1], strides = [1, 1]} : vector<8x100xf32> to vector<8x1xf32>
    %328 = vector.shape_cast %327 : vector<8x1xf32> to vector<8xf32>
    %329 = vector.shape_cast %328 : vector<8xf32> to vector<8x1x1xf32>
    %330 = vector.shape_cast %326 : vector<8x16xf32> to vector<1x8x16xf32>
    %331 = vector.broadcast %329 : vector<8x1x1xf32> to vector<8x8x16xf32>
    %332 = vector.broadcast %330 : vector<1x8x16xf32> to vector<8x8x16xf32>
    %333 = arith.mulf %331, %332 : vector<8x8x16xf32>
    %334 = arith.addf %322, %333 : vector<8x8x16xf32>
    %335 = vector.extract_strided_slice %9 {offsets = [0, 4, 4], sizes = [1, 8, 16], strides = [1, 1, 1]} : vector<4x12x20xf32> to vector<1x8x16xf32>
    %336 = vector.shape_cast %335 : vector<1x8x16xf32> to vector<8x16xf32>
    %337 = arith.subf %336, %38 : vector<8x16xf32>
    %338 = math.exp %337 : vector<8x16xf32>
    %339 = vector.extract_strided_slice %45 {offsets = [0, 24], sizes = [8, 1], strides = [1, 1]} : vector<8x100xf32> to vector<8x1xf32>
    %340 = vector.shape_cast %339 : vector<8x1xf32> to vector<8xf32>
    %341 = vector.shape_cast %340 : vector<8xf32> to vector<8x1x1xf32>
    %342 = vector.shape_cast %338 : vector<8x16xf32> to vector<1x8x16xf32>
    %343 = vector.broadcast %341 : vector<8x1x1xf32> to vector<8x8x16xf32>
    %344 = vector.broadcast %342 : vector<1x8x16xf32> to vector<8x8x16xf32>
    %345 = arith.mulf %343, %344 : vector<8x8x16xf32>
    %346 = arith.addf %334, %345 : vector<8x8x16xf32>
    %347 = vector.extract_strided_slice %9 {offsets = [1, 0, 0], sizes = [1, 8, 16], strides = [1, 1, 1]} : vector<4x12x20xf32> to vector<1x8x16xf32>
    %348 = vector.shape_cast %347 : vector<1x8x16xf32> to vector<8x16xf32>
    %349 = arith.subf %348, %38 : vector<8x16xf32>
    %350 = math.exp %349 : vector<8x16xf32>
    %351 = vector.extract_strided_slice %45 {offsets = [0, 25], sizes = [8, 1], strides = [1, 1]} : vector<8x100xf32> to vector<8x1xf32>
    %352 = vector.shape_cast %351 : vector<8x1xf32> to vector<8xf32>
    %353 = vector.shape_cast %352 : vector<8xf32> to vector<8x1x1xf32>
    %354 = vector.shape_cast %350 : vector<8x16xf32> to vector<1x8x16xf32>
    %355 = vector.broadcast %353 : vector<8x1x1xf32> to vector<8x8x16xf32>
    %356 = vector.broadcast %354 : vector<1x8x16xf32> to vector<8x8x16xf32>
    %357 = arith.mulf %355, %356 : vector<8x8x16xf32>
    %358 = arith.addf %346, %357 : vector<8x8x16xf32>
    %359 = vector.extract_strided_slice %9 {offsets = [1, 0, 1], sizes = [1, 8, 16], strides = [1, 1, 1]} : vector<4x12x20xf32> to vector<1x8x16xf32>
    %360 = vector.shape_cast %359 : vector<1x8x16xf32> to vector<8x16xf32>
    %361 = arith.subf %360, %38 : vector<8x16xf32>
    %362 = math.exp %361 : vector<8x16xf32>
    %363 = vector.extract_strided_slice %45 {offsets = [0, 26], sizes = [8, 1], strides = [1, 1]} : vector<8x100xf32> to vector<8x1xf32>
    %364 = vector.shape_cast %363 : vector<8x1xf32> to vector<8xf32>
    %365 = vector.shape_cast %364 : vector<8xf32> to vector<8x1x1xf32>
    %366 = vector.shape_cast %362 : vector<8x16xf32> to vector<1x8x16xf32>
    %367 = vector.broadcast %365 : vector<8x1x1xf32> to vector<8x8x16xf32>
    %368 = vector.broadcast %366 : vector<1x8x16xf32> to vector<8x8x16xf32>
    %369 = arith.mulf %367, %368 : vector<8x8x16xf32>
    %370 = arith.addf %358, %369 : vector<8x8x16xf32>
    %371 = vector.extract_strided_slice %9 {offsets = [1, 0, 2], sizes = [1, 8, 16], strides = [1, 1, 1]} : vector<4x12x20xf32> to vector<1x8x16xf32>
    %372 = vector.shape_cast %371 : vector<1x8x16xf32> to vector<8x16xf32>
    %373 = arith.subf %372, %38 : vector<8x16xf32>
    %374 = math.exp %373 : vector<8x16xf32>
    %375 = vector.extract_strided_slice %45 {offsets = [0, 27], sizes = [8, 1], strides = [1, 1]} : vector<8x100xf32> to vector<8x1xf32>
    %376 = vector.shape_cast %375 : vector<8x1xf32> to vector<8xf32>
    %377 = vector.shape_cast %376 : vector<8xf32> to vector<8x1x1xf32>
    %378 = vector.shape_cast %374 : vector<8x16xf32> to vector<1x8x16xf32>
    %379 = vector.broadcast %377 : vector<8x1x1xf32> to vector<8x8x16xf32>
    %380 = vector.broadcast %378 : vector<1x8x16xf32> to vector<8x8x16xf32>
    %381 = arith.mulf %379, %380 : vector<8x8x16xf32>
    %382 = arith.addf %370, %381 : vector<8x8x16xf32>
    %383 = vector.extract_strided_slice %9 {offsets = [1, 0, 3], sizes = [1, 8, 16], strides = [1, 1, 1]} : vector<4x12x20xf32> to vector<1x8x16xf32>
    %384 = vector.shape_cast %383 : vector<1x8x16xf32> to vector<8x16xf32>
    %385 = arith.subf %384, %38 : vector<8x16xf32>
    %386 = math.exp %385 : vector<8x16xf32>
    %387 = vector.extract_strided_slice %45 {offsets = [0, 28], sizes = [8, 1], strides = [1, 1]} : vector<8x100xf32> to vector<8x1xf32>
    %388 = vector.shape_cast %387 : vector<8x1xf32> to vector<8xf32>
    %389 = vector.shape_cast %388 : vector<8xf32> to vector<8x1x1xf32>
    %390 = vector.shape_cast %386 : vector<8x16xf32> to vector<1x8x16xf32>
    %391 = vector.broadcast %389 : vector<8x1x1xf32> to vector<8x8x16xf32>
    %392 = vector.broadcast %390 : vector<1x8x16xf32> to vector<8x8x16xf32>
    %393 = arith.mulf %391, %392 : vector<8x8x16xf32>
    %394 = arith.addf %382, %393 : vector<8x8x16xf32>
    %395 = vector.extract_strided_slice %9 {offsets = [1, 0, 4], sizes = [1, 8, 16], strides = [1, 1, 1]} : vector<4x12x20xf32> to vector<1x8x16xf32>
    %396 = vector.shape_cast %395 : vector<1x8x16xf32> to vector<8x16xf32>
    %397 = arith.subf %396, %38 : vector<8x16xf32>
    %398 = math.exp %397 : vector<8x16xf32>
    %399 = vector.extract_strided_slice %45 {offsets = [0, 29], sizes = [8, 1], strides = [1, 1]} : vector<8x100xf32> to vector<8x1xf32>
    %400 = vector.shape_cast %399 : vector<8x1xf32> to vector<8xf32>
    %401 = vector.shape_cast %400 : vector<8xf32> to vector<8x1x1xf32>
    %402 = vector.shape_cast %398 : vector<8x16xf32> to vector<1x8x16xf32>
    %403 = vector.broadcast %401 : vector<8x1x1xf32> to vector<8x8x16xf32>
    %404 = vector.broadcast %402 : vector<1x8x16xf32> to vector<8x8x16xf32>
    %405 = arith.mulf %403, %404 : vector<8x8x16xf32>
    %406 = arith.addf %394, %405 : vector<8x8x16xf32>
    %407 = vector.extract_strided_slice %9 {offsets = [1, 1, 0], sizes = [1, 8, 16], strides = [1, 1, 1]} : vector<4x12x20xf32> to vector<1x8x16xf32>
    %408 = vector.shape_cast %407 : vector<1x8x16xf32> to vector<8x16xf32>
    %409 = arith.subf %408, %38 : vector<8x16xf32>
    %410 = math.exp %409 : vector<8x16xf32>
    %411 = vector.extract_strided_slice %45 {offsets = [0, 30], sizes = [8, 1], strides = [1, 1]} : vector<8x100xf32> to vector<8x1xf32>
    %412 = vector.shape_cast %411 : vector<8x1xf32> to vector<8xf32>
    %413 = vector.shape_cast %412 : vector<8xf32> to vector<8x1x1xf32>
    %414 = vector.shape_cast %410 : vector<8x16xf32> to vector<1x8x16xf32>
    %415 = vector.broadcast %413 : vector<8x1x1xf32> to vector<8x8x16xf32>
    %416 = vector.broadcast %414 : vector<1x8x16xf32> to vector<8x8x16xf32>
    %417 = arith.mulf %415, %416 : vector<8x8x16xf32>
    %418 = arith.addf %406, %417 : vector<8x8x16xf32>
    %419 = vector.extract_strided_slice %9 {offsets = [1, 1, 1], sizes = [1, 8, 16], strides = [1, 1, 1]} : vector<4x12x20xf32> to vector<1x8x16xf32>
    %420 = vector.shape_cast %419 : vector<1x8x16xf32> to vector<8x16xf32>
    %421 = arith.subf %420, %38 : vector<8x16xf32>
    %422 = math.exp %421 : vector<8x16xf32>
    %423 = vector.extract_strided_slice %45 {offsets = [0, 31], sizes = [8, 1], strides = [1, 1]} : vector<8x100xf32> to vector<8x1xf32>
    %424 = vector.shape_cast %423 : vector<8x1xf32> to vector<8xf32>
    %425 = vector.shape_cast %424 : vector<8xf32> to vector<8x1x1xf32>
    %426 = vector.shape_cast %422 : vector<8x16xf32> to vector<1x8x16xf32>
    %427 = vector.broadcast %425 : vector<8x1x1xf32> to vector<8x8x16xf32>
    %428 = vector.broadcast %426 : vector<1x8x16xf32> to vector<8x8x16xf32>
    %429 = arith.mulf %427, %428 : vector<8x8x16xf32>
    %430 = arith.addf %418, %429 : vector<8x8x16xf32>
    %431 = vector.extract_strided_slice %9 {offsets = [1, 1, 2], sizes = [1, 8, 16], strides = [1, 1, 1]} : vector<4x12x20xf32> to vector<1x8x16xf32>
    %432 = vector.shape_cast %431 : vector<1x8x16xf32> to vector<8x16xf32>
    %433 = arith.subf %432, %38 : vector<8x16xf32>
    %434 = math.exp %433 : vector<8x16xf32>
    %435 = vector.extract_strided_slice %45 {offsets = [0, 32], sizes = [8, 1], strides = [1, 1]} : vector<8x100xf32> to vector<8x1xf32>
    %436 = vector.shape_cast %435 : vector<8x1xf32> to vector<8xf32>
    %437 = vector.shape_cast %436 : vector<8xf32> to vector<8x1x1xf32>
    %438 = vector.shape_cast %434 : vector<8x16xf32> to vector<1x8x16xf32>
    %439 = vector.broadcast %437 : vector<8x1x1xf32> to vector<8x8x16xf32>
    %440 = vector.broadcast %438 : vector<1x8x16xf32> to vector<8x8x16xf32>
    %441 = arith.mulf %439, %440 : vector<8x8x16xf32>
    %442 = arith.addf %430, %441 : vector<8x8x16xf32>
    %443 = vector.extract_strided_slice %9 {offsets = [1, 1, 3], sizes = [1, 8, 16], strides = [1, 1, 1]} : vector<4x12x20xf32> to vector<1x8x16xf32>
    %444 = vector.shape_cast %443 : vector<1x8x16xf32> to vector<8x16xf32>
    %445 = arith.subf %444, %38 : vector<8x16xf32>
    %446 = math.exp %445 : vector<8x16xf32>
    %447 = vector.extract_strided_slice %45 {offsets = [0, 33], sizes = [8, 1], strides = [1, 1]} : vector<8x100xf32> to vector<8x1xf32>
    %448 = vector.shape_cast %447 : vector<8x1xf32> to vector<8xf32>
    %449 = vector.shape_cast %448 : vector<8xf32> to vector<8x1x1xf32>
    %450 = vector.shape_cast %446 : vector<8x16xf32> to vector<1x8x16xf32>
    %451 = vector.broadcast %449 : vector<8x1x1xf32> to vector<8x8x16xf32>
    %452 = vector.broadcast %450 : vector<1x8x16xf32> to vector<8x8x16xf32>
    %453 = arith.mulf %451, %452 : vector<8x8x16xf32>
    %454 = arith.addf %442, %453 : vector<8x8x16xf32>
    %455 = vector.extract_strided_slice %9 {offsets = [1, 1, 4], sizes = [1, 8, 16], strides = [1, 1, 1]} : vector<4x12x20xf32> to vector<1x8x16xf32>
    %456 = vector.shape_cast %455 : vector<1x8x16xf32> to vector<8x16xf32>
    %457 = arith.subf %456, %38 : vector<8x16xf32>
    %458 = math.exp %457 : vector<8x16xf32>
    %459 = vector.extract_strided_slice %45 {offsets = [0, 34], sizes = [8, 1], strides = [1, 1]} : vector<8x100xf32> to vector<8x1xf32>
    %460 = vector.shape_cast %459 : vector<8x1xf32> to vector<8xf32>
    %461 = vector.shape_cast %460 : vector<8xf32> to vector<8x1x1xf32>
    %462 = vector.shape_cast %458 : vector<8x16xf32> to vector<1x8x16xf32>
    %463 = vector.broadcast %461 : vector<8x1x1xf32> to vector<8x8x16xf32>
    %464 = vector.broadcast %462 : vector<1x8x16xf32> to vector<8x8x16xf32>
    %465 = arith.mulf %463, %464 : vector<8x8x16xf32>
    %466 = arith.addf %454, %465 : vector<8x8x16xf32>
    %467 = vector.extract_strided_slice %9 {offsets = [1, 2, 0], sizes = [1, 8, 16], strides = [1, 1, 1]} : vector<4x12x20xf32> to vector<1x8x16xf32>
    %468 = vector.shape_cast %467 : vector<1x8x16xf32> to vector<8x16xf32>
    %469 = arith.subf %468, %38 : vector<8x16xf32>
    %470 = math.exp %469 : vector<8x16xf32>
    %471 = vector.extract_strided_slice %45 {offsets = [0, 35], sizes = [8, 1], strides = [1, 1]} : vector<8x100xf32> to vector<8x1xf32>
    %472 = vector.shape_cast %471 : vector<8x1xf32> to vector<8xf32>
    %473 = vector.shape_cast %472 : vector<8xf32> to vector<8x1x1xf32>
    %474 = vector.shape_cast %470 : vector<8x16xf32> to vector<1x8x16xf32>
    %475 = vector.broadcast %473 : vector<8x1x1xf32> to vector<8x8x16xf32>
    %476 = vector.broadcast %474 : vector<1x8x16xf32> to vector<8x8x16xf32>
    %477 = arith.mulf %475, %476 : vector<8x8x16xf32>
    %478 = arith.addf %466, %477 : vector<8x8x16xf32>
    %479 = vector.extract_strided_slice %9 {offsets = [1, 2, 1], sizes = [1, 8, 16], strides = [1, 1, 1]} : vector<4x12x20xf32> to vector<1x8x16xf32>
    %480 = vector.shape_cast %479 : vector<1x8x16xf32> to vector<8x16xf32>
    %481 = arith.subf %480, %38 : vector<8x16xf32>
    %482 = math.exp %481 : vector<8x16xf32>
    %483 = vector.extract_strided_slice %45 {offsets = [0, 36], sizes = [8, 1], strides = [1, 1]} : vector<8x100xf32> to vector<8x1xf32>
    %484 = vector.shape_cast %483 : vector<8x1xf32> to vector<8xf32>
    %485 = vector.shape_cast %484 : vector<8xf32> to vector<8x1x1xf32>
    %486 = vector.shape_cast %482 : vector<8x16xf32> to vector<1x8x16xf32>
    %487 = vector.broadcast %485 : vector<8x1x1xf32> to vector<8x8x16xf32>
    %488 = vector.broadcast %486 : vector<1x8x16xf32> to vector<8x8x16xf32>
    %489 = arith.mulf %487, %488 : vector<8x8x16xf32>
    %490 = arith.addf %478, %489 : vector<8x8x16xf32>
    %491 = vector.extract_strided_slice %9 {offsets = [1, 2, 2], sizes = [1, 8, 16], strides = [1, 1, 1]} : vector<4x12x20xf32> to vector<1x8x16xf32>
    %492 = vector.shape_cast %491 : vector<1x8x16xf32> to vector<8x16xf32>
    %493 = arith.subf %492, %38 : vector<8x16xf32>
    %494 = math.exp %493 : vector<8x16xf32>
    %495 = vector.extract_strided_slice %45 {offsets = [0, 37], sizes = [8, 1], strides = [1, 1]} : vector<8x100xf32> to vector<8x1xf32>
    %496 = vector.shape_cast %495 : vector<8x1xf32> to vector<8xf32>
    %497 = vector.shape_cast %496 : vector<8xf32> to vector<8x1x1xf32>
    %498 = vector.shape_cast %494 : vector<8x16xf32> to vector<1x8x16xf32>
    %499 = vector.broadcast %497 : vector<8x1x1xf32> to vector<8x8x16xf32>
    %500 = vector.broadcast %498 : vector<1x8x16xf32> to vector<8x8x16xf32>
    %501 = arith.mulf %499, %500 : vector<8x8x16xf32>
    %502 = arith.addf %490, %501 : vector<8x8x16xf32>
    %503 = vector.extract_strided_slice %9 {offsets = [1, 2, 3], sizes = [1, 8, 16], strides = [1, 1, 1]} : vector<4x12x20xf32> to vector<1x8x16xf32>
    %504 = vector.shape_cast %503 : vector<1x8x16xf32> to vector<8x16xf32>
    %505 = arith.subf %504, %38 : vector<8x16xf32>
    %506 = math.exp %505 : vector<8x16xf32>
    %507 = vector.extract_strided_slice %45 {offsets = [0, 38], sizes = [8, 1], strides = [1, 1]} : vector<8x100xf32> to vector<8x1xf32>
    %508 = vector.shape_cast %507 : vector<8x1xf32> to vector<8xf32>
    %509 = vector.shape_cast %508 : vector<8xf32> to vector<8x1x1xf32>
    %510 = vector.shape_cast %506 : vector<8x16xf32> to vector<1x8x16xf32>
    %511 = vector.broadcast %509 : vector<8x1x1xf32> to vector<8x8x16xf32>
    %512 = vector.broadcast %510 : vector<1x8x16xf32> to vector<8x8x16xf32>
    %513 = arith.mulf %511, %512 : vector<8x8x16xf32>
    %514 = arith.addf %502, %513 : vector<8x8x16xf32>
    %515 = vector.extract_strided_slice %9 {offsets = [1, 2, 4], sizes = [1, 8, 16], strides = [1, 1, 1]} : vector<4x12x20xf32> to vector<1x8x16xf32>
    %516 = vector.shape_cast %515 : vector<1x8x16xf32> to vector<8x16xf32>
    %517 = arith.subf %516, %38 : vector<8x16xf32>
    %518 = math.exp %517 : vector<8x16xf32>
    %519 = vector.extract_strided_slice %45 {offsets = [0, 39], sizes = [8, 1], strides = [1, 1]} : vector<8x100xf32> to vector<8x1xf32>
    %520 = vector.shape_cast %519 : vector<8x1xf32> to vector<8xf32>
    %521 = vector.shape_cast %520 : vector<8xf32> to vector<8x1x1xf32>
    %522 = vector.shape_cast %518 : vector<8x16xf32> to vector<1x8x16xf32>
    %523 = vector.broadcast %521 : vector<8x1x1xf32> to vector<8x8x16xf32>
    %524 = vector.broadcast %522 : vector<1x8x16xf32> to vector<8x8x16xf32>
    %525 = arith.mulf %523, %524 : vector<8x8x16xf32>
    %526 = arith.addf %514, %525 : vector<8x8x16xf32>
    %527 = vector.extract_strided_slice %9 {offsets = [1, 3, 0], sizes = [1, 8, 16], strides = [1, 1, 1]} : vector<4x12x20xf32> to vector<1x8x16xf32>
    %528 = vector.shape_cast %527 : vector<1x8x16xf32> to vector<8x16xf32>
    %529 = arith.subf %528, %38 : vector<8x16xf32>
    %530 = math.exp %529 : vector<8x16xf32>
    %531 = vector.extract_strided_slice %45 {offsets = [0, 40], sizes = [8, 1], strides = [1, 1]} : vector<8x100xf32> to vector<8x1xf32>
    %532 = vector.shape_cast %531 : vector<8x1xf32> to vector<8xf32>
    %533 = vector.shape_cast %532 : vector<8xf32> to vector<8x1x1xf32>
    %534 = vector.shape_cast %530 : vector<8x16xf32> to vector<1x8x16xf32>
    %535 = vector.broadcast %533 : vector<8x1x1xf32> to vector<8x8x16xf32>
    %536 = vector.broadcast %534 : vector<1x8x16xf32> to vector<8x8x16xf32>
    %537 = arith.mulf %535, %536 : vector<8x8x16xf32>
    %538 = arith.addf %526, %537 : vector<8x8x16xf32>
    %539 = vector.extract_strided_slice %9 {offsets = [1, 3, 1], sizes = [1, 8, 16], strides = [1, 1, 1]} : vector<4x12x20xf32> to vector<1x8x16xf32>
    %540 = vector.shape_cast %539 : vector<1x8x16xf32> to vector<8x16xf32>
    %541 = arith.subf %540, %38 : vector<8x16xf32>
    %542 = math.exp %541 : vector<8x16xf32>
    %543 = vector.extract_strided_slice %45 {offsets = [0, 41], sizes = [8, 1], strides = [1, 1]} : vector<8x100xf32> to vector<8x1xf32>
    %544 = vector.shape_cast %543 : vector<8x1xf32> to vector<8xf32>
    %545 = vector.shape_cast %544 : vector<8xf32> to vector<8x1x1xf32>
    %546 = vector.shape_cast %542 : vector<8x16xf32> to vector<1x8x16xf32>
    %547 = vector.broadcast %545 : vector<8x1x1xf32> to vector<8x8x16xf32>
    %548 = vector.broadcast %546 : vector<1x8x16xf32> to vector<8x8x16xf32>
    %549 = arith.mulf %547, %548 : vector<8x8x16xf32>
    %550 = arith.addf %538, %549 : vector<8x8x16xf32>
    %551 = vector.extract_strided_slice %9 {offsets = [1, 3, 2], sizes = [1, 8, 16], strides = [1, 1, 1]} : vector<4x12x20xf32> to vector<1x8x16xf32>
    %552 = vector.shape_cast %551 : vector<1x8x16xf32> to vector<8x16xf32>
    %553 = arith.subf %552, %38 : vector<8x16xf32>
    %554 = math.exp %553 : vector<8x16xf32>
    %555 = vector.extract_strided_slice %45 {offsets = [0, 42], sizes = [8, 1], strides = [1, 1]} : vector<8x100xf32> to vector<8x1xf32>
    %556 = vector.shape_cast %555 : vector<8x1xf32> to vector<8xf32>
    %557 = vector.shape_cast %556 : vector<8xf32> to vector<8x1x1xf32>
    %558 = vector.shape_cast %554 : vector<8x16xf32> to vector<1x8x16xf32>
    %559 = vector.broadcast %557 : vector<8x1x1xf32> to vector<8x8x16xf32>
    %560 = vector.broadcast %558 : vector<1x8x16xf32> to vector<8x8x16xf32>
    %561 = arith.mulf %559, %560 : vector<8x8x16xf32>
    %562 = arith.addf %550, %561 : vector<8x8x16xf32>
    %563 = vector.extract_strided_slice %9 {offsets = [1, 3, 3], sizes = [1, 8, 16], strides = [1, 1, 1]} : vector<4x12x20xf32> to vector<1x8x16xf32>
    %564 = vector.shape_cast %563 : vector<1x8x16xf32> to vector<8x16xf32>
    %565 = arith.subf %564, %38 : vector<8x16xf32>
    %566 = math.exp %565 : vector<8x16xf32>
    %567 = vector.extract_strided_slice %45 {offsets = [0, 43], sizes = [8, 1], strides = [1, 1]} : vector<8x100xf32> to vector<8x1xf32>
    %568 = vector.shape_cast %567 : vector<8x1xf32> to vector<8xf32>
    %569 = vector.shape_cast %568 : vector<8xf32> to vector<8x1x1xf32>
    %570 = vector.shape_cast %566 : vector<8x16xf32> to vector<1x8x16xf32>
    %571 = vector.broadcast %569 : vector<8x1x1xf32> to vector<8x8x16xf32>
    %572 = vector.broadcast %570 : vector<1x8x16xf32> to vector<8x8x16xf32>
    %573 = arith.mulf %571, %572 : vector<8x8x16xf32>
    %574 = arith.addf %562, %573 : vector<8x8x16xf32>
    %575 = vector.extract_strided_slice %9 {offsets = [1, 3, 4], sizes = [1, 8, 16], strides = [1, 1, 1]} : vector<4x12x20xf32> to vector<1x8x16xf32>
    %576 = vector.shape_cast %575 : vector<1x8x16xf32> to vector<8x16xf32>
    %577 = arith.subf %576, %38 : vector<8x16xf32>
    %578 = math.exp %577 : vector<8x16xf32>
    %579 = vector.extract_strided_slice %45 {offsets = [0, 44], sizes = [8, 1], strides = [1, 1]} : vector<8x100xf32> to vector<8x1xf32>
    %580 = vector.shape_cast %579 : vector<8x1xf32> to vector<8xf32>
    %581 = vector.shape_cast %580 : vector<8xf32> to vector<8x1x1xf32>
    %582 = vector.shape_cast %578 : vector<8x16xf32> to vector<1x8x16xf32>
    %583 = vector.broadcast %581 : vector<8x1x1xf32> to vector<8x8x16xf32>
    %584 = vector.broadcast %582 : vector<1x8x16xf32> to vector<8x8x16xf32>
    %585 = arith.mulf %583, %584 : vector<8x8x16xf32>
    %586 = arith.addf %574, %585 : vector<8x8x16xf32>
    %587 = vector.extract_strided_slice %9 {offsets = [1, 4, 0], sizes = [1, 8, 16], strides = [1, 1, 1]} : vector<4x12x20xf32> to vector<1x8x16xf32>
    %588 = vector.shape_cast %587 : vector<1x8x16xf32> to vector<8x16xf32>
    %589 = arith.subf %588, %38 : vector<8x16xf32>
    %590 = math.exp %589 : vector<8x16xf32>
    %591 = vector.extract_strided_slice %45 {offsets = [0, 45], sizes = [8, 1], strides = [1, 1]} : vector<8x100xf32> to vector<8x1xf32>
    %592 = vector.shape_cast %591 : vector<8x1xf32> to vector<8xf32>
    %593 = vector.shape_cast %592 : vector<8xf32> to vector<8x1x1xf32>
    %594 = vector.shape_cast %590 : vector<8x16xf32> to vector<1x8x16xf32>
    %595 = vector.broadcast %593 : vector<8x1x1xf32> to vector<8x8x16xf32>
    %596 = vector.broadcast %594 : vector<1x8x16xf32> to vector<8x8x16xf32>
    %597 = arith.mulf %595, %596 : vector<8x8x16xf32>
    %598 = arith.addf %586, %597 : vector<8x8x16xf32>
    %599 = vector.extract_strided_slice %9 {offsets = [1, 4, 1], sizes = [1, 8, 16], strides = [1, 1, 1]} : vector<4x12x20xf32> to vector<1x8x16xf32>
    %600 = vector.shape_cast %599 : vector<1x8x16xf32> to vector<8x16xf32>
    %601 = arith.subf %600, %38 : vector<8x16xf32>
    %602 = math.exp %601 : vector<8x16xf32>
    %603 = vector.extract_strided_slice %45 {offsets = [0, 46], sizes = [8, 1], strides = [1, 1]} : vector<8x100xf32> to vector<8x1xf32>
    %604 = vector.shape_cast %603 : vector<8x1xf32> to vector<8xf32>
    %605 = vector.shape_cast %604 : vector<8xf32> to vector<8x1x1xf32>
    %606 = vector.shape_cast %602 : vector<8x16xf32> to vector<1x8x16xf32>
    %607 = vector.broadcast %605 : vector<8x1x1xf32> to vector<8x8x16xf32>
    %608 = vector.broadcast %606 : vector<1x8x16xf32> to vector<8x8x16xf32>
    %609 = arith.mulf %607, %608 : vector<8x8x16xf32>
    %610 = arith.addf %598, %609 : vector<8x8x16xf32>
    %611 = vector.extract_strided_slice %9 {offsets = [1, 4, 2], sizes = [1, 8, 16], strides = [1, 1, 1]} : vector<4x12x20xf32> to vector<1x8x16xf32>
    %612 = vector.shape_cast %611 : vector<1x8x16xf32> to vector<8x16xf32>
    %613 = arith.subf %612, %38 : vector<8x16xf32>
    %614 = math.exp %613 : vector<8x16xf32>
    %615 = vector.extract_strided_slice %45 {offsets = [0, 47], sizes = [8, 1], strides = [1, 1]} : vector<8x100xf32> to vector<8x1xf32>
    %616 = vector.shape_cast %615 : vector<8x1xf32> to vector<8xf32>
    %617 = vector.shape_cast %616 : vector<8xf32> to vector<8x1x1xf32>
    %618 = vector.shape_cast %614 : vector<8x16xf32> to vector<1x8x16xf32>
    %619 = vector.broadcast %617 : vector<8x1x1xf32> to vector<8x8x16xf32>
    %620 = vector.broadcast %618 : vector<1x8x16xf32> to vector<8x8x16xf32>
    %621 = arith.mulf %619, %620 : vector<8x8x16xf32>
    %622 = arith.addf %610, %621 : vector<8x8x16xf32>
    %623 = vector.extract_strided_slice %9 {offsets = [1, 4, 3], sizes = [1, 8, 16], strides = [1, 1, 1]} : vector<4x12x20xf32> to vector<1x8x16xf32>
    %624 = vector.shape_cast %623 : vector<1x8x16xf32> to vector<8x16xf32>
    %625 = arith.subf %624, %38 : vector<8x16xf32>
    %626 = math.exp %625 : vector<8x16xf32>
    %627 = vector.extract_strided_slice %45 {offsets = [0, 48], sizes = [8, 1], strides = [1, 1]} : vector<8x100xf32> to vector<8x1xf32>
    %628 = vector.shape_cast %627 : vector<8x1xf32> to vector<8xf32>
    %629 = vector.shape_cast %628 : vector<8xf32> to vector<8x1x1xf32>
    %630 = vector.shape_cast %626 : vector<8x16xf32> to vector<1x8x16xf32>
    %631 = vector.broadcast %629 : vector<8x1x1xf32> to vector<8x8x16xf32>
    %632 = vector.broadcast %630 : vector<1x8x16xf32> to vector<8x8x16xf32>
    %633 = arith.mulf %631, %632 : vector<8x8x16xf32>
    %634 = arith.addf %622, %633 : vector<8x8x16xf32>
    %635 = vector.extract_strided_slice %9 {offsets = [1, 4, 4], sizes = [1, 8, 16], strides = [1, 1, 1]} : vector<4x12x20xf32> to vector<1x8x16xf32>
    %636 = vector.shape_cast %635 : vector<1x8x16xf32> to vector<8x16xf32>
    %637 = arith.subf %636, %38 : vector<8x16xf32>
    %638 = math.exp %637 : vector<8x16xf32>
    %639 = vector.extract_strided_slice %45 {offsets = [0, 49], sizes = [8, 1], strides = [1, 1]} : vector<8x100xf32> to vector<8x1xf32>
    %640 = vector.shape_cast %639 : vector<8x1xf32> to vector<8xf32>
    %641 = vector.shape_cast %640 : vector<8xf32> to vector<8x1x1xf32>
    %642 = vector.shape_cast %638 : vector<8x16xf32> to vector<1x8x16xf32>
    %643 = vector.broadcast %641 : vector<8x1x1xf32> to vector<8x8x16xf32>
    %644 = vector.broadcast %642 : vector<1x8x16xf32> to vector<8x8x16xf32>
    %645 = arith.mulf %643, %644 : vector<8x8x16xf32>
    %646 = arith.addf %634, %645 : vector<8x8x16xf32>
    %647 = vector.extract_strided_slice %9 {offsets = [2, 0, 0], sizes = [1, 8, 16], strides = [1, 1, 1]} : vector<4x12x20xf32> to vector<1x8x16xf32>
    %648 = vector.shape_cast %647 : vector<1x8x16xf32> to vector<8x16xf32>
    %649 = arith.subf %648, %38 : vector<8x16xf32>
    %650 = math.exp %649 : vector<8x16xf32>
    %651 = vector.extract_strided_slice %45 {offsets = [0, 50], sizes = [8, 1], strides = [1, 1]} : vector<8x100xf32> to vector<8x1xf32>
    %652 = vector.shape_cast %651 : vector<8x1xf32> to vector<8xf32>
    %653 = vector.shape_cast %652 : vector<8xf32> to vector<8x1x1xf32>
    %654 = vector.shape_cast %650 : vector<8x16xf32> to vector<1x8x16xf32>
    %655 = vector.broadcast %653 : vector<8x1x1xf32> to vector<8x8x16xf32>
    %656 = vector.broadcast %654 : vector<1x8x16xf32> to vector<8x8x16xf32>
    %657 = arith.mulf %655, %656 : vector<8x8x16xf32>
    %658 = arith.addf %646, %657 : vector<8x8x16xf32>
    %659 = vector.extract_strided_slice %9 {offsets = [2, 0, 1], sizes = [1, 8, 16], strides = [1, 1, 1]} : vector<4x12x20xf32> to vector<1x8x16xf32>
    %660 = vector.shape_cast %659 : vector<1x8x16xf32> to vector<8x16xf32>
    %661 = arith.subf %660, %38 : vector<8x16xf32>
    %662 = math.exp %661 : vector<8x16xf32>
    %663 = vector.extract_strided_slice %45 {offsets = [0, 51], sizes = [8, 1], strides = [1, 1]} : vector<8x100xf32> to vector<8x1xf32>
    %664 = vector.shape_cast %663 : vector<8x1xf32> to vector<8xf32>
    %665 = vector.shape_cast %664 : vector<8xf32> to vector<8x1x1xf32>
    %666 = vector.shape_cast %662 : vector<8x16xf32> to vector<1x8x16xf32>
    %667 = vector.broadcast %665 : vector<8x1x1xf32> to vector<8x8x16xf32>
    %668 = vector.broadcast %666 : vector<1x8x16xf32> to vector<8x8x16xf32>
    %669 = arith.mulf %667, %668 : vector<8x8x16xf32>
    %670 = arith.addf %658, %669 : vector<8x8x16xf32>
    %671 = vector.extract_strided_slice %9 {offsets = [2, 0, 2], sizes = [1, 8, 16], strides = [1, 1, 1]} : vector<4x12x20xf32> to vector<1x8x16xf32>
    %672 = vector.shape_cast %671 : vector<1x8x16xf32> to vector<8x16xf32>
    %673 = arith.subf %672, %38 : vector<8x16xf32>
    %674 = math.exp %673 : vector<8x16xf32>
    %675 = vector.extract_strided_slice %45 {offsets = [0, 52], sizes = [8, 1], strides = [1, 1]} : vector<8x100xf32> to vector<8x1xf32>
    %676 = vector.shape_cast %675 : vector<8x1xf32> to vector<8xf32>
    %677 = vector.shape_cast %676 : vector<8xf32> to vector<8x1x1xf32>
    %678 = vector.shape_cast %674 : vector<8x16xf32> to vector<1x8x16xf32>
    %679 = vector.broadcast %677 : vector<8x1x1xf32> to vector<8x8x16xf32>
    %680 = vector.broadcast %678 : vector<1x8x16xf32> to vector<8x8x16xf32>
    %681 = arith.mulf %679, %680 : vector<8x8x16xf32>
    %682 = arith.addf %670, %681 : vector<8x8x16xf32>
    %683 = vector.extract_strided_slice %9 {offsets = [2, 0, 3], sizes = [1, 8, 16], strides = [1, 1, 1]} : vector<4x12x20xf32> to vector<1x8x16xf32>
    %684 = vector.shape_cast %683 : vector<1x8x16xf32> to vector<8x16xf32>
    %685 = arith.subf %684, %38 : vector<8x16xf32>
    %686 = math.exp %685 : vector<8x16xf32>
    %687 = vector.extract_strided_slice %45 {offsets = [0, 53], sizes = [8, 1], strides = [1, 1]} : vector<8x100xf32> to vector<8x1xf32>
    %688 = vector.shape_cast %687 : vector<8x1xf32> to vector<8xf32>
    %689 = vector.shape_cast %688 : vector<8xf32> to vector<8x1x1xf32>
    %690 = vector.shape_cast %686 : vector<8x16xf32> to vector<1x8x16xf32>
    %691 = vector.broadcast %689 : vector<8x1x1xf32> to vector<8x8x16xf32>
    %692 = vector.broadcast %690 : vector<1x8x16xf32> to vector<8x8x16xf32>
    %693 = arith.mulf %691, %692 : vector<8x8x16xf32>
    %694 = arith.addf %682, %693 : vector<8x8x16xf32>
    %695 = vector.extract_strided_slice %9 {offsets = [2, 0, 4], sizes = [1, 8, 16], strides = [1, 1, 1]} : vector<4x12x20xf32> to vector<1x8x16xf32>
    %696 = vector.shape_cast %695 : vector<1x8x16xf32> to vector<8x16xf32>
    %697 = arith.subf %696, %38 : vector<8x16xf32>
    %698 = math.exp %697 : vector<8x16xf32>
    %699 = vector.extract_strided_slice %45 {offsets = [0, 54], sizes = [8, 1], strides = [1, 1]} : vector<8x100xf32> to vector<8x1xf32>
    %700 = vector.shape_cast %699 : vector<8x1xf32> to vector<8xf32>
    %701 = vector.shape_cast %700 : vector<8xf32> to vector<8x1x1xf32>
    %702 = vector.shape_cast %698 : vector<8x16xf32> to vector<1x8x16xf32>
    %703 = vector.broadcast %701 : vector<8x1x1xf32> to vector<8x8x16xf32>
    %704 = vector.broadcast %702 : vector<1x8x16xf32> to vector<8x8x16xf32>
    %705 = arith.mulf %703, %704 : vector<8x8x16xf32>
    %706 = arith.addf %694, %705 : vector<8x8x16xf32>
    %707 = vector.extract_strided_slice %9 {offsets = [2, 1, 0], sizes = [1, 8, 16], strides = [1, 1, 1]} : vector<4x12x20xf32> to vector<1x8x16xf32>
    %708 = vector.shape_cast %707 : vector<1x8x16xf32> to vector<8x16xf32>
    %709 = arith.subf %708, %38 : vector<8x16xf32>
    %710 = math.exp %709 : vector<8x16xf32>
    %711 = vector.extract_strided_slice %45 {offsets = [0, 55], sizes = [8, 1], strides = [1, 1]} : vector<8x100xf32> to vector<8x1xf32>
    %712 = vector.shape_cast %711 : vector<8x1xf32> to vector<8xf32>
    %713 = vector.shape_cast %712 : vector<8xf32> to vector<8x1x1xf32>
    %714 = vector.shape_cast %710 : vector<8x16xf32> to vector<1x8x16xf32>
    %715 = vector.broadcast %713 : vector<8x1x1xf32> to vector<8x8x16xf32>
    %716 = vector.broadcast %714 : vector<1x8x16xf32> to vector<8x8x16xf32>
    %717 = arith.mulf %715, %716 : vector<8x8x16xf32>
    %718 = arith.addf %706, %717 : vector<8x8x16xf32>
    %719 = vector.extract_strided_slice %9 {offsets = [2, 1, 1], sizes = [1, 8, 16], strides = [1, 1, 1]} : vector<4x12x20xf32> to vector<1x8x16xf32>
    %720 = vector.shape_cast %719 : vector<1x8x16xf32> to vector<8x16xf32>
    %721 = arith.subf %720, %38 : vector<8x16xf32>
    %722 = math.exp %721 : vector<8x16xf32>
    %723 = vector.extract_strided_slice %45 {offsets = [0, 56], sizes = [8, 1], strides = [1, 1]} : vector<8x100xf32> to vector<8x1xf32>
    %724 = vector.shape_cast %723 : vector<8x1xf32> to vector<8xf32>
    %725 = vector.shape_cast %724 : vector<8xf32> to vector<8x1x1xf32>
    %726 = vector.shape_cast %722 : vector<8x16xf32> to vector<1x8x16xf32>
    %727 = vector.broadcast %725 : vector<8x1x1xf32> to vector<8x8x16xf32>
    %728 = vector.broadcast %726 : vector<1x8x16xf32> to vector<8x8x16xf32>
    %729 = arith.mulf %727, %728 : vector<8x8x16xf32>
    %730 = arith.addf %718, %729 : vector<8x8x16xf32>
    %731 = vector.extract_strided_slice %9 {offsets = [2, 1, 2], sizes = [1, 8, 16], strides = [1, 1, 1]} : vector<4x12x20xf32> to vector<1x8x16xf32>
    %732 = vector.shape_cast %731 : vector<1x8x16xf32> to vector<8x16xf32>
    %733 = arith.subf %732, %38 : vector<8x16xf32>
    %734 = math.exp %733 : vector<8x16xf32>
    %735 = vector.extract_strided_slice %45 {offsets = [0, 57], sizes = [8, 1], strides = [1, 1]} : vector<8x100xf32> to vector<8x1xf32>
    %736 = vector.shape_cast %735 : vector<8x1xf32> to vector<8xf32>
    %737 = vector.shape_cast %736 : vector<8xf32> to vector<8x1x1xf32>
    %738 = vector.shape_cast %734 : vector<8x16xf32> to vector<1x8x16xf32>
    %739 = vector.broadcast %737 : vector<8x1x1xf32> to vector<8x8x16xf32>
    %740 = vector.broadcast %738 : vector<1x8x16xf32> to vector<8x8x16xf32>
    %741 = arith.mulf %739, %740 : vector<8x8x16xf32>
    %742 = arith.addf %730, %741 : vector<8x8x16xf32>
    %743 = vector.extract_strided_slice %9 {offsets = [2, 1, 3], sizes = [1, 8, 16], strides = [1, 1, 1]} : vector<4x12x20xf32> to vector<1x8x16xf32>
    %744 = vector.shape_cast %743 : vector<1x8x16xf32> to vector<8x16xf32>
    %745 = arith.subf %744, %38 : vector<8x16xf32>
    %746 = math.exp %745 : vector<8x16xf32>
    %747 = vector.extract_strided_slice %45 {offsets = [0, 58], sizes = [8, 1], strides = [1, 1]} : vector<8x100xf32> to vector<8x1xf32>
    %748 = vector.shape_cast %747 : vector<8x1xf32> to vector<8xf32>
    %749 = vector.shape_cast %748 : vector<8xf32> to vector<8x1x1xf32>
    %750 = vector.shape_cast %746 : vector<8x16xf32> to vector<1x8x16xf32>
    %751 = vector.broadcast %749 : vector<8x1x1xf32> to vector<8x8x16xf32>
    %752 = vector.broadcast %750 : vector<1x8x16xf32> to vector<8x8x16xf32>
    %753 = arith.mulf %751, %752 : vector<8x8x16xf32>
    %754 = arith.addf %742, %753 : vector<8x8x16xf32>
    %755 = vector.extract_strided_slice %9 {offsets = [2, 1, 4], sizes = [1, 8, 16], strides = [1, 1, 1]} : vector<4x12x20xf32> to vector<1x8x16xf32>
    %756 = vector.shape_cast %755 : vector<1x8x16xf32> to vector<8x16xf32>
    %757 = arith.subf %756, %38 : vector<8x16xf32>
    %758 = math.exp %757 : vector<8x16xf32>
    %759 = vector.extract_strided_slice %45 {offsets = [0, 59], sizes = [8, 1], strides = [1, 1]} : vector<8x100xf32> to vector<8x1xf32>
    %760 = vector.shape_cast %759 : vector<8x1xf32> to vector<8xf32>
    %761 = vector.shape_cast %760 : vector<8xf32> to vector<8x1x1xf32>
    %762 = vector.shape_cast %758 : vector<8x16xf32> to vector<1x8x16xf32>
    %763 = vector.broadcast %761 : vector<8x1x1xf32> to vector<8x8x16xf32>
    %764 = vector.broadcast %762 : vector<1x8x16xf32> to vector<8x8x16xf32>
    %765 = arith.mulf %763, %764 : vector<8x8x16xf32>
    %766 = arith.addf %754, %765 : vector<8x8x16xf32>
    %767 = vector.extract_strided_slice %9 {offsets = [2, 2, 0], sizes = [1, 8, 16], strides = [1, 1, 1]} : vector<4x12x20xf32> to vector<1x8x16xf32>
    %768 = vector.shape_cast %767 : vector<1x8x16xf32> to vector<8x16xf32>
    %769 = arith.subf %768, %38 : vector<8x16xf32>
    %770 = math.exp %769 : vector<8x16xf32>
    %771 = vector.extract_strided_slice %45 {offsets = [0, 60], sizes = [8, 1], strides = [1, 1]} : vector<8x100xf32> to vector<8x1xf32>
    %772 = vector.shape_cast %771 : vector<8x1xf32> to vector<8xf32>
    %773 = vector.shape_cast %772 : vector<8xf32> to vector<8x1x1xf32>
    %774 = vector.shape_cast %770 : vector<8x16xf32> to vector<1x8x16xf32>
    %775 = vector.broadcast %773 : vector<8x1x1xf32> to vector<8x8x16xf32>
    %776 = vector.broadcast %774 : vector<1x8x16xf32> to vector<8x8x16xf32>
    %777 = arith.mulf %775, %776 : vector<8x8x16xf32>
    %778 = arith.addf %766, %777 : vector<8x8x16xf32>
    %779 = vector.extract_strided_slice %9 {offsets = [2, 2, 1], sizes = [1, 8, 16], strides = [1, 1, 1]} : vector<4x12x20xf32> to vector<1x8x16xf32>
    %780 = vector.shape_cast %779 : vector<1x8x16xf32> to vector<8x16xf32>
    %781 = arith.subf %780, %38 : vector<8x16xf32>
    %782 = math.exp %781 : vector<8x16xf32>
    %783 = vector.extract_strided_slice %45 {offsets = [0, 61], sizes = [8, 1], strides = [1, 1]} : vector<8x100xf32> to vector<8x1xf32>
    %784 = vector.shape_cast %783 : vector<8x1xf32> to vector<8xf32>
    %785 = vector.shape_cast %784 : vector<8xf32> to vector<8x1x1xf32>
    %786 = vector.shape_cast %782 : vector<8x16xf32> to vector<1x8x16xf32>
    %787 = vector.broadcast %785 : vector<8x1x1xf32> to vector<8x8x16xf32>
    %788 = vector.broadcast %786 : vector<1x8x16xf32> to vector<8x8x16xf32>
    %789 = arith.mulf %787, %788 : vector<8x8x16xf32>
    %790 = arith.addf %778, %789 : vector<8x8x16xf32>
    %791 = vector.extract_strided_slice %9 {offsets = [2, 2, 2], sizes = [1, 8, 16], strides = [1, 1, 1]} : vector<4x12x20xf32> to vector<1x8x16xf32>
    %792 = vector.shape_cast %791 : vector<1x8x16xf32> to vector<8x16xf32>
    %793 = arith.subf %792, %38 : vector<8x16xf32>
    %794 = math.exp %793 : vector<8x16xf32>
    %795 = vector.extract_strided_slice %45 {offsets = [0, 62], sizes = [8, 1], strides = [1, 1]} : vector<8x100xf32> to vector<8x1xf32>
    %796 = vector.shape_cast %795 : vector<8x1xf32> to vector<8xf32>
    %797 = vector.shape_cast %796 : vector<8xf32> to vector<8x1x1xf32>
    %798 = vector.shape_cast %794 : vector<8x16xf32> to vector<1x8x16xf32>
    %799 = vector.broadcast %797 : vector<8x1x1xf32> to vector<8x8x16xf32>
    %800 = vector.broadcast %798 : vector<1x8x16xf32> to vector<8x8x16xf32>
    %801 = arith.mulf %799, %800 : vector<8x8x16xf32>
    %802 = arith.addf %790, %801 : vector<8x8x16xf32>
    %803 = vector.extract_strided_slice %9 {offsets = [2, 2, 3], sizes = [1, 8, 16], strides = [1, 1, 1]} : vector<4x12x20xf32> to vector<1x8x16xf32>
    %804 = vector.shape_cast %803 : vector<1x8x16xf32> to vector<8x16xf32>
    %805 = arith.subf %804, %38 : vector<8x16xf32>
    %806 = math.exp %805 : vector<8x16xf32>
    %807 = vector.extract_strided_slice %45 {offsets = [0, 63], sizes = [8, 1], strides = [1, 1]} : vector<8x100xf32> to vector<8x1xf32>
    %808 = vector.shape_cast %807 : vector<8x1xf32> to vector<8xf32>
    %809 = vector.shape_cast %808 : vector<8xf32> to vector<8x1x1xf32>
    %810 = vector.shape_cast %806 : vector<8x16xf32> to vector<1x8x16xf32>
    %811 = vector.broadcast %809 : vector<8x1x1xf32> to vector<8x8x16xf32>
    %812 = vector.broadcast %810 : vector<1x8x16xf32> to vector<8x8x16xf32>
    %813 = arith.mulf %811, %812 : vector<8x8x16xf32>
    %814 = arith.addf %802, %813 : vector<8x8x16xf32>
    %815 = vector.extract_strided_slice %9 {offsets = [2, 2, 4], sizes = [1, 8, 16], strides = [1, 1, 1]} : vector<4x12x20xf32> to vector<1x8x16xf32>
    %816 = vector.shape_cast %815 : vector<1x8x16xf32> to vector<8x16xf32>
    %817 = arith.subf %816, %38 : vector<8x16xf32>
    %818 = math.exp %817 : vector<8x16xf32>
    %819 = vector.extract_strided_slice %45 {offsets = [0, 64], sizes = [8, 1], strides = [1, 1]} : vector<8x100xf32> to vector<8x1xf32>
    %820 = vector.shape_cast %819 : vector<8x1xf32> to vector<8xf32>
    %821 = vector.shape_cast %820 : vector<8xf32> to vector<8x1x1xf32>
    %822 = vector.shape_cast %818 : vector<8x16xf32> to vector<1x8x16xf32>
    %823 = vector.broadcast %821 : vector<8x1x1xf32> to vector<8x8x16xf32>
    %824 = vector.broadcast %822 : vector<1x8x16xf32> to vector<8x8x16xf32>
    %825 = arith.mulf %823, %824 : vector<8x8x16xf32>
    %826 = arith.addf %814, %825 : vector<8x8x16xf32>
    %827 = vector.extract_strided_slice %9 {offsets = [2, 3, 0], sizes = [1, 8, 16], strides = [1, 1, 1]} : vector<4x12x20xf32> to vector<1x8x16xf32>
    %828 = vector.shape_cast %827 : vector<1x8x16xf32> to vector<8x16xf32>
    %829 = arith.subf %828, %38 : vector<8x16xf32>
    %830 = math.exp %829 : vector<8x16xf32>
    %831 = vector.extract_strided_slice %45 {offsets = [0, 65], sizes = [8, 1], strides = [1, 1]} : vector<8x100xf32> to vector<8x1xf32>
    %832 = vector.shape_cast %831 : vector<8x1xf32> to vector<8xf32>
    %833 = vector.shape_cast %832 : vector<8xf32> to vector<8x1x1xf32>
    %834 = vector.shape_cast %830 : vector<8x16xf32> to vector<1x8x16xf32>
    %835 = vector.broadcast %833 : vector<8x1x1xf32> to vector<8x8x16xf32>
    %836 = vector.broadcast %834 : vector<1x8x16xf32> to vector<8x8x16xf32>
    %837 = arith.mulf %835, %836 : vector<8x8x16xf32>
    %838 = arith.addf %826, %837 : vector<8x8x16xf32>
    %839 = vector.extract_strided_slice %9 {offsets = [2, 3, 1], sizes = [1, 8, 16], strides = [1, 1, 1]} : vector<4x12x20xf32> to vector<1x8x16xf32>
    %840 = vector.shape_cast %839 : vector<1x8x16xf32> to vector<8x16xf32>
    %841 = arith.subf %840, %38 : vector<8x16xf32>
    %842 = math.exp %841 : vector<8x16xf32>
    %843 = vector.extract_strided_slice %45 {offsets = [0, 66], sizes = [8, 1], strides = [1, 1]} : vector<8x100xf32> to vector<8x1xf32>
    %844 = vector.shape_cast %843 : vector<8x1xf32> to vector<8xf32>
    %845 = vector.shape_cast %844 : vector<8xf32> to vector<8x1x1xf32>
    %846 = vector.shape_cast %842 : vector<8x16xf32> to vector<1x8x16xf32>
    %847 = vector.broadcast %845 : vector<8x1x1xf32> to vector<8x8x16xf32>
    %848 = vector.broadcast %846 : vector<1x8x16xf32> to vector<8x8x16xf32>
    %849 = arith.mulf %847, %848 : vector<8x8x16xf32>
    %850 = arith.addf %838, %849 : vector<8x8x16xf32>
    %851 = vector.extract_strided_slice %9 {offsets = [2, 3, 2], sizes = [1, 8, 16], strides = [1, 1, 1]} : vector<4x12x20xf32> to vector<1x8x16xf32>
    %852 = vector.shape_cast %851 : vector<1x8x16xf32> to vector<8x16xf32>
    %853 = arith.subf %852, %38 : vector<8x16xf32>
    %854 = math.exp %853 : vector<8x16xf32>
    %855 = vector.extract_strided_slice %45 {offsets = [0, 67], sizes = [8, 1], strides = [1, 1]} : vector<8x100xf32> to vector<8x1xf32>
    %856 = vector.shape_cast %855 : vector<8x1xf32> to vector<8xf32>
    %857 = vector.shape_cast %856 : vector<8xf32> to vector<8x1x1xf32>
    %858 = vector.shape_cast %854 : vector<8x16xf32> to vector<1x8x16xf32>
    %859 = vector.broadcast %857 : vector<8x1x1xf32> to vector<8x8x16xf32>
    %860 = vector.broadcast %858 : vector<1x8x16xf32> to vector<8x8x16xf32>
    %861 = arith.mulf %859, %860 : vector<8x8x16xf32>
    %862 = arith.addf %850, %861 : vector<8x8x16xf32>
    %863 = vector.extract_strided_slice %9 {offsets = [2, 3, 3], sizes = [1, 8, 16], strides = [1, 1, 1]} : vector<4x12x20xf32> to vector<1x8x16xf32>
    %864 = vector.shape_cast %863 : vector<1x8x16xf32> to vector<8x16xf32>
    %865 = arith.subf %864, %38 : vector<8x16xf32>
    %866 = math.exp %865 : vector<8x16xf32>
    %867 = vector.extract_strided_slice %45 {offsets = [0, 68], sizes = [8, 1], strides = [1, 1]} : vector<8x100xf32> to vector<8x1xf32>
    %868 = vector.shape_cast %867 : vector<8x1xf32> to vector<8xf32>
    %869 = vector.shape_cast %868 : vector<8xf32> to vector<8x1x1xf32>
    %870 = vector.shape_cast %866 : vector<8x16xf32> to vector<1x8x16xf32>
    %871 = vector.broadcast %869 : vector<8x1x1xf32> to vector<8x8x16xf32>
    %872 = vector.broadcast %870 : vector<1x8x16xf32> to vector<8x8x16xf32>
    %873 = arith.mulf %871, %872 : vector<8x8x16xf32>
    %874 = arith.addf %862, %873 : vector<8x8x16xf32>
    %875 = vector.extract_strided_slice %9 {offsets = [2, 3, 4], sizes = [1, 8, 16], strides = [1, 1, 1]} : vector<4x12x20xf32> to vector<1x8x16xf32>
    %876 = vector.shape_cast %875 : vector<1x8x16xf32> to vector<8x16xf32>
    %877 = arith.subf %876, %38 : vector<8x16xf32>
    %878 = math.exp %877 : vector<8x16xf32>
    %879 = vector.extract_strided_slice %45 {offsets = [0, 69], sizes = [8, 1], strides = [1, 1]} : vector<8x100xf32> to vector<8x1xf32>
    %880 = vector.shape_cast %879 : vector<8x1xf32> to vector<8xf32>
    %881 = vector.shape_cast %880 : vector<8xf32> to vector<8x1x1xf32>
    %882 = vector.shape_cast %878 : vector<8x16xf32> to vector<1x8x16xf32>
    %883 = vector.broadcast %881 : vector<8x1x1xf32> to vector<8x8x16xf32>
    %884 = vector.broadcast %882 : vector<1x8x16xf32> to vector<8x8x16xf32>
    %885 = arith.mulf %883, %884 : vector<8x8x16xf32>
    %886 = arith.addf %874, %885 : vector<8x8x16xf32>
    %887 = vector.extract_strided_slice %9 {offsets = [2, 4, 0], sizes = [1, 8, 16], strides = [1, 1, 1]} : vector<4x12x20xf32> to vector<1x8x16xf32>
    %888 = vector.shape_cast %887 : vector<1x8x16xf32> to vector<8x16xf32>
    %889 = arith.subf %888, %38 : vector<8x16xf32>
    %890 = math.exp %889 : vector<8x16xf32>
    %891 = vector.extract_strided_slice %45 {offsets = [0, 70], sizes = [8, 1], strides = [1, 1]} : vector<8x100xf32> to vector<8x1xf32>
    %892 = vector.shape_cast %891 : vector<8x1xf32> to vector<8xf32>
    %893 = vector.shape_cast %892 : vector<8xf32> to vector<8x1x1xf32>
    %894 = vector.shape_cast %890 : vector<8x16xf32> to vector<1x8x16xf32>
    %895 = vector.broadcast %893 : vector<8x1x1xf32> to vector<8x8x16xf32>
    %896 = vector.broadcast %894 : vector<1x8x16xf32> to vector<8x8x16xf32>
    %897 = arith.mulf %895, %896 : vector<8x8x16xf32>
    %898 = arith.addf %886, %897 : vector<8x8x16xf32>
    %899 = vector.extract_strided_slice %9 {offsets = [2, 4, 1], sizes = [1, 8, 16], strides = [1, 1, 1]} : vector<4x12x20xf32> to vector<1x8x16xf32>
    %900 = vector.shape_cast %899 : vector<1x8x16xf32> to vector<8x16xf32>
    %901 = arith.subf %900, %38 : vector<8x16xf32>
    %902 = math.exp %901 : vector<8x16xf32>
    %903 = vector.extract_strided_slice %45 {offsets = [0, 71], sizes = [8, 1], strides = [1, 1]} : vector<8x100xf32> to vector<8x1xf32>
    %904 = vector.shape_cast %903 : vector<8x1xf32> to vector<8xf32>
    %905 = vector.shape_cast %904 : vector<8xf32> to vector<8x1x1xf32>
    %906 = vector.shape_cast %902 : vector<8x16xf32> to vector<1x8x16xf32>
    %907 = vector.broadcast %905 : vector<8x1x1xf32> to vector<8x8x16xf32>
    %908 = vector.broadcast %906 : vector<1x8x16xf32> to vector<8x8x16xf32>
    %909 = arith.mulf %907, %908 : vector<8x8x16xf32>
    %910 = arith.addf %898, %909 : vector<8x8x16xf32>
    %911 = vector.extract_strided_slice %9 {offsets = [2, 4, 2], sizes = [1, 8, 16], strides = [1, 1, 1]} : vector<4x12x20xf32> to vector<1x8x16xf32>
    %912 = vector.shape_cast %911 : vector<1x8x16xf32> to vector<8x16xf32>
    %913 = arith.subf %912, %38 : vector<8x16xf32>
    %914 = math.exp %913 : vector<8x16xf32>
    %915 = vector.extract_strided_slice %45 {offsets = [0, 72], sizes = [8, 1], strides = [1, 1]} : vector<8x100xf32> to vector<8x1xf32>
    %916 = vector.shape_cast %915 : vector<8x1xf32> to vector<8xf32>
    %917 = vector.shape_cast %916 : vector<8xf32> to vector<8x1x1xf32>
    %918 = vector.shape_cast %914 : vector<8x16xf32> to vector<1x8x16xf32>
    %919 = vector.broadcast %917 : vector<8x1x1xf32> to vector<8x8x16xf32>
    %920 = vector.broadcast %918 : vector<1x8x16xf32> to vector<8x8x16xf32>
    %921 = arith.mulf %919, %920 : vector<8x8x16xf32>
    %922 = arith.addf %910, %921 : vector<8x8x16xf32>
    %923 = vector.extract_strided_slice %9 {offsets = [2, 4, 3], sizes = [1, 8, 16], strides = [1, 1, 1]} : vector<4x12x20xf32> to vector<1x8x16xf32>
    %924 = vector.shape_cast %923 : vector<1x8x16xf32> to vector<8x16xf32>
    %925 = arith.subf %924, %38 : vector<8x16xf32>
    %926 = math.exp %925 : vector<8x16xf32>
    %927 = vector.extract_strided_slice %45 {offsets = [0, 73], sizes = [8, 1], strides = [1, 1]} : vector<8x100xf32> to vector<8x1xf32>
    %928 = vector.shape_cast %927 : vector<8x1xf32> to vector<8xf32>
    %929 = vector.shape_cast %928 : vector<8xf32> to vector<8x1x1xf32>
    %930 = vector.shape_cast %926 : vector<8x16xf32> to vector<1x8x16xf32>
    %931 = vector.broadcast %929 : vector<8x1x1xf32> to vector<8x8x16xf32>
    %932 = vector.broadcast %930 : vector<1x8x16xf32> to vector<8x8x16xf32>
    %933 = arith.mulf %931, %932 : vector<8x8x16xf32>
    %934 = arith.addf %922, %933 : vector<8x8x16xf32>
    %935 = vector.extract_strided_slice %9 {offsets = [2, 4, 4], sizes = [1, 8, 16], strides = [1, 1, 1]} : vector<4x12x20xf32> to vector<1x8x16xf32>
    %936 = vector.shape_cast %935 : vector<1x8x16xf32> to vector<8x16xf32>
    %937 = arith.subf %936, %38 : vector<8x16xf32>
    %938 = math.exp %937 : vector<8x16xf32>
    %939 = vector.extract_strided_slice %45 {offsets = [0, 74], sizes = [8, 1], strides = [1, 1]} : vector<8x100xf32> to vector<8x1xf32>
    %940 = vector.shape_cast %939 : vector<8x1xf32> to vector<8xf32>
    %941 = vector.shape_cast %940 : vector<8xf32> to vector<8x1x1xf32>
    %942 = vector.shape_cast %938 : vector<8x16xf32> to vector<1x8x16xf32>
    %943 = vector.broadcast %941 : vector<8x1x1xf32> to vector<8x8x16xf32>
    %944 = vector.broadcast %942 : vector<1x8x16xf32> to vector<8x8x16xf32>
    %945 = arith.mulf %943, %944 : vector<8x8x16xf32>
    %946 = arith.addf %934, %945 : vector<8x8x16xf32>
    %947 = vector.extract_strided_slice %9 {offsets = [3, 0, 0], sizes = [1, 8, 16], strides = [1, 1, 1]} : vector<4x12x20xf32> to vector<1x8x16xf32>
    %948 = vector.shape_cast %947 : vector<1x8x16xf32> to vector<8x16xf32>
    %949 = arith.subf %948, %38 : vector<8x16xf32>
    %950 = math.exp %949 : vector<8x16xf32>
    %951 = vector.extract_strided_slice %45 {offsets = [0, 75], sizes = [8, 1], strides = [1, 1]} : vector<8x100xf32> to vector<8x1xf32>
    %952 = vector.shape_cast %951 : vector<8x1xf32> to vector<8xf32>
    %953 = vector.shape_cast %952 : vector<8xf32> to vector<8x1x1xf32>
    %954 = vector.shape_cast %950 : vector<8x16xf32> to vector<1x8x16xf32>
    %955 = vector.broadcast %953 : vector<8x1x1xf32> to vector<8x8x16xf32>
    %956 = vector.broadcast %954 : vector<1x8x16xf32> to vector<8x8x16xf32>
    %957 = arith.mulf %955, %956 : vector<8x8x16xf32>
    %958 = arith.addf %946, %957 : vector<8x8x16xf32>
    %959 = vector.extract_strided_slice %9 {offsets = [3, 0, 1], sizes = [1, 8, 16], strides = [1, 1, 1]} : vector<4x12x20xf32> to vector<1x8x16xf32>
    %960 = vector.shape_cast %959 : vector<1x8x16xf32> to vector<8x16xf32>
    %961 = arith.subf %960, %38 : vector<8x16xf32>
    %962 = math.exp %961 : vector<8x16xf32>
    %963 = vector.extract_strided_slice %45 {offsets = [0, 76], sizes = [8, 1], strides = [1, 1]} : vector<8x100xf32> to vector<8x1xf32>
    %964 = vector.shape_cast %963 : vector<8x1xf32> to vector<8xf32>
    %965 = vector.shape_cast %964 : vector<8xf32> to vector<8x1x1xf32>
    %966 = vector.shape_cast %962 : vector<8x16xf32> to vector<1x8x16xf32>
    %967 = vector.broadcast %965 : vector<8x1x1xf32> to vector<8x8x16xf32>
    %968 = vector.broadcast %966 : vector<1x8x16xf32> to vector<8x8x16xf32>
    %969 = arith.mulf %967, %968 : vector<8x8x16xf32>
    %970 = arith.addf %958, %969 : vector<8x8x16xf32>
    %971 = vector.extract_strided_slice %9 {offsets = [3, 0, 2], sizes = [1, 8, 16], strides = [1, 1, 1]} : vector<4x12x20xf32> to vector<1x8x16xf32>
    %972 = vector.shape_cast %971 : vector<1x8x16xf32> to vector<8x16xf32>
    %973 = arith.subf %972, %38 : vector<8x16xf32>
    %974 = math.exp %973 : vector<8x16xf32>
    %975 = vector.extract_strided_slice %45 {offsets = [0, 77], sizes = [8, 1], strides = [1, 1]} : vector<8x100xf32> to vector<8x1xf32>
    %976 = vector.shape_cast %975 : vector<8x1xf32> to vector<8xf32>
    %977 = vector.shape_cast %976 : vector<8xf32> to vector<8x1x1xf32>
    %978 = vector.shape_cast %974 : vector<8x16xf32> to vector<1x8x16xf32>
    %979 = vector.broadcast %977 : vector<8x1x1xf32> to vector<8x8x16xf32>
    %980 = vector.broadcast %978 : vector<1x8x16xf32> to vector<8x8x16xf32>
    %981 = arith.mulf %979, %980 : vector<8x8x16xf32>
    %982 = arith.addf %970, %981 : vector<8x8x16xf32>
    %983 = vector.extract_strided_slice %9 {offsets = [3, 0, 3], sizes = [1, 8, 16], strides = [1, 1, 1]} : vector<4x12x20xf32> to vector<1x8x16xf32>
    %984 = vector.shape_cast %983 : vector<1x8x16xf32> to vector<8x16xf32>
    %985 = arith.subf %984, %38 : vector<8x16xf32>
    %986 = math.exp %985 : vector<8x16xf32>
    %987 = vector.extract_strided_slice %45 {offsets = [0, 78], sizes = [8, 1], strides = [1, 1]} : vector<8x100xf32> to vector<8x1xf32>
    %988 = vector.shape_cast %987 : vector<8x1xf32> to vector<8xf32>
    %989 = vector.shape_cast %988 : vector<8xf32> to vector<8x1x1xf32>
    %990 = vector.shape_cast %986 : vector<8x16xf32> to vector<1x8x16xf32>
    %991 = vector.broadcast %989 : vector<8x1x1xf32> to vector<8x8x16xf32>
    %992 = vector.broadcast %990 : vector<1x8x16xf32> to vector<8x8x16xf32>
    %993 = arith.mulf %991, %992 : vector<8x8x16xf32>
    %994 = arith.addf %982, %993 : vector<8x8x16xf32>
    %995 = vector.extract_strided_slice %9 {offsets = [3, 0, 4], sizes = [1, 8, 16], strides = [1, 1, 1]} : vector<4x12x20xf32> to vector<1x8x16xf32>
    %996 = vector.shape_cast %995 : vector<1x8x16xf32> to vector<8x16xf32>
    %997 = arith.subf %996, %38 : vector<8x16xf32>
    %998 = math.exp %997 : vector<8x16xf32>
    %999 = vector.extract_strided_slice %45 {offsets = [0, 79], sizes = [8, 1], strides = [1, 1]} : vector<8x100xf32> to vector<8x1xf32>
    %1000 = vector.shape_cast %999 : vector<8x1xf32> to vector<8xf32>
    %1001 = vector.shape_cast %1000 : vector<8xf32> to vector<8x1x1xf32>
    %1002 = vector.shape_cast %998 : vector<8x16xf32> to vector<1x8x16xf32>
    %1003 = vector.broadcast %1001 : vector<8x1x1xf32> to vector<8x8x16xf32>
    %1004 = vector.broadcast %1002 : vector<1x8x16xf32> to vector<8x8x16xf32>
    %1005 = arith.mulf %1003, %1004 : vector<8x8x16xf32>
    %1006 = arith.addf %994, %1005 : vector<8x8x16xf32>
    %1007 = vector.extract_strided_slice %9 {offsets = [3, 1, 0], sizes = [1, 8, 16], strides = [1, 1, 1]} : vector<4x12x20xf32> to vector<1x8x16xf32>
    %1008 = vector.shape_cast %1007 : vector<1x8x16xf32> to vector<8x16xf32>
    %1009 = arith.subf %1008, %38 : vector<8x16xf32>
    %1010 = math.exp %1009 : vector<8x16xf32>
    %1011 = vector.extract_strided_slice %45 {offsets = [0, 80], sizes = [8, 1], strides = [1, 1]} : vector<8x100xf32> to vector<8x1xf32>
    %1012 = vector.shape_cast %1011 : vector<8x1xf32> to vector<8xf32>
    %1013 = vector.shape_cast %1012 : vector<8xf32> to vector<8x1x1xf32>
    %1014 = vector.shape_cast %1010 : vector<8x16xf32> to vector<1x8x16xf32>
    %1015 = vector.broadcast %1013 : vector<8x1x1xf32> to vector<8x8x16xf32>
    %1016 = vector.broadcast %1014 : vector<1x8x16xf32> to vector<8x8x16xf32>
    %1017 = arith.mulf %1015, %1016 : vector<8x8x16xf32>
    %1018 = arith.addf %1006, %1017 : vector<8x8x16xf32>
    %1019 = vector.extract_strided_slice %9 {offsets = [3, 1, 1], sizes = [1, 8, 16], strides = [1, 1, 1]} : vector<4x12x20xf32> to vector<1x8x16xf32>
    %1020 = vector.shape_cast %1019 : vector<1x8x16xf32> to vector<8x16xf32>
    %1021 = arith.subf %1020, %38 : vector<8x16xf32>
    %1022 = math.exp %1021 : vector<8x16xf32>
    %1023 = vector.extract_strided_slice %45 {offsets = [0, 81], sizes = [8, 1], strides = [1, 1]} : vector<8x100xf32> to vector<8x1xf32>
    %1024 = vector.shape_cast %1023 : vector<8x1xf32> to vector<8xf32>
    %1025 = vector.shape_cast %1024 : vector<8xf32> to vector<8x1x1xf32>
    %1026 = vector.shape_cast %1022 : vector<8x16xf32> to vector<1x8x16xf32>
    %1027 = vector.broadcast %1025 : vector<8x1x1xf32> to vector<8x8x16xf32>
    %1028 = vector.broadcast %1026 : vector<1x8x16xf32> to vector<8x8x16xf32>
    %1029 = arith.mulf %1027, %1028 : vector<8x8x16xf32>
    %1030 = arith.addf %1018, %1029 : vector<8x8x16xf32>
    %1031 = vector.extract_strided_slice %9 {offsets = [3, 1, 2], sizes = [1, 8, 16], strides = [1, 1, 1]} : vector<4x12x20xf32> to vector<1x8x16xf32>
    %1032 = vector.shape_cast %1031 : vector<1x8x16xf32> to vector<8x16xf32>
    %1033 = arith.subf %1032, %38 : vector<8x16xf32>
    %1034 = math.exp %1033 : vector<8x16xf32>
    %1035 = vector.extract_strided_slice %45 {offsets = [0, 82], sizes = [8, 1], strides = [1, 1]} : vector<8x100xf32> to vector<8x1xf32>
    %1036 = vector.shape_cast %1035 : vector<8x1xf32> to vector<8xf32>
    %1037 = vector.shape_cast %1036 : vector<8xf32> to vector<8x1x1xf32>
    %1038 = vector.shape_cast %1034 : vector<8x16xf32> to vector<1x8x16xf32>
    %1039 = vector.broadcast %1037 : vector<8x1x1xf32> to vector<8x8x16xf32>
    %1040 = vector.broadcast %1038 : vector<1x8x16xf32> to vector<8x8x16xf32>
    %1041 = arith.mulf %1039, %1040 : vector<8x8x16xf32>
    %1042 = arith.addf %1030, %1041 : vector<8x8x16xf32>
    %1043 = vector.extract_strided_slice %9 {offsets = [3, 1, 3], sizes = [1, 8, 16], strides = [1, 1, 1]} : vector<4x12x20xf32> to vector<1x8x16xf32>
    %1044 = vector.shape_cast %1043 : vector<1x8x16xf32> to vector<8x16xf32>
    %1045 = arith.subf %1044, %38 : vector<8x16xf32>
    %1046 = math.exp %1045 : vector<8x16xf32>
    %1047 = vector.extract_strided_slice %45 {offsets = [0, 83], sizes = [8, 1], strides = [1, 1]} : vector<8x100xf32> to vector<8x1xf32>
    %1048 = vector.shape_cast %1047 : vector<8x1xf32> to vector<8xf32>
    %1049 = vector.shape_cast %1048 : vector<8xf32> to vector<8x1x1xf32>
    %1050 = vector.shape_cast %1046 : vector<8x16xf32> to vector<1x8x16xf32>
    %1051 = vector.broadcast %1049 : vector<8x1x1xf32> to vector<8x8x16xf32>
    %1052 = vector.broadcast %1050 : vector<1x8x16xf32> to vector<8x8x16xf32>
    %1053 = arith.mulf %1051, %1052 : vector<8x8x16xf32>
    %1054 = arith.addf %1042, %1053 : vector<8x8x16xf32>
    %1055 = vector.extract_strided_slice %9 {offsets = [3, 1, 4], sizes = [1, 8, 16], strides = [1, 1, 1]} : vector<4x12x20xf32> to vector<1x8x16xf32>
    %1056 = vector.shape_cast %1055 : vector<1x8x16xf32> to vector<8x16xf32>
    %1057 = arith.subf %1056, %38 : vector<8x16xf32>
    %1058 = math.exp %1057 : vector<8x16xf32>
    %1059 = vector.extract_strided_slice %45 {offsets = [0, 84], sizes = [8, 1], strides = [1, 1]} : vector<8x100xf32> to vector<8x1xf32>
    %1060 = vector.shape_cast %1059 : vector<8x1xf32> to vector<8xf32>
    %1061 = vector.shape_cast %1060 : vector<8xf32> to vector<8x1x1xf32>
    %1062 = vector.shape_cast %1058 : vector<8x16xf32> to vector<1x8x16xf32>
    %1063 = vector.broadcast %1061 : vector<8x1x1xf32> to vector<8x8x16xf32>
    %1064 = vector.broadcast %1062 : vector<1x8x16xf32> to vector<8x8x16xf32>
    %1065 = arith.mulf %1063, %1064 : vector<8x8x16xf32>
    %1066 = arith.addf %1054, %1065 : vector<8x8x16xf32>
    %1067 = vector.extract_strided_slice %9 {offsets = [3, 2, 0], sizes = [1, 8, 16], strides = [1, 1, 1]} : vector<4x12x20xf32> to vector<1x8x16xf32>
    %1068 = vector.shape_cast %1067 : vector<1x8x16xf32> to vector<8x16xf32>
    %1069 = arith.subf %1068, %38 : vector<8x16xf32>
    %1070 = math.exp %1069 : vector<8x16xf32>
    %1071 = vector.extract_strided_slice %45 {offsets = [0, 85], sizes = [8, 1], strides = [1, 1]} : vector<8x100xf32> to vector<8x1xf32>
    %1072 = vector.shape_cast %1071 : vector<8x1xf32> to vector<8xf32>
    %1073 = vector.shape_cast %1072 : vector<8xf32> to vector<8x1x1xf32>
    %1074 = vector.shape_cast %1070 : vector<8x16xf32> to vector<1x8x16xf32>
    %1075 = vector.broadcast %1073 : vector<8x1x1xf32> to vector<8x8x16xf32>
    %1076 = vector.broadcast %1074 : vector<1x8x16xf32> to vector<8x8x16xf32>
    %1077 = arith.mulf %1075, %1076 : vector<8x8x16xf32>
    %1078 = arith.addf %1066, %1077 : vector<8x8x16xf32>
    %1079 = vector.extract_strided_slice %9 {offsets = [3, 2, 1], sizes = [1, 8, 16], strides = [1, 1, 1]} : vector<4x12x20xf32> to vector<1x8x16xf32>
    %1080 = vector.shape_cast %1079 : vector<1x8x16xf32> to vector<8x16xf32>
    %1081 = arith.subf %1080, %38 : vector<8x16xf32>
    %1082 = math.exp %1081 : vector<8x16xf32>
    %1083 = vector.extract_strided_slice %45 {offsets = [0, 86], sizes = [8, 1], strides = [1, 1]} : vector<8x100xf32> to vector<8x1xf32>
    %1084 = vector.shape_cast %1083 : vector<8x1xf32> to vector<8xf32>
    %1085 = vector.shape_cast %1084 : vector<8xf32> to vector<8x1x1xf32>
    %1086 = vector.shape_cast %1082 : vector<8x16xf32> to vector<1x8x16xf32>
    %1087 = vector.broadcast %1085 : vector<8x1x1xf32> to vector<8x8x16xf32>
    %1088 = vector.broadcast %1086 : vector<1x8x16xf32> to vector<8x8x16xf32>
    %1089 = arith.mulf %1087, %1088 : vector<8x8x16xf32>
    %1090 = arith.addf %1078, %1089 : vector<8x8x16xf32>
    %1091 = vector.extract_strided_slice %9 {offsets = [3, 2, 2], sizes = [1, 8, 16], strides = [1, 1, 1]} : vector<4x12x20xf32> to vector<1x8x16xf32>
    %1092 = vector.shape_cast %1091 : vector<1x8x16xf32> to vector<8x16xf32>
    %1093 = arith.subf %1092, %38 : vector<8x16xf32>
    %1094 = math.exp %1093 : vector<8x16xf32>
    %1095 = vector.extract_strided_slice %45 {offsets = [0, 87], sizes = [8, 1], strides = [1, 1]} : vector<8x100xf32> to vector<8x1xf32>
    %1096 = vector.shape_cast %1095 : vector<8x1xf32> to vector<8xf32>
    %1097 = vector.shape_cast %1096 : vector<8xf32> to vector<8x1x1xf32>
    %1098 = vector.shape_cast %1094 : vector<8x16xf32> to vector<1x8x16xf32>
    %1099 = vector.broadcast %1097 : vector<8x1x1xf32> to vector<8x8x16xf32>
    %1100 = vector.broadcast %1098 : vector<1x8x16xf32> to vector<8x8x16xf32>
    %1101 = arith.mulf %1099, %1100 : vector<8x8x16xf32>
    %1102 = arith.addf %1090, %1101 : vector<8x8x16xf32>
    %1103 = vector.extract_strided_slice %9 {offsets = [3, 2, 3], sizes = [1, 8, 16], strides = [1, 1, 1]} : vector<4x12x20xf32> to vector<1x8x16xf32>
    %1104 = vector.shape_cast %1103 : vector<1x8x16xf32> to vector<8x16xf32>
    %1105 = arith.subf %1104, %38 : vector<8x16xf32>
    %1106 = math.exp %1105 : vector<8x16xf32>
    %1107 = vector.extract_strided_slice %45 {offsets = [0, 88], sizes = [8, 1], strides = [1, 1]} : vector<8x100xf32> to vector<8x1xf32>
    %1108 = vector.shape_cast %1107 : vector<8x1xf32> to vector<8xf32>
    %1109 = vector.shape_cast %1108 : vector<8xf32> to vector<8x1x1xf32>
    %1110 = vector.shape_cast %1106 : vector<8x16xf32> to vector<1x8x16xf32>
    %1111 = vector.broadcast %1109 : vector<8x1x1xf32> to vector<8x8x16xf32>
    %1112 = vector.broadcast %1110 : vector<1x8x16xf32> to vector<8x8x16xf32>
    %1113 = arith.mulf %1111, %1112 : vector<8x8x16xf32>
    %1114 = arith.addf %1102, %1113 : vector<8x8x16xf32>
    %1115 = vector.extract_strided_slice %9 {offsets = [3, 2, 4], sizes = [1, 8, 16], strides = [1, 1, 1]} : vector<4x12x20xf32> to vector<1x8x16xf32>
    %1116 = vector.shape_cast %1115 : vector<1x8x16xf32> to vector<8x16xf32>
    %1117 = arith.subf %1116, %38 : vector<8x16xf32>
    %1118 = math.exp %1117 : vector<8x16xf32>
    %1119 = vector.extract_strided_slice %45 {offsets = [0, 89], sizes = [8, 1], strides = [1, 1]} : vector<8x100xf32> to vector<8x1xf32>
    %1120 = vector.shape_cast %1119 : vector<8x1xf32> to vector<8xf32>
    %1121 = vector.shape_cast %1120 : vector<8xf32> to vector<8x1x1xf32>
    %1122 = vector.shape_cast %1118 : vector<8x16xf32> to vector<1x8x16xf32>
    %1123 = vector.broadcast %1121 : vector<8x1x1xf32> to vector<8x8x16xf32>
    %1124 = vector.broadcast %1122 : vector<1x8x16xf32> to vector<8x8x16xf32>
    %1125 = arith.mulf %1123, %1124 : vector<8x8x16xf32>
    %1126 = arith.addf %1114, %1125 : vector<8x8x16xf32>
    %1127 = vector.extract_strided_slice %9 {offsets = [3, 3, 0], sizes = [1, 8, 16], strides = [1, 1, 1]} : vector<4x12x20xf32> to vector<1x8x16xf32>
    %1128 = vector.shape_cast %1127 : vector<1x8x16xf32> to vector<8x16xf32>
    %1129 = arith.subf %1128, %38 : vector<8x16xf32>
    %1130 = math.exp %1129 : vector<8x16xf32>
    %1131 = vector.extract_strided_slice %45 {offsets = [0, 90], sizes = [8, 1], strides = [1, 1]} : vector<8x100xf32> to vector<8x1xf32>
    %1132 = vector.shape_cast %1131 : vector<8x1xf32> to vector<8xf32>
    %1133 = vector.shape_cast %1132 : vector<8xf32> to vector<8x1x1xf32>
    %1134 = vector.shape_cast %1130 : vector<8x16xf32> to vector<1x8x16xf32>
    %1135 = vector.broadcast %1133 : vector<8x1x1xf32> to vector<8x8x16xf32>
    %1136 = vector.broadcast %1134 : vector<1x8x16xf32> to vector<8x8x16xf32>
    %1137 = arith.mulf %1135, %1136 : vector<8x8x16xf32>
    %1138 = arith.addf %1126, %1137 : vector<8x8x16xf32>
    %1139 = vector.extract_strided_slice %9 {offsets = [3, 3, 1], sizes = [1, 8, 16], strides = [1, 1, 1]} : vector<4x12x20xf32> to vector<1x8x16xf32>
    %1140 = vector.shape_cast %1139 : vector<1x8x16xf32> to vector<8x16xf32>
    %1141 = arith.subf %1140, %38 : vector<8x16xf32>
    %1142 = math.exp %1141 : vector<8x16xf32>
    %1143 = vector.extract_strided_slice %45 {offsets = [0, 91], sizes = [8, 1], strides = [1, 1]} : vector<8x100xf32> to vector<8x1xf32>
    %1144 = vector.shape_cast %1143 : vector<8x1xf32> to vector<8xf32>
    %1145 = vector.shape_cast %1144 : vector<8xf32> to vector<8x1x1xf32>
    %1146 = vector.shape_cast %1142 : vector<8x16xf32> to vector<1x8x16xf32>
    %1147 = vector.broadcast %1145 : vector<8x1x1xf32> to vector<8x8x16xf32>
    %1148 = vector.broadcast %1146 : vector<1x8x16xf32> to vector<8x8x16xf32>
    %1149 = arith.mulf %1147, %1148 : vector<8x8x16xf32>
    %1150 = arith.addf %1138, %1149 : vector<8x8x16xf32>
    %1151 = vector.extract_strided_slice %9 {offsets = [3, 3, 2], sizes = [1, 8, 16], strides = [1, 1, 1]} : vector<4x12x20xf32> to vector<1x8x16xf32>
    %1152 = vector.shape_cast %1151 : vector<1x8x16xf32> to vector<8x16xf32>
    %1153 = arith.subf %1152, %38 : vector<8x16xf32>
    %1154 = math.exp %1153 : vector<8x16xf32>
    %1155 = vector.extract_strided_slice %45 {offsets = [0, 92], sizes = [8, 1], strides = [1, 1]} : vector<8x100xf32> to vector<8x1xf32>
    %1156 = vector.shape_cast %1155 : vector<8x1xf32> to vector<8xf32>
    %1157 = vector.shape_cast %1156 : vector<8xf32> to vector<8x1x1xf32>
    %1158 = vector.shape_cast %1154 : vector<8x16xf32> to vector<1x8x16xf32>
    %1159 = vector.broadcast %1157 : vector<8x1x1xf32> to vector<8x8x16xf32>
    %1160 = vector.broadcast %1158 : vector<1x8x16xf32> to vector<8x8x16xf32>
    %1161 = arith.mulf %1159, %1160 : vector<8x8x16xf32>
    %1162 = arith.addf %1150, %1161 : vector<8x8x16xf32>
    %1163 = vector.extract_strided_slice %9 {offsets = [3, 3, 3], sizes = [1, 8, 16], strides = [1, 1, 1]} : vector<4x12x20xf32> to vector<1x8x16xf32>
    %1164 = vector.shape_cast %1163 : vector<1x8x16xf32> to vector<8x16xf32>
    %1165 = arith.subf %1164, %38 : vector<8x16xf32>
    %1166 = math.exp %1165 : vector<8x16xf32>
    %1167 = vector.extract_strided_slice %45 {offsets = [0, 93], sizes = [8, 1], strides = [1, 1]} : vector<8x100xf32> to vector<8x1xf32>
    %1168 = vector.shape_cast %1167 : vector<8x1xf32> to vector<8xf32>
    %1169 = vector.shape_cast %1168 : vector<8xf32> to vector<8x1x1xf32>
    %1170 = vector.shape_cast %1166 : vector<8x16xf32> to vector<1x8x16xf32>
    %1171 = vector.broadcast %1169 : vector<8x1x1xf32> to vector<8x8x16xf32>
    %1172 = vector.broadcast %1170 : vector<1x8x16xf32> to vector<8x8x16xf32>
    %1173 = arith.mulf %1171, %1172 : vector<8x8x16xf32>
    %1174 = arith.addf %1162, %1173 : vector<8x8x16xf32>
    %1175 = vector.extract_strided_slice %9 {offsets = [3, 3, 4], sizes = [1, 8, 16], strides = [1, 1, 1]} : vector<4x12x20xf32> to vector<1x8x16xf32>
    %1176 = vector.shape_cast %1175 : vector<1x8x16xf32> to vector<8x16xf32>
    %1177 = arith.subf %1176, %38 : vector<8x16xf32>
    %1178 = math.exp %1177 : vector<8x16xf32>
    %1179 = vector.extract_strided_slice %45 {offsets = [0, 94], sizes = [8, 1], strides = [1, 1]} : vector<8x100xf32> to vector<8x1xf32>
    %1180 = vector.shape_cast %1179 : vector<8x1xf32> to vector<8xf32>
    %1181 = vector.shape_cast %1180 : vector<8xf32> to vector<8x1x1xf32>
    %1182 = vector.shape_cast %1178 : vector<8x16xf32> to vector<1x8x16xf32>
    %1183 = vector.broadcast %1181 : vector<8x1x1xf32> to vector<8x8x16xf32>
    %1184 = vector.broadcast %1182 : vector<1x8x16xf32> to vector<8x8x16xf32>
    %1185 = arith.mulf %1183, %1184 : vector<8x8x16xf32>
    %1186 = arith.addf %1174, %1185 : vector<8x8x16xf32>
    %1187 = vector.extract_strided_slice %9 {offsets = [3, 4, 0], sizes = [1, 8, 16], strides = [1, 1, 1]} : vector<4x12x20xf32> to vector<1x8x16xf32>
    %1188 = vector.shape_cast %1187 : vector<1x8x16xf32> to vector<8x16xf32>
    %1189 = arith.subf %1188, %38 : vector<8x16xf32>
    %1190 = math.exp %1189 : vector<8x16xf32>
    %1191 = vector.extract_strided_slice %45 {offsets = [0, 95], sizes = [8, 1], strides = [1, 1]} : vector<8x100xf32> to vector<8x1xf32>
    %1192 = vector.shape_cast %1191 : vector<8x1xf32> to vector<8xf32>
    %1193 = vector.shape_cast %1192 : vector<8xf32> to vector<8x1x1xf32>
    %1194 = vector.shape_cast %1190 : vector<8x16xf32> to vector<1x8x16xf32>
    %1195 = vector.broadcast %1193 : vector<8x1x1xf32> to vector<8x8x16xf32>
    %1196 = vector.broadcast %1194 : vector<1x8x16xf32> to vector<8x8x16xf32>
    %1197 = arith.mulf %1195, %1196 : vector<8x8x16xf32>
    %1198 = arith.addf %1186, %1197 : vector<8x8x16xf32>
    %1199 = vector.extract_strided_slice %9 {offsets = [3, 4, 1], sizes = [1, 8, 16], strides = [1, 1, 1]} : vector<4x12x20xf32> to vector<1x8x16xf32>
    %1200 = vector.shape_cast %1199 : vector<1x8x16xf32> to vector<8x16xf32>
    %1201 = arith.subf %1200, %38 : vector<8x16xf32>
    %1202 = math.exp %1201 : vector<8x16xf32>
    %1203 = vector.extract_strided_slice %45 {offsets = [0, 96], sizes = [8, 1], strides = [1, 1]} : vector<8x100xf32> to vector<8x1xf32>
    %1204 = vector.shape_cast %1203 : vector<8x1xf32> to vector<8xf32>
    %1205 = vector.shape_cast %1204 : vector<8xf32> to vector<8x1x1xf32>
    %1206 = vector.shape_cast %1202 : vector<8x16xf32> to vector<1x8x16xf32>
    %1207 = vector.broadcast %1205 : vector<8x1x1xf32> to vector<8x8x16xf32>
    %1208 = vector.broadcast %1206 : vector<1x8x16xf32> to vector<8x8x16xf32>
    %1209 = arith.mulf %1207, %1208 : vector<8x8x16xf32>
    %1210 = arith.addf %1198, %1209 : vector<8x8x16xf32>
    %1211 = vector.extract_strided_slice %9 {offsets = [3, 4, 2], sizes = [1, 8, 16], strides = [1, 1, 1]} : vector<4x12x20xf32> to vector<1x8x16xf32>
    %1212 = vector.shape_cast %1211 : vector<1x8x16xf32> to vector<8x16xf32>
    %1213 = arith.subf %1212, %38 : vector<8x16xf32>
    %1214 = math.exp %1213 : vector<8x16xf32>
    %1215 = vector.extract_strided_slice %45 {offsets = [0, 97], sizes = [8, 1], strides = [1, 1]} : vector<8x100xf32> to vector<8x1xf32>
    %1216 = vector.shape_cast %1215 : vector<8x1xf32> to vector<8xf32>
    %1217 = vector.shape_cast %1216 : vector<8xf32> to vector<8x1x1xf32>
    %1218 = vector.shape_cast %1214 : vector<8x16xf32> to vector<1x8x16xf32>
    %1219 = vector.broadcast %1217 : vector<8x1x1xf32> to vector<8x8x16xf32>
    %1220 = vector.broadcast %1218 : vector<1x8x16xf32> to vector<8x8x16xf32>
    %1221 = arith.mulf %1219, %1220 : vector<8x8x16xf32>
    %1222 = arith.addf %1210, %1221 : vector<8x8x16xf32>
    %1223 = vector.extract_strided_slice %9 {offsets = [3, 4, 3], sizes = [1, 8, 16], strides = [1, 1, 1]} : vector<4x12x20xf32> to vector<1x8x16xf32>
    %1224 = vector.shape_cast %1223 : vector<1x8x16xf32> to vector<8x16xf32>
    %1225 = arith.subf %1224, %38 : vector<8x16xf32>
    %1226 = math.exp %1225 : vector<8x16xf32>
    %1227 = vector.extract_strided_slice %45 {offsets = [0, 98], sizes = [8, 1], strides = [1, 1]} : vector<8x100xf32> to vector<8x1xf32>
    %1228 = vector.shape_cast %1227 : vector<8x1xf32> to vector<8xf32>
    %1229 = vector.shape_cast %1228 : vector<8xf32> to vector<8x1x1xf32>
    %1230 = vector.shape_cast %1226 : vector<8x16xf32> to vector<1x8x16xf32>
    %1231 = vector.broadcast %1229 : vector<8x1x1xf32> to vector<8x8x16xf32>
    %1232 = vector.broadcast %1230 : vector<1x8x16xf32> to vector<8x8x16xf32>
    %1233 = arith.mulf %1231, %1232 : vector<8x8x16xf32>
    %1234 = arith.addf %1222, %1233 : vector<8x8x16xf32>
    %1235 = vector.extract_strided_slice %9 {offsets = [3, 4, 4], sizes = [1, 8, 16], strides = [1, 1, 1]} : vector<4x12x20xf32> to vector<1x8x16xf32>
    %1236 = vector.shape_cast %1235 : vector<1x8x16xf32> to vector<8x16xf32>
    %1237 = arith.subf %1236, %38 : vector<8x16xf32>
    %1238 = math.exp %1237 : vector<8x16xf32>
    %1239 = vector.extract_strided_slice %45 {offsets = [0, 99], sizes = [8, 1], strides = [1, 1]} : vector<8x100xf32> to vector<8x1xf32>
    %1240 = vector.shape_cast %1239 : vector<8x1xf32> to vector<8xf32>
    %1241 = vector.shape_cast %1240 : vector<8xf32> to vector<8x1x1xf32>
    %1242 = vector.shape_cast %1238 : vector<8x16xf32> to vector<1x8x16xf32>
    %1243 = vector.broadcast %1241 : vector<8x1x1xf32> to vector<8x8x16xf32>
    %1244 = vector.broadcast %1242 : vector<1x8x16xf32> to vector<8x8x16xf32>
    %1245 = arith.mulf %1243, %1244 : vector<8x8x16xf32>
    %1246 = arith.addf %1234, %1245 : vector<8x8x16xf32>
    %1247 = vector.shape_cast %42 : vector<8x1xf32> to vector<8x1x1xf32>
    %1248 = vector.shape_cast %38 : vector<8x16xf32> to vector<1x8x16xf32>
    %1249 = vector.broadcast %1247 : vector<8x1x1xf32> to vector<8x8x16xf32>
    %1250 = vector.broadcast %1248 : vector<1x8x16xf32> to vector<8x8x16xf32>
    %1251 = arith.addf %1249, %1250 : vector<8x8x16xf32>
    %1252 = math.log %1246 : vector<8x8x16xf32>
    %1253 = arith.addf %1251, %1252 : vector<8x8x16xf32>
    %cst_8 = arith.constant 0.0666666701 : f32
    %1254 = vector.broadcast %cst_8 : f32 to vector<8x8x16xf32>
    %1255 = arith.mulf %1253, %1254 : vector<8x8x16xf32>
    %c0_9 = arith.constant 0 : index
    %c0_10 = arith.constant 0 : index
    %c0_11 = arith.constant 0 : index
    %c0_12 = arith.constant 0 : index
    %1256 = vector.load %arg4[%c0_9, %c0_10, %c0_11, %c0_12] : memref<1x8x8x16xf32, #tpu.memory_space<vmem>>, vector<1x8x8x16xf32>
    %1257 = vector.shape_cast %1256 : vector<1x8x8x16xf32> to vector<8x8x16xf32>
    %1258 = vector.shape_cast %1255 : vector<8x8x16xf32> to vector<1x8x8x16xf32>
    tpu.vector_store %arg4[%c0_9, %c0_10, %c0_11, %c0_12], %1258 {strides = array<i32>} : memref<1x8x8x16xf32, #tpu.memory_space<vmem>>, vector<1x8x8x16xf32>,
    return
  }
  func.func @transform_0(%arg0: i32, %arg1: i32) -> (i32, i32, i32, i32) {
    %c0_i32 = arith.constant 0 : i32
    %c0_i32_0 = arith.constant 0 : i32
    %c0_i32_1 = arith.constant 0 : i32
    %c0_i32_2 = arith.constant 0 : i32
    return %arg0, %c0_i32, %c0_i32_0, %c0_i32_1 : i32, i32, i32, i32
  }
  func.func @transform_1(%arg0: i32, %arg1: i32) -> (i32, i32) {
    %c0_i32 = arith.constant 0 : i32
    %c0_i32_0 = arith.constant 0 : i32
    %c0_i32_1 = arith.constant 0 : i32
    return %c0_i32, %c0_i32_0 : i32, i32
  }
  func.func @transform_2(%arg0: i32, %arg1: i32) -> (i32, i32, i32, i32) {
    %c0_i32 = arith.constant 0 : i32
    %c0_i32_0 = arith.constant 0 : i32
    %c0_i32_1 = arith.constant 0 : i32
    return %arg0, %c0_i32, %arg1, %c0_i32_0 : i32, i32, i32, i32
  }
}

</mosaic_0001>

<llo_original>
// kernel: tpu_custom_call.1
$region0: #{tpu_custom_call.1}
  #allocation0 [shape = 'u32[]', space=smem, size = 0x4, offset = 0x4, fixed_abs, tag = 'smem constant byte address 0x4 - core index']
  #allocation1 [shape = 'u32[72,128]{1,0:T(1,128)}', space=vmem, size = 0x9000, scoped, tag = 'internal scratch']
  %s0 = inlined_call_operand.vmem [shape: f32[2,4,20,20], index: 0, kind: input, shape index: {}]
  %s1 = inlined_call_operand.vmem [shape: f32[8,100], index: 1, kind: input, shape index: {}]
  %s2 = inlined_call_operand.hbm [shape: f32[2,8,16,16], index: 2, kind: output, shape index: {}]
  %s3 = sld [smem:[#allocation0]]
  $region41: #{tpu_custom_call.1} parent=0
    _
  %s5 = ssub.s32 1, %s3
  %s6 = scalar_select 0, %s5, %s3
  $region1: #{tpu_custom_call.1} parent=0
    #allocation2 [shape = 'u8[65536]{0}', space=vmem, size = 0x10000, scoped, tag = 'output window, operand 0']
    #allocation3 [shape = 's32[2]{0}', space=sflag, size = 0x8, scoped, tag = 'scoped memory for tpu_custom_call.1']
    %7 = vsyncpa [#allocation3], 0
    %s8 = scalar_lea.sflag [#allocation3], 1
    %9 = vsyncpa %s8, 0
    loop: start=0, step=1, limit=6
    $region2: #{tpu_custom_call.1} parent=1 // loop_pre_header
      _
    $region3: #{tpu_custom_call.1} parent=1 // loop_header
      %s11 = sphi 0, %s15
      %p12 = scmp.ge.s32.totalorder %s11, 6
      %s18 = sphi 0, %s30
      %s19 = sphi 0, %s26
      %s20 = sphi 0, %s18
      %s21 = sphi 0, %s19
      %s22 = sphi 0, %s20
      %s23 = sphi 0, %s21
      %s33 = sphi 0, %s35
      %s36 = sphi 0, %s33
      %s37 = sphi 0, %s36
      %s53 = sphi 0, %s37
      %s57 = sphi 0, %s57
      %s59 = sphi 0, %s57
      %s60 = sphi 0, %s59
      %s74 = sphi 0, %s60
      %s82 = sphi 0, %s84
      %s85 = sphi 0, %s82
      %s86 = sphi 0, %s85
      %s102 = sphi 0, %s86
    $region4: #{tpu_custom_call.1} parent=1 // loop_header_branch
      %14 = sbr.rel (%p12) target = $region8
    $region5: #{tpu_custom_call.1} parent=1 // loop_body
      %s16 = ssub.s32 %s11, 1
      %s17 = ssub.s32 %s11, 2
      %s24 = sadd.s32 1, %s19
      %p25 = scmp.ge.s32.totalorder %s24, 2
      %s26 = scalar_select %p25, 0, %s24
      %s27 = sadd.s32 1, %s18
      %s28 = scalar_select %p25, %s27, %s18
      %p29 = scmp.ge.s32.totalorder %s28, 2
      %s30 = scalar_select %p29, 0, %s28
      %s31 = ssub.s32 %s18, %s30
      %p32 = scmp.eq.s32.totalorder %s31, 0
      %s34 = sadd.s32 %s33, 1
      %s35 = scalar_select %p32, %s33, %s34
      %p38 = pneg %p32
      %p39 = scmp.eq.s32.totalorder %s11, 3
      %p40 = por %p38, %p39
      %p41 = scmp.ne.s32.totalorder %s33, %s36
      %p42 = scmp.eq.s32.totalorder %s11, 0
      %p43 = por %p41, %p42
      %p44 = scmp.ne.s32.totalorder %s33, %s36
      %p45 = scmp.eq.s32.totalorder %s16, 3
      %p46 = por %p44, %p45
      %p47 = scmp.ne.s32.totalorder %s36, %s37
      %p48 = scmp.eq.s32.totalorder %s16, 0
      %p49 = por %p47, %p48
      %p50 = scmp.ne.s32.totalorder %s36, %s37
      %p51 = scmp.eq.s32.totalorder %s17, 3
      %p52 = por %p50, %p51
      %p54 = scmp.ne.s32.totalorder %s37, %s53
      %p55 = scmp.eq.s32.totalorder %s17, 0
      %p56 = por %p54, %p55
      %s58 = sadd.s32 %s57, 1
      %p61 = scmp.eq.s32.totalorder %s11, 3
      %p62 = scmp.ne.s32.totalorder %s57, %s59
      %p63 = scmp.eq.s32.totalorder %s11, 0
      %p64 = por %p62, %p63
      %p65 = scmp.ne.s32.totalorder %s57, %s59
      %p66 = scmp.eq.s32.totalorder %s16, 3
      %p67 = por %p65, %p66
      %p68 = scmp.ne.s32.totalorder %s59, %s60
      %p69 = scmp.eq.s32.totalorder %s16, 0
      %p70 = por %p68, %p69
      %p71 = scmp.ne.s32.totalorder %s59, %s60
      %p72 = scmp.eq.s32.totalorder %s17, 3
      %p73 = por %p71, %p72
      %p75 = scmp.ne.s32.totalorder %s60, %s74
      %p76 = scmp.eq.s32.totalorder %s17, 0
      %p77 = por %p75, %p76
      %s78 = ssub.s32 %s18, %s30
      %s79 = ssub.s32 %s19, %s26
      %s80 = sor.u32 %s78, %s79
      %p81 = scmp.eq.s32.totalorder %s80, 0
      %s83 = sadd.s32 %s82, 1
      %s84 = scalar_select %p81, %s82, %s83
      %p87 = pneg %p81
      %p88 = scmp.eq.s32.totalorder %s11, 3
      %p89 = por %p87, %p88
      %p90 = scmp.ne.s32.totalorder %s82, %s85
      %p91 = scmp.eq.s32.totalorder %s11, 0
      %p92 = por %p90, %p91
      %p93 = scmp.ne.s32.totalorder %s82, %s85
      %p94 = scmp.eq.s32.totalorder %s16, 3
      %p95 = por %p93, %p94
      %p96 = scmp.ne.s32.totalorder %s85, %s86
      %p97 = scmp.eq.s32.totalorder %s16, 0
      %p98 = por %p96, %p97
      %p99 = scmp.ne.s32.totalorder %s85, %s86
      %p100 = scmp.eq.s32.totalorder %s17, 3
      %p101 = por %p99, %p100
      %p103 = scmp.ne.s32.totalorder %s86, %s102
      %p104 = scmp.eq.s32.totalorder %s17, 0
      %p105 = por %p103, %p104
      %p106 = scmp.le.s32.totalorder 1, %s11
      %p107 = scmp.lt.s32.totalorder %s11, 5
      %p108 = pnand %p106, %p107
      %p109 = pneg %p108
      // Predicated region
      $region9: #{tpu_custom_call.1} parent=5 // pred_check
        _
      $region10: #{tpu_custom_call.1} parent=5 // pred_check_branch
        %111 = sbr.rel (%p108) target = $region12
      $region11: #{tpu_custom_call.1} parent=5 // pred_region
        %s112 = ssub.s32 %s11, 1
        // Predicated region
        $region13: #{tpu_custom_call.1} parent=11 // pred_check
          %p113 = pneg %p70
        $region14: #{tpu_custom_call.1} parent=11 // pred_check_branch
          %115 = sbr.rel (%p113) target = $region16
        $region15: #{tpu_custom_call.1} parent=11 // pred_region
          _
        $region16: #{tpu_custom_call.1} parent=11 // pred_fallthru
          _
      $region12: #{tpu_custom_call.1} parent=5 // pred_fallthru
        _
      %p116 = scmp.lt.s32.totalorder %s11, 4
      // Predicated region
      $region17: #{tpu_custom_call.1} parent=5 // pred_check
        %p117 = pneg %p116
      $region18: #{tpu_custom_call.1} parent=5 // pred_check_branch
        %119 = sbr.rel (%p117) target = $region20
      $region19: #{tpu_custom_call.1} parent=5 // pred_region
        // Predicated region
        $region21: #{tpu_custom_call.1} parent=19 // pred_check
          %p120 = pneg %p43
        $region22: #{tpu_custom_call.1} parent=19 // pred_check_branch
          %122 = sbr.rel (%p120) target = $region24
        $region23: #{tpu_custom_call.1} parent=19 // pred_region
          %p123 = scmp.lt.s32.totalorder %s18, 1
          %s124 = scalar_select %p123, %s18, 1
          %s125 = smul.addr %s124, 12
          %s126 = smul.addr %s125, 8
          %s127 = scalar_lea.vmem %s0, %s126
        $region24: #{tpu_custom_call.1} parent=19 // pred_fallthru
          _
      $region20: #{tpu_custom_call.1} parent=5 // pred_fallthru
        _
      %p128 = scmp.le.s32.totalorder 1, %s11
      %p129 = scmp.lt.s32.totalorder %s11, 5
      %p130 = pnand %p128, %p129
      %p131 = pneg %p130
      // Predicated region
      $region25: #{tpu_custom_call.1} parent=5 // pred_check
        _
      $region26: #{tpu_custom_call.1} parent=5 // pred_check_branch
        %133 = sbr.rel (%p130) target = $region28
      $region27: #{tpu_custom_call.1} parent=5 // pred_region
        %s134 = ssub.s32 %s11, 1
        %p135 = scmp.lt.s32.totalorder %s20, 1
        %s136 = scalar_select %p135, %s20, 1
        %s137 = smul.addr %s136, 12
        %s138 = smul.addr %s137, 8
        %s139 = scalar_lea.vmem %s0, %s138
        %p140 = pneg %p49
        %p141 = pneg %p46
        %p142 = pneg %p70
        %p143 = pneg %p67
        %p144 = pneg %p98
        %p145 = pneg %p95
        %s146 = sand.u32 %s85, 1
        %s147 = scalar_lea.sflag [#allocation3], %s146
        %s148 = sand.u32 %s85, 1
        %s149 = smul.addr %s148, 64
        %s150 = scalar_lea.vmem [#allocation2], %s149
        %p151 = scmp.lt.s32.totalorder %s20, 1
        %s152 = scalar_select %p151, %s20, 1
        %s153 = smul.addr %s152, 12
        %s154 = smul.addr %s153, 8
        %s155 = scalar_lea.vmem %s0, %s154
        %s156 = smul.u32 %s21, 8
        %s157 = scalar_lea.vmem %s155, %s156
        %v158 = vld [vmem:[%s157] sm:$0xff]
        %v159 = vld [vmem:[%s157 + $0x8] sm:$0xf]
        %v160 = vld [vmem:[%s157 + $0x18] sm:$0xff]
        %v161 = vld [vmem:[%s157 + $0x20] sm:$0xf]
        %v162 = vld [vmem:[%s157 + $0x30] sm:$0xff]
        %v163 = vld [vmem:[%s157 + $0x38] sm:$0xf]
        %v164 = vld [vmem:[%s157 + $0x48] sm:$0xff]
        %v165 = vld [vmem:[%s157 + $0x50] sm:$0xf]
        %v166 = vld [vmem:[%s1] sm:$0xff]
        %v167 = vmul.f32 %v158, 15.0
        %v168 = vmul.f32 %v159, 15.0
        %v169 = vmul.f32 %v160, 15.0
        %v170 = vmul.f32 %v161, 15.0
        %v171 = vmul.f32 %v162, 15.0
        %v172 = vmul.f32 %v163, 15.0
        %v173 = vmul.f32 %v164, 15.0
        %v174 = vmul.f32 %v165, 15.0
        %183 = vrot.lane.b32.xlu0 %v167, 127
        %v184 = vpop.permute.xlu0 %183
        %185 = vrot.lane.b32.xlu0 %v168, 127
        %v186 = vpop.permute.xlu0 %185
        %187 = vrot.lane.b32.xlu0 %v169, 127
        %v188 = vpop.permute.xlu0 %187
        %189 = vrot.lane.b32.xlu0 %v170, 127
        %v190 = vpop.permute.xlu0 %189
        %191 = vrot.lane.b32.xlu0 %v171, 127
        %v192 = vpop.permute.xlu0 %191
        %193 = vrot.lane.b32.xlu0 %v172, 127
        %v194 = vpop.permute.xlu0 %193
        %195 = vrot.lane.b32.xlu0 %v173, 127
        %v196 = vpop.permute.xlu0 %195
        %197 = vrot.lane.b32.xlu0 %v174, 127
        %v198 = vpop.permute.xlu0 %197
        %v207 = vmax.f32 %v167, %v184
        %v208 = vmax.f32 %v168, %v186
        %v209 = vmax.f32 %v169, %v188
        %v210 = vmax.f32 %v170, %v190
        %v211 = vmax.f32 %v171, %v192
        %v212 = vmax.f32 %v172, %v194
        %v213 = vmax.f32 %v173, %v196
        %v214 = vmax.f32 %v174, %v198
        %215 = vrot.lane.b32.xlu0 %v167, 126
        %v216 = vpop.permute.xlu0 %215
        %217 = vrot.lane.b32.xlu0 %v168, 126
        %v218 = vpop.permute.xlu0 %217
        %219 = vrot.lane.b32.xlu0 %v169, 126
        %v220 = vpop.permute.xlu0 %219
        %221 = vrot.lane.b32.xlu0 %v170, 126
        %v222 = vpop.permute.xlu0 %221
        %223 = vrot.lane.b32.xlu0 %v171, 126
        %v224 = vpop.permute.xlu0 %223
        %225 = vrot.lane.b32.xlu0 %v172, 126
        %v226 = vpop.permute.xlu0 %225
        %227 = vrot.lane.b32.xlu0 %v173, 126
        %v228 = vpop.permute.xlu0 %227
        %229 = vrot.lane.b32.xlu0 %v174, 126
        %v230 = vpop.permute.xlu0 %229
        %v239 = vmax.f32 %v207, %v216
        %v240 = vmax.f32 %v208, %v218
        %v241 = vmax.f32 %v209, %v220
        %v242 = vmax.f32 %v210, %v222
        %v243 = vmax.f32 %v211, %v224
        %v244 = vmax.f32 %v212, %v226
        %v245 = vmax.f32 %v213, %v228
        %v246 = vmax.f32 %v214, %v230
        %247 = vrot.lane.b32.xlu0 %v167, 125
        %v248 = vpop.permute.xlu0 %247
        %249 = vrot.lane.b32.xlu0 %v168, 125
        %v250 = vpop.permute.xlu0 %249
        %251 = vrot.lane.b32.xlu0 %v169, 125
        %v252 = vpop.permute.xlu0 %251
        %253 = vrot.lane.b32.xlu0 %v170, 125
        %v254 = vpop.permute.xlu0 %253
        %255 = vrot.lane.b32.xlu0 %v171, 125
        %v256 = vpop.permute.xlu0 %255
        %257 = vrot.lane.b32.xlu0 %v172, 125
        %v258 = vpop.permute.xlu0 %257
        %259 = vrot.lane.b32.xlu0 %v173, 125
        %v260 = vpop.permute.xlu0 %259
        %261 = vrot.lane.b32.xlu0 %v174, 125
        %v262 = vpop.permute.xlu0 %261
        %v271 = vmax.f32 %v239, %v248
        %v272 = vmax.f32 %v240, %v250
        %v273 = vmax.f32 %v241, %v252
        %v274 = vmax.f32 %v242, %v254
        %v275 = vmax.f32 %v243, %v256
        %v276 = vmax.f32 %v244, %v258
        %v277 = vmax.f32 %v245, %v260
        %v278 = vmax.f32 %v246, %v262
        %279 = vrot.lane.b32.xlu0 %v167, 124
        %v280 = vpop.permute.xlu0 %279
        %281 = vrot.lane.b32.xlu0 %v168, 124
        %v282 = vpop.permute.xlu0 %281
        %283 = vrot.lane.b32.xlu0 %v169, 124
        %v284 = vpop.permute.xlu0 %283
        %285 = vrot.lane.b32.xlu0 %v170, 124
        %v286 = vpop.permute.xlu0 %285
        %287 = vrot.lane.b32.xlu0 %v171, 124
        %v288 = vpop.permute.xlu0 %287
        %289 = vrot.lane.b32.xlu0 %v172, 124
        %v290 = vpop.permute.xlu0 %289
        %291 = vrot.lane.b32.xlu0 %v173, 124
        %v292 = vpop.permute.xlu0 %291
        %293 = vrot.lane.b32.xlu0 %v174, 124
        %v294 = vpop.permute.xlu0 %293
        %v303 = vmax.f32 %v271, %v280
        %v304 = vmax.f32 %v272, %v282
        %v305 = vmax.f32 %v273, %v284
        %v306 = vmax.f32 %v274, %v286
        %v307 = vmax.f32 %v275, %v288
        %v308 = vmax.f32 %v276, %v290
        %v309 = vmax.f32 %v277, %v292
        %v310 = vmax.f32 %v278, %v294
        %vm319 = vcmask 1046528
        %v320 = vrot.slane %v303, 1
        %v321 = vrot.slane %v304, 1
        %v322 = vsel %vm319, %v320, %v321
        %v323 = vrot.slane %v305, 1
        %v324 = vrot.slane %v306, 1
        %v325 = vsel %vm319, %v323, %v324
        %v326 = vrot.slane %v307, 1
        %v327 = vrot.slane %v308, 1
        %v328 = vsel %vm319, %v326, %v327
        %v329 = vrot.slane %v309, 1
        %v330 = vrot.slane %v310, 1
        %v331 = vsel %vm319, %v329, %v330
        %v336 = vmax.f32 %v303, %v322
        %v337 = vmax.f32 %v305, %v325
        %v338 = vmax.f32 %v307, %v328
        %v339 = vmax.f32 %v309, %v331
        %vm340 = vcmask 1045504
        %v341 = vrot.slane %v303, 2
        %v342 = vrot.slane %v304, 2
        %v343 = vsel %vm340, %v341, %v342
        %v344 = vrot.slane %v305, 2
        %v345 = vrot.slane %v306, 2
        %v346 = vsel %vm340, %v344, %v345
        %v347 = vrot.slane %v307, 2
        %v348 = vrot.slane %v308, 2
        %v349 = vsel %vm340, %v347, %v348
        %v350 = vrot.slane %v309, 2
        %v351 = vrot.slane %v310, 2
        %v352 = vsel %vm340, %v350, %v351
        %v357 = vmax.f32 %v336, %v343
        %v358 = vmax.f32 %v337, %v346
        %v359 = vmax.f32 %v338, %v349
        %v360 = vmax.f32 %v339, %v352
        %vm361 = vcmask 1044480
        %v362 = vrot.slane %v303, 3
        %v363 = vrot.slane %v304, 3
        %v364 = vsel %vm361, %v362, %v363
        %v365 = vrot.slane %v305, 3
        %v366 = vrot.slane %v306, 3
        %v367 = vsel %vm361, %v365, %v366
        %v368 = vrot.slane %v307, 3
        %v369 = vrot.slane %v308, 3
        %v370 = vsel %vm361, %v368, %v369
        %v371 = vrot.slane %v309, 3
        %v372 = vrot.slane %v310, 3
        %v373 = vsel %vm361, %v371, %v372
        %v378 = vmax.f32 %v357, %v364
        %v379 = vmax.f32 %v358, %v367
        %v380 = vmax.f32 %v359, %v370
        %v381 = vmax.f32 %v360, %v373
        %vm382 = vcmask 1043456
        %v383 = vrot.slane %v303, 4
        %v384 = vrot.slane %v304, 4
        %v385 = vsel %vm382, %v383, %v384
        %v386 = vrot.slane %v305, 4
        %v387 = vrot.slane %v306, 4
        %v388 = vsel %vm382, %v386, %v387
        %v389 = vrot.slane %v307, 4
        %v390 = vrot.slane %v308, 4
        %v391 = vsel %vm382, %v389, %v390
        %v392 = vrot.slane %v309, 4
        %v393 = vrot.slane %v310, 4
        %v394 = vsel %vm382, %v392, %v393
        %v399 = vmax.f32 %v378, %v385
        %v400 = vmax.f32 %v379, %v388
        %v401 = vmax.f32 %v380, %v391
        %v402 = vmax.f32 %v381, %v394
        %v403 = vmax.f32 %v399, %v400
        %v404 = vmax.f32 %v403, %v401
        %v405 = vmax.f32 %v404, %v402
        %v406 = vmul.f32 %v166, 15.0
        %vm407 = vcmask 818176
        %v408 = vsel %vm407, %v406, -inf
        %409 = vmax.xlane.f32.xlu0 %v408
        %v410 = vpop.xlane.xlu0 %409
        %v411 = vsub.f32 %v406, %v410
        %v412 = vmul.f32 %v411, 1.442695
        %v413 = vpow.pop %v412
        %v414 = vsub.f32 %v167, %v405
        %v415 = vmul.f32 %v414, 1.442695
        %v416 = vpow.pop %v415
        %v418 = vrot.slane %v413, 1
        %v419 = vrot.slane %v413, 2
        %v420 = vrot.slane %v413, 3
        %v421 = vrot.slane %v413, 4
        %v422 = vrot.slane %v413, 5
        %v423 = vrot.slane %v413, 6
        %v424 = vrot.slane %v413, 7
        %v425 = vperm.slane %v413, 0
        %v426 = vperm.slane %v418, 0
        %v427 = vperm.slane %v419, 0
        %v428 = vperm.slane %v420, 0
        %v429 = vperm.slane %v421, 0
        %v430 = vperm.slane %v422, 0
        %v431 = vperm.slane %v423, 0
        %v432 = vperm.slane %v424, 0
        %433 = vset.pattern.permute.xlu0 0
        %434 = vperm.xlu0 %433, %v425
        %v435 = vpop.permute.xlu0 %434
        %437 = vset.pattern.permute.xlu0 0
        %438 = vperm.xlu0 %437, %v426
        %v439 = vpop.permute.xlu0 %438
        %441 = vset.pattern.permute.xlu0 0
        %442 = vperm.xlu0 %441, %v427
        %v443 = vpop.permute.xlu0 %442
        %445 = vset.pattern.permute.xlu0 0
        %446 = vperm.xlu0 %445, %v428
        %v447 = vpop.permute.xlu0 %446
        %449 = vset.pattern.permute.xlu0 0
        %450 = vperm.xlu0 %449, %v429
        %v451 = vpop.permute.xlu0 %450
        %453 = vset.pattern.permute.xlu0 0
        %454 = vperm.xlu0 %453, %v430
        %v455 = vpop.permute.xlu0 %454
        %457 = vset.pattern.permute.xlu0 0
        %458 = vperm.xlu0 %457, %v431
        %v459 = vpop.permute.xlu0 %458
        %461 = vset.pattern.permute.xlu0 0
        %462 = vperm.xlu0 %461, %v432
        %v463 = vpop.permute.xlu0 %462
        %v465 = vmul.f32 %v435, %v416
        %v466 = vmul.f32 %v439, %v416
        %v467 = vmul.f32 %v443, %v416
        %v468 = vmul.f32 %v447, %v416
        %v469 = vmul.f32 %v451, %v416
        %v470 = vmul.f32 %v455, %v416
        %v471 = vmul.f32 %v459, %v416
        %v472 = vmul.f32 %v463, %v416
        %v473 = vadd.f32 %v465, 0.0
        %v474 = vadd.f32 %v466, 0.0
        %v475 = vadd.f32 %v467, 0.0
        %v476 = vadd.f32 %v468, 0.0
        %v477 = vadd.f32 %v469, 0.0
        %v478 = vadd.f32 %v470, 0.0
        %v479 = vadd.f32 %v471, 0.0
        %v480 = vadd.f32 %v472, 0.0
        %482 = vrot.lane.b32.xlu0 %v405, 1
        %v483 = vpop.permute.xlu0 %482
        %v485 = vsub.f32 %v167, %v483
        %v486 = vmul.f32 %v485, 1.442695
        %v487 = vpow.pop %v486
        %488 = vset.pattern.permute.xlu0 1
        %489 = vperm.xlu0 %488, %v425
        %v490 = vpop.permute.xlu0 %489
        %492 = vset.pattern.permute.xlu0 1
        %493 = vperm.xlu0 %492, %v426
        %v494 = vpop.permute.xlu0 %493
        %496 = vset.pattern.permute.xlu0 1
        %497 = vperm.xlu0 %496, %v427
        %v498 = vpop.permute.xlu0 %497
        %500 = vset.pattern.permute.xlu0 1
        %501 = vperm.xlu0 %500, %v428
        %v502 = vpop.permute.xlu0 %501
        %504 = vset.pattern.permute.xlu0 1
        %505 = vperm.xlu0 %504, %v429
        %v506 = vpop.permute.xlu0 %505
        %508 = vset.pattern.permute.xlu0 1
        %509 = vperm.xlu0 %508, %v430
        %v510 = vpop.permute.xlu0 %509
        %512 = vset.pattern.permute.xlu0 1
        %513 = vperm.xlu0 %512, %v431
        %v514 = vpop.permute.xlu0 %513
        %516 = vset.pattern.permute.xlu0 1
        %517 = vperm.xlu0 %516, %v432
        %v518 = vpop.permute.xlu0 %517
        %v520 = vmul.f32 %v490, %v487
        %v521 = vmul.f32 %v494, %v487
        %v522 = vmul.f32 %v498, %v487
        %v523 = vmul.f32 %v502, %v487
        %v524 = vmul.f32 %v506, %v487
        %v525 = vmul.f32 %v510, %v487
        %v526 = vmul.f32 %v514, %v487
        %v527 = vmul.f32 %v518, %v487
        %536 = vrot.lane.b32.xlu0 %v520, 127
        %v537 = vpop.permute.xlu0 %536
        %538 = vrot.lane.b32.xlu0 %v521, 127
        %v539 = vpop.permute.xlu0 %538
        %540 = vrot.lane.b32.xlu0 %v522, 127
        %v541 = vpop.permute.xlu0 %540
        %542 = vrot.lane.b32.xlu0 %v523, 127
        %v543 = vpop.permute.xlu0 %542
        %544 = vrot.lane.b32.xlu0 %v524, 127
        %v545 = vpop.permute.xlu0 %544
        %546 = vrot.lane.b32.xlu0 %v525, 127
        %v547 = vpop.permute.xlu0 %546
        %548 = vrot.lane.b32.xlu0 %v526, 127
        %v549 = vpop.permute.xlu0 %548
        %550 = vrot.lane.b32.xlu0 %v527, 127
        %v551 = vpop.permute.xlu0 %550
        %v560 = vadd.f32 %v473, %v537
        %v561 = vadd.f32 %v474, %v539
        %v562 = vadd.f32 %v475, %v541
        %v563 = vadd.f32 %v476, %v543
        %v564 = vadd.f32 %v477, %v545
        %v565 = vadd.f32 %v478, %v547
        %v566 = vadd.f32 %v479, %v549
        %v567 = vadd.f32 %v480, %v551
        %568 = vrot.lane.b32.xlu0 %v405, 2
        %v569 = vpop.permute.xlu0 %568
        %v571 = vsub.f32 %v167, %v569
        %v572 = vmul.f32 %v571, 1.442695
        %v573 = vpow.pop %v572
        %574 = vset.pattern.permute.xlu0 2
        %575 = vperm.xlu0 %574, %v425
        %v576 = vpop.permute.xlu0 %575
        %578 = vset.pattern.permute.xlu0 2
        %579 = vperm.xlu0 %578, %v426
        %v580 = vpop.permute.xlu0 %579
        %582 = vset.pattern.permute.xlu0 2
        %583 = vperm.xlu0 %582, %v427
        %v584 = vpop.permute.xlu0 %583
        %586 = vset.pattern.permute.xlu0 2
        %587 = vperm.xlu0 %586, %v428
        %v588 = vpop.permute.xlu0 %587
        %590 = vset.pattern.permute.xlu0 2
        %591 = vperm.xlu0 %590, %v429
        %v592 = vpop.permute.xlu0 %591
        %594 = vset.pattern.permute.xlu0 2
        %595 = vperm.xlu0 %594, %v430
        %v596 = vpop.permute.xlu0 %595
        %598 = vset.pattern.permute.xlu0 2
        %599 = vperm.xlu0 %598, %v431
        %v600 = vpop.permute.xlu0 %599
        %602 = vset.pattern.permute.xlu0 2
        %603 = vperm.xlu0 %602, %v432
        %v604 = vpop.permute.xlu0 %603
        %v606 = vmul.f32 %v576, %v573
        %v607 = vmul.f32 %v580, %v573
        %v608 = vmul.f32 %v584, %v573
        %v609 = vmul.f32 %v588, %v573
        %v610 = vmul.f32 %v592, %v573
        %v611 = vmul.f32 %v596, %v573
        %v612 = vmul.f32 %v600, %v573
        %v613 = vmul.f32 %v604, %v573
        %622 = vrot.lane.b32.xlu0 %v606, 126
        %v623 = vpop.permute.xlu0 %622
        %624 = vrot.lane.b32.xlu0 %v607, 126
        %v625 = vpop.permute.xlu0 %624
        %626 = vrot.lane.b32.xlu0 %v608, 126
        %v627 = vpop.permute.xlu0 %626
        %628 = vrot.lane.b32.xlu0 %v609, 126
        %v629 = vpop.permute.xlu0 %628
        %630 = vrot.lane.b32.xlu0 %v610, 126
        %v631 = vpop.permute.xlu0 %630
        %632 = vrot.lane.b32.xlu0 %v611, 126
        %v633 = vpop.permute.xlu0 %632
        %634 = vrot.lane.b32.xlu0 %v612, 126
        %v635 = vpop.permute.xlu0 %634
        %636 = vrot.lane.b32.xlu0 %v613, 126
        %v637 = vpop.permute.xlu0 %636
        %v646 = vadd.f32 %v560, %v623
        %v647 = vadd.f32 %v561, %v625
        %v648 = vadd.f32 %v562, %v627
        %v649 = vadd.f32 %v563, %v629
        %v650 = vadd.f32 %v564, %v631
        %v651 = vadd.f32 %v565, %v633
        %v652 = vadd.f32 %v566, %v635
        %v653 = vadd.f32 %v567, %v637
        %654 = vrot.lane.b32.xlu0 %v405, 3
        %v655 = vpop.permute.xlu0 %654
        %v657 = vsub.f32 %v167, %v655
        %v658 = vmul.f32 %v657, 1.442695
        %v659 = vpow.pop %v658
        %660 = vset.pattern.permute.xlu0 3
        %661 = vperm.xlu0 %660, %v425
        %v662 = vpop.permute.xlu0 %661
        %664 = vset.pattern.permute.xlu0 3
        %665 = vperm.xlu0 %664, %v426
        %v666 = vpop.permute.xlu0 %665
        %668 = vset.pattern.permute.xlu0 3
        %669 = vperm.xlu0 %668, %v427
        %v670 = vpop.permute.xlu0 %669
        %672 = vset.pattern.permute.xlu0 3
        %673 = vperm.xlu0 %672, %v428
        %v674 = vpop.permute.xlu0 %673
        %676 = vset.pattern.permute.xlu0 3
        %677 = vperm.xlu0 %676, %v429
        %v678 = vpop.permute.xlu0 %677
        %680 = vset.pattern.permute.xlu0 3
        %681 = vperm.xlu0 %680, %v430
        %v682 = vpop.permute.xlu0 %681
        %684 = vset.pattern.permute.xlu0 3
        %685 = vperm.xlu0 %684, %v431
        %v686 = vpop.permute.xlu0 %685
        %688 = vset.pattern.permute.xlu0 3
        %689 = vperm.xlu0 %688, %v432
        %v690 = vpop.permute.xlu0 %689
        %v692 = vmul.f32 %v662, %v659
        %v693 = vmul.f32 %v666, %v659
        %v694 = vmul.f32 %v670, %v659
        %v695 = vmul.f32 %v674, %v659
        %v696 = vmul.f32 %v678, %v659
        %v697 = vmul.f32 %v682, %v659
        %v698 = vmul.f32 %v686, %v659
        %v699 = vmul.f32 %v690, %v659
        %708 = vrot.lane.b32.xlu0 %v692, 125
        %v709 = vpop.permute.xlu0 %708
        %710 = vrot.lane.b32.xlu0 %v693, 125
        %v711 = vpop.permute.xlu0 %710
        %712 = vrot.lane.b32.xlu0 %v694, 125
        %v713 = vpop.permute.xlu0 %712
        %714 = vrot.lane.b32.xlu0 %v695, 125
        %v715 = vpop.permute.xlu0 %714
        %716 = vrot.lane.b32.xlu0 %v696, 125
        %v717 = vpop.permute.xlu0 %716
        %718 = vrot.lane.b32.xlu0 %v697, 125
        %v719 = vpop.permute.xlu0 %718
        %720 = vrot.lane.b32.xlu0 %v698, 125
        %v721 = vpop.permute.xlu0 %720
        %722 = vrot.lane.b32.xlu0 %v699, 125
        %v723 = vpop.permute.xlu0 %722
        %v732 = vadd.f32 %v646, %v709
        %v733 = vadd.f32 %v647, %v711
        %v734 = vadd.f32 %v648, %v713
        %v735 = vadd.f32 %v649, %v715
        %v736 = vadd.f32 %v650, %v717
        %v737 = vadd.f32 %v651, %v719
        %v738 = vadd.f32 %v652, %v721
        %v739 = vadd.f32 %v653, %v723
        %740 = vrot.lane.b32.xlu0 %v405, 4
        %v741 = vpop.permute.xlu0 %740
        %v743 = vsub.f32 %v167, %v741
        %v744 = vmul.f32 %v743, 1.442695
        %v745 = vpow.pop %v744
        %746 = vset.pattern.permute.xlu0 4
        %747 = vperm.xlu0 %746, %v425
        %v748 = vpop.permute.xlu0 %747
        %750 = vset.pattern.permute.xlu0 4
        %751 = vperm.xlu0 %750, %v426
        %v752 = vpop.permute.xlu0 %751
        %754 = vset.pattern.permute.xlu0 4
        %755 = vperm.xlu0 %754, %v427
        %v756 = vpop.permute.xlu0 %755
        %758 = vset.pattern.permute.xlu0 4
        %759 = vperm.xlu0 %758, %v428
        %v760 = vpop.permute.xlu0 %759
        %762 = vset.pattern.permute.xlu0 4
        %763 = vperm.xlu0 %762, %v429
        %v764 = vpop.permute.xlu0 %763
        %766 = vset.pattern.permute.xlu0 4
        %767 = vperm.xlu0 %766, %v430
        %v768 = vpop.permute.xlu0 %767
        %770 = vset.pattern.permute.xlu0 4
        %771 = vperm.xlu0 %770, %v431
        %v772 = vpop.permute.xlu0 %771
        %774 = vset.pattern.permute.xlu0 4
        %775 = vperm.xlu0 %774, %v432
        %v776 = vpop.permute.xlu0 %775
        %v778 = vmul.f32 %v748, %v745
        %v779 = vmul.f32 %v752, %v745
        %v780 = vmul.f32 %v756, %v745
        %v781 = vmul.f32 %v760, %v745
        %v782 = vmul.f32 %v764, %v745
        %v783 = vmul.f32 %v768, %v745
        %v784 = vmul.f32 %v772, %v745
        %v785 = vmul.f32 %v776, %v745
        %794 = vrot.lane.b32.xlu0 %v778, 124
        %v795 = vpop.permute.xlu0 %794
        %796 = vrot.lane.b32.xlu0 %v779, 124
        %v797 = vpop.permute.xlu0 %796
        %798 = vrot.lane.b32.xlu0 %v780, 124
        %v799 = vpop.permute.xlu0 %798
        %800 = vrot.lane.b32.xlu0 %v781, 124
        %v801 = vpop.permute.xlu0 %800
        %802 = vrot.lane.b32.xlu0 %v782, 124
        %v803 = vpop.permute.xlu0 %802
        %804 = vrot.lane.b32.xlu0 %v783, 124
        %v805 = vpop.permute.xlu0 %804
        %806 = vrot.lane.b32.xlu0 %v784, 124
        %v807 = vpop.permute.xlu0 %806
        %808 = vrot.lane.b32.xlu0 %v785, 124
        %v809 = vpop.permute.xlu0 %808
        %v818 = vadd.f32 %v732, %v795
        %v819 = vadd.f32 %v733, %v797
        %v820 = vadd.f32 %v734, %v799
        %v821 = vadd.f32 %v735, %v801
        %v822 = vadd.f32 %v736, %v803
        %v823 = vadd.f32 %v737, %v805
        %v824 = vadd.f32 %v738, %v807
        %v825 = vadd.f32 %v739, %v809
        %v826 = vrot.slane %v405, 7
        %v828 = vsub.f32 %v167, %v826
        %v829 = vsub.f32 %v168, %v826
        %v830 = vmul.f32 %v828, 1.442695
        %v831 = vpow.pop %v830
        %v832 = vmul.f32 %v829, 1.442695
        %v833 = vpow.pop %v832
        %834 = vset.pattern.permute.xlu0 5
        %835 = vperm.xlu0 %834, %v425
        %v836 = vpop.permute.xlu0 %835
        %838 = vset.pattern.permute.xlu0 5
        %839 = vperm.xlu0 %838, %v426
        %v840 = vpop.permute.xlu0 %839
        %842 = vset.pattern.permute.xlu0 5
        %843 = vperm.xlu0 %842, %v427
        %v844 = vpop.permute.xlu0 %843
        %846 = vset.pattern.permute.xlu0 5
        %847 = vperm.xlu0 %846, %v428
        %v848 = vpop.permute.xlu0 %847
        %850 = vset.pattern.permute.xlu0 5
        %851 = vperm.xlu0 %850, %v429
        %v852 = vpop.permute.xlu0 %851
        %854 = vset.pattern.permute.xlu0 5
        %855 = vperm.xlu0 %854, %v430
        %v856 = vpop.permute.xlu0 %855
        %858 = vset.pattern.permute.xlu0 5
        %859 = vperm.xlu0 %858, %v431
        %v860 = vpop.permute.xlu0 %859
        %862 = vset.pattern.permute.xlu0 5
        %863 = vperm.xlu0 %862, %v432
        %v864 = vpop.permute.xlu0 %863
        %v866 = vmul.f32 %v836, %v831
        %v867 = vmul.f32 %v836, %v833
        %v868 = vmul.f32 %v840, %v831
        %v869 = vmul.f32 %v840, %v833
        %v870 = vmul.f32 %v844, %v831
        %v871 = vmul.f32 %v844, %v833
        %v872 = vmul.f32 %v848, %v831
        %v873 = vmul.f32 %v848, %v833
        %v874 = vmul.f32 %v852, %v831
        %v875 = vmul.f32 %v852, %v833
        %v876 = vmul.f32 %v856, %v831
        %v877 = vmul.f32 %v856, %v833
        %v878 = vmul.f32 %v860, %v831
        %v879 = vmul.f32 %v860, %v833
        %v880 = vmul.f32 %v864, %v831
        %v881 = vmul.f32 %v864, %v833
        %v898 = vrot.slane %v866, 1
        %v899 = vrot.slane %v867, 1
        %v900 = vsel %vm319, %v898, %v899
        %v901 = vrot.slane %v868, 1
        %v902 = vrot.slane %v869, 1
        %v903 = vsel %vm319, %v901, %v902
        %v904 = vrot.slane %v870, 1
        %v905 = vrot.slane %v871, 1
        %v906 = vsel %vm319, %v904, %v905
        %v907 = vrot.slane %v872, 1
        %v908 = vrot.slane %v873, 1
        %v909 = vsel %vm319, %v907, %v908
        %v910 = vrot.slane %v874, 1
        %v911 = vrot.slane %v875, 1
        %v912 = vsel %vm319, %v910, %v911
        %v913 = vrot.slane %v876, 1
        %v914 = vrot.slane %v877, 1
        %v915 = vsel %vm319, %v913, %v914
        %v916 = vrot.slane %v878, 1
        %v917 = vrot.slane %v879, 1
        %v918 = vsel %vm319, %v916, %v917
        %v919 = vrot.slane %v880, 1
        %v920 = vrot.slane %v881, 1
        %v921 = vsel %vm319, %v919, %v920
        %v930 = vadd.f32 %v818, %v900
        %v931 = vadd.f32 %v819, %v903
        %v932 = vadd.f32 %v820, %v906
        %v933 = vadd.f32 %v821, %v909
        %v934 = vadd.f32 %v822, %v912
        %v935 = vadd.f32 %v823, %v915
        %v936 = vadd.f32 %v824, %v918
        %v937 = vadd.f32 %v825, %v921
        %938 = vrot.lane.b32.xlu0 %v826, 1
        %v939 = vpop.permute.xlu0 %938
        %v941 = vsub.f32 %v167, %v939
        %v942 = vsub.f32 %v168, %v939
        %v943 = vmul.f32 %v941, 1.442695
        %v944 = vpow.pop %v943
        %v945 = vmul.f32 %v942, 1.442695
        %v946 = vpow.pop %v945
        %947 = vset.pattern.permute.xlu0 6
        %948 = vperm.xlu0 %947, %v425
        %v949 = vpop.permute.xlu0 %948
        %951 = vset.pattern.permute.xlu0 6
        %952 = vperm.xlu0 %951, %v426
        %v953 = vpop.permute.xlu0 %952
        %955 = vset.pattern.permute.xlu0 6
        %956 = vperm.xlu0 %955, %v427
        %v957 = vpop.permute.xlu0 %956
        %959 = vset.pattern.permute.xlu0 6
        %960 = vperm.xlu0 %959, %v428
        %v961 = vpop.permute.xlu0 %960
        %963 = vset.pattern.permute.xlu0 6
        %964 = vperm.xlu0 %963, %v429
        %v965 = vpop.permute.xlu0 %964
        %967 = vset.pattern.permute.xlu0 6
        %968 = vperm.xlu0 %967, %v430
        %v969 = vpop.permute.xlu0 %968
        %971 = vset.pattern.permute.xlu0 6
        %972 = vperm.xlu0 %971, %v431
        %v973 = vpop.permute.xlu0 %972
        %975 = vset.pattern.permute.xlu0 6
        %976 = vperm.xlu0 %975, %v432
        %v977 = vpop.permute.xlu0 %976
        %v979 = vmul.f32 %v949, %v944
        %v980 = vmul.f32 %v949, %v946
        %v981 = vmul.f32 %v953, %v944
        %v982 = vmul.f32 %v953, %v946
        %v983 = vmul.f32 %v957, %v944
        %v984 = vmul.f32 %v957, %v946
        %v985 = vmul.f32 %v961, %v944
        %v986 = vmul.f32 %v961, %v946
        %v987 = vmul.f32 %v965, %v944
        %v988 = vmul.f32 %v965, %v946
        %v989 = vmul.f32 %v969, %v944
        %v990 = vmul.f32 %v969, %v946
        %v991 = vmul.f32 %v973, %v944
        %v992 = vmul.f32 %v973, %v946
        %v993 = vmul.f32 %v977, %v944
        %v994 = vmul.f32 %v977, %v946
        %v1011 = vrot.slane %v979, 1
        %v1012 = vrot.slane %v980, 1
        %v1013 = vsel %vm319, %v1011, %v1012
        %v1014 = vrot.slane %v981, 1
        %v1015 = vrot.slane %v982, 1
        %v1016 = vsel %vm319, %v1014, %v1015
        %v1017 = vrot.slane %v983, 1
        %v1018 = vrot.slane %v984, 1
        %v1019 = vsel %vm319, %v1017, %v1018
        %v1020 = vrot.slane %v985, 1
        %v1021 = vrot.slane %v986, 1
        %v1022 = vsel %vm319, %v1020, %v1021
        %v1023 = vrot.slane %v987, 1
        %v1024 = vrot.slane %v988, 1
        %v1025 = vsel %vm319, %v1023, %v1024
        %v1026 = vrot.slane %v989, 1
        %v1027 = vrot.slane %v990, 1
        %v1028 = vsel %vm319, %v1026, %v1027
        %v1029 = vrot.slane %v991, 1
        %v1030 = vrot.slane %v992, 1
        %v1031 = vsel %vm319, %v1029, %v1030
        %v1032 = vrot.slane %v993, 1
        %v1033 = vrot.slane %v994, 1
        %v1034 = vsel %vm319, %v1032, %v1033
        %1035 = vrot.lane.b32.xlu0 %v1013, 127
        %v1036 = vpop.permute.xlu0 %1035
        %1037 = vrot.lane.b32.xlu0 %v1016, 127
        %v1038 = vpop.permute.xlu0 %1037
        %1039 = vrot.lane.b32.xlu0 %v1019, 127
        %v1040 = vpop.permute.xlu0 %1039
        %1041 = vrot.lane.b32.xlu0 %v1022, 127
        %v1042 = vpop.permute.xlu0 %1041
        %1043 = vrot.lane.b32.xlu0 %v1025, 127
        %v1044 = vpop.permute.xlu0 %1043
        %1045 = vrot.lane.b32.xlu0 %v1028, 127
        %v1046 = vpop.permute.xlu0 %1045
        %1047 = vrot.lane.b32.xlu0 %v1031, 127
        %v1048 = vpop.permute.xlu0 %1047
        %1049 = vrot.lane.b32.xlu0 %v1034, 127
        %v1050 = vpop.permute.xlu0 %1049
        %v1059 = vadd.f32 %v930, %v1036
        %v1060 = vadd.f32 %v931, %v1038
        %v1061 = vadd.f32 %v932, %v1040
        %v1062 = vadd.f32 %v933, %v1042
        %v1063 = vadd.f32 %v934, %v1044
        %v1064 = vadd.f32 %v935, %v1046
        %v1065 = vadd.f32 %v936, %v1048
        %v1066 = vadd.f32 %v937, %v1050
        %1067 = vrot.lane.b32.xlu0 %v826, 2
        %v1068 = vpop.permute.xlu0 %1067
        %v1070 = vsub.f32 %v167, %v1068
        %v1071 = vsub.f32 %v168, %v1068
        %v1072 = vmul.f32 %v1070, 1.442695
        %v1073 = vpow.pop %v1072
        %v1074 = vmul.f32 %v1071, 1.442695
        %v1075 = vpow.pop %v1074
        %1076 = vset.pattern.permute.xlu0 7
        %1077 = vperm.xlu0 %1076, %v425
        %v1078 = vpop.permute.xlu0 %1077
        %1080 = vset.pattern.permute.xlu0 7
        %1081 = vperm.xlu0 %1080, %v426
        %v1082 = vpop.permute.xlu0 %1081
        %1084 = vset.pattern.permute.xlu0 7
        %1085 = vperm.xlu0 %1084, %v427
        %v1086 = vpop.permute.xlu0 %1085
        %1088 = vset.pattern.permute.xlu0 7
        %1089 = vperm.xlu0 %1088, %v428
        %v1090 = vpop.permute.xlu0 %1089
        %1092 = vset.pattern.permute.xlu0 7
        %1093 = vperm.xlu0 %1092, %v429
        %v1094 = vpop.permute.xlu0 %1093
        %1096 = vset.pattern.permute.xlu0 7
        %1097 = vperm.xlu0 %1096, %v430
        %v1098 = vpop.permute.xlu0 %1097
        %1100 = vset.pattern.permute.xlu0 7
        %1101 = vperm.xlu0 %1100, %v431
        %v1102 = vpop.permute.xlu0 %1101
        %1104 = vset.pattern.permute.xlu0 7
        %1105 = vperm.xlu0 %1104, %v432
        %v1106 = vpop.permute.xlu0 %1105
        %v1108 = vmul.f32 %v1078, %v1073
        %v1109 = vmul.f32 %v1078, %v1075
        %v1110 = vmul.f32 %v1082, %v1073
        %v1111 = vmul.f32 %v1082, %v1075
        %v1112 = vmul.f32 %v1086, %v1073
        %v1113 = vmul.f32 %v1086, %v1075
        %v1114 = vmul.f32 %v1090, %v1073
        %v1115 = vmul.f32 %v1090, %v1075
        %v1116 = vmul.f32 %v1094, %v1073
        %v1117 = vmul.f32 %v1094, %v1075
        %v1118 = vmul.f32 %v1098, %v1073
        %v1119 = vmul.f32 %v1098, %v1075
        %v1120 = vmul.f32 %v1102, %v1073
        %v1121 = vmul.f32 %v1102, %v1075
        %v1122 = vmul.f32 %v1106, %v1073
        %v1123 = vmul.f32 %v1106, %v1075
        %v1140 = vrot.slane %v1108, 1
        %v1141 = vrot.slane %v1109, 1
        %v1142 = vsel %vm319, %v1140, %v1141
        %v1143 = vrot.slane %v1110, 1
        %v1144 = vrot.slane %v1111, 1
        %v1145 = vsel %vm319, %v1143, %v1144
        %v1146 = vrot.slane %v1112, 1
        %v1147 = vrot.slane %v1113, 1
        %v1148 = vsel %vm319, %v1146, %v1147
        %v1149 = vrot.slane %v1114, 1
        %v1150 = vrot.slane %v1115, 1
        %v1151 = vsel %vm319, %v1149, %v1150
        %v1152 = vrot.slane %v1116, 1
        %v1153 = vrot.slane %v1117, 1
        %v1154 = vsel %vm319, %v1152, %v1153
        %v1155 = vrot.slane %v1118, 1
        %v1156 = vrot.slane %v1119, 1
        %v1157 = vsel %vm319, %v1155, %v1156
        %v1158 = vrot.slane %v1120, 1
        %v1159 = vrot.slane %v1121, 1
        %v1160 = vsel %vm319, %v1158, %v1159
        %v1161 = vrot.slane %v1122, 1
        %v1162 = vrot.slane %v1123, 1
        %v1163 = vsel %vm319, %v1161, %v1162
        %1164 = vrot.lane.b32.xlu0 %v1142, 126
        %v1165 = vpop.permute.xlu0 %1164
        %1166 = vrot.lane.b32.xlu0 %v1145, 126
        %v1167 = vpop.permute.xlu0 %1166
        %1168 = vrot.lane.b32.xlu0 %v1148, 126
        %v1169 = vpop.permute.xlu0 %1168
        %1170 = vrot.lane.b32.xlu0 %v1151, 126
        %v1171 = vpop.permute.xlu0 %1170
        %1172 = vrot.lane.b32.xlu0 %v1154, 126
        %v1173 = vpop.permute.xlu0 %1172
        %1174 = vrot.lane.b32.xlu0 %v1157, 126
        %v1175 = vpop.permute.xlu0 %1174
        %1176 = vrot.lane.b32.xlu0 %v1160, 126
        %v1177 = vpop.permute.xlu0 %1176
        %1178 = vrot.lane.b32.xlu0 %v1163, 126
        %v1179 = vpop.permute.xlu0 %1178
        %v1188 = vadd.f32 %v1059, %v1165
        %v1189 = vadd.f32 %v1060, %v1167
        %v1190 = vadd.f32 %v1061, %v1169
        %v1191 = vadd.f32 %v1062, %v1171
        %v1192 = vadd.f32 %v1063, %v1173
        %v1193 = vadd.f32 %v1064, %v1175
        %v1194 = vadd.f32 %v1065, %v1177
        %v1195 = vadd.f32 %v1066, %v1179
        %1196 = vrot.lane.b32.xlu0 %v826, 3
        %v1197 = vpop.permute.xlu0 %1196
        %v1199 = vsub.f32 %v167, %v1197
        %v1200 = vsub.f32 %v168, %v1197
        %v1201 = vmul.f32 %v1199, 1.442695
        %v1202 = vpow.pop %v1201
        %v1203 = vmul.f32 %v1200, 1.442695
        %v1204 = vpow.pop %v1203
        %1205 = vset.pattern.permute.xlu0 8
        %1206 = vperm.xlu0 %1205, %v425
        %v1207 = vpop.permute.xlu0 %1206
        %1209 = vset.pattern.permute.xlu0 8
        %1210 = vperm.xlu0 %1209, %v426
        %v1211 = vpop.permute.xlu0 %1210
        %1213 = vset.pattern.permute.xlu0 8
        %1214 = vperm.xlu0 %1213, %v427
        %v1215 = vpop.permute.xlu0 %1214
        %1217 = vset.pattern.permute.xlu0 8
        %1218 = vperm.xlu0 %1217, %v428
        %v1219 = vpop.permute.xlu0 %1218
        %1221 = vset.pattern.permute.xlu0 8
        %1222 = vperm.xlu0 %1221, %v429
        %v1223 = vpop.permute.xlu0 %1222
        %1225 = vset.pattern.permute.xlu0 8
        %1226 = vperm.xlu0 %1225, %v430
        %v1227 = vpop.permute.xlu0 %1226
        %1229 = vset.pattern.permute.xlu0 8
        %1230 = vperm.xlu0 %1229, %v431
        %v1231 = vpop.permute.xlu0 %1230
        %1233 = vset.pattern.permute.xlu0 8
        %1234 = vperm.xlu0 %1233, %v432
        %v1235 = vpop.permute.xlu0 %1234
        %v1237 = vmul.f32 %v1207, %v1202
        %v1238 = vmul.f32 %v1207, %v1204
        %v1239 = vmul.f32 %v1211, %v1202
        %v1240 = vmul.f32 %v1211, %v1204
        %v1241 = vmul.f32 %v1215, %v1202
        %v1242 = vmul.f32 %v1215, %v1204
        %v1243 = vmul.f32 %v1219, %v1202
        %v1244 = vmul.f32 %v1219, %v1204
        %v1245 = vmul.f32 %v1223, %v1202
        %v1246 = vmul.f32 %v1223, %v1204
        %v1247 = vmul.f32 %v1227, %v1202
        %v1248 = vmul.f32 %v1227, %v1204
        %v1249 = vmul.f32 %v1231, %v1202
        %v1250 = vmul.f32 %v1231, %v1204
        %v1251 = vmul.f32 %v1235, %v1202
        %v1252 = vmul.f32 %v1235, %v1204
        %v1269 = vrot.slane %v1237, 1
        %v1270 = vrot.slane %v1238, 1
        %v1271 = vsel %vm319, %v1269, %v1270
        %v1272 = vrot.slane %v1239, 1
        %v1273 = vrot.slane %v1240, 1
        %v1274 = vsel %vm319, %v1272, %v1273
        %v1275 = vrot.slane %v1241, 1
        %v1276 = vrot.slane %v1242, 1
        %v1277 = vsel %vm319, %v1275, %v1276
        %v1278 = vrot.slane %v1243, 1
        %v1279 = vrot.slane %v1244, 1
        %v1280 = vsel %vm319, %v1278, %v1279
        %v1281 = vrot.slane %v1245, 1
        %v1282 = vrot.slane %v1246, 1
        %v1283 = vsel %vm319, %v1281, %v1282
        %v1284 = vrot.slane %v1247, 1
        %v1285 = vrot.slane %v1248, 1
        %v1286 = vsel %vm319, %v1284, %v1285
        %v1287 = vrot.slane %v1249, 1
        %v1288 = vrot.slane %v1250, 1
        %v1289 = vsel %vm319, %v1287, %v1288
        %v1290 = vrot.slane %v1251, 1
        %v1291 = vrot.slane %v1252, 1
        %v1292 = vsel %vm319, %v1290, %v1291
        %1293 = vrot.lane.b32.xlu0 %v1271, 125
        %v1294 = vpop.permute.xlu0 %1293
        %1295 = vrot.lane.b32.xlu0 %v1274, 125
        %v1296 = vpop.permute.xlu0 %1295
        %1297 = vrot.lane.b32.xlu0 %v1277, 125
        %v1298 = vpop.permute.xlu0 %1297
        %1299 = vrot.lane.b32.xlu0 %v1280, 125
        %v1300 = vpop.permute.xlu0 %1299
        %1301 = vrot.lane.b32.xlu0 %v1283, 125
        %v1302 = vpop.permute.xlu0 %1301
        %1303 = vrot.lane.b32.xlu0 %v1286, 125
        %v1304 = vpop.permute.xlu0 %1303
        %1305 = vrot.lane.b32.xlu0 %v1289, 125
        %v1306 = vpop.permute.xlu0 %1305
        %1307 = vrot.lane.b32.xlu0 %v1292, 125
        %v1308 = vpop.permute.xlu0 %1307
        %v1317 = vadd.f32 %v1188, %v1294
        %v1318 = vadd.f32 %v1189, %v1296
        %v1319 = vadd.f32 %v1190, %v1298
        %v1320 = vadd.f32 %v1191, %v1300
        %v1321 = vadd.f32 %v1192, %v1302
        %v1322 = vadd.f32 %v1193, %v1304
        %v1323 = vadd.f32 %v1194, %v1306
        %v1324 = vadd.f32 %v1195, %v1308
        %1325 = vrot.lane.b32.xlu0 %v826, 4
        %v1326 = vpop.permute.xlu0 %1325
        %v1328 = vsub.f32 %v167, %v1326
        %v1329 = vsub.f32 %v168, %v1326
        %v1330 = vmul.f32 %v1328, 1.442695
        %v1331 = vpow.pop %v1330
        %v1332 = vmul.f32 %v1329, 1.442695
        %v1333 = vpow.pop %v1332
        %1334 = vset.pattern.permute.xlu0 9
        %1335 = vperm.xlu0 %1334, %v425
        %v1336 = vpop.permute.xlu0 %1335
        %1338 = vset.pattern.permute.xlu0 9
        %1339 = vperm.xlu0 %1338, %v426
        %v1340 = vpop.permute.xlu0 %1339
        %1342 = vset.pattern.permute.xlu0 9
        %1343 = vperm.xlu0 %1342, %v427
        %v1344 = vpop.permute.xlu0 %1343
        %1346 = vset.pattern.permute.xlu0 9
        %1347 = vperm.xlu0 %1346, %v428
        %v1348 = vpop.permute.xlu0 %1347
        %1350 = vset.pattern.permute.xlu0 9
        %1351 = vperm.xlu0 %1350, %v429
        %v1352 = vpop.permute.xlu0 %1351
        %1354 = vset.pattern.permute.xlu0 9
        %1355 = vperm.xlu0 %1354, %v430
        %v1356 = vpop.permute.xlu0 %1355
        %1358 = vset.pattern.permute.xlu0 9
        %1359 = vperm.xlu0 %1358, %v431
        %v1360 = vpop.permute.xlu0 %1359
        %1362 = vset.pattern.permute.xlu0 9
        %1363 = vperm.xlu0 %1362, %v432
        %v1364 = vpop.permute.xlu0 %1363
        %v1366 = vmul.f32 %v1336, %v1331
        %v1367 = vmul.f32 %v1336, %v1333
        %v1368 = vmul.f32 %v1340, %v1331
        %v1369 = vmul.f32 %v1340, %v1333
        %v1370 = vmul.f32 %v1344, %v1331
        %v1371 = vmul.f32 %v1344, %v1333
        %v1372 = vmul.f32 %v1348, %v1331
        %v1373 = vmul.f32 %v1348, %v1333
        %v1374 = vmul.f32 %v1352, %v1331
        %v1375 = vmul.f32 %v1352, %v1333
        %v1376 = vmul.f32 %v1356, %v1331
        %v1377 = vmul.f32 %v1356, %v1333
        %v1378 = vmul.f32 %v1360, %v1331
        %v1379 = vmul.f32 %v1360, %v1333
        %v1380 = vmul.f32 %v1364, %v1331
        %v1381 = vmul.f32 %v1364, %v1333
        %v1398 = vrot.slane %v1366, 1
        %v1399 = vrot.slane %v1367, 1
        %v1400 = vsel %vm319, %v1398, %v1399
        %v1401 = vrot.slane %v1368, 1
        %v1402 = vrot.slane %v1369, 1
        %v1403 = vsel %vm319, %v1401, %v1402
        %v1404 = vrot.slane %v1370, 1
        %v1405 = vrot.slane %v1371, 1
        %v1406 = vsel %vm319, %v1404, %v1405
        %v1407 = vrot.slane %v1372, 1
        %v1408 = vrot.slane %v1373, 1
        %v1409 = vsel %vm319, %v1407, %v1408
        %v1410 = vrot.slane %v1374, 1
        %v1411 = vrot.slane %v1375, 1
        %v1412 = vsel %vm319, %v1410, %v1411
        %v1413 = vrot.slane %v1376, 1
        %v1414 = vrot.slane %v1377, 1
        %v1415 = vsel %vm319, %v1413, %v1414
        %v1416 = vrot.slane %v1378, 1
        %v1417 = vrot.slane %v1379, 1
        %v1418 = vsel %vm319, %v1416, %v1417
        %v1419 = vrot.slane %v1380, 1
        %v1420 = vrot.slane %v1381, 1
        %v1421 = vsel %vm319, %v1419, %v1420
        %1422 = vrot.lane.b32.xlu0 %v1400, 124
        %v1423 = vpop.permute.xlu0 %1422
        %1424 = vrot.lane.b32.xlu0 %v1403, 124
        %v1425 = vpop.permute.xlu0 %1424
        %1426 = vrot.lane.b32.xlu0 %v1406, 124
        %v1427 = vpop.permute.xlu0 %1426
        %1428 = vrot.lane.b32.xlu0 %v1409, 124
        %v1429 = vpop.permute.xlu0 %1428
        %1430 = vrot.lane.b32.xlu0 %v1412, 124
        %v1431 = vpop.permute.xlu0 %1430
        %1432 = vrot.lane.b32.xlu0 %v1415, 124
        %v1433 = vpop.permute.xlu0 %1432
        %1434 = vrot.lane.b32.xlu0 %v1418, 124
        %v1435 = vpop.permute.xlu0 %1434
        %1436 = vrot.lane.b32.xlu0 %v1421, 124
        %v1437 = vpop.permute.xlu0 %1436
        %v1446 = vadd.f32 %v1317, %v1423
        %v1447 = vadd.f32 %v1318, %v1425
        %v1448 = vadd.f32 %v1319, %v1427
        %v1449 = vadd.f32 %v1320, %v1429
        %v1450 = vadd.f32 %v1321, %v1431
        %v1451 = vadd.f32 %v1322, %v1433
        %v1452 = vadd.f32 %v1323, %v1435
        %v1453 = vadd.f32 %v1324, %v1437
        %v1454 = vrot.slane %v405, 6
        %v1456 = vsub.f32 %v167, %v1454
        %v1457 = vsub.f32 %v168, %v1454
        %v1458 = vmul.f32 %v1456, 1.442695
        %v1459 = vpow.pop %v1458
        %v1460 = vmul.f32 %v1457, 1.442695
        %v1461 = vpow.pop %v1460
        %1462 = vset.pattern.permute.xlu0 10
        %1463 = vperm.xlu0 %1462, %v425
        %v1464 = vpop.permute.xlu0 %1463
        %1466 = vset.pattern.permute.xlu0 10
        %1467 = vperm.xlu0 %1466, %v426
        %v1468 = vpop.permute.xlu0 %1467
        %1470 = vset.pattern.permute.xlu0 10
        %1471 = vperm.xlu0 %1470, %v427
        %v1472 = vpop.permute.xlu0 %1471
        %1474 = vset.pattern.permute.xlu0 10
        %1475 = vperm.xlu0 %1474, %v428
        %v1476 = vpop.permute.xlu0 %1475
        %1478 = vset.pattern.permute.xlu0 10
        %1479 = vperm.xlu0 %1478, %v429
        %v1480 = vpop.permute.xlu0 %1479
        %1482 = vset.pattern.permute.xlu0 10
        %1483 = vperm.xlu0 %1482, %v430
        %v1484 = vpop.permute.xlu0 %1483
        %1486 = vset.pattern.permute.xlu0 10
        %1487 = vperm.xlu0 %1486, %v431
        %v1488 = vpop.permute.xlu0 %1487
        %1490 = vset.pattern.permute.xlu0 10
        %1491 = vperm.xlu0 %1490, %v432
        %v1492 = vpop.permute.xlu0 %1491
        %v1494 = vmul.f32 %v1464, %v1459
        %v1495 = vmul.f32 %v1464, %v1461
        %v1496 = vmul.f32 %v1468, %v1459
        %v1497 = vmul.f32 %v1468, %v1461
        %v1498 = vmul.f32 %v1472, %v1459
        %v1499 = vmul.f32 %v1472, %v1461
        %v1500 = vmul.f32 %v1476, %v1459
        %v1501 = vmul.f32 %v1476, %v1461
        %v1502 = vmul.f32 %v1480, %v1459
        %v1503 = vmul.f32 %v1480, %v1461
        %v1504 = vmul.f32 %v1484, %v1459
        %v1505 = vmul.f32 %v1484, %v1461
        %v1506 = vmul.f32 %v1488, %v1459
        %v1507 = vmul.f32 %v1488, %v1461
        %v1508 = vmul.f32 %v1492, %v1459
        %v1509 = vmul.f32 %v1492, %v1461
        %v1526 = vrot.slane %v1494, 2
        %v1527 = vrot.slane %v1495, 2
        %v1528 = vsel %vm340, %v1526, %v1527
        %v1529 = vrot.slane %v1496, 2
        %v1530 = vrot.slane %v1497, 2
        %v1531 = vsel %vm340, %v1529, %v1530
        %v1532 = vrot.slane %v1498, 2
        %v1533 = vrot.slane %v1499, 2
        %v1534 = vsel %vm340, %v1532, %v1533
        %v1535 = vrot.slane %v1500, 2
        %v1536 = vrot.slane %v1501, 2
        %v1537 = vsel %vm340, %v1535, %v1536
        %v1538 = vrot.slane %v1502, 2
        %v1539 = vrot.slane %v1503, 2
        %v1540 = vsel %vm340, %v1538, %v1539
        %v1541 = vrot.slane %v1504, 2
        %v1542 = vrot.slane %v1505, 2
        %v1543 = vsel %vm340, %v1541, %v1542
        %v1544 = vrot.slane %v1506, 2
        %v1545 = vrot.slane %v1507, 2
        %v1546 = vsel %vm340, %v1544, %v1545
        %v1547 = vrot.slane %v1508, 2
        %v1548 = vrot.slane %v1509, 2
        %v1549 = vsel %vm340, %v1547, %v1548
        %v1558 = vadd.f32 %v1446, %v1528
        %v1559 = vadd.f32 %v1447, %v1531
        %v1560 = vadd.f32 %v1448, %v1534
        %v1561 = vadd.f32 %v1449, %v1537
        %v1562 = vadd.f32 %v1450, %v1540
        %v1563 = vadd.f32 %v1451, %v1543
        %v1564 = vadd.f32 %v1452, %v1546
        %v1565 = vadd.f32 %v1453, %v1549
        %1566 = vrot.lane.b32.xlu0 %v1454, 1
        %v1567 = vpop.permute.xlu0 %1566
        %v1569 = vsub.f32 %v167, %v1567
        %v1570 = vsub.f32 %v168, %v1567
        %v1571 = vmul.f32 %v1569, 1.442695
        %v1572 = vpow.pop %v1571
        %v1573 = vmul.f32 %v1570, 1.442695
        %v1574 = vpow.pop %v1573
        %1575 = vset.pattern.permute.xlu0 11
        %1576 = vperm.xlu0 %1575, %v425
        %v1577 = vpop.permute.xlu0 %1576
        %1579 = vset.pattern.permute.xlu0 11
        %1580 = vperm.xlu0 %1579, %v426
        %v1581 = vpop.permute.xlu0 %1580
        %1583 = vset.pattern.permute.xlu0 11
        %1584 = vperm.xlu0 %1583, %v427
        %v1585 = vpop.permute.xlu0 %1584
        %1587 = vset.pattern.permute.xlu0 11
        %1588 = vperm.xlu0 %1587, %v428
        %v1589 = vpop.permute.xlu0 %1588
        %1591 = vset.pattern.permute.xlu0 11
        %1592 = vperm.xlu0 %1591, %v429
        %v1593 = vpop.permute.xlu0 %1592
        %1595 = vset.pattern.permute.xlu0 11
        %1596 = vperm.xlu0 %1595, %v430
        %v1597 = vpop.permute.xlu0 %1596
        %1599 = vset.pattern.permute.xlu0 11
        %1600 = vperm.xlu0 %1599, %v431
        %v1601 = vpop.permute.xlu0 %1600
        %1603 = vset.pattern.permute.xlu0 11
        %1604 = vperm.xlu0 %1603, %v432
        %v1605 = vpop.permute.xlu0 %1604
        %v1607 = vmul.f32 %v1577, %v1572
        %v1608 = vmul.f32 %v1577, %v1574
        %v1609 = vmul.f32 %v1581, %v1572
        %v1610 = vmul.f32 %v1581, %v1574
        %v1611 = vmul.f32 %v1585, %v1572
        %v1612 = vmul.f32 %v1585, %v1574
        %v1613 = vmul.f32 %v1589, %v1572
        %v1614 = vmul.f32 %v1589, %v1574
        %v1615 = vmul.f32 %v1593, %v1572
        %v1616 = vmul.f32 %v1593, %v1574
        %v1617 = vmul.f32 %v1597, %v1572
        %v1618 = vmul.f32 %v1597, %v1574
        %v1619 = vmul.f32 %v1601, %v1572
        %v1620 = vmul.f32 %v1601, %v1574
        %v1621 = vmul.f32 %v1605, %v1572
        %v1622 = vmul.f32 %v1605, %v1574
        %v1639 = vrot.slane %v1607, 2
        %v1640 = vrot.slane %v1608, 2
        %v1641 = vsel %vm340, %v1639, %v1640
        %v1642 = vrot.slane %v1609, 2
        %v1643 = vrot.slane %v1610, 2
        %v1644 = vsel %vm340, %v1642, %v1643
        %v1645 = vrot.slane %v1611, 2
        %v1646 = vrot.slane %v1612, 2
        %v1647 = vsel %vm340, %v1645, %v1646
        %v1648 = vrot.slane %v1613, 2
        %v1649 = vrot.slane %v1614, 2
        %v1650 = vsel %vm340, %v1648, %v1649
        %v1651 = vrot.slane %v1615, 2
        %v1652 = vrot.slane %v1616, 2
        %v1653 = vsel %vm340, %v1651, %v1652
        %v1654 = vrot.slane %v1617, 2
        %v1655 = vrot.slane %v1618, 2
        %v1656 = vsel %vm340, %v1654, %v1655
        %v1657 = vrot.slane %v1619, 2
        %v1658 = vrot.slane %v1620, 2
        %v1659 = vsel %vm340, %v1657, %v1658
        %v1660 = vrot.slane %v1621, 2
        %v1661 = vrot.slane %v1622, 2
        %v1662 = vsel %vm340, %v1660, %v1661
        %1663 = vrot.lane.b32.xlu0 %v1641, 127
        %v1664 = vpop.permute.xlu0 %1663
        %1665 = vrot.lane.b32.xlu0 %v1644, 127
        %v1666 = vpop.permute.xlu0 %1665
        %1667 = vrot.lane.b32.xlu0 %v1647, 127
        %v1668 = vpop.permute.xlu0 %1667
        %1669 = vrot.lane.b32.xlu0 %v1650, 127
        %v1670 = vpop.permute.xlu0 %1669
        %1671 = vrot.lane.b32.xlu0 %v1653, 127
        %v1672 = vpop.permute.xlu0 %1671
        %1673 = vrot.lane.b32.xlu0 %v1656, 127
        %v1674 = vpop.permute.xlu0 %1673
        %1675 = vrot.lane.b32.xlu0 %v1659, 127
        %v1676 = vpop.permute.xlu0 %1675
        %1677 = vrot.lane.b32.xlu0 %v1662, 127
        %v1678 = vpop.permute.xlu0 %1677
        %v1687 = vadd.f32 %v1558, %v1664
        %v1688 = vadd.f32 %v1559, %v1666
        %v1689 = vadd.f32 %v1560, %v1668
        %v1690 = vadd.f32 %v1561, %v1670
        %v1691 = vadd.f32 %v1562, %v1672
        %v1692 = vadd.f32 %v1563, %v1674
        %v1693 = vadd.f32 %v1564, %v1676
        %v1694 = vadd.f32 %v1565, %v1678
        %1695 = vrot.lane.b32.xlu0 %v1454, 2
        %v1696 = vpop.permute.xlu0 %1695
        %v1698 = vsub.f32 %v167, %v1696
        %v1699 = vsub.f32 %v168, %v1696
        %v1700 = vmul.f32 %v1698, 1.442695
        %v1701 = vpow.pop %v1700
        %v1702 = vmul.f32 %v1699, 1.442695
        %v1703 = vpow.pop %v1702
        %1704 = vset.pattern.permute.xlu0 12
        %1705 = vperm.xlu0 %1704, %v425
        %v1706 = vpop.permute.xlu0 %1705
        %1708 = vset.pattern.permute.xlu0 12
        %1709 = vperm.xlu0 %1708, %v426
        %v1710 = vpop.permute.xlu0 %1709
        %1712 = vset.pattern.permute.xlu0 12
        %1713 = vperm.xlu0 %1712, %v427
        %v1714 = vpop.permute.xlu0 %1713
        %1716 = vset.pattern.permute.xlu0 12
        %1717 = vperm.xlu0 %1716, %v428
        %v1718 = vpop.permute.xlu0 %1717
        %1720 = vset.pattern.permute.xlu0 12
        %1721 = vperm.xlu0 %1720, %v429
        %v1722 = vpop.permute.xlu0 %1721
        %1724 = vset.pattern.permute.xlu0 12
        %1725 = vperm.xlu0 %1724, %v430
        %v1726 = vpop.permute.xlu0 %1725
        %1728 = vset.pattern.permute.xlu0 12
        %1729 = vperm.xlu0 %1728, %v431
        %v1730 = vpop.permute.xlu0 %1729
        %1732 = vset.pattern.permute.xlu0 12
        %1733 = vperm.xlu0 %1732, %v432
        %v1734 = vpop.permute.xlu0 %1733
        %v1736 = vmul.f32 %v1706, %v1701
        %v1737 = vmul.f32 %v1706, %v1703
        %v1738 = vmul.f32 %v1710, %v1701
        %v1739 = vmul.f32 %v1710, %v1703
        %v1740 = vmul.f32 %v1714, %v1701
        %v1741 = vmul.f32 %v1714, %v1703
        %v1742 = vmul.f32 %v1718, %v1701
        %v1743 = vmul.f32 %v1718, %v1703
        %v1744 = vmul.f32 %v1722, %v1701
        %v1745 = vmul.f32 %v1722, %v1703
        %v1746 = vmul.f32 %v1726, %v1701
        %v1747 = vmul.f32 %v1726, %v1703
        %v1748 = vmul.f32 %v1730, %v1701
        %v1749 = vmul.f32 %v1730, %v1703
        %v1750 = vmul.f32 %v1734, %v1701
        %v1751 = vmul.f32 %v1734, %v1703
        %v1768 = vrot.slane %v1736, 2
        %v1769 = vrot.slane %v1737, 2
        %v1770 = vsel %vm340, %v1768, %v1769
        %v1771 = vrot.slane %v1738, 2
        %v1772 = vrot.slane %v1739, 2
        %v1773 = vsel %vm340, %v1771, %v1772
        %v1774 = vrot.slane %v1740, 2
        %v1775 = vrot.slane %v1741, 2
        %v1776 = vsel %vm340, %v1774, %v1775
        %v1777 = vrot.slane %v1742, 2
        %v1778 = vrot.slane %v1743, 2
        %v1779 = vsel %vm340, %v1777, %v1778
        %v1780 = vrot.slane %v1744, 2
        %v1781 = vrot.slane %v1745, 2
        %v1782 = vsel %vm340, %v1780, %v1781
        %v1783 = vrot.slane %v1746, 2
        %v1784 = vrot.slane %v1747, 2
        %v1785 = vsel %vm340, %v1783, %v1784
        %v1786 = vrot.slane %v1748, 2
        %v1787 = vrot.slane %v1749, 2
        %v1788 = vsel %vm340, %v1786, %v1787
        %v1789 = vrot.slane %v1750, 2
        %v1790 = vrot.slane %v1751, 2
        %v1791 = vsel %vm340, %v1789, %v1790
        %1792 = vrot.lane.b32.xlu0 %v1770, 126
        %v1793 = vpop.permute.xlu0 %1792
        %1794 = vrot.lane.b32.xlu0 %v1773, 126
        %v1795 = vpop.permute.xlu0 %1794
        %1796 = vrot.lane.b32.xlu0 %v1776, 126
        %v1797 = vpop.permute.xlu0 %1796
        %1798 = vrot.lane.b32.xlu0 %v1779, 126
        %v1799 = vpop.permute.xlu0 %1798
        %1800 = vrot.lane.b32.xlu0 %v1782, 126
        %v1801 = vpop.permute.xlu0 %1800
        %1802 = vrot.lane.b32.xlu0 %v1785, 126
        %v1803 = vpop.permute.xlu0 %1802
        %1804 = vrot.lane.b32.xlu0 %v1788, 126
        %v1805 = vpop.permute.xlu0 %1804
        %1806 = vrot.lane.b32.xlu0 %v1791, 126
        %v1807 = vpop.permute.xlu0 %1806
        %v1816 = vadd.f32 %v1687, %v1793
        %v1817 = vadd.f32 %v1688, %v1795
        %v1818 = vadd.f32 %v1689, %v1797
        %v1819 = vadd.f32 %v1690, %v1799
        %v1820 = vadd.f32 %v1691, %v1801
        %v1821 = vadd.f32 %v1692, %v1803
        %v1822 = vadd.f32 %v1693, %v1805
        %v1823 = vadd.f32 %v1694, %v1807
        %1824 = vrot.lane.b32.xlu0 %v1454, 3
        %v1825 = vpop.permute.xlu0 %1824
        %v1827 = vsub.f32 %v167, %v1825
        %v1828 = vsub.f32 %v168, %v1825
        %v1829 = vmul.f32 %v1827, 1.442695
        %v1830 = vpow.pop %v1829
        %v1831 = vmul.f32 %v1828, 1.442695
        %v1832 = vpow.pop %v1831
        %1833 = vset.pattern.permute.xlu0 13
        %1834 = vperm.xlu0 %1833, %v425
        %v1835 = vpop.permute.xlu0 %1834
        %1837 = vset.pattern.permute.xlu0 13
        %1838 = vperm.xlu0 %1837, %v426
        %v1839 = vpop.permute.xlu0 %1838
        %1841 = vset.pattern.permute.xlu0 13
        %1842 = vperm.xlu0 %1841, %v427
        %v1843 = vpop.permute.xlu0 %1842
        %1845 = vset.pattern.permute.xlu0 13
        %1846 = vperm.xlu0 %1845, %v428
        %v1847 = vpop.permute.xlu0 %1846
        %1849 = vset.pattern.permute.xlu0 13
        %1850 = vperm.xlu0 %1849, %v429
        %v1851 = vpop.permute.xlu0 %1850
        %1853 = vset.pattern.permute.xlu0 13
        %1854 = vperm.xlu0 %1853, %v430
        %v1855 = vpop.permute.xlu0 %1854
        %1857 = vset.pattern.permute.xlu0 13
        %1858 = vperm.xlu0 %1857, %v431
        %v1859 = vpop.permute.xlu0 %1858
        %1861 = vset.pattern.permute.xlu0 13
        %1862 = vperm.xlu0 %1861, %v432
        %v1863 = vpop.permute.xlu0 %1862
        %v1865 = vmul.f32 %v1835, %v1830
        %v1866 = vmul.f32 %v1835, %v1832
        %v1867 = vmul.f32 %v1839, %v1830
        %v1868 = vmul.f32 %v1839, %v1832
        %v1869 = vmul.f32 %v1843, %v1830
        %v1870 = vmul.f32 %v1843, %v1832
        %v1871 = vmul.f32 %v1847, %v1830
        %v1872 = vmul.f32 %v1847, %v1832
        %v1873 = vmul.f32 %v1851, %v1830
        %v1874 = vmul.f32 %v1851, %v1832
        %v1875 = vmul.f32 %v1855, %v1830
        %v1876 = vmul.f32 %v1855, %v1832
        %v1877 = vmul.f32 %v1859, %v1830
        %v1878 = vmul.f32 %v1859, %v1832
        %v1879 = vmul.f32 %v1863, %v1830
        %v1880 = vmul.f32 %v1863, %v1832
        %v1897 = vrot.slane %v1865, 2
        %v1898 = vrot.slane %v1866, 2
        %v1899 = vsel %vm340, %v1897, %v1898
        %v1900 = vrot.slane %v1867, 2
        %v1901 = vrot.slane %v1868, 2
        %v1902 = vsel %vm340, %v1900, %v1901
        %v1903 = vrot.slane %v1869, 2
        %v1904 = vrot.slane %v1870, 2
        %v1905 = vsel %vm340, %v1903, %v1904
        %v1906 = vrot.slane %v1871, 2
        %v1907 = vrot.slane %v1872, 2
        %v1908 = vsel %vm340, %v1906, %v1907
        %v1909 = vrot.slane %v1873, 2
        %v1910 = vrot.slane %v1874, 2
        %v1911 = vsel %vm340, %v1909, %v1910
        %v1912 = vrot.slane %v1875, 2
        %v1913 = vrot.slane %v1876, 2
        %v1914 = vsel %vm340, %v1912, %v1913
        %v1915 = vrot.slane %v1877, 2
        %v1916 = vrot.slane %v1878, 2
        %v1917 = vsel %vm340, %v1915, %v1916
        %v1918 = vrot.slane %v1879, 2
        %v1919 = vrot.slane %v1880, 2
        %v1920 = vsel %vm340, %v1918, %v1919
        %1921 = vrot.lane.b32.xlu0 %v1899, 125
        %v1922 = vpop.permute.xlu0 %1921
        %1923 = vrot.lane.b32.xlu0 %v1902, 125
        %v1924 = vpop.permute.xlu0 %1923
        %1925 = vrot.lane.b32.xlu0 %v1905, 125
        %v1926 = vpop.permute.xlu0 %1925
        %1927 = vrot.lane.b32.xlu0 %v1908, 125
        %v1928 = vpop.permute.xlu0 %1927
        %1929 = vrot.lane.b32.xlu0 %v1911, 125
        %v1930 = vpop.permute.xlu0 %1929
        %1931 = vrot.lane.b32.xlu0 %v1914, 125
        %v1932 = vpop.permute.xlu0 %1931
        %1933 = vrot.lane.b32.xlu0 %v1917, 125
        %v1934 = vpop.permute.xlu0 %1933
        %1935 = vrot.lane.b32.xlu0 %v1920, 125
        %v1936 = vpop.permute.xlu0 %1935
        %v1945 = vadd.f32 %v1816, %v1922
        %v1946 = vadd.f32 %v1817, %v1924
        %v1947 = vadd.f32 %v1818, %v1926
        %v1948 = vadd.f32 %v1819, %v1928
        %v1949 = vadd.f32 %v1820, %v1930
        %v1950 = vadd.f32 %v1821, %v1932
        %v1951 = vadd.f32 %v1822, %v1934
        %v1952 = vadd.f32 %v1823, %v1936
        %1953 = vrot.lane.b32.xlu0 %v1454, 4
        %v1954 = vpop.permute.xlu0 %1953
        %v1956 = vsub.f32 %v167, %v1954
        %v1957 = vsub.f32 %v168, %v1954
        %v1958 = vmul.f32 %v1956, 1.442695
        %v1959 = vpow.pop %v1958
        %v1960 = vmul.f32 %v1957, 1.442695
        %v1961 = vpow.pop %v1960
        %1962 = vset.pattern.permute.xlu0 14
        %1963 = vperm.xlu0 %1962, %v425
        %v1964 = vpop.permute.xlu0 %1963
        %1966 = vset.pattern.permute.xlu0 14
        %1967 = vperm.xlu0 %1966, %v426
        %v1968 = vpop.permute.xlu0 %1967
        %1970 = vset.pattern.permute.xlu0 14
        %1971 = vperm.xlu0 %1970, %v427
        %v1972 = vpop.permute.xlu0 %1971
        %1974 = vset.pattern.permute.xlu0 14
        %1975 = vperm.xlu0 %1974, %v428
        %v1976 = vpop.permute.xlu0 %1975
        %1978 = vset.pattern.permute.xlu0 14
        %1979 = vperm.xlu0 %1978, %v429
        %v1980 = vpop.permute.xlu0 %1979
        %1982 = vset.pattern.permute.xlu0 14
        %1983 = vperm.xlu0 %1982, %v430
        %v1984 = vpop.permute.xlu0 %1983
        %1986 = vset.pattern.permute.xlu0 14
        %1987 = vperm.xlu0 %1986, %v431
        %v1988 = vpop.permute.xlu0 %1987
        %1990 = vset.pattern.permute.xlu0 14
        %1991 = vperm.xlu0 %1990, %v432
        %v1992 = vpop.permute.xlu0 %1991
        %v1994 = vmul.f32 %v1964, %v1959
        %v1995 = vmul.f32 %v1964, %v1961
        %v1996 = vmul.f32 %v1968, %v1959
        %v1997 = vmul.f32 %v1968, %v1961
        %v1998 = vmul.f32 %v1972, %v1959
        %v1999 = vmul.f32 %v1972, %v1961
        %v2000 = vmul.f32 %v1976, %v1959
        %v2001 = vmul.f32 %v1976, %v1961
        %v2002 = vmul.f32 %v1980, %v1959
        %v2003 = vmul.f32 %v1980, %v1961
        %v2004 = vmul.f32 %v1984, %v1959
        %v2005 = vmul.f32 %v1984, %v1961
        %v2006 = vmul.f32 %v1988, %v1959
        %v2007 = vmul.f32 %v1988, %v1961
        %v2008 = vmul.f32 %v1992, %v1959
        %v2009 = vmul.f32 %v1992, %v1961
        %v2026 = vrot.slane %v1994, 2
        %v2027 = vrot.slane %v1995, 2
        %v2028 = vsel %vm340, %v2026, %v2027
        %v2029 = vrot.slane %v1996, 2
        %v2030 = vrot.slane %v1997, 2
        %v2031 = vsel %vm340, %v2029, %v2030
        %v2032 = vrot.slane %v1998, 2
        %v2033 = vrot.slane %v1999, 2
        %v2034 = vsel %vm340, %v2032, %v2033
        %v2035 = vrot.slane %v2000, 2
        %v2036 = vrot.slane %v2001, 2
        %v2037 = vsel %vm340, %v2035, %v2036
        %v2038 = vrot.slane %v2002, 2
        %v2039 = vrot.slane %v2003, 2
        %v2040 = vsel %vm340, %v2038, %v2039
        %v2041 = vrot.slane %v2004, 2
        %v2042 = vrot.slane %v2005, 2
        %v2043 = vsel %vm340, %v2041, %v2042
        %v2044 = vrot.slane %v2006, 2
        %v2045 = vrot.slane %v2007, 2
        %v2046 = vsel %vm340, %v2044, %v2045
        %v2047 = vrot.slane %v2008, 2
        %v2048 = vrot.slane %v2009, 2
        %v2049 = vsel %vm340, %v2047, %v2048
        %2050 = vrot.lane.b32.xlu0 %v2028, 124
        %v2051 = vpop.permute.xlu0 %2050
        %2052 = vrot.lane.b32.xlu0 %v2031, 124
        %v2053 = vpop.permute.xlu0 %2052
        %2054 = vrot.lane.b32.xlu0 %v2034, 124
        %v2055 = vpop.permute.xlu0 %2054
        %2056 = vrot.lane.b32.xlu0 %v2037, 124
        %v2057 = vpop.permute.xlu0 %2056
        %2058 = vrot.lane.b32.xlu0 %v2040, 124
        %v2059 = vpop.permute.xlu0 %2058
        %2060 = vrot.lane.b32.xlu0 %v2043, 124
        %v2061 = vpop.permute.xlu0 %2060
        %2062 = vrot.lane.b32.xlu0 %v2046, 124
        %v2063 = vpop.permute.xlu0 %2062
        %2064 = vrot.lane.b32.xlu0 %v2049, 124
        %v2065 = vpop.permute.xlu0 %2064
        %v2074 = vadd.f32 %v1945, %v2051
        %v2075 = vadd.f32 %v1946, %v2053
        %v2076 = vadd.f32 %v1947, %v2055
        %v2077 = vadd.f32 %v1948, %v2057
        %v2078 = vadd.f32 %v1949, %v2059
        %v2079 = vadd.f32 %v1950, %v2061
        %v2080 = vadd.f32 %v1951, %v2063
        %v2081 = vadd.f32 %v1952, %v2065
        %v2082 = vrot.slane %v405, 5
        %v2084 = vsub.f32 %v167, %v2082
        %v2085 = vsub.f32 %v168, %v2082
        %v2086 = vmul.f32 %v2084, 1.442695
        %v2087 = vpow.pop %v2086
        %v2088 = vmul.f32 %v2085, 1.442695
        %v2089 = vpow.pop %v2088
        %2090 = vset.pattern.permute.xlu0 15
        %2091 = vperm.xlu0 %2090, %v425
        %v2092 = vpop.permute.xlu0 %2091
        %2094 = vset.pattern.permute.xlu0 15
        %2095 = vperm.xlu0 %2094, %v426
        %v2096 = vpop.permute.xlu0 %2095
        %2098 = vset.pattern.permute.xlu0 15
        %2099 = vperm.xlu0 %2098, %v427
        %v2100 = vpop.permute.xlu0 %2099
        %2102 = vset.pattern.permute.xlu0 15
        %2103 = vperm.xlu0 %2102, %v428
        %v2104 = vpop.permute.xlu0 %2103
        %2106 = vset.pattern.permute.xlu0 15
        %2107 = vperm.xlu0 %2106, %v429
        %v2108 = vpop.permute.xlu0 %2107
        %2110 = vset.pattern.permute.xlu0 15
        %2111 = vperm.xlu0 %2110, %v430
        %v2112 = vpop.permute.xlu0 %2111
        %2114 = vset.pattern.permute.xlu0 15
        %2115 = vperm.xlu0 %2114, %v431
        %v2116 = vpop.permute.xlu0 %2115
        %2118 = vset.pattern.permute.xlu0 15
        %2119 = vperm.xlu0 %2118, %v432
        %v2120 = vpop.permute.xlu0 %2119
        %v2122 = vmul.f32 %v2092, %v2087
        %v2123 = vmul.f32 %v2092, %v2089
        %v2124 = vmul.f32 %v2096, %v2087
        %v2125 = vmul.f32 %v2096, %v2089
        %v2126 = vmul.f32 %v2100, %v2087
        %v2127 = vmul.f32 %v2100, %v2089
        %v2128 = vmul.f32 %v2104, %v2087
        %v2129 = vmul.f32 %v2104, %v2089
        %v2130 = vmul.f32 %v2108, %v2087
        %v2131 = vmul.f32 %v2108, %v2089
        %v2132 = vmul.f32 %v2112, %v2087
        %v2133 = vmul.f32 %v2112, %v2089
        %v2134 = vmul.f32 %v2116, %v2087
        %v2135 = vmul.f32 %v2116, %v2089
        %v2136 = vmul.f32 %v2120, %v2087
        %v2137 = vmul.f32 %v2120, %v2089
        %v2154 = vrot.slane %v2122, 3
        %v2155 = vrot.slane %v2123, 3
        %v2156 = vsel %vm361, %v2154, %v2155
        %v2157 = vrot.slane %v2124, 3
        %v2158 = vrot.slane %v2125, 3
        %v2159 = vsel %vm361, %v2157, %v2158
        %v2160 = vrot.slane %v2126, 3
        %v2161 = vrot.slane %v2127, 3
        %v2162 = vsel %vm361, %v2160, %v2161
        %v2163 = vrot.slane %v2128, 3
        %v2164 = vrot.slane %v2129, 3
        %v2165 = vsel %vm361, %v2163, %v2164
        %v2166 = vrot.slane %v2130, 3
        %v2167 = vrot.slane %v2131, 3
        %v2168 = vsel %vm361, %v2166, %v2167
        %v2169 = vrot.slane %v2132, 3
        %v2170 = vrot.slane %v2133, 3
        %v2171 = vsel %vm361, %v2169, %v2170
        %v2172 = vrot.slane %v2134, 3
        %v2173 = vrot.slane %v2135, 3
        %v2174 = vsel %vm361, %v2172, %v2173
        %v2175 = vrot.slane %v2136, 3
        %v2176 = vrot.slane %v2137, 3
        %v2177 = vsel %vm361, %v2175, %v2176
        %v2186 = vadd.f32 %v2074, %v2156
        %v2187 = vadd.f32 %v2075, %v2159
        %v2188 = vadd.f32 %v2076, %v2162
        %v2189 = vadd.f32 %v2077, %v2165
        %v2190 = vadd.f32 %v2078, %v2168
        %v2191 = vadd.f32 %v2079, %v2171
        %v2192 = vadd.f32 %v2080, %v2174
        %v2193 = vadd.f32 %v2081, %v2177
        %2194 = vrot.lane.b32.xlu0 %v2082, 1
        %v2195 = vpop.permute.xlu0 %2194
        %v2197 = vsub.f32 %v167, %v2195
        %v2198 = vsub.f32 %v168, %v2195
        %v2199 = vmul.f32 %v2197, 1.442695
        %v2200 = vpow.pop %v2199
        %v2201 = vmul.f32 %v2198, 1.442695
        %v2202 = vpow.pop %v2201
        %2203 = vset.pattern.permute.xlu0 16
        %2204 = vperm.xlu0 %2203, %v425
        %v2205 = vpop.permute.xlu0 %2204
        %2207 = vset.pattern.permute.xlu0 16
        %2208 = vperm.xlu0 %2207, %v426
        %v2209 = vpop.permute.xlu0 %2208
        %2211 = vset.pattern.permute.xlu0 16
        %2212 = vperm.xlu0 %2211, %v427
        %v2213 = vpop.permute.xlu0 %2212
        %2215 = vset.pattern.permute.xlu0 16
        %2216 = vperm.xlu0 %2215, %v428
        %v2217 = vpop.permute.xlu0 %2216
        %2219 = vset.pattern.permute.xlu0 16
        %2220 = vperm.xlu0 %2219, %v429
        %v2221 = vpop.permute.xlu0 %2220
        %2223 = vset.pattern.permute.xlu0 16
        %2224 = vperm.xlu0 %2223, %v430
        %v2225 = vpop.permute.xlu0 %2224
        %2227 = vset.pattern.permute.xlu0 16
        %2228 = vperm.xlu0 %2227, %v431
        %v2229 = vpop.permute.xlu0 %2228
        %2231 = vset.pattern.permute.xlu0 16
        %2232 = vperm.xlu0 %2231, %v432
        %v2233 = vpop.permute.xlu0 %2232
        %v2235 = vmul.f32 %v2205, %v2200
        %v2236 = vmul.f32 %v2205, %v2202
        %v2237 = vmul.f32 %v2209, %v2200
        %v2238 = vmul.f32 %v2209, %v2202
        %v2239 = vmul.f32 %v2213, %v2200
        %v2240 = vmul.f32 %v2213, %v2202
        %v2241 = vmul.f32 %v2217, %v2200
        %v2242 = vmul.f32 %v2217, %v2202
        %v2243 = vmul.f32 %v2221, %v2200
        %v2244 = vmul.f32 %v2221, %v2202
        %v2245 = vmul.f32 %v2225, %v2200
        %v2246 = vmul.f32 %v2225, %v2202
        %v2247 = vmul.f32 %v2229, %v2200
        %v2248 = vmul.f32 %v2229, %v2202
        %v2249 = vmul.f32 %v2233, %v2200
        %v2250 = vmul.f32 %v2233, %v2202
        %v2267 = vrot.slane %v2235, 3
        %v2268 = vrot.slane %v2236, 3
        %v2269 = vsel %vm361, %v2267, %v2268
        %v2270 = vrot.slane %v2237, 3
        %v2271 = vrot.slane %v2238, 3
        %v2272 = vsel %vm361, %v2270, %v2271
        %v2273 = vrot.slane %v2239, 3
        %v2274 = vrot.slane %v2240, 3
        %v2275 = vsel %vm361, %v2273, %v2274
        %v2276 = vrot.slane %v2241, 3
        %v2277 = vrot.slane %v2242, 3
        %v2278 = vsel %vm361, %v2276, %v2277
        %v2279 = vrot.slane %v2243, 3
        %v2280 = vrot.slane %v2244, 3
        %v2281 = vsel %vm361, %v2279, %v2280
        %v2282 = vrot.slane %v2245, 3
        %v2283 = vrot.slane %v2246, 3
        %v2284 = vsel %vm361, %v2282, %v2283
        %v2285 = vrot.slane %v2247, 3
        %v2286 = vrot.slane %v2248, 3
        %v2287 = vsel %vm361, %v2285, %v2286
        %v2288 = vrot.slane %v2249, 3
        %v2289 = vrot.slane %v2250, 3
        %v2290 = vsel %vm361, %v2288, %v2289
        %2291 = vrot.lane.b32.xlu0 %v2269, 127
        %v2292 = vpop.permute.xlu0 %2291
        %2293 = vrot.lane.b32.xlu0 %v2272, 127
        %v2294 = vpop.permute.xlu0 %2293
        %2295 = vrot.lane.b32.xlu0 %v2275, 127
        %v2296 = vpop.permute.xlu0 %2295
        %2297 = vrot.lane.b32.xlu0 %v2278, 127
        %v2298 = vpop.permute.xlu0 %2297
        %2299 = vrot.lane.b32.xlu0 %v2281, 127
        %v2300 = vpop.permute.xlu0 %2299
        %2301 = vrot.lane.b32.xlu0 %v2284, 127
        %v2302 = vpop.permute.xlu0 %2301
        %2303 = vrot.lane.b32.xlu0 %v2287, 127
        %v2304 = vpop.permute.xlu0 %2303
        %2305 = vrot.lane.b32.xlu0 %v2290, 127
        %v2306 = vpop.permute.xlu0 %2305
        %v2315 = vadd.f32 %v2186, %v2292
        %v2316 = vadd.f32 %v2187, %v2294
        %v2317 = vadd.f32 %v2188, %v2296
        %v2318 = vadd.f32 %v2189, %v2298
        %v2319 = vadd.f32 %v2190, %v2300
        %v2320 = vadd.f32 %v2191, %v2302
        %v2321 = vadd.f32 %v2192, %v2304
        %v2322 = vadd.f32 %v2193, %v2306
        %2323 = vrot.lane.b32.xlu0 %v2082, 2
        %v2324 = vpop.permute.xlu0 %2323
        %v2326 = vsub.f32 %v167, %v2324
        %v2327 = vsub.f32 %v168, %v2324
        %v2328 = vmul.f32 %v2326, 1.442695
        %v2329 = vpow.pop %v2328
        %v2330 = vmul.f32 %v2327, 1.442695
        %v2331 = vpow.pop %v2330
        %2332 = vset.pattern.permute.xlu0 17
        %2333 = vperm.xlu0 %2332, %v425
        %v2334 = vpop.permute.xlu0 %2333
        %2336 = vset.pattern.permute.xlu0 17
        %2337 = vperm.xlu0 %2336, %v426
        %v2338 = vpop.permute.xlu0 %2337
        %2340 = vset.pattern.permute.xlu0 17
        %2341 = vperm.xlu0 %2340, %v427
        %v2342 = vpop.permute.xlu0 %2341
        %2344 = vset.pattern.permute.xlu0 17
        %2345 = vperm.xlu0 %2344, %v428
        %v2346 = vpop.permute.xlu0 %2345
        %2348 = vset.pattern.permute.xlu0 17
        %2349 = vperm.xlu0 %2348, %v429
        %v2350 = vpop.permute.xlu0 %2349
        %2352 = vset.pattern.permute.xlu0 17
        %2353 = vperm.xlu0 %2352, %v430
        %v2354 = vpop.permute.xlu0 %2353
        %2356 = vset.pattern.permute.xlu0 17
        %2357 = vperm.xlu0 %2356, %v431
        %v2358 = vpop.permute.xlu0 %2357
        %2360 = vset.pattern.permute.xlu0 17
        %2361 = vperm.xlu0 %2360, %v432
        %v2362 = vpop.permute.xlu0 %2361
        %v2364 = vmul.f32 %v2334, %v2329
        %v2365 = vmul.f32 %v2334, %v2331
        %v2366 = vmul.f32 %v2338, %v2329
        %v2367 = vmul.f32 %v2338, %v2331
        %v2368 = vmul.f32 %v2342, %v2329
        %v2369 = vmul.f32 %v2342, %v2331
        %v2370 = vmul.f32 %v2346, %v2329
        %v2371 = vmul.f32 %v2346, %v2331
        %v2372 = vmul.f32 %v2350, %v2329
        %v2373 = vmul.f32 %v2350, %v2331
        %v2374 = vmul.f32 %v2354, %v2329
        %v2375 = vmul.f32 %v2354, %v2331
        %v2376 = vmul.f32 %v2358, %v2329
        %v2377 = vmul.f32 %v2358, %v2331
        %v2378 = vmul.f32 %v2362, %v2329
        %v2379 = vmul.f32 %v2362, %v2331
        %v2396 = vrot.slane %v2364, 3
        %v2397 = vrot.slane %v2365, 3
        %v2398 = vsel %vm361, %v2396, %v2397
        %v2399 = vrot.slane %v2366, 3
        %v2400 = vrot.slane %v2367, 3
        %v2401 = vsel %vm361, %v2399, %v2400
        %v2402 = vrot.slane %v2368, 3
        %v2403 = vrot.slane %v2369, 3
        %v2404 = vsel %vm361, %v2402, %v2403
        %v2405 = vrot.slane %v2370, 3
        %v2406 = vrot.slane %v2371, 3
        %v2407 = vsel %vm361, %v2405, %v2406
        %v2408 = vrot.slane %v2372, 3
        %v2409 = vrot.slane %v2373, 3
        %v2410 = vsel %vm361, %v2408, %v2409
        %v2411 = vrot.slane %v2374, 3
        %v2412 = vrot.slane %v2375, 3
        %v2413 = vsel %vm361, %v2411, %v2412
        %v2414 = vrot.slane %v2376, 3
        %v2415 = vrot.slane %v2377, 3
        %v2416 = vsel %vm361, %v2414, %v2415
        %v2417 = vrot.slane %v2378, 3
        %v2418 = vrot.slane %v2379, 3
        %v2419 = vsel %vm361, %v2417, %v2418
        %2420 = vrot.lane.b32.xlu0 %v2398, 126
        %v2421 = vpop.permute.xlu0 %2420
        %2422 = vrot.lane.b32.xlu0 %v2401, 126
        %v2423 = vpop.permute.xlu0 %2422
        %2424 = vrot.lane.b32.xlu0 %v2404, 126
        %v2425 = vpop.permute.xlu0 %2424
        %2426 = vrot.lane.b32.xlu0 %v2407, 126
        %v2427 = vpop.permute.xlu0 %2426
        %2428 = vrot.lane.b32.xlu0 %v2410, 126
        %v2429 = vpop.permute.xlu0 %2428
        %2430 = vrot.lane.b32.xlu0 %v2413, 126
        %v2431 = vpop.permute.xlu0 %2430
        %2432 = vrot.lane.b32.xlu0 %v2416, 126
        %v2433 = vpop.permute.xlu0 %2432
        %2434 = vrot.lane.b32.xlu0 %v2419, 126
        %v2435 = vpop.permute.xlu0 %2434
        %v2444 = vadd.f32 %v2315, %v2421
        %v2445 = vadd.f32 %v2316, %v2423
        %v2446 = vadd.f32 %v2317, %v2425
        %v2447 = vadd.f32 %v2318, %v2427
        %v2448 = vadd.f32 %v2319, %v2429
        %v2449 = vadd.f32 %v2320, %v2431
        %v2450 = vadd.f32 %v2321, %v2433
        %v2451 = vadd.f32 %v2322, %v2435
        %2452 = vrot.lane.b32.xlu0 %v2082, 3
        %v2453 = vpop.permute.xlu0 %2452
        %v2455 = vsub.f32 %v167, %v2453
        %v2456 = vsub.f32 %v168, %v2453
        %v2457 = vmul.f32 %v2455, 1.442695
        %v2458 = vpow.pop %v2457
        %v2459 = vmul.f32 %v2456, 1.442695
        %v2460 = vpow.pop %v2459
        %2461 = vset.pattern.permute.xlu0 18
        %2462 = vperm.xlu0 %2461, %v425
        %v2463 = vpop.permute.xlu0 %2462
        %2465 = vset.pattern.permute.xlu0 18
        %2466 = vperm.xlu0 %2465, %v426
        %v2467 = vpop.permute.xlu0 %2466
        %2469 = vset.pattern.permute.xlu0 18
        %2470 = vperm.xlu0 %2469, %v427
        %v2471 = vpop.permute.xlu0 %2470
        %2473 = vset.pattern.permute.xlu0 18
        %2474 = vperm.xlu0 %2473, %v428
        %v2475 = vpop.permute.xlu0 %2474
        %2477 = vset.pattern.permute.xlu0 18
        %2478 = vperm.xlu0 %2477, %v429
        %v2479 = vpop.permute.xlu0 %2478
        %2481 = vset.pattern.permute.xlu0 18
        %2482 = vperm.xlu0 %2481, %v430
        %v2483 = vpop.permute.xlu0 %2482
        %2485 = vset.pattern.permute.xlu0 18
        %2486 = vperm.xlu0 %2485, %v431
        %v2487 = vpop.permute.xlu0 %2486
        %2489 = vset.pattern.permute.xlu0 18
        %2490 = vperm.xlu0 %2489, %v432
        %v2491 = vpop.permute.xlu0 %2490
        %v2493 = vmul.f32 %v2463, %v2458
        %v2494 = vmul.f32 %v2463, %v2460
        %v2495 = vmul.f32 %v2467, %v2458
        %v2496 = vmul.f32 %v2467, %v2460
        %v2497 = vmul.f32 %v2471, %v2458
        %v2498 = vmul.f32 %v2471, %v2460
        %v2499 = vmul.f32 %v2475, %v2458
        %v2500 = vmul.f32 %v2475, %v2460
        %v2501 = vmul.f32 %v2479, %v2458
        %v2502 = vmul.f32 %v2479, %v2460
        %v2503 = vmul.f32 %v2483, %v2458
        %v2504 = vmul.f32 %v2483, %v2460
        %v2505 = vmul.f32 %v2487, %v2458
        %v2506 = vmul.f32 %v2487, %v2460
        %v2507 = vmul.f32 %v2491, %v2458
        %v2508 = vmul.f32 %v2491, %v2460
        %v2525 = vrot.slane %v2493, 3
        %v2526 = vrot.slane %v2494, 3
        %v2527 = vsel %vm361, %v2525, %v2526
        %v2528 = vrot.slane %v2495, 3
        %v2529 = vrot.slane %v2496, 3
        %v2530 = vsel %vm361, %v2528, %v2529
        %v2531 = vrot.slane %v2497, 3
        %v2532 = vrot.slane %v2498, 3
        %v2533 = vsel %vm361, %v2531, %v2532
        %v2534 = vrot.slane %v2499, 3
        %v2535 = vrot.slane %v2500, 3
        %v2536 = vsel %vm361, %v2534, %v2535
        %v2537 = vrot.slane %v2501, 3
        %v2538 = vrot.slane %v2502, 3
        %v2539 = vsel %vm361, %v2537, %v2538
        %v2540 = vrot.slane %v2503, 3
        %v2541 = vrot.slane %v2504, 3
        %v2542 = vsel %vm361, %v2540, %v2541
        %v2543 = vrot.slane %v2505, 3
        %v2544 = vrot.slane %v2506, 3
        %v2545 = vsel %vm361, %v2543, %v2544
        %v2546 = vrot.slane %v2507, 3
        %v2547 = vrot.slane %v2508, 3
        %v2548 = vsel %vm361, %v2546, %v2547
        %2549 = vrot.lane.b32.xlu0 %v2527, 125
        %v2550 = vpop.permute.xlu0 %2549
        %2551 = vrot.lane.b32.xlu0 %v2530, 125
        %v2552 = vpop.permute.xlu0 %2551
        %2553 = vrot.lane.b32.xlu0 %v2533, 125
        %v2554 = vpop.permute.xlu0 %2553
        %2555 = vrot.lane.b32.xlu0 %v2536, 125
        %v2556 = vpop.permute.xlu0 %2555
        %2557 = vrot.lane.b32.xlu0 %v2539, 125
        %v2558 = vpop.permute.xlu0 %2557
        %2559 = vrot.lane.b32.xlu0 %v2542, 125
        %v2560 = vpop.permute.xlu0 %2559
        %2561 = vrot.lane.b32.xlu0 %v2545, 125
        %v2562 = vpop.permute.xlu0 %2561
        %2563 = vrot.lane.b32.xlu0 %v2548, 125
        %v2564 = vpop.permute.xlu0 %2563
        %v2573 = vadd.f32 %v2444, %v2550
        %v2574 = vadd.f32 %v2445, %v2552
        %v2575 = vadd.f32 %v2446, %v2554
        %v2576 = vadd.f32 %v2447, %v2556
        %v2577 = vadd.f32 %v2448, %v2558
        %v2578 = vadd.f32 %v2449, %v2560
        %v2579 = vadd.f32 %v2450, %v2562
        %v2580 = vadd.f32 %v2451, %v2564
        %2581 = vrot.lane.b32.xlu0 %v2082, 4
        %v2582 = vpop.permute.xlu0 %2581
        %v2584 = vsub.f32 %v167, %v2582
        %v2585 = vsub.f32 %v168, %v2582
        %v2586 = vmul.f32 %v2584, 1.442695
        %v2587 = vpow.pop %v2586
        %v2588 = vmul.f32 %v2585, 1.442695
        %v2589 = vpow.pop %v2588
        %2590 = vset.pattern.permute.xlu0 19
        %2591 = vperm.xlu0 %2590, %v425
        %v2592 = vpop.permute.xlu0 %2591
        %2594 = vset.pattern.permute.xlu0 19
        %2595 = vperm.xlu0 %2594, %v426
        %v2596 = vpop.permute.xlu0 %2595
        %2598 = vset.pattern.permute.xlu0 19
        %2599 = vperm.xlu0 %2598, %v427
        %v2600 = vpop.permute.xlu0 %2599
        %2602 = vset.pattern.permute.xlu0 19
        %2603 = vperm.xlu0 %2602, %v428
        %v2604 = vpop.permute.xlu0 %2603
        %2606 = vset.pattern.permute.xlu0 19
        %2607 = vperm.xlu0 %2606, %v429
        %v2608 = vpop.permute.xlu0 %2607
        %2610 = vset.pattern.permute.xlu0 19
        %2611 = vperm.xlu0 %2610, %v430
        %v2612 = vpop.permute.xlu0 %2611
        %2614 = vset.pattern.permute.xlu0 19
        %2615 = vperm.xlu0 %2614, %v431
        %v2616 = vpop.permute.xlu0 %2615
        %2618 = vset.pattern.permute.xlu0 19
        %2619 = vperm.xlu0 %2618, %v432
        %v2620 = vpop.permute.xlu0 %2619
        %v2622 = vmul.f32 %v2592, %v2587
        %v2623 = vmul.f32 %v2592, %v2589
        %v2624 = vmul.f32 %v2596, %v2587
        %v2625 = vmul.f32 %v2596, %v2589
        %v2626 = vmul.f32 %v2600, %v2587
        %v2627 = vmul.f32 %v2600, %v2589
        %v2628 = vmul.f32 %v2604, %v2587
        %v2629 = vmul.f32 %v2604, %v2589
        %v2630 = vmul.f32 %v2608, %v2587
        %v2631 = vmul.f32 %v2608, %v2589
        %v2632 = vmul.f32 %v2612, %v2587
        %v2633 = vmul.f32 %v2612, %v2589
        %v2634 = vmul.f32 %v2616, %v2587
        %v2635 = vmul.f32 %v2616, %v2589
        %v2636 = vmul.f32 %v2620, %v2587
        %v2637 = vmul.f32 %v2620, %v2589
        %v2654 = vrot.slane %v2622, 3
        %v2655 = vrot.slane %v2623, 3
        %v2656 = vsel %vm361, %v2654, %v2655
        %v2657 = vrot.slane %v2624, 3
        %v2658 = vrot.slane %v2625, 3
        %v2659 = vsel %vm361, %v2657, %v2658
        %v2660 = vrot.slane %v2626, 3
        %v2661 = vrot.slane %v2627, 3
        %v2662 = vsel %vm361, %v2660, %v2661
        %v2663 = vrot.slane %v2628, 3
        %v2664 = vrot.slane %v2629, 3
        %v2665 = vsel %vm361, %v2663, %v2664
        %v2666 = vrot.slane %v2630, 3
        %v2667 = vrot.slane %v2631, 3
        %v2668 = vsel %vm361, %v2666, %v2667
        %v2669 = vrot.slane %v2632, 3
        %v2670 = vrot.slane %v2633, 3
        %v2671 = vsel %vm361, %v2669, %v2670
        %v2672 = vrot.slane %v2634, 3
        %v2673 = vrot.slane %v2635, 3
        %v2674 = vsel %vm361, %v2672, %v2673
        %v2675 = vrot.slane %v2636, 3
        %v2676 = vrot.slane %v2637, 3
        %v2677 = vsel %vm361, %v2675, %v2676
        %2678 = vrot.lane.b32.xlu0 %v2656, 124
        %v2679 = vpop.permute.xlu0 %2678
        %2680 = vrot.lane.b32.xlu0 %v2659, 124
        %v2681 = vpop.permute.xlu0 %2680
        %2682 = vrot.lane.b32.xlu0 %v2662, 124
        %v2683 = vpop.permute.xlu0 %2682
        %2684 = vrot.lane.b32.xlu0 %v2665, 124
        %v2685 = vpop.permute.xlu0 %2684
        %2686 = vrot.lane.b32.xlu0 %v2668, 124
        %v2687 = vpop.permute.xlu0 %2686
        %2688 = vrot.lane.b32.xlu0 %v2671, 124
        %v2689 = vpop.permute.xlu0 %2688
        %2690 = vrot.lane.b32.xlu0 %v2674, 124
        %v2691 = vpop.permute.xlu0 %2690
        %2692 = vrot.lane.b32.xlu0 %v2677, 124
        %v2693 = vpop.permute.xlu0 %2692
        %v2702 = vadd.f32 %v2573, %v2679
        %v2703 = vadd.f32 %v2574, %v2681
        %v2704 = vadd.f32 %v2575, %v2683
        %v2705 = vadd.f32 %v2576, %v2685
        %v2706 = vadd.f32 %v2577, %v2687
        %v2707 = vadd.f32 %v2578, %v2689
        %v2708 = vadd.f32 %v2579, %v2691
        %v2709 = vadd.f32 %v2580, %v2693
        %v2710 = vrot.slane %v405, 4
        %v2712 = vsub.f32 %v167, %v2710
        %v2713 = vsub.f32 %v168, %v2710
        %v2714 = vmul.f32 %v2712, 1.442695
        %v2715 = vpow.pop %v2714
        %v2716 = vmul.f32 %v2713, 1.442695
        %v2717 = vpow.pop %v2716
        %2718 = vset.pattern.permute.xlu0 20
        %2719 = vperm.xlu0 %2718, %v425
        %v2720 = vpop.permute.xlu0 %2719
        %2722 = vset.pattern.permute.xlu0 20
        %2723 = vperm.xlu0 %2722, %v426
        %v2724 = vpop.permute.xlu0 %2723
        %2726 = vset.pattern.permute.xlu0 20
        %2727 = vperm.xlu0 %2726, %v427
        %v2728 = vpop.permute.xlu0 %2727
        %2730 = vset.pattern.permute.xlu0 20
        %2731 = vperm.xlu0 %2730, %v428
        %v2732 = vpop.permute.xlu0 %2731
        %2734 = vset.pattern.permute.xlu0 20
        %2735 = vperm.xlu0 %2734, %v429
        %v2736 = vpop.permute.xlu0 %2735
        %2738 = vset.pattern.permute.xlu0 20
        %2739 = vperm.xlu0 %2738, %v430
        %v2740 = vpop.permute.xlu0 %2739
        %2742 = vset.pattern.permute.xlu0 20
        %2743 = vperm.xlu0 %2742, %v431
        %v2744 = vpop.permute.xlu0 %2743
        %2746 = vset.pattern.permute.xlu0 20
        %2747 = vperm.xlu0 %2746, %v432
        %v2748 = vpop.permute.xlu0 %2747
        %v2750 = vmul.f32 %v2720, %v2715
        %v2751 = vmul.f32 %v2720, %v2717
        %v2752 = vmul.f32 %v2724, %v2715
        %v2753 = vmul.f32 %v2724, %v2717
        %v2754 = vmul.f32 %v2728, %v2715
        %v2755 = vmul.f32 %v2728, %v2717
        %v2756 = vmul.f32 %v2732, %v2715
        %v2757 = vmul.f32 %v2732, %v2717
        %v2758 = vmul.f32 %v2736, %v2715
        %v2759 = vmul.f32 %v2736, %v2717
        %v2760 = vmul.f32 %v2740, %v2715
        %v2761 = vmul.f32 %v2740, %v2717
        %v2762 = vmul.f32 %v2744, %v2715
        %v2763 = vmul.f32 %v2744, %v2717
        %v2764 = vmul.f32 %v2748, %v2715
        %v2765 = vmul.f32 %v2748, %v2717
        %v2782 = vrot.slane %v2750, 4
        %v2783 = vrot.slane %v2751, 4
        %v2784 = vsel %vm382, %v2782, %v2783
        %v2785 = vrot.slane %v2752, 4
        %v2786 = vrot.slane %v2753, 4
        %v2787 = vsel %vm382, %v2785, %v2786
        %v2788 = vrot.slane %v2754, 4
        %v2789 = vrot.slane %v2755, 4
        %v2790 = vsel %vm382, %v2788, %v2789
        %v2791 = vrot.slane %v2756, 4
        %v2792 = vrot.slane %v2757, 4
        %v2793 = vsel %vm382, %v2791, %v2792
        %v2794 = vrot.slane %v2758, 4
        %v2795 = vrot.slane %v2759, 4
        %v2796 = vsel %vm382, %v2794, %v2795
        %v2797 = vrot.slane %v2760, 4
        %v2798 = vrot.slane %v2761, 4
        %v2799 = vsel %vm382, %v2797, %v2798
        %v2800 = vrot.slane %v2762, 4
        %v2801 = vrot.slane %v2763, 4
        %v2802 = vsel %vm382, %v2800, %v2801
        %v2803 = vrot.slane %v2764, 4
        %v2804 = vrot.slane %v2765, 4
        %v2805 = vsel %vm382, %v2803, %v2804
        %v2814 = vadd.f32 %v2702, %v2784
        %v2815 = vadd.f32 %v2703, %v2787
        %v2816 = vadd.f32 %v2704, %v2790
        %v2817 = vadd.f32 %v2705, %v2793
        %v2818 = vadd.f32 %v2706, %v2796
        %v2819 = vadd.f32 %v2707, %v2799
        %v2820 = vadd.f32 %v2708, %v2802
        %v2821 = vadd.f32 %v2709, %v2805
        %2822 = vrot.lane.b32.xlu0 %v2710, 1
        %v2823 = vpop.permute.xlu0 %2822
        %v2825 = vsub.f32 %v167, %v2823
        %v2826 = vsub.f32 %v168, %v2823
        %v2827 = vmul.f32 %v2825, 1.442695
        %v2828 = vpow.pop %v2827
        %v2829 = vmul.f32 %v2826, 1.442695
        %v2830 = vpow.pop %v2829
        %2831 = vset.pattern.permute.xlu0 21
        %2832 = vperm.xlu0 %2831, %v425
        %v2833 = vpop.permute.xlu0 %2832
        %2835 = vset.pattern.permute.xlu0 21
        %2836 = vperm.xlu0 %2835, %v426
        %v2837 = vpop.permute.xlu0 %2836
        %2839 = vset.pattern.permute.xlu0 21
        %2840 = vperm.xlu0 %2839, %v427
        %v2841 = vpop.permute.xlu0 %2840
        %2843 = vset.pattern.permute.xlu0 21
        %2844 = vperm.xlu0 %2843, %v428
        %v2845 = vpop.permute.xlu0 %2844
        %2847 = vset.pattern.permute.xlu0 21
        %2848 = vperm.xlu0 %2847, %v429
        %v2849 = vpop.permute.xlu0 %2848
        %2851 = vset.pattern.permute.xlu0 21
        %2852 = vperm.xlu0 %2851, %v430
        %v2853 = vpop.permute.xlu0 %2852
        %2855 = vset.pattern.permute.xlu0 21
        %2856 = vperm.xlu0 %2855, %v431
        %v2857 = vpop.permute.xlu0 %2856
        %2859 = vset.pattern.permute.xlu0 21
        %2860 = vperm.xlu0 %2859, %v432
        %v2861 = vpop.permute.xlu0 %2860
        %v2863 = vmul.f32 %v2833, %v2828
        %v2864 = vmul.f32 %v2833, %v2830
        %v2865 = vmul.f32 %v2837, %v2828
        %v2866 = vmul.f32 %v2837, %v2830
        %v2867 = vmul.f32 %v2841, %v2828
        %v2868 = vmul.f32 %v2841, %v2830
        %v2869 = vmul.f32 %v2845, %v2828
        %v2870 = vmul.f32 %v2845, %v2830
        %v2871 = vmul.f32 %v2849, %v2828
        %v2872 = vmul.f32 %v2849, %v2830
        %v2873 = vmul.f32 %v2853, %v2828
        %v2874 = vmul.f32 %v2853, %v2830
        %v2875 = vmul.f32 %v2857, %v2828
        %v2876 = vmul.f32 %v2857, %v2830
        %v2877 = vmul.f32 %v2861, %v2828
        %v2878 = vmul.f32 %v2861, %v2830
        %v2895 = vrot.slane %v2863, 4
        %v2896 = vrot.slane %v2864, 4
        %v2897 = vsel %vm382, %v2895, %v2896
        %v2898 = vrot.slane %v2865, 4
        %v2899 = vrot.slane %v2866, 4
        %v2900 = vsel %vm382, %v2898, %v2899
        %v2901 = vrot.slane %v2867, 4
        %v2902 = vrot.slane %v2868, 4
        %v2903 = vsel %vm382, %v2901, %v2902
        %v2904 = vrot.slane %v2869, 4
        %v2905 = vrot.slane %v2870, 4
        %v2906 = vsel %vm382, %v2904, %v2905
        %v2907 = vrot.slane %v2871, 4
        %v2908 = vrot.slane %v2872, 4
        %v2909 = vsel %vm382, %v2907, %v2908
        %v2910 = vrot.slane %v2873, 4
        %v2911 = vrot.slane %v2874, 4
        %v2912 = vsel %vm382, %v2910, %v2911
        %v2913 = vrot.slane %v2875, 4
        %v2914 = vrot.slane %v2876, 4
        %v2915 = vsel %vm382, %v2913, %v2914
        %v2916 = vrot.slane %v2877, 4
        %v2917 = vrot.slane %v2878, 4
        %v2918 = vsel %vm382, %v2916, %v2917
        %2919 = vrot.lane.b32.xlu0 %v2897, 127
        %v2920 = vpop.permute.xlu0 %2919
        %2921 = vrot.lane.b32.xlu0 %v2900, 127
        %v2922 = vpop.permute.xlu0 %2921
        %2923 = vrot.lane.b32.xlu0 %v2903, 127
        %v2924 = vpop.permute.xlu0 %2923
        %2925 = vrot.lane.b32.xlu0 %v2906, 127
        %v2926 = vpop.permute.xlu0 %2925
        %2927 = vrot.lane.b32.xlu0 %v2909, 127
        %v2928 = vpop.permute.xlu0 %2927
        %2929 = vrot.lane.b32.xlu0 %v2912, 127
        %v2930 = vpop.permute.xlu0 %2929
        %2931 = vrot.lane.b32.xlu0 %v2915, 127
        %v2932 = vpop.permute.xlu0 %2931
        %2933 = vrot.lane.b32.xlu0 %v2918, 127
        %v2934 = vpop.permute.xlu0 %2933
        %v2943 = vadd.f32 %v2814, %v2920
        %v2944 = vadd.f32 %v2815, %v2922
        %v2945 = vadd.f32 %v2816, %v2924
        %v2946 = vadd.f32 %v2817, %v2926
        %v2947 = vadd.f32 %v2818, %v2928
        %v2948 = vadd.f32 %v2819, %v2930
        %v2949 = vadd.f32 %v2820, %v2932
        %v2950 = vadd.f32 %v2821, %v2934
        %2951 = vrot.lane.b32.xlu0 %v2710, 2
        %v2952 = vpop.permute.xlu0 %2951
        %v2954 = vsub.f32 %v167, %v2952
        %v2955 = vsub.f32 %v168, %v2952
        %v2956 = vmul.f32 %v2954, 1.442695
        %v2957 = vpow.pop %v2956
        %v2958 = vmul.f32 %v2955, 1.442695
        %v2959 = vpow.pop %v2958
        %2960 = vset.pattern.permute.xlu0 22
        %2961 = vperm.xlu0 %2960, %v425
        %v2962 = vpop.permute.xlu0 %2961
        %2964 = vset.pattern.permute.xlu0 22
        %2965 = vperm.xlu0 %2964, %v426
        %v2966 = vpop.permute.xlu0 %2965
        %2968 = vset.pattern.permute.xlu0 22
        %2969 = vperm.xlu0 %2968, %v427
        %v2970 = vpop.permute.xlu0 %2969
        %2972 = vset.pattern.permute.xlu0 22
        %2973 = vperm.xlu0 %2972, %v428
        %v2974 = vpop.permute.xlu0 %2973
        %2976 = vset.pattern.permute.xlu0 22
        %2977 = vperm.xlu0 %2976, %v429
        %v2978 = vpop.permute.xlu0 %2977
        %2980 = vset.pattern.permute.xlu0 22
        %2981 = vperm.xlu0 %2980, %v430
        %v2982 = vpop.permute.xlu0 %2981
        %2984 = vset.pattern.permute.xlu0 22
        %2985 = vperm.xlu0 %2984, %v431
        %v2986 = vpop.permute.xlu0 %2985
        %2988 = vset.pattern.permute.xlu0 22
        %2989 = vperm.xlu0 %2988, %v432
        %v2990 = vpop.permute.xlu0 %2989
        %v2992 = vmul.f32 %v2962, %v2957
        %v2993 = vmul.f32 %v2962, %v2959
        %v2994 = vmul.f32 %v2966, %v2957
        %v2995 = vmul.f32 %v2966, %v2959
        %v2996 = vmul.f32 %v2970, %v2957
        %v2997 = vmul.f32 %v2970, %v2959
        %v2998 = vmul.f32 %v2974, %v2957
        %v2999 = vmul.f32 %v2974, %v2959
        %v3000 = vmul.f32 %v2978, %v2957
        %v3001 = vmul.f32 %v2978, %v2959
        %v3002 = vmul.f32 %v2982, %v2957
        %v3003 = vmul.f32 %v2982, %v2959
        %v3004 = vmul.f32 %v2986, %v2957
        %v3005 = vmul.f32 %v2986, %v2959
        %v3006 = vmul.f32 %v2990, %v2957
        %v3007 = vmul.f32 %v2990, %v2959
        %v3024 = vrot.slane %v2992, 4
        %v3025 = vrot.slane %v2993, 4
        %v3026 = vsel %vm382, %v3024, %v3025
        %v3027 = vrot.slane %v2994, 4
        %v3028 = vrot.slane %v2995, 4
        %v3029 = vsel %vm382, %v3027, %v3028
        %v3030 = vrot.slane %v2996, 4
        %v3031 = vrot.slane %v2997, 4
        %v3032 = vsel %vm382, %v3030, %v3031
        %v3033 = vrot.slane %v2998, 4
        %v3034 = vrot.slane %v2999, 4
        %v3035 = vsel %vm382, %v3033, %v3034
        %v3036 = vrot.slane %v3000, 4
        %v3037 = vrot.slane %v3001, 4
        %v3038 = vsel %vm382, %v3036, %v3037
        %v3039 = vrot.slane %v3002, 4
        %v3040 = vrot.slane %v3003, 4
        %v3041 = vsel %vm382, %v3039, %v3040
        %v3042 = vrot.slane %v3004, 4
        %v3043 = vrot.slane %v3005, 4
        %v3044 = vsel %vm382, %v3042, %v3043
        %v3045 = vrot.slane %v3006, 4
        %v3046 = vrot.slane %v3007, 4
        %v3047 = vsel %vm382, %v3045, %v3046
        %3048 = vrot.lane.b32.xlu0 %v3026, 126
        %v3049 = vpop.permute.xlu0 %3048
        %3050 = vrot.lane.b32.xlu0 %v3029, 126
        %v3051 = vpop.permute.xlu0 %3050
        %3052 = vrot.lane.b32.xlu0 %v3032, 126
        %v3053 = vpop.permute.xlu0 %3052
        %3054 = vrot.lane.b32.xlu0 %v3035, 126
        %v3055 = vpop.permute.xlu0 %3054
        %3056 = vrot.lane.b32.xlu0 %v3038, 126
        %v3057 = vpop.permute.xlu0 %3056
        %3058 = vrot.lane.b32.xlu0 %v3041, 126
        %v3059 = vpop.permute.xlu0 %3058
        %3060 = vrot.lane.b32.xlu0 %v3044, 126
        %v3061 = vpop.permute.xlu0 %3060
        %3062 = vrot.lane.b32.xlu0 %v3047, 126
        %v3063 = vpop.permute.xlu0 %3062
        %v3072 = vadd.f32 %v2943, %v3049
        %v3073 = vadd.f32 %v2944, %v3051
        %v3074 = vadd.f32 %v2945, %v3053
        %v3075 = vadd.f32 %v2946, %v3055
        %v3076 = vadd.f32 %v2947, %v3057
        %v3077 = vadd.f32 %v2948, %v3059
        %v3078 = vadd.f32 %v2949, %v3061
        %v3079 = vadd.f32 %v2950, %v3063
        %3080 = vrot.lane.b32.xlu0 %v2710, 3
        %v3081 = vpop.permute.xlu0 %3080
        %v3083 = vsub.f32 %v167, %v3081
        %v3084 = vsub.f32 %v168, %v3081
        %v3085 = vmul.f32 %v3083, 1.442695
        %v3086 = vpow.pop %v3085
        %v3087 = vmul.f32 %v3084, 1.442695
        %v3088 = vpow.pop %v3087
        %3089 = vset.pattern.permute.xlu0 23
        %3090 = vperm.xlu0 %3089, %v425
        %v3091 = vpop.permute.xlu0 %3090
        %3093 = vset.pattern.permute.xlu0 23
        %3094 = vperm.xlu0 %3093, %v426
        %v3095 = vpop.permute.xlu0 %3094
        %3097 = vset.pattern.permute.xlu0 23
        %3098 = vperm.xlu0 %3097, %v427
        %v3099 = vpop.permute.xlu0 %3098
        %3101 = vset.pattern.permute.xlu0 23
        %3102 = vperm.xlu0 %3101, %v428
        %v3103 = vpop.permute.xlu0 %3102
        %3105 = vset.pattern.permute.xlu0 23
        %3106 = vperm.xlu0 %3105, %v429
        %v3107 = vpop.permute.xlu0 %3106
        %3109 = vset.pattern.permute.xlu0 23
        %3110 = vperm.xlu0 %3109, %v430
        %v3111 = vpop.permute.xlu0 %3110
        %3113 = vset.pattern.permute.xlu0 23
        %3114 = vperm.xlu0 %3113, %v431
        %v3115 = vpop.permute.xlu0 %3114
        %3117 = vset.pattern.permute.xlu0 23
        %3118 = vperm.xlu0 %3117, %v432
        %v3119 = vpop.permute.xlu0 %3118
        %v3121 = vmul.f32 %v3091, %v3086
        %v3122 = vmul.f32 %v3091, %v3088
        %v3123 = vmul.f32 %v3095, %v3086
        %v3124 = vmul.f32 %v3095, %v3088
        %v3125 = vmul.f32 %v3099, %v3086
        %v3126 = vmul.f32 %v3099, %v3088
        %v3127 = vmul.f32 %v3103, %v3086
        %v3128 = vmul.f32 %v3103, %v3088
        %v3129 = vmul.f32 %v3107, %v3086
        %v3130 = vmul.f32 %v3107, %v3088
        %v3131 = vmul.f32 %v3111, %v3086
        %v3132 = vmul.f32 %v3111, %v3088
        %v3133 = vmul.f32 %v3115, %v3086
        %v3134 = vmul.f32 %v3115, %v3088
        %v3135 = vmul.f32 %v3119, %v3086
        %v3136 = vmul.f32 %v3119, %v3088
        %v3153 = vrot.slane %v3121, 4
        %v3154 = vrot.slane %v3122, 4
        %v3155 = vsel %vm382, %v3153, %v3154
        %v3156 = vrot.slane %v3123, 4
        %v3157 = vrot.slane %v3124, 4
        %v3158 = vsel %vm382, %v3156, %v3157
        %v3159 = vrot.slane %v3125, 4
        %v3160 = vrot.slane %v3126, 4
        %v3161 = vsel %vm382, %v3159, %v3160
        %v3162 = vrot.slane %v3127, 4
        %v3163 = vrot.slane %v3128, 4
        %v3164 = vsel %vm382, %v3162, %v3163
        %v3165 = vrot.slane %v3129, 4
        %v3166 = vrot.slane %v3130, 4
        %v3167 = vsel %vm382, %v3165, %v3166
        %v3168 = vrot.slane %v3131, 4
        %v3169 = vrot.slane %v3132, 4
        %v3170 = vsel %vm382, %v3168, %v3169
        %v3171 = vrot.slane %v3133, 4
        %v3172 = vrot.slane %v3134, 4
        %v3173 = vsel %vm382, %v3171, %v3172
        %v3174 = vrot.slane %v3135, 4
        %v3175 = vrot.slane %v3136, 4
        %v3176 = vsel %vm382, %v3174, %v3175
        %3177 = vrot.lane.b32.xlu0 %v3155, 125
        %v3178 = vpop.permute.xlu0 %3177
        %3179 = vrot.lane.b32.xlu0 %v3158, 125
        %v3180 = vpop.permute.xlu0 %3179
        %3181 = vrot.lane.b32.xlu0 %v3161, 125
        %v3182 = vpop.permute.xlu0 %3181
        %3183 = vrot.lane.b32.xlu0 %v3164, 125
        %v3184 = vpop.permute.xlu0 %3183
        %3185 = vrot.lane.b32.xlu0 %v3167, 125
        %v3186 = vpop.permute.xlu0 %3185
        %3187 = vrot.lane.b32.xlu0 %v3170, 125
        %v3188 = vpop.permute.xlu0 %3187
        %3189 = vrot.lane.b32.xlu0 %v3173, 125
        %v3190 = vpop.permute.xlu0 %3189
        %3191 = vrot.lane.b32.xlu0 %v3176, 125
        %v3192 = vpop.permute.xlu0 %3191
        %v3201 = vadd.f32 %v3072, %v3178
        %v3202 = vadd.f32 %v3073, %v3180
        %v3203 = vadd.f32 %v3074, %v3182
        %v3204 = vadd.f32 %v3075, %v3184
        %v3205 = vadd.f32 %v3076, %v3186
        %v3206 = vadd.f32 %v3077, %v3188
        %v3207 = vadd.f32 %v3078, %v3190
        %v3208 = vadd.f32 %v3079, %v3192
        %3209 = vrot.lane.b32.xlu0 %v2710, 4
        %v3210 = vpop.permute.xlu0 %3209
        %v3212 = vsub.f32 %v167, %v3210
        %v3213 = vsub.f32 %v168, %v3210
        %v3214 = vmul.f32 %v3212, 1.442695
        %v3215 = vpow.pop %v3214
        %v3216 = vmul.f32 %v3213, 1.442695
        %v3217 = vpow.pop %v3216
        %3218 = vset.pattern.permute.xlu0 24
        %3219 = vperm.xlu0 %3218, %v425
        %v3220 = vpop.permute.xlu0 %3219
        %3222 = vset.pattern.permute.xlu0 24
        %3223 = vperm.xlu0 %3222, %v426
        %v3224 = vpop.permute.xlu0 %3223
        %3226 = vset.pattern.permute.xlu0 24
        %3227 = vperm.xlu0 %3226, %v427
        %v3228 = vpop.permute.xlu0 %3227
        %3230 = vset.pattern.permute.xlu0 24
        %3231 = vperm.xlu0 %3230, %v428
        %v3232 = vpop.permute.xlu0 %3231
        %3234 = vset.pattern.permute.xlu0 24
        %3235 = vperm.xlu0 %3234, %v429
        %v3236 = vpop.permute.xlu0 %3235
        %3238 = vset.pattern.permute.xlu0 24
        %3239 = vperm.xlu0 %3238, %v430
        %v3240 = vpop.permute.xlu0 %3239
        %3242 = vset.pattern.permute.xlu0 24
        %3243 = vperm.xlu0 %3242, %v431
        %v3244 = vpop.permute.xlu0 %3243
        %3246 = vset.pattern.permute.xlu0 24
        %3247 = vperm.xlu0 %3246, %v432
        %v3248 = vpop.permute.xlu0 %3247
        %v3250 = vmul.f32 %v3220, %v3215
        %v3251 = vmul.f32 %v3220, %v3217
        %v3252 = vmul.f32 %v3224, %v3215
        %v3253 = vmul.f32 %v3224, %v3217
        %v3254 = vmul.f32 %v3228, %v3215
        %v3255 = vmul.f32 %v3228, %v3217
        %v3256 = vmul.f32 %v3232, %v3215
        %v3257 = vmul.f32 %v3232, %v3217
        %v3258 = vmul.f32 %v3236, %v3215
        %v3259 = vmul.f32 %v3236, %v3217
        %v3260 = vmul.f32 %v3240, %v3215
        %v3261 = vmul.f32 %v3240, %v3217
        %v3262 = vmul.f32 %v3244, %v3215
        %v3263 = vmul.f32 %v3244, %v3217
        %v3264 = vmul.f32 %v3248, %v3215
        %v3265 = vmul.f32 %v3248, %v3217
        %v3282 = vrot.slane %v3250, 4
        %v3283 = vrot.slane %v3251, 4
        %v3284 = vsel %vm382, %v3282, %v3283
        %v3285 = vrot.slane %v3252, 4
        %v3286 = vrot.slane %v3253, 4
        %v3287 = vsel %vm382, %v3285, %v3286
        %v3288 = vrot.slane %v3254, 4
        %v3289 = vrot.slane %v3255, 4
        %v3290 = vsel %vm382, %v3288, %v3289
        %v3291 = vrot.slane %v3256, 4
        %v3292 = vrot.slane %v3257, 4
        %v3293 = vsel %vm382, %v3291, %v3292
        %v3294 = vrot.slane %v3258, 4
        %v3295 = vrot.slane %v3259, 4
        %v3296 = vsel %vm382, %v3294, %v3295
        %v3297 = vrot.slane %v3260, 4
        %v3298 = vrot.slane %v3261, 4
        %v3299 = vsel %vm382, %v3297, %v3298
        %v3300 = vrot.slane %v3262, 4
        %v3301 = vrot.slane %v3263, 4
        %v3302 = vsel %vm382, %v3300, %v3301
        %v3303 = vrot.slane %v3264, 4
        %v3304 = vrot.slane %v3265, 4
        %v3305 = vsel %vm382, %v3303, %v3304
        %3306 = vrot.lane.b32.xlu0 %v3284, 124
        %v3307 = vpop.permute.xlu0 %3306
        %3308 = vrot.lane.b32.xlu0 %v3287, 124
        %v3309 = vpop.permute.xlu0 %3308
        %3310 = vrot.lane.b32.xlu0 %v3290, 124
        %v3311 = vpop.permute.xlu0 %3310
        %3312 = vrot.lane.b32.xlu0 %v3293, 124
        %v3313 = vpop.permute.xlu0 %3312
        %3314 = vrot.lane.b32.xlu0 %v3296, 124
        %v3315 = vpop.permute.xlu0 %3314
        %3316 = vrot.lane.b32.xlu0 %v3299, 124
        %v3317 = vpop.permute.xlu0 %3316
        %3318 = vrot.lane.b32.xlu0 %v3302, 124
        %v3319 = vpop.permute.xlu0 %3318
        %3320 = vrot.lane.b32.xlu0 %v3305, 124
        %v3321 = vpop.permute.xlu0 %3320
        %v3330 = vadd.f32 %v3201, %v3307
        %v3331 = vadd.f32 %v3202, %v3309
        %v3332 = vadd.f32 %v3203, %v3311
        %v3333 = vadd.f32 %v3204, %v3313
        %v3334 = vadd.f32 %v3205, %v3315
        %v3335 = vadd.f32 %v3206, %v3317
        %v3336 = vadd.f32 %v3207, %v3319
        %v3337 = vadd.f32 %v3208, %v3321
        %v3338 = vsub.f32 %v169, %v405
        %v3339 = vmul.f32 %v3338, 1.442695
        %v3340 = vpow.pop %v3339
        %3341 = vset.pattern.permute.xlu0 25
        %3342 = vperm.xlu0 %3341, %v425
        %v3343 = vpop.permute.xlu0 %3342
        %3345 = vset.pattern.permute.xlu0 25
        %3346 = vperm.xlu0 %3345, %v426
        %v3347 = vpop.permute.xlu0 %3346
        %3349 = vset.pattern.permute.xlu0 25
        %3350 = vperm.xlu0 %3349, %v427
        %v3351 = vpop.permute.xlu0 %3350
        %3353 = vset.pattern.permute.xlu0 25
        %3354 = vperm.xlu0 %3353, %v428
        %v3355 = vpop.permute.xlu0 %3354
        %3357 = vset.pattern.permute.xlu0 25
        %3358 = vperm.xlu0 %3357, %v429
        %v3359 = vpop.permute.xlu0 %3358
        %3361 = vset.pattern.permute.xlu0 25
        %3362 = vperm.xlu0 %3361, %v430
        %v3363 = vpop.permute.xlu0 %3362
        %3365 = vset.pattern.permute.xlu0 25
        %3366 = vperm.xlu0 %3365, %v431
        %v3367 = vpop.permute.xlu0 %3366
        %3369 = vset.pattern.permute.xlu0 25
        %3370 = vperm.xlu0 %3369, %v432
        %v3371 = vpop.permute.xlu0 %3370
        %v3373 = vmul.f32 %v3343, %v3340
        %v3374 = vmul.f32 %v3347, %v3340
        %v3375 = vmul.f32 %v3351, %v3340
        %v3376 = vmul.f32 %v3355, %v3340
        %v3377 = vmul.f32 %v3359, %v3340
        %v3378 = vmul.f32 %v3363, %v3340
        %v3379 = vmul.f32 %v3367, %v3340
        %v3380 = vmul.f32 %v3371, %v3340
        %v3381 = vadd.f32 %v3330, %v3373
        %v3382 = vadd.f32 %v3331, %v3374
        %v3383 = vadd.f32 %v3332, %v3375
        %v3384 = vadd.f32 %v3333, %v3376
        %v3385 = vadd.f32 %v3334, %v3377
        %v3386 = vadd.f32 %v3335, %v3378
        %v3387 = vadd.f32 %v3336, %v3379
        %v3388 = vadd.f32 %v3337, %v3380
        %v3389 = vsub.f32 %v169, %v483
        %v3390 = vmul.f32 %v3389, 1.442695
        %v3391 = vpow.pop %v3390
        %3392 = vset.pattern.permute.xlu0 26
        %3393 = vperm.xlu0 %3392, %v425
        %v3394 = vpop.permute.xlu0 %3393
        %3396 = vset.pattern.permute.xlu0 26
        %3397 = vperm.xlu0 %3396, %v426
        %v3398 = vpop.permute.xlu0 %3397
        %3400 = vset.pattern.permute.xlu0 26
        %3401 = vperm.xlu0 %3400, %v427
        %v3402 = vpop.permute.xlu0 %3401
        %3404 = vset.pattern.permute.xlu0 26
        %3405 = vperm.xlu0 %3404, %v428
        %v3406 = vpop.permute.xlu0 %3405
        %3408 = vset.pattern.permute.xlu0 26
        %3409 = vperm.xlu0 %3408, %v429
        %v3410 = vpop.permute.xlu0 %3409
        %3412 = vset.pattern.permute.xlu0 26
        %3413 = vperm.xlu0 %3412, %v430
        %v3414 = vpop.permute.xlu0 %3413
        %3416 = vset.pattern.permute.xlu0 26
        %3417 = vperm.xlu0 %3416, %v431
        %v3418 = vpop.permute.xlu0 %3417
        %3420 = vset.pattern.permute.xlu0 26
        %3421 = vperm.xlu0 %3420, %v432
        %v3422 = vpop.permute.xlu0 %3421
        %v3424 = vmul.f32 %v3394, %v3391
        %v3425 = vmul.f32 %v3398, %v3391
        %v3426 = vmul.f32 %v3402, %v3391
        %v3427 = vmul.f32 %v3406, %v3391
        %v3428 = vmul.f32 %v3410, %v3391
        %v3429 = vmul.f32 %v3414, %v3391
        %v3430 = vmul.f32 %v3418, %v3391
        %v3431 = vmul.f32 %v3422, %v3391
        %3440 = vrot.lane.b32.xlu0 %v3424, 127
        %v3441 = vpop.permute.xlu0 %3440
        %3442 = vrot.lane.b32.xlu0 %v3425, 127
        %v3443 = vpop.permute.xlu0 %3442
        %3444 = vrot.lane.b32.xlu0 %v3426, 127
        %v3445 = vpop.permute.xlu0 %3444
        %3446 = vrot.lane.b32.xlu0 %v3427, 127
        %v3447 = vpop.permute.xlu0 %3446
        %3448 = vrot.lane.b32.xlu0 %v3428, 127
        %v3449 = vpop.permute.xlu0 %3448
        %3450 = vrot.lane.b32.xlu0 %v3429, 127
        %v3451 = vpop.permute.xlu0 %3450
        %3452 = vrot.lane.b32.xlu0 %v3430, 127
        %v3453 = vpop.permute.xlu0 %3452
        %3454 = vrot.lane.b32.xlu0 %v3431, 127
        %v3455 = vpop.permute.xlu0 %3454
        %v3464 = vadd.f32 %v3381, %v3441
        %v3465 = vadd.f32 %v3382, %v3443
        %v3466 = vadd.f32 %v3383, %v3445
        %v3467 = vadd.f32 %v3384, %v3447
        %v3468 = vadd.f32 %v3385, %v3449
        %v3469 = vadd.f32 %v3386, %v3451
        %v3470 = vadd.f32 %v3387, %v3453
        %v3471 = vadd.f32 %v3388, %v3455
        %v3472 = vsub.f32 %v169, %v569
        %v3473 = vmul.f32 %v3472, 1.442695
        %v3474 = vpow.pop %v3473
        %3475 = vset.pattern.permute.xlu0 27
        %3476 = vperm.xlu0 %3475, %v425
        %v3477 = vpop.permute.xlu0 %3476
        %3479 = vset.pattern.permute.xlu0 27
        %3480 = vperm.xlu0 %3479, %v426
        %v3481 = vpop.permute.xlu0 %3480
        %3483 = vset.pattern.permute.xlu0 27
        %3484 = vperm.xlu0 %3483, %v427
        %v3485 = vpop.permute.xlu0 %3484
        %3487 = vset.pattern.permute.xlu0 27
        %3488 = vperm.xlu0 %3487, %v428
        %v3489 = vpop.permute.xlu0 %3488
        %3491 = vset.pattern.permute.xlu0 27
        %3492 = vperm.xlu0 %3491, %v429
        %v3493 = vpop.permute.xlu0 %3492
        %3495 = vset.pattern.permute.xlu0 27
        %3496 = vperm.xlu0 %3495, %v430
        %v3497 = vpop.permute.xlu0 %3496
        %3499 = vset.pattern.permute.xlu0 27
        %3500 = vperm.xlu0 %3499, %v431
        %v3501 = vpop.permute.xlu0 %3500
        %3503 = vset.pattern.permute.xlu0 27
        %3504 = vperm.xlu0 %3503, %v432
        %v3505 = vpop.permute.xlu0 %3504
        %v3507 = vmul.f32 %v3477, %v3474
        %v3508 = vmul.f32 %v3481, %v3474
        %v3509 = vmul.f32 %v3485, %v3474
        %v3510 = vmul.f32 %v3489, %v3474
        %v3511 = vmul.f32 %v3493, %v3474
        %v3512 = vmul.f32 %v3497, %v3474
        %v3513 = vmul.f32 %v3501, %v3474
        %v3514 = vmul.f32 %v3505, %v3474
        %3523 = vrot.lane.b32.xlu0 %v3507, 126
        %v3524 = vpop.permute.xlu0 %3523
        %3525 = vrot.lane.b32.xlu0 %v3508, 126
        %v3526 = vpop.permute.xlu0 %3525
        %3527 = vrot.lane.b32.xlu0 %v3509, 126
        %v3528 = vpop.permute.xlu0 %3527
        %3529 = vrot.lane.b32.xlu0 %v3510, 126
        %v3530 = vpop.permute.xlu0 %3529
        %3531 = vrot.lane.b32.xlu0 %v3511, 126
        %v3532 = vpop.permute.xlu0 %3531
        %3533 = vrot.lane.b32.xlu0 %v3512, 126
        %v3534 = vpop.permute.xlu0 %3533
        %3535 = vrot.lane.b32.xlu0 %v3513, 126
        %v3536 = vpop.permute.xlu0 %3535
        %3537 = vrot.lane.b32.xlu0 %v3514, 126
        %v3538 = vpop.permute.xlu0 %3537
        %v3547 = vadd.f32 %v3464, %v3524
        %v3548 = vadd.f32 %v3465, %v3526
        %v3549 = vadd.f32 %v3466, %v3528
        %v3550 = vadd.f32 %v3467, %v3530
        %v3551 = vadd.f32 %v3468, %v3532
        %v3552 = vadd.f32 %v3469, %v3534
        %v3553 = vadd.f32 %v3470, %v3536
        %v3554 = vadd.f32 %v3471, %v3538
        %v3555 = vsub.f32 %v169, %v655
        %v3556 = vmul.f32 %v3555, 1.442695
        %v3557 = vpow.pop %v3556
        %3558 = vset.pattern.permute.xlu0 28
        %3559 = vperm.xlu0 %3558, %v425
        %v3560 = vpop.permute.xlu0 %3559
        %3562 = vset.pattern.permute.xlu0 28
        %3563 = vperm.xlu0 %3562, %v426
        %v3564 = vpop.permute.xlu0 %3563
        %3566 = vset.pattern.permute.xlu0 28
        %3567 = vperm.xlu0 %3566, %v427
        %v3568 = vpop.permute.xlu0 %3567
        %3570 = vset.pattern.permute.xlu0 28
        %3571 = vperm.xlu0 %3570, %v428
        %v3572 = vpop.permute.xlu0 %3571
        %3574 = vset.pattern.permute.xlu0 28
        %3575 = vperm.xlu0 %3574, %v429
        %v3576 = vpop.permute.xlu0 %3575
        %3578 = vset.pattern.permute.xlu0 28
        %3579 = vperm.xlu0 %3578, %v430
        %v3580 = vpop.permute.xlu0 %3579
        %3582 = vset.pattern.permute.xlu0 28
        %3583 = vperm.xlu0 %3582, %v431
        %v3584 = vpop.permute.xlu0 %3583
        %3586 = vset.pattern.permute.xlu0 28
        %3587 = vperm.xlu0 %3586, %v432
        %v3588 = vpop.permute.xlu0 %3587
        %v3590 = vmul.f32 %v3560, %v3557
        %v3591 = vmul.f32 %v3564, %v3557
        %v3592 = vmul.f32 %v3568, %v3557
        %v3593 = vmul.f32 %v3572, %v3557
        %v3594 = vmul.f32 %v3576, %v3557
        %v3595 = vmul.f32 %v3580, %v3557
        %v3596 = vmul.f32 %v3584, %v3557
        %v3597 = vmul.f32 %v3588, %v3557
        %3606 = vrot.lane.b32.xlu0 %v3590, 125
        %v3607 = vpop.permute.xlu0 %3606
        %3608 = vrot.lane.b32.xlu0 %v3591, 125
        %v3609 = vpop.permute.xlu0 %3608
        %3610 = vrot.lane.b32.xlu0 %v3592, 125
        %v3611 = vpop.permute.xlu0 %3610
        %3612 = vrot.lane.b32.xlu0 %v3593, 125
        %v3613 = vpop.permute.xlu0 %3612
        %3614 = vrot.lane.b32.xlu0 %v3594, 125
        %v3615 = vpop.permute.xlu0 %3614
        %3616 = vrot.lane.b32.xlu0 %v3595, 125
        %v3617 = vpop.permute.xlu0 %3616
        %3618 = vrot.lane.b32.xlu0 %v3596, 125
        %v3619 = vpop.permute.xlu0 %3618
        %3620 = vrot.lane.b32.xlu0 %v3597, 125
        %v3621 = vpop.permute.xlu0 %3620
        %v3630 = vadd.f32 %v3547, %v3607
        %v3631 = vadd.f32 %v3548, %v3609
        %v3632 = vadd.f32 %v3549, %v3611
        %v3633 = vadd.f32 %v3550, %v3613
        %v3634 = vadd.f32 %v3551, %v3615
        %v3635 = vadd.f32 %v3552, %v3617
        %v3636 = vadd.f32 %v3553, %v3619
        %v3637 = vadd.f32 %v3554, %v3621
        %v3638 = vsub.f32 %v169, %v741
        %v3639 = vmul.f32 %v3638, 1.442695
        %v3640 = vpow.pop %v3639
        %3641 = vset.pattern.permute.xlu0 29
        %3642 = vperm.xlu0 %3641, %v425
        %v3643 = vpop.permute.xlu0 %3642
        %3645 = vset.pattern.permute.xlu0 29
        %3646 = vperm.xlu0 %3645, %v426
        %v3647 = vpop.permute.xlu0 %3646
        %3649 = vset.pattern.permute.xlu0 29
        %3650 = vperm.xlu0 %3649, %v427
        %v3651 = vpop.permute.xlu0 %3650
        %3653 = vset.pattern.permute.xlu0 29
        %3654 = vperm.xlu0 %3653, %v428
        %v3655 = vpop.permute.xlu0 %3654
        %3657 = vset.pattern.permute.xlu0 29
        %3658 = vperm.xlu0 %3657, %v429
        %v3659 = vpop.permute.xlu0 %3658
        %3661 = vset.pattern.permute.xlu0 29
        %3662 = vperm.xlu0 %3661, %v430
        %v3663 = vpop.permute.xlu0 %3662
        %3665 = vset.pattern.permute.xlu0 29
        %3666 = vperm.xlu0 %3665, %v431
        %v3667 = vpop.permute.xlu0 %3666
        %3669 = vset.pattern.permute.xlu0 29
        %3670 = vperm.xlu0 %3669, %v432
        %v3671 = vpop.permute.xlu0 %3670
        %v3673 = vmul.f32 %v3643, %v3640
        %v3674 = vmul.f32 %v3647, %v3640
        %v3675 = vmul.f32 %v3651, %v3640
        %v3676 = vmul.f32 %v3655, %v3640
        %v3677 = vmul.f32 %v3659, %v3640
        %v3678 = vmul.f32 %v3663, %v3640
        %v3679 = vmul.f32 %v3667, %v3640
        %v3680 = vmul.f32 %v3671, %v3640
        %3689 = vrot.lane.b32.xlu0 %v3673, 124
        %v3690 = vpop.permute.xlu0 %3689
        %3691 = vrot.lane.b32.xlu0 %v3674, 124
        %v3692 = vpop.permute.xlu0 %3691
        %3693 = vrot.lane.b32.xlu0 %v3675, 124
        %v3694 = vpop.permute.xlu0 %3693
        %3695 = vrot.lane.b32.xlu0 %v3676, 124
        %v3696 = vpop.permute.xlu0 %3695
        %3697 = vrot.lane.b32.xlu0 %v3677, 124
        %v3698 = vpop.permute.xlu0 %3697
        %3699 = vrot.lane.b32.xlu0 %v3678, 124
        %v3700 = vpop.permute.xlu0 %3699
        %3701 = vrot.lane.b32.xlu0 %v3679, 124
        %v3702 = vpop.permute.xlu0 %3701
        %3703 = vrot.lane.b32.xlu0 %v3680, 124
        %v3704 = vpop.permute.xlu0 %3703
        %v3713 = vadd.f32 %v3630, %v3690
        %v3714 = vadd.f32 %v3631, %v3692
        %v3715 = vadd.f32 %v3632, %v3694
        %v3716 = vadd.f32 %v3633, %v3696
        %v3717 = vadd.f32 %v3634, %v3698
        %v3718 = vadd.f32 %v3635, %v3700
        %v3719 = vadd.f32 %v3636, %v3702
        %v3720 = vadd.f32 %v3637, %v3704
        %v3721 = vsub.f32 %v169, %v826
        %v3722 = vsub.f32 %v170, %v826
        %v3723 = vmul.f32 %v3721, 1.442695
        %v3724 = vpow.pop %v3723
        %v3725 = vmul.f32 %v3722, 1.442695
        %v3726 = vpow.pop %v3725
        %3727 = vset.pattern.permute.xlu0 30
        %3728 = vperm.xlu0 %3727, %v425
        %v3729 = vpop.permute.xlu0 %3728
        %3731 = vset.pattern.permute.xlu0 30
        %3732 = vperm.xlu0 %3731, %v426
        %v3733 = vpop.permute.xlu0 %3732
        %3735 = vset.pattern.permute.xlu0 30
        %3736 = vperm.xlu0 %3735, %v427
        %v3737 = vpop.permute.xlu0 %3736
        %3739 = vset.pattern.permute.xlu0 30
        %3740 = vperm.xlu0 %3739, %v428
        %v3741 = vpop.permute.xlu0 %3740
        %3743 = vset.pattern.permute.xlu0 30
        %3744 = vperm.xlu0 %3743, %v429
        %v3745 = vpop.permute.xlu0 %3744
        %3747 = vset.pattern.permute.xlu0 30
        %3748 = vperm.xlu0 %3747, %v430
        %v3749 = vpop.permute.xlu0 %3748
        %3751 = vset.pattern.permute.xlu0 30
        %3752 = vperm.xlu0 %3751, %v431
        %v3753 = vpop.permute.xlu0 %3752
        %3755 = vset.pattern.permute.xlu0 30
        %3756 = vperm.xlu0 %3755, %v432
        %v3757 = vpop.permute.xlu0 %3756
        %v3759 = vmul.f32 %v3729, %v3724
        %v3760 = vmul.f32 %v3729, %v3726
        %v3761 = vmul.f32 %v3733, %v3724
        %v3762 = vmul.f32 %v3733, %v3726
        %v3763 = vmul.f32 %v3737, %v3724
        %v3764 = vmul.f32 %v3737, %v3726
        %v3765 = vmul.f32 %v3741, %v3724
        %v3766 = vmul.f32 %v3741, %v3726
        %v3767 = vmul.f32 %v3745, %v3724
        %v3768 = vmul.f32 %v3745, %v3726
        %v3769 = vmul.f32 %v3749, %v3724
        %v3770 = vmul.f32 %v3749, %v3726
        %v3771 = vmul.f32 %v3753, %v3724
        %v3772 = vmul.f32 %v3753, %v3726
        %v3773 = vmul.f32 %v3757, %v3724
        %v3774 = vmul.f32 %v3757, %v3726
        %v3791 = vrot.slane %v3759, 1
        %v3792 = vrot.slane %v3760, 1
        %v3793 = vsel %vm319, %v3791, %v3792
        %v3794 = vrot.slane %v3761, 1
        %v3795 = vrot.slane %v3762, 1
        %v3796 = vsel %vm319, %v3794, %v3795
        %v3797 = vrot.slane %v3763, 1
        %v3798 = vrot.slane %v3764, 1
        %v3799 = vsel %vm319, %v3797, %v3798
        %v3800 = vrot.slane %v3765, 1
        %v3801 = vrot.slane %v3766, 1
        %v3802 = vsel %vm319, %v3800, %v3801
        %v3803 = vrot.slane %v3767, 1
        %v3804 = vrot.slane %v3768, 1
        %v3805 = vsel %vm319, %v3803, %v3804
        %v3806 = vrot.slane %v3769, 1
        %v3807 = vrot.slane %v3770, 1
        %v3808 = vsel %vm319, %v3806, %v3807
        %v3809 = vrot.slane %v3771, 1
        %v3810 = vrot.slane %v3772, 1
        %v3811 = vsel %vm319, %v3809, %v3810
        %v3812 = vrot.slane %v3773, 1
        %v3813 = vrot.slane %v3774, 1
        %v3814 = vsel %vm319, %v3812, %v3813
        %v3823 = vadd.f32 %v3713, %v3793
        %v3824 = vadd.f32 %v3714, %v3796
        %v3825 = vadd.f32 %v3715, %v3799
        %v3826 = vadd.f32 %v3716, %v3802
        %v3827 = vadd.f32 %v3717, %v3805
        %v3828 = vadd.f32 %v3718, %v3808
        %v3829 = vadd.f32 %v3719, %v3811
        %v3830 = vadd.f32 %v3720, %v3814
        %v3831 = vsub.f32 %v169, %v939
        %v3832 = vsub.f32 %v170, %v939
        %v3833 = vmul.f32 %v3831, 1.442695
        %v3834 = vpow.pop %v3833
        %v3835 = vmul.f32 %v3832, 1.442695
        %v3836 = vpow.pop %v3835
        %3837 = vset.pattern.permute.xlu0 31
        %3838 = vperm.xlu0 %3837, %v425
        %v3839 = vpop.permute.xlu0 %3838
        %3841 = vset.pattern.permute.xlu0 31
        %3842 = vperm.xlu0 %3841, %v426
        %v3843 = vpop.permute.xlu0 %3842
        %3845 = vset.pattern.permute.xlu0 31
        %3846 = vperm.xlu0 %3845, %v427
        %v3847 = vpop.permute.xlu0 %3846
        %3849 = vset.pattern.permute.xlu0 31
        %3850 = vperm.xlu0 %3849, %v428
        %v3851 = vpop.permute.xlu0 %3850
        %3853 = vset.pattern.permute.xlu0 31
        %3854 = vperm.xlu0 %3853, %v429
        %v3855 = vpop.permute.xlu0 %3854
        %3857 = vset.pattern.permute.xlu0 31
        %3858 = vperm.xlu0 %3857, %v430
        %v3859 = vpop.permute.xlu0 %3858
        %3861 = vset.pattern.permute.xlu0 31
        %3862 = vperm.xlu0 %3861, %v431
        %v3863 = vpop.permute.xlu0 %3862
        %3865 = vset.pattern.permute.xlu0 31
        %3866 = vperm.xlu0 %3865, %v432
        %v3867 = vpop.permute.xlu0 %3866
        %v3869 = vmul.f32 %v3839, %v3834
        %v3870 = vmul.f32 %v3839, %v3836
        %v3871 = vmul.f32 %v3843, %v3834
        %v3872 = vmul.f32 %v3843, %v3836
        %v3873 = vmul.f32 %v3847, %v3834
        %v3874 = vmul.f32 %v3847, %v3836
        %v3875 = vmul.f32 %v3851, %v3834
        %v3876 = vmul.f32 %v3851, %v3836
        %v3877 = vmul.f32 %v3855, %v3834
        %v3878 = vmul.f32 %v3855, %v3836
        %v3879 = vmul.f32 %v3859, %v3834
        %v3880 = vmul.f32 %v3859, %v3836
        %v3881 = vmul.f32 %v3863, %v3834
        %v3882 = vmul.f32 %v3863, %v3836
        %v3883 = vmul.f32 %v3867, %v3834
        %v3884 = vmul.f32 %v3867, %v3836
        %v3901 = vrot.slane %v3869, 1
        %v3902 = vrot.slane %v3870, 1
        %v3903 = vsel %vm319, %v3901, %v3902
        %v3904 = vrot.slane %v3871, 1
        %v3905 = vrot.slane %v3872, 1
        %v3906 = vsel %vm319, %v3904, %v3905
        %v3907 = vrot.slane %v3873, 1
        %v3908 = vrot.slane %v3874, 1
        %v3909 = vsel %vm319, %v3907, %v3908
        %v3910 = vrot.slane %v3875, 1
        %v3911 = vrot.slane %v3876, 1
        %v3912 = vsel %vm319, %v3910, %v3911
        %v3913 = vrot.slane %v3877, 1
        %v3914 = vrot.slane %v3878, 1
        %v3915 = vsel %vm319, %v3913, %v3914
        %v3916 = vrot.slane %v3879, 1
        %v3917 = vrot.slane %v3880, 1
        %v3918 = vsel %vm319, %v3916, %v3917
        %v3919 = vrot.slane %v3881, 1
        %v3920 = vrot.slane %v3882, 1
        %v3921 = vsel %vm319, %v3919, %v3920
        %v3922 = vrot.slane %v3883, 1
        %v3923 = vrot.slane %v3884, 1
        %v3924 = vsel %vm319, %v3922, %v3923
        %3925 = vrot.lane.b32.xlu0 %v3903, 127
        %v3926 = vpop.permute.xlu0 %3925
        %3927 = vrot.lane.b32.xlu0 %v3906, 127
        %v3928 = vpop.permute.xlu0 %3927
        %3929 = vrot.lane.b32.xlu0 %v3909, 127
        %v3930 = vpop.permute.xlu0 %3929
        %3931 = vrot.lane.b32.xlu0 %v3912, 127
        %v3932 = vpop.permute.xlu0 %3931
        %3933 = vrot.lane.b32.xlu0 %v3915, 127
        %v3934 = vpop.permute.xlu0 %3933
        %3935 = vrot.lane.b32.xlu0 %v3918, 127
        %v3936 = vpop.permute.xlu0 %3935
        %3937 = vrot.lane.b32.xlu0 %v3921, 127
        %v3938 = vpop.permute.xlu0 %3937
        %3939 = vrot.lane.b32.xlu0 %v3924, 127
        %v3940 = vpop.permute.xlu0 %3939
        %v3949 = vadd.f32 %v3823, %v3926
        %v3950 = vadd.f32 %v3824, %v3928
        %v3951 = vadd.f32 %v3825, %v3930
        %v3952 = vadd.f32 %v3826, %v3932
        %v3953 = vadd.f32 %v3827, %v3934
        %v3954 = vadd.f32 %v3828, %v3936
        %v3955 = vadd.f32 %v3829, %v3938
        %v3956 = vadd.f32 %v3830, %v3940
        %v3957 = vsub.f32 %v169, %v1068
        %v3958 = vsub.f32 %v170, %v1068
        %v3959 = vmul.f32 %v3957, 1.442695
        %v3960 = vpow.pop %v3959
        %v3961 = vmul.f32 %v3958, 1.442695
        %v3962 = vpow.pop %v3961
        %3963 = vset.pattern.permute.xlu0 32
        %3964 = vperm.xlu0 %3963, %v425
        %v3965 = vpop.permute.xlu0 %3964
        %3967 = vset.pattern.permute.xlu0 32
        %3968 = vperm.xlu0 %3967, %v426
        %v3969 = vpop.permute.xlu0 %3968
        %3971 = vset.pattern.permute.xlu0 32
        %3972 = vperm.xlu0 %3971, %v427
        %v3973 = vpop.permute.xlu0 %3972
        %3975 = vset.pattern.permute.xlu0 32
        %3976 = vperm.xlu0 %3975, %v428
        %v3977 = vpop.permute.xlu0 %3976
        %3979 = vset.pattern.permute.xlu0 32
        %3980 = vperm.xlu0 %3979, %v429
        %v3981 = vpop.permute.xlu0 %3980
        %3983 = vset.pattern.permute.xlu0 32
        %3984 = vperm.xlu0 %3983, %v430
        %v3985 = vpop.permute.xlu0 %3984
        %3987 = vset.pattern.permute.xlu0 32
        %3988 = vperm.xlu0 %3987, %v431
        %v3989 = vpop.permute.xlu0 %3988
        %3991 = vset.pattern.permute.xlu0 32
        %3992 = vperm.xlu0 %3991, %v432
        %v3993 = vpop.permute.xlu0 %3992
        %v3995 = vmul.f32 %v3965, %v3960
        %v3996 = vmul.f32 %v3965, %v3962
        %v3997 = vmul.f32 %v3969, %v3960
        %v3998 = vmul.f32 %v3969, %v3962
        %v3999 = vmul.f32 %v3973, %v3960
        %v4000 = vmul.f32 %v3973, %v3962
        %v4001 = vmul.f32 %v3977, %v3960
        %v4002 = vmul.f32 %v3977, %v3962
        %v4003 = vmul.f32 %v3981, %v3960
        %v4004 = vmul.f32 %v3981, %v3962
        %v4005 = vmul.f32 %v3985, %v3960
        %v4006 = vmul.f32 %v3985, %v3962
        %v4007 = vmul.f32 %v3989, %v3960
        %v4008 = vmul.f32 %v3989, %v3962
        %v4009 = vmul.f32 %v3993, %v3960
        %v4010 = vmul.f32 %v3993, %v3962
        %v4027 = vrot.slane %v3995, 1
        %v4028 = vrot.slane %v3996, 1
        %v4029 = vsel %vm319, %v4027, %v4028
        %v4030 = vrot.slane %v3997, 1
        %v4031 = vrot.slane %v3998, 1
        %v4032 = vsel %vm319, %v4030, %v4031
        %v4033 = vrot.slane %v3999, 1
        %v4034 = vrot.slane %v4000, 1
        %v4035 = vsel %vm319, %v4033, %v4034
        %v4036 = vrot.slane %v4001, 1
        %v4037 = vrot.slane %v4002, 1
        %v4038 = vsel %vm319, %v4036, %v4037
        %v4039 = vrot.slane %v4003, 1
        %v4040 = vrot.slane %v4004, 1
        %v4041 = vsel %vm319, %v4039, %v4040
        %v4042 = vrot.slane %v4005, 1
        %v4043 = vrot.slane %v4006, 1
        %v4044 = vsel %vm319, %v4042, %v4043
        %v4045 = vrot.slane %v4007, 1
        %v4046 = vrot.slane %v4008, 1
        %v4047 = vsel %vm319, %v4045, %v4046
        %v4048 = vrot.slane %v4009, 1
        %v4049 = vrot.slane %v4010, 1
        %v4050 = vsel %vm319, %v4048, %v4049
        %4051 = vrot.lane.b32.xlu0 %v4029, 126
        %v4052 = vpop.permute.xlu0 %4051
        %4053 = vrot.lane.b32.xlu0 %v4032, 126
        %v4054 = vpop.permute.xlu0 %4053
        %4055 = vrot.lane.b32.xlu0 %v4035, 126
        %v4056 = vpop.permute.xlu0 %4055
        %4057 = vrot.lane.b32.xlu0 %v4038, 126
        %v4058 = vpop.permute.xlu0 %4057
        %4059 = vrot.lane.b32.xlu0 %v4041, 126
        %v4060 = vpop.permute.xlu0 %4059
        %4061 = vrot.lane.b32.xlu0 %v4044, 126
        %v4062 = vpop.permute.xlu0 %4061
        %4063 = vrot.lane.b32.xlu0 %v4047, 126
        %v4064 = vpop.permute.xlu0 %4063
        %4065 = vrot.lane.b32.xlu0 %v4050, 126
        %v4066 = vpop.permute.xlu0 %4065
        %v4075 = vadd.f32 %v3949, %v4052
        %v4076 = vadd.f32 %v3950, %v4054
        %v4077 = vadd.f32 %v3951, %v4056
        %v4078 = vadd.f32 %v3952, %v4058
        %v4079 = vadd.f32 %v3953, %v4060
        %v4080 = vadd.f32 %v3954, %v4062
        %v4081 = vadd.f32 %v3955, %v4064
        %v4082 = vadd.f32 %v3956, %v4066
        %v4083 = vsub.f32 %v169, %v1197
        %v4084 = vsub.f32 %v170, %v1197
        %v4085 = vmul.f32 %v4083, 1.442695
        %v4086 = vpow.pop %v4085
        %v4087 = vmul.f32 %v4084, 1.442695
        %v4088 = vpow.pop %v4087
        %4089 = vset.pattern.permute.xlu0 33
        %4090 = vperm.xlu0 %4089, %v425
        %v4091 = vpop.permute.xlu0 %4090
        %4093 = vset.pattern.permute.xlu0 33
        %4094 = vperm.xlu0 %4093, %v426
        %v4095 = vpop.permute.xlu0 %4094
        %4097 = vset.pattern.permute.xlu0 33
        %4098 = vperm.xlu0 %4097, %v427
        %v4099 = vpop.permute.xlu0 %4098
        %4101 = vset.pattern.permute.xlu0 33
        %4102 = vperm.xlu0 %4101, %v428
        %v4103 = vpop.permute.xlu0 %4102
        %4105 = vset.pattern.permute.xlu0 33
        %4106 = vperm.xlu0 %4105, %v429
        %v4107 = vpop.permute.xlu0 %4106
        %4109 = vset.pattern.permute.xlu0 33
        %4110 = vperm.xlu0 %4109, %v430
        %v4111 = vpop.permute.xlu0 %4110
        %4113 = vset.pattern.permute.xlu0 33
        %4114 = vperm.xlu0 %4113, %v431
        %v4115 = vpop.permute.xlu0 %4114
        %4117 = vset.pattern.permute.xlu0 33
        %4118 = vperm.xlu0 %4117, %v432
        %v4119 = vpop.permute.xlu0 %4118
        %v4121 = vmul.f32 %v4091, %v4086
        %v4122 = vmul.f32 %v4091, %v4088
        %v4123 = vmul.f32 %v4095, %v4086
        %v4124 = vmul.f32 %v4095, %v4088
        %v4125 = vmul.f32 %v4099, %v4086
        %v4126 = vmul.f32 %v4099, %v4088
        %v4127 = vmul.f32 %v4103, %v4086
        %v4128 = vmul.f32 %v4103, %v4088
        %v4129 = vmul.f32 %v4107, %v4086
        %v4130 = vmul.f32 %v4107, %v4088
        %v4131 = vmul.f32 %v4111, %v4086
        %v4132 = vmul.f32 %v4111, %v4088
        %v4133 = vmul.f32 %v4115, %v4086
        %v4134 = vmul.f32 %v4115, %v4088
        %v4135 = vmul.f32 %v4119, %v4086
        %v4136 = vmul.f32 %v4119, %v4088
        %v4153 = vrot.slane %v4121, 1
        %v4154 = vrot.slane %v4122, 1
        %v4155 = vsel %vm319, %v4153, %v4154
        %v4156 = vrot.slane %v4123, 1
        %v4157 = vrot.slane %v4124, 1
        %v4158 = vsel %vm319, %v4156, %v4157
        %v4159 = vrot.slane %v4125, 1
        %v4160 = vrot.slane %v4126, 1
        %v4161 = vsel %vm319, %v4159, %v4160
        %v4162 = vrot.slane %v4127, 1
        %v4163 = vrot.slane %v4128, 1
        %v4164 = vsel %vm319, %v4162, %v4163
        %v4165 = vrot.slane %v4129, 1
        %v4166 = vrot.slane %v4130, 1
        %v4167 = vsel %vm319, %v4165, %v4166
        %v4168 = vrot.slane %v4131, 1
        %v4169 = vrot.slane %v4132, 1
        %v4170 = vsel %vm319, %v4168, %v4169
        %v4171 = vrot.slane %v4133, 1
        %v4172 = vrot.slane %v4134, 1
        %v4173 = vsel %vm319, %v4171, %v4172
        %v4174 = vrot.slane %v4135, 1
        %v4175 = vrot.slane %v4136, 1
        %v4176 = vsel %vm319, %v4174, %v4175
        %4177 = vrot.lane.b32.xlu0 %v4155, 125
        %v4178 = vpop.permute.xlu0 %4177
        %4179 = vrot.lane.b32.xlu0 %v4158, 125
        %v4180 = vpop.permute.xlu0 %4179
        %4181 = vrot.lane.b32.xlu0 %v4161, 125
        %v4182 = vpop.permute.xlu0 %4181
        %4183 = vrot.lane.b32.xlu0 %v4164, 125
        %v4184 = vpop.permute.xlu0 %4183
        %4185 = vrot.lane.b32.xlu0 %v4167, 125
        %v4186 = vpop.permute.xlu0 %4185
        %4187 = vrot.lane.b32.xlu0 %v4170, 125
        %v4188 = vpop.permute.xlu0 %4187
        %4189 = vrot.lane.b32.xlu0 %v4173, 125
        %v4190 = vpop.permute.xlu0 %4189
        %4191 = vrot.lane.b32.xlu0 %v4176, 125
        %v4192 = vpop.permute.xlu0 %4191
        %v4201 = vadd.f32 %v4075, %v4178
        %v4202 = vadd.f32 %v4076, %v4180
        %v4203 = vadd.f32 %v4077, %v4182
        %v4204 = vadd.f32 %v4078, %v4184
        %v4205 = vadd.f32 %v4079, %v4186
        %v4206 = vadd.f32 %v4080, %v4188
        %v4207 = vadd.f32 %v4081, %v4190
        %v4208 = vadd.f32 %v4082, %v4192
        %v4209 = vsub.f32 %v169, %v1326
        %v4210 = vsub.f32 %v170, %v1326
        %v4211 = vmul.f32 %v4209, 1.442695
        %v4212 = vpow.pop %v4211
        %v4213 = vmul.f32 %v4210, 1.442695
        %v4214 = vpow.pop %v4213
        %4215 = vset.pattern.permute.xlu0 34
        %4216 = vperm.xlu0 %4215, %v425
        %v4217 = vpop.permute.xlu0 %4216
        %4219 = vset.pattern.permute.xlu0 34
        %4220 = vperm.xlu0 %4219, %v426
        %v4221 = vpop.permute.xlu0 %4220
        %4223 = vset.pattern.permute.xlu0 34
        %4224 = vperm.xlu0 %4223, %v427
        %v4225 = vpop.permute.xlu0 %4224
        %4227 = vset.pattern.permute.xlu0 34
        %4228 = vperm.xlu0 %4227, %v428
        %v4229 = vpop.permute.xlu0 %4228
        %4231 = vset.pattern.permute.xlu0 34
        %4232 = vperm.xlu0 %4231, %v429
        %v4233 = vpop.permute.xlu0 %4232
        %4235 = vset.pattern.permute.xlu0 34
        %4236 = vperm.xlu0 %4235, %v430
        %v4237 = vpop.permute.xlu0 %4236
        %4239 = vset.pattern.permute.xlu0 34
        %4240 = vperm.xlu0 %4239, %v431
        %v4241 = vpop.permute.xlu0 %4240
        %4243 = vset.pattern.permute.xlu0 34
        %4244 = vperm.xlu0 %4243, %v432
        %v4245 = vpop.permute.xlu0 %4244
        %v4247 = vmul.f32 %v4217, %v4212
        %v4248 = vmul.f32 %v4217, %v4214
        %v4249 = vmul.f32 %v4221, %v4212
        %v4250 = vmul.f32 %v4221, %v4214
        %v4251 = vmul.f32 %v4225, %v4212
        %v4252 = vmul.f32 %v4225, %v4214
        %v4253 = vmul.f32 %v4229, %v4212
        %v4254 = vmul.f32 %v4229, %v4214
        %v4255 = vmul.f32 %v4233, %v4212
        %v4256 = vmul.f32 %v4233, %v4214
        %v4257 = vmul.f32 %v4237, %v4212
        %v4258 = vmul.f32 %v4237, %v4214
        %v4259 = vmul.f32 %v4241, %v4212
        %v4260 = vmul.f32 %v4241, %v4214
        %v4261 = vmul.f32 %v4245, %v4212
        %v4262 = vmul.f32 %v4245, %v4214
        %v4279 = vrot.slane %v4247, 1
        %v4280 = vrot.slane %v4248, 1
        %v4281 = vsel %vm319, %v4279, %v4280
        %v4282 = vrot.slane %v4249, 1
        %v4283 = vrot.slane %v4250, 1
        %v4284 = vsel %vm319, %v4282, %v4283
        %v4285 = vrot.slane %v4251, 1
        %v4286 = vrot.slane %v4252, 1
        %v4287 = vsel %vm319, %v4285, %v4286
        %v4288 = vrot.slane %v4253, 1
        %v4289 = vrot.slane %v4254, 1
        %v4290 = vsel %vm319, %v4288, %v4289
        %v4291 = vrot.slane %v4255, 1
        %v4292 = vrot.slane %v4256, 1
        %v4293 = vsel %vm319, %v4291, %v4292
        %v4294 = vrot.slane %v4257, 1
        %v4295 = vrot.slane %v4258, 1
        %v4296 = vsel %vm319, %v4294, %v4295
        %v4297 = vrot.slane %v4259, 1
        %v4298 = vrot.slane %v4260, 1
        %v4299 = vsel %vm319, %v4297, %v4298
        %v4300 = vrot.slane %v4261, 1
        %v4301 = vrot.slane %v4262, 1
        %v4302 = vsel %vm319, %v4300, %v4301
        %4303 = vrot.lane.b32.xlu0 %v4281, 124
        %v4304 = vpop.permute.xlu0 %4303
        %4305 = vrot.lane.b32.xlu0 %v4284, 124
        %v4306 = vpop.permute.xlu0 %4305
        %4307 = vrot.lane.b32.xlu0 %v4287, 124
        %v4308 = vpop.permute.xlu0 %4307
        %4309 = vrot.lane.b32.xlu0 %v4290, 124
        %v4310 = vpop.permute.xlu0 %4309
        %4311 = vrot.lane.b32.xlu0 %v4293, 124
        %v4312 = vpop.permute.xlu0 %4311
        %4313 = vrot.lane.b32.xlu0 %v4296, 124
        %v4314 = vpop.permute.xlu0 %4313
        %4315 = vrot.lane.b32.xlu0 %v4299, 124
        %v4316 = vpop.permute.xlu0 %4315
        %4317 = vrot.lane.b32.xlu0 %v4302, 124
        %v4318 = vpop.permute.xlu0 %4317
        %v4327 = vadd.f32 %v4201, %v4304
        %v4328 = vadd.f32 %v4202, %v4306
        %v4329 = vadd.f32 %v4203, %v4308
        %v4330 = vadd.f32 %v4204, %v4310
        %v4331 = vadd.f32 %v4205, %v4312
        %v4332 = vadd.f32 %v4206, %v4314
        %v4333 = vadd.f32 %v4207, %v4316
        %v4334 = vadd.f32 %v4208, %v4318
        %v4335 = vsub.f32 %v169, %v1454
        %v4336 = vsub.f32 %v170, %v1454
        %v4337 = vmul.f32 %v4335, 1.442695
        %v4338 = vpow.pop %v4337
        %v4339 = vmul.f32 %v4336, 1.442695
        %v4340 = vpow.pop %v4339
        %4341 = vset.pattern.permute.xlu0 35
        %4342 = vperm.xlu0 %4341, %v425
        %v4343 = vpop.permute.xlu0 %4342
        %4345 = vset.pattern.permute.xlu0 35
        %4346 = vperm.xlu0 %4345, %v426
        %v4347 = vpop.permute.xlu0 %4346
        %4349 = vset.pattern.permute.xlu0 35
        %4350 = vperm.xlu0 %4349, %v427
        %v4351 = vpop.permute.xlu0 %4350
        %4353 = vset.pattern.permute.xlu0 35
        %4354 = vperm.xlu0 %4353, %v428
        %v4355 = vpop.permute.xlu0 %4354
        %4357 = vset.pattern.permute.xlu0 35
        %4358 = vperm.xlu0 %4357, %v429
        %v4359 = vpop.permute.xlu0 %4358
        %4361 = vset.pattern.permute.xlu0 35
        %4362 = vperm.xlu0 %4361, %v430
        %v4363 = vpop.permute.xlu0 %4362
        %4365 = vset.pattern.permute.xlu0 35
        %4366 = vperm.xlu0 %4365, %v431
        %v4367 = vpop.permute.xlu0 %4366
        %4369 = vset.pattern.permute.xlu0 35
        %4370 = vperm.xlu0 %4369, %v432
        %v4371 = vpop.permute.xlu0 %4370
        %v4373 = vmul.f32 %v4343, %v4338
        %v4374 = vmul.f32 %v4343, %v4340
        %v4375 = vmul.f32 %v4347, %v4338
        %v4376 = vmul.f32 %v4347, %v4340
        %v4377 = vmul.f32 %v4351, %v4338
        %v4378 = vmul.f32 %v4351, %v4340
        %v4379 = vmul.f32 %v4355, %v4338
        %v4380 = vmul.f32 %v4355, %v4340
        %v4381 = vmul.f32 %v4359, %v4338
        %v4382 = vmul.f32 %v4359, %v4340
        %v4383 = vmul.f32 %v4363, %v4338
        %v4384 = vmul.f32 %v4363, %v4340
        %v4385 = vmul.f32 %v4367, %v4338
        %v4386 = vmul.f32 %v4367, %v4340
        %v4387 = vmul.f32 %v4371, %v4338
        %v4388 = vmul.f32 %v4371, %v4340
        %v4405 = vrot.slane %v4373, 2
        %v4406 = vrot.slane %v4374, 2
        %v4407 = vsel %vm340, %v4405, %v4406
        %v4408 = vrot.slane %v4375, 2
        %v4409 = vrot.slane %v4376, 2
        %v4410 = vsel %vm340, %v4408, %v4409
        %v4411 = vrot.slane %v4377, 2
        %v4412 = vrot.slane %v4378, 2
        %v4413 = vsel %vm340, %v4411, %v4412
        %v4414 = vrot.slane %v4379, 2
        %v4415 = vrot.slane %v4380, 2
        %v4416 = vsel %vm340, %v4414, %v4415
        %v4417 = vrot.slane %v4381, 2
        %v4418 = vrot.slane %v4382, 2
        %v4419 = vsel %vm340, %v4417, %v4418
        %v4420 = vrot.slane %v4383, 2
        %v4421 = vrot.slane %v4384, 2
        %v4422 = vsel %vm340, %v4420, %v4421
        %v4423 = vrot.slane %v4385, 2
        %v4424 = vrot.slane %v4386, 2
        %v4425 = vsel %vm340, %v4423, %v4424
        %v4426 = vrot.slane %v4387, 2
        %v4427 = vrot.slane %v4388, 2
        %v4428 = vsel %vm340, %v4426, %v4427
        %v4437 = vadd.f32 %v4327, %v4407
        %v4438 = vadd.f32 %v4328, %v4410
        %v4439 = vadd.f32 %v4329, %v4413
        %v4440 = vadd.f32 %v4330, %v4416
        %v4441 = vadd.f32 %v4331, %v4419
        %v4442 = vadd.f32 %v4332, %v4422
        %v4443 = vadd.f32 %v4333, %v4425
        %v4444 = vadd.f32 %v4334, %v4428
        %v4445 = vsub.f32 %v169, %v1567
        %v4446 = vsub.f32 %v170, %v1567
        %v4447 = vmul.f32 %v4445, 1.442695
        %v4448 = vpow.pop %v4447
        %v4449 = vmul.f32 %v4446, 1.442695
        %v4450 = vpow.pop %v4449
        %4451 = vset.pattern.permute.xlu0 36
        %4452 = vperm.xlu0 %4451, %v425
        %v4453 = vpop.permute.xlu0 %4452
        %4455 = vset.pattern.permute.xlu0 36
        %4456 = vperm.xlu0 %4455, %v426
        %v4457 = vpop.permute.xlu0 %4456
        %4459 = vset.pattern.permute.xlu0 36
        %4460 = vperm.xlu0 %4459, %v427
        %v4461 = vpop.permute.xlu0 %4460
        %4463 = vset.pattern.permute.xlu0 36
        %4464 = vperm.xlu0 %4463, %v428
        %v4465 = vpop.permute.xlu0 %4464
        %4467 = vset.pattern.permute.xlu0 36
        %4468 = vperm.xlu0 %4467, %v429
        %v4469 = vpop.permute.xlu0 %4468
        %4471 = vset.pattern.permute.xlu0 36
        %4472 = vperm.xlu0 %4471, %v430
        %v4473 = vpop.permute.xlu0 %4472
        %4475 = vset.pattern.permute.xlu0 36
        %4476 = vperm.xlu0 %4475, %v431
        %v4477 = vpop.permute.xlu0 %4476
        %4479 = vset.pattern.permute.xlu0 36
        %4480 = vperm.xlu0 %4479, %v432
        %v4481 = vpop.permute.xlu0 %4480
        %v4483 = vmul.f32 %v4453, %v4448
        %v4484 = vmul.f32 %v4453, %v4450
        %v4485 = vmul.f32 %v4457, %v4448
        %v4486 = vmul.f32 %v4457, %v4450
        %v4487 = vmul.f32 %v4461, %v4448
        %v4488 = vmul.f32 %v4461, %v4450
        %v4489 = vmul.f32 %v4465, %v4448
        %v4490 = vmul.f32 %v4465, %v4450
        %v4491 = vmul.f32 %v4469, %v4448
        %v4492 = vmul.f32 %v4469, %v4450
        %v4493 = vmul.f32 %v4473, %v4448
        %v4494 = vmul.f32 %v4473, %v4450
        %v4495 = vmul.f32 %v4477, %v4448
        %v4496 = vmul.f32 %v4477, %v4450
        %v4497 = vmul.f32 %v4481, %v4448
        %v4498 = vmul.f32 %v4481, %v4450
        %v4515 = vrot.slane %v4483, 2
        %v4516 = vrot.slane %v4484, 2
        %v4517 = vsel %vm340, %v4515, %v4516
        %v4518 = vrot.slane %v4485, 2
        %v4519 = vrot.slane %v4486, 2
        %v4520 = vsel %vm340, %v4518, %v4519
        %v4521 = vrot.slane %v4487, 2
        %v4522 = vrot.slane %v4488, 2
        %v4523 = vsel %vm340, %v4521, %v4522
        %v4524 = vrot.slane %v4489, 2
        %v4525 = vrot.slane %v4490, 2
        %v4526 = vsel %vm340, %v4524, %v4525
        %v4527 = vrot.slane %v4491, 2
        %v4528 = vrot.slane %v4492, 2
        %v4529 = vsel %vm340, %v4527, %v4528
        %v4530 = vrot.slane %v4493, 2
        %v4531 = vrot.slane %v4494, 2
        %v4532 = vsel %vm340, %v4530, %v4531
        %v4533 = vrot.slane %v4495, 2
        %v4534 = vrot.slane %v4496, 2
        %v4535 = vsel %vm340, %v4533, %v4534
        %v4536 = vrot.slane %v4497, 2
        %v4537 = vrot.slane %v4498, 2
        %v4538 = vsel %vm340, %v4536, %v4537
        %4539 = vrot.lane.b32.xlu0 %v4517, 127
        %v4540 = vpop.permute.xlu0 %4539
        %4541 = vrot.lane.b32.xlu0 %v4520, 127
        %v4542 = vpop.permute.xlu0 %4541
        %4543 = vrot.lane.b32.xlu0 %v4523, 127
        %v4544 = vpop.permute.xlu0 %4543
        %4545 = vrot.lane.b32.xlu0 %v4526, 127
        %v4546 = vpop.permute.xlu0 %4545
        %4547 = vrot.lane.b32.xlu0 %v4529, 127
        %v4548 = vpop.permute.xlu0 %4547
        %4549 = vrot.lane.b32.xlu0 %v4532, 127
        %v4550 = vpop.permute.xlu0 %4549
        %4551 = vrot.lane.b32.xlu0 %v4535, 127
        %v4552 = vpop.permute.xlu0 %4551
        %4553 = vrot.lane.b32.xlu0 %v4538, 127
        %v4554 = vpop.permute.xlu0 %4553
        %v4563 = vadd.f32 %v4437, %v4540
        %v4564 = vadd.f32 %v4438, %v4542
        %v4565 = vadd.f32 %v4439, %v4544
        %v4566 = vadd.f32 %v4440, %v4546
        %v4567 = vadd.f32 %v4441, %v4548
        %v4568 = vadd.f32 %v4442, %v4550
        %v4569 = vadd.f32 %v4443, %v4552
        %v4570 = vadd.f32 %v4444, %v4554
        %v4571 = vsub.f32 %v169, %v1696
        %v4572 = vsub.f32 %v170, %v1696
        %v4573 = vmul.f32 %v4571, 1.442695
        %v4574 = vpow.pop %v4573
        %v4575 = vmul.f32 %v4572, 1.442695
        %v4576 = vpow.pop %v4575
        %4577 = vset.pattern.permute.xlu0 37
        %4578 = vperm.xlu0 %4577, %v425
        %v4579 = vpop.permute.xlu0 %4578
        %4581 = vset.pattern.permute.xlu0 37
        %4582 = vperm.xlu0 %4581, %v426
        %v4583 = vpop.permute.xlu0 %4582
        %4585 = vset.pattern.permute.xlu0 37
        %4586 = vperm.xlu0 %4585, %v427
        %v4587 = vpop.permute.xlu0 %4586
        %4589 = vset.pattern.permute.xlu0 37
        %4590 = vperm.xlu0 %4589, %v428
        %v4591 = vpop.permute.xlu0 %4590
        %4593 = vset.pattern.permute.xlu0 37
        %4594 = vperm.xlu0 %4593, %v429
        %v4595 = vpop.permute.xlu0 %4594
        %4597 = vset.pattern.permute.xlu0 37
        %4598 = vperm.xlu0 %4597, %v430
        %v4599 = vpop.permute.xlu0 %4598
        %4601 = vset.pattern.permute.xlu0 37
        %4602 = vperm.xlu0 %4601, %v431
        %v4603 = vpop.permute.xlu0 %4602
        %4605 = vset.pattern.permute.xlu0 37
        %4606 = vperm.xlu0 %4605, %v432
        %v4607 = vpop.permute.xlu0 %4606
        %v4609 = vmul.f32 %v4579, %v4574
        %v4610 = vmul.f32 %v4579, %v4576
        %v4611 = vmul.f32 %v4583, %v4574
        %v4612 = vmul.f32 %v4583, %v4576
        %v4613 = vmul.f32 %v4587, %v4574
        %v4614 = vmul.f32 %v4587, %v4576
        %v4615 = vmul.f32 %v4591, %v4574
        %v4616 = vmul.f32 %v4591, %v4576
        %v4617 = vmul.f32 %v4595, %v4574
        %v4618 = vmul.f32 %v4595, %v4576
        %v4619 = vmul.f32 %v4599, %v4574
        %v4620 = vmul.f32 %v4599, %v4576
        %v4621 = vmul.f32 %v4603, %v4574
        %v4622 = vmul.f32 %v4603, %v4576
        %v4623 = vmul.f32 %v4607, %v4574
        %v4624 = vmul.f32 %v4607, %v4576
        %v4641 = vrot.slane %v4609, 2
        %v4642 = vrot.slane %v4610, 2
        %v4643 = vsel %vm340, %v4641, %v4642
        %v4644 = vrot.slane %v4611, 2
        %v4645 = vrot.slane %v4612, 2
        %v4646 = vsel %vm340, %v4644, %v4645
        %v4647 = vrot.slane %v4613, 2
        %v4648 = vrot.slane %v4614, 2
        %v4649 = vsel %vm340, %v4647, %v4648
        %v4650 = vrot.slane %v4615, 2
        %v4651 = vrot.slane %v4616, 2
        %v4652 = vsel %vm340, %v4650, %v4651
        %v4653 = vrot.slane %v4617, 2
        %v4654 = vrot.slane %v4618, 2
        %v4655 = vsel %vm340, %v4653, %v4654
        %v4656 = vrot.slane %v4619, 2
        %v4657 = vrot.slane %v4620, 2
        %v4658 = vsel %vm340, %v4656, %v4657
        %v4659 = vrot.slane %v4621, 2
        %v4660 = vrot.slane %v4622, 2
        %v4661 = vsel %vm340, %v4659, %v4660
        %v4662 = vrot.slane %v4623, 2
        %v4663 = vrot.slane %v4624, 2
        %v4664 = vsel %vm340, %v4662, %v4663
        %4665 = vrot.lane.b32.xlu0 %v4643, 126
        %v4666 = vpop.permute.xlu0 %4665
        %4667 = vrot.lane.b32.xlu0 %v4646, 126
        %v4668 = vpop.permute.xlu0 %4667
        %4669 = vrot.lane.b32.xlu0 %v4649, 126
        %v4670 = vpop.permute.xlu0 %4669
        %4671 = vrot.lane.b32.xlu0 %v4652, 126
        %v4672 = vpop.permute.xlu0 %4671
        %4673 = vrot.lane.b32.xlu0 %v4655, 126
        %v4674 = vpop.permute.xlu0 %4673
        %4675 = vrot.lane.b32.xlu0 %v4658, 126
        %v4676 = vpop.permute.xlu0 %4675
        %4677 = vrot.lane.b32.xlu0 %v4661, 126
        %v4678 = vpop.permute.xlu0 %4677
        %4679 = vrot.lane.b32.xlu0 %v4664, 126
        %v4680 = vpop.permute.xlu0 %4679
        %v4689 = vadd.f32 %v4563, %v4666
        %v4690 = vadd.f32 %v4564, %v4668
        %v4691 = vadd.f32 %v4565, %v4670
        %v4692 = vadd.f32 %v4566, %v4672
        %v4693 = vadd.f32 %v4567, %v4674
        %v4694 = vadd.f32 %v4568, %v4676
        %v4695 = vadd.f32 %v4569, %v4678
        %v4696 = vadd.f32 %v4570, %v4680
        %v4697 = vsub.f32 %v169, %v1825
        %v4698 = vsub.f32 %v170, %v1825
        %v4699 = vmul.f32 %v4697, 1.442695
        %v4700 = vpow.pop %v4699
        %v4701 = vmul.f32 %v4698, 1.442695
        %v4702 = vpow.pop %v4701
        %4703 = vset.pattern.permute.xlu0 38
        %4704 = vperm.xlu0 %4703, %v425
        %v4705 = vpop.permute.xlu0 %4704
        %4707 = vset.pattern.permute.xlu0 38
        %4708 = vperm.xlu0 %4707, %v426
        %v4709 = vpop.permute.xlu0 %4708
        %4711 = vset.pattern.permute.xlu0 38
        %4712 = vperm.xlu0 %4711, %v427
        %v4713 = vpop.permute.xlu0 %4712
        %4715 = vset.pattern.permute.xlu0 38
        %4716 = vperm.xlu0 %4715, %v428
        %v4717 = vpop.permute.xlu0 %4716
        %4719 = vset.pattern.permute.xlu0 38
        %4720 = vperm.xlu0 %4719, %v429
        %v4721 = vpop.permute.xlu0 %4720
        %4723 = vset.pattern.permute.xlu0 38
        %4724 = vperm.xlu0 %4723, %v430
        %v4725 = vpop.permute.xlu0 %4724
        %4727 = vset.pattern.permute.xlu0 38
        %4728 = vperm.xlu0 %4727, %v431
        %v4729 = vpop.permute.xlu0 %4728
        %4731 = vset.pattern.permute.xlu0 38
        %4732 = vperm.xlu0 %4731, %v432
        %v4733 = vpop.permute.xlu0 %4732
        %v4735 = vmul.f32 %v4705, %v4700
        %v4736 = vmul.f32 %v4705, %v4702
        %v4737 = vmul.f32 %v4709, %v4700
        %v4738 = vmul.f32 %v4709, %v4702
        %v4739 = vmul.f32 %v4713, %v4700
        %v4740 = vmul.f32 %v4713, %v4702
        %v4741 = vmul.f32 %v4717, %v4700
        %v4742 = vmul.f32 %v4717, %v4702
        %v4743 = vmul.f32 %v4721, %v4700
        %v4744 = vmul.f32 %v4721, %v4702
        %v4745 = vmul.f32 %v4725, %v4700
        %v4746 = vmul.f32 %v4725, %v4702
        %v4747 = vmul.f32 %v4729, %v4700
        %v4748 = vmul.f32 %v4729, %v4702
        %v4749 = vmul.f32 %v4733, %v4700
        %v4750 = vmul.f32 %v4733, %v4702
        %v4767 = vrot.slane %v4735, 2
        %v4768 = vrot.slane %v4736, 2
        %v4769 = vsel %vm340, %v4767, %v4768
        %v4770 = vrot.slane %v4737, 2
        %v4771 = vrot.slane %v4738, 2
        %v4772 = vsel %vm340, %v4770, %v4771
        %v4773 = vrot.slane %v4739, 2
        %v4774 = vrot.slane %v4740, 2
        %v4775 = vsel %vm340, %v4773, %v4774
        %v4776 = vrot.slane %v4741, 2
        %v4777 = vrot.slane %v4742, 2
        %v4778 = vsel %vm340, %v4776, %v4777
        %v4779 = vrot.slane %v4743, 2
        %v4780 = vrot.slane %v4744, 2
        %v4781 = vsel %vm340, %v4779, %v4780
        %v4782 = vrot.slane %v4745, 2
        %v4783 = vrot.slane %v4746, 2
        %v4784 = vsel %vm340, %v4782, %v4783
        %v4785 = vrot.slane %v4747, 2
        %v4786 = vrot.slane %v4748, 2
        %v4787 = vsel %vm340, %v4785, %v4786
        %v4788 = vrot.slane %v4749, 2
        %v4789 = vrot.slane %v4750, 2
        %v4790 = vsel %vm340, %v4788, %v4789
        %4791 = vrot.lane.b32.xlu0 %v4769, 125
        %v4792 = vpop.permute.xlu0 %4791
        %4793 = vrot.lane.b32.xlu0 %v4772, 125
        %v4794 = vpop.permute.xlu0 %4793
        %4795 = vrot.lane.b32.xlu0 %v4775, 125
        %v4796 = vpop.permute.xlu0 %4795
        %4797 = vrot.lane.b32.xlu0 %v4778, 125
        %v4798 = vpop.permute.xlu0 %4797
        %4799 = vrot.lane.b32.xlu0 %v4781, 125
        %v4800 = vpop.permute.xlu0 %4799
        %4801 = vrot.lane.b32.xlu0 %v4784, 125
        %v4802 = vpop.permute.xlu0 %4801
        %4803 = vrot.lane.b32.xlu0 %v4787, 125
        %v4804 = vpop.permute.xlu0 %4803
        %4805 = vrot.lane.b32.xlu0 %v4790, 125
        %v4806 = vpop.permute.xlu0 %4805
        %v4815 = vadd.f32 %v4689, %v4792
        %v4816 = vadd.f32 %v4690, %v4794
        %v4817 = vadd.f32 %v4691, %v4796
        %v4818 = vadd.f32 %v4692, %v4798
        %v4819 = vadd.f32 %v4693, %v4800
        %v4820 = vadd.f32 %v4694, %v4802
        %v4821 = vadd.f32 %v4695, %v4804
        %v4822 = vadd.f32 %v4696, %v4806
        %v4823 = vsub.f32 %v169, %v1954
        %v4824 = vsub.f32 %v170, %v1954
        %v4825 = vmul.f32 %v4823, 1.442695
        %v4826 = vpow.pop %v4825
        %v4827 = vmul.f32 %v4824, 1.442695
        %v4828 = vpow.pop %v4827
        %4829 = vset.pattern.permute.xlu0 39
        %4830 = vperm.xlu0 %4829, %v425
        %v4831 = vpop.permute.xlu0 %4830
        %4833 = vset.pattern.permute.xlu0 39
        %4834 = vperm.xlu0 %4833, %v426
        %v4835 = vpop.permute.xlu0 %4834
        %4837 = vset.pattern.permute.xlu0 39
        %4838 = vperm.xlu0 %4837, %v427
        %v4839 = vpop.permute.xlu0 %4838
        %4841 = vset.pattern.permute.xlu0 39
        %4842 = vperm.xlu0 %4841, %v428
        %v4843 = vpop.permute.xlu0 %4842
        %4845 = vset.pattern.permute.xlu0 39
        %4846 = vperm.xlu0 %4845, %v429
        %v4847 = vpop.permute.xlu0 %4846
        %4849 = vset.pattern.permute.xlu0 39
        %4850 = vperm.xlu0 %4849, %v430
        %v4851 = vpop.permute.xlu0 %4850
        %4853 = vset.pattern.permute.xlu0 39
        %4854 = vperm.xlu0 %4853, %v431
        %v4855 = vpop.permute.xlu0 %4854
        %4857 = vset.pattern.permute.xlu0 39
        %4858 = vperm.xlu0 %4857, %v432
        %v4859 = vpop.permute.xlu0 %4858
        %v4861 = vmul.f32 %v4831, %v4826
        %v4862 = vmul.f32 %v4831, %v4828
        %v4863 = vmul.f32 %v4835, %v4826
        %v4864 = vmul.f32 %v4835, %v4828
        %v4865 = vmul.f32 %v4839, %v4826
        %v4866 = vmul.f32 %v4839, %v4828
        %v4867 = vmul.f32 %v4843, %v4826
        %v4868 = vmul.f32 %v4843, %v4828
        %v4869 = vmul.f32 %v4847, %v4826
        %v4870 = vmul.f32 %v4847, %v4828
        %v4871 = vmul.f32 %v4851, %v4826
        %v4872 = vmul.f32 %v4851, %v4828
        %v4873 = vmul.f32 %v4855, %v4826
        %v4874 = vmul.f32 %v4855, %v4828
        %v4875 = vmul.f32 %v4859, %v4826
        %v4876 = vmul.f32 %v4859, %v4828
        %v4893 = vrot.slane %v4861, 2
        %v4894 = vrot.slane %v4862, 2
        %v4895 = vsel %vm340, %v4893, %v4894
        %v4896 = vrot.slane %v4863, 2
        %v4897 = vrot.slane %v4864, 2
        %v4898 = vsel %vm340, %v4896, %v4897
        %v4899 = vrot.slane %v4865, 2
        %v4900 = vrot.slane %v4866, 2
        %v4901 = vsel %vm340, %v4899, %v4900
        %v4902 = vrot.slane %v4867, 2
        %v4903 = vrot.slane %v4868, 2
        %v4904 = vsel %vm340, %v4902, %v4903
        %v4905 = vrot.slane %v4869, 2
        %v4906 = vrot.slane %v4870, 2
        %v4907 = vsel %vm340, %v4905, %v4906
        %v4908 = vrot.slane %v4871, 2
        %v4909 = vrot.slane %v4872, 2
        %v4910 = vsel %vm340, %v4908, %v4909
        %v4911 = vrot.slane %v4873, 2
        %v4912 = vrot.slane %v4874, 2
        %v4913 = vsel %vm340, %v4911, %v4912
        %v4914 = vrot.slane %v4875, 2
        %v4915 = vrot.slane %v4876, 2
        %v4916 = vsel %vm340, %v4914, %v4915
        %4917 = vrot.lane.b32.xlu0 %v4895, 124
        %v4918 = vpop.permute.xlu0 %4917
        %4919 = vrot.lane.b32.xlu0 %v4898, 124
        %v4920 = vpop.permute.xlu0 %4919
        %4921 = vrot.lane.b32.xlu0 %v4901, 124
        %v4922 = vpop.permute.xlu0 %4921
        %4923 = vrot.lane.b32.xlu0 %v4904, 124
        %v4924 = vpop.permute.xlu0 %4923
        %4925 = vrot.lane.b32.xlu0 %v4907, 124
        %v4926 = vpop.permute.xlu0 %4925
        %4927 = vrot.lane.b32.xlu0 %v4910, 124
        %v4928 = vpop.permute.xlu0 %4927
        %4929 = vrot.lane.b32.xlu0 %v4913, 124
        %v4930 = vpop.permute.xlu0 %4929
        %4931 = vrot.lane.b32.xlu0 %v4916, 124
        %v4932 = vpop.permute.xlu0 %4931
        %v4941 = vadd.f32 %v4815, %v4918
        %v4942 = vadd.f32 %v4816, %v4920
        %v4943 = vadd.f32 %v4817, %v4922
        %v4944 = vadd.f32 %v4818, %v4924
        %v4945 = vadd.f32 %v4819, %v4926
        %v4946 = vadd.f32 %v4820, %v4928
        %v4947 = vadd.f32 %v4821, %v4930
        %v4948 = vadd.f32 %v4822, %v4932
        %v4949 = vsub.f32 %v169, %v2082
        %v4950 = vsub.f32 %v170, %v2082
        %v4951 = vmul.f32 %v4949, 1.442695
        %v4952 = vpow.pop %v4951
        %v4953 = vmul.f32 %v4950, 1.442695
        %v4954 = vpow.pop %v4953
        %4955 = vset.pattern.permute.xlu0 40
        %4956 = vperm.xlu0 %4955, %v425
        %v4957 = vpop.permute.xlu0 %4956
        %4959 = vset.pattern.permute.xlu0 40
        %4960 = vperm.xlu0 %4959, %v426
        %v4961 = vpop.permute.xlu0 %4960
        %4963 = vset.pattern.permute.xlu0 40
        %4964 = vperm.xlu0 %4963, %v427
        %v4965 = vpop.permute.xlu0 %4964
        %4967 = vset.pattern.permute.xlu0 40
        %4968 = vperm.xlu0 %4967, %v428
        %v4969 = vpop.permute.xlu0 %4968
        %4971 = vset.pattern.permute.xlu0 40
        %4972 = vperm.xlu0 %4971, %v429
        %v4973 = vpop.permute.xlu0 %4972
        %4975 = vset.pattern.permute.xlu0 40
        %4976 = vperm.xlu0 %4975, %v430
        %v4977 = vpop.permute.xlu0 %4976
        %4979 = vset.pattern.permute.xlu0 40
        %4980 = vperm.xlu0 %4979, %v431
        %v4981 = vpop.permute.xlu0 %4980
        %4983 = vset.pattern.permute.xlu0 40
        %4984 = vperm.xlu0 %4983, %v432
        %v4985 = vpop.permute.xlu0 %4984
        %v4987 = vmul.f32 %v4957, %v4952
        %v4988 = vmul.f32 %v4957, %v4954
        %v4989 = vmul.f32 %v4961, %v4952
        %v4990 = vmul.f32 %v4961, %v4954
        %v4991 = vmul.f32 %v4965, %v4952
        %v4992 = vmul.f32 %v4965, %v4954
        %v4993 = vmul.f32 %v4969, %v4952
        %v4994 = vmul.f32 %v4969, %v4954
        %v4995 = vmul.f32 %v4973, %v4952
        %v4996 = vmul.f32 %v4973, %v4954
        %v4997 = vmul.f32 %v4977, %v4952
        %v4998 = vmul.f32 %v4977, %v4954
        %v4999 = vmul.f32 %v4981, %v4952
        %v5000 = vmul.f32 %v4981, %v4954
        %v5001 = vmul.f32 %v4985, %v4952
        %v5002 = vmul.f32 %v4985, %v4954
        %v5019 = vrot.slane %v4987, 3
        %v5020 = vrot.slane %v4988, 3
        %v5021 = vsel %vm361, %v5019, %v5020
        %v5022 = vrot.slane %v4989, 3
        %v5023 = vrot.slane %v4990, 3
        %v5024 = vsel %vm361, %v5022, %v5023
        %v5025 = vrot.slane %v4991, 3
        %v5026 = vrot.slane %v4992, 3
        %v5027 = vsel %vm361, %v5025, %v5026
        %v5028 = vrot.slane %v4993, 3
        %v5029 = vrot.slane %v4994, 3
        %v5030 = vsel %vm361, %v5028, %v5029
        %v5031 = vrot.slane %v4995, 3
        %v5032 = vrot.slane %v4996, 3
        %v5033 = vsel %vm361, %v5031, %v5032
        %v5034 = vrot.slane %v4997, 3
        %v5035 = vrot.slane %v4998, 3
        %v5036 = vsel %vm361, %v5034, %v5035
        %v5037 = vrot.slane %v4999, 3
        %v5038 = vrot.slane %v5000, 3
        %v5039 = vsel %vm361, %v5037, %v5038
        %v5040 = vrot.slane %v5001, 3
        %v5041 = vrot.slane %v5002, 3
        %v5042 = vsel %vm361, %v5040, %v5041
        %v5051 = vadd.f32 %v4941, %v5021
        %v5052 = vadd.f32 %v4942, %v5024
        %v5053 = vadd.f32 %v4943, %v5027
        %v5054 = vadd.f32 %v4944, %v5030
        %v5055 = vadd.f32 %v4945, %v5033
        %v5056 = vadd.f32 %v4946, %v5036
        %v5057 = vadd.f32 %v4947, %v5039
        %v5058 = vadd.f32 %v4948, %v5042
        %v5059 = vsub.f32 %v169, %v2195
        %v5060 = vsub.f32 %v170, %v2195
        %v5061 = vmul.f32 %v5059, 1.442695
        %v5062 = vpow.pop %v5061
        %v5063 = vmul.f32 %v5060, 1.442695
        %v5064 = vpow.pop %v5063
        %5065 = vset.pattern.permute.xlu0 41
        %5066 = vperm.xlu0 %5065, %v425
        %v5067 = vpop.permute.xlu0 %5066
        %5069 = vset.pattern.permute.xlu0 41
        %5070 = vperm.xlu0 %5069, %v426
        %v5071 = vpop.permute.xlu0 %5070
        %5073 = vset.pattern.permute.xlu0 41
        %5074 = vperm.xlu0 %5073, %v427
        %v5075 = vpop.permute.xlu0 %5074
        %5077 = vset.pattern.permute.xlu0 41
        %5078 = vperm.xlu0 %5077, %v428
        %v5079 = vpop.permute.xlu0 %5078
        %5081 = vset.pattern.permute.xlu0 41
        %5082 = vperm.xlu0 %5081, %v429
        %v5083 = vpop.permute.xlu0 %5082
        %5085 = vset.pattern.permute.xlu0 41
        %5086 = vperm.xlu0 %5085, %v430
        %v5087 = vpop.permute.xlu0 %5086
        %5089 = vset.pattern.permute.xlu0 41
        %5090 = vperm.xlu0 %5089, %v431
        %v5091 = vpop.permute.xlu0 %5090
        %5093 = vset.pattern.permute.xlu0 41
        %5094 = vperm.xlu0 %5093, %v432
        %v5095 = vpop.permute.xlu0 %5094
        %v5097 = vmul.f32 %v5067, %v5062
        %v5098 = vmul.f32 %v5067, %v5064
        %v5099 = vmul.f32 %v5071, %v5062
        %v5100 = vmul.f32 %v5071, %v5064
        %v5101 = vmul.f32 %v5075, %v5062
        %v5102 = vmul.f32 %v5075, %v5064
        %v5103 = vmul.f32 %v5079, %v5062
        %v5104 = vmul.f32 %v5079, %v5064
        %v5105 = vmul.f32 %v5083, %v5062
        %v5106 = vmul.f32 %v5083, %v5064
        %v5107 = vmul.f32 %v5087, %v5062
        %v5108 = vmul.f32 %v5087, %v5064
        %v5109 = vmul.f32 %v5091, %v5062
        %v5110 = vmul.f32 %v5091, %v5064
        %v5111 = vmul.f32 %v5095, %v5062
        %v5112 = vmul.f32 %v5095, %v5064
        %v5129 = vrot.slane %v5097, 3
        %v5130 = vrot.slane %v5098, 3
        %v5131 = vsel %vm361, %v5129, %v5130
        %v5132 = vrot.slane %v5099, 3
        %v5133 = vrot.slane %v5100, 3
        %v5134 = vsel %vm361, %v5132, %v5133
        %v5135 = vrot.slane %v5101, 3
        %v5136 = vrot.slane %v5102, 3
        %v5137 = vsel %vm361, %v5135, %v5136
        %v5138 = vrot.slane %v5103, 3
        %v5139 = vrot.slane %v5104, 3
        %v5140 = vsel %vm361, %v5138, %v5139
        %v5141 = vrot.slane %v5105, 3
        %v5142 = vrot.slane %v5106, 3
        %v5143 = vsel %vm361, %v5141, %v5142
        %v5144 = vrot.slane %v5107, 3
        %v5145 = vrot.slane %v5108, 3
        %v5146 = vsel %vm361, %v5144, %v5145
        %v5147 = vrot.slane %v5109, 3
        %v5148 = vrot.slane %v5110, 3
        %v5149 = vsel %vm361, %v5147, %v5148
        %v5150 = vrot.slane %v5111, 3
        %v5151 = vrot.slane %v5112, 3
        %v5152 = vsel %vm361, %v5150, %v5151
        %5153 = vrot.lane.b32.xlu0 %v5131, 127
        %v5154 = vpop.permute.xlu0 %5153
        %5155 = vrot.lane.b32.xlu0 %v5134, 127
        %v5156 = vpop.permute.xlu0 %5155
        %5157 = vrot.lane.b32.xlu0 %v5137, 127
        %v5158 = vpop.permute.xlu0 %5157
        %5159 = vrot.lane.b32.xlu0 %v5140, 127
        %v5160 = vpop.permute.xlu0 %5159
        %5161 = vrot.lane.b32.xlu0 %v5143, 127
        %v5162 = vpop.permute.xlu0 %5161
        %5163 = vrot.lane.b32.xlu0 %v5146, 127
        %v5164 = vpop.permute.xlu0 %5163
        %5165 = vrot.lane.b32.xlu0 %v5149, 127
        %v5166 = vpop.permute.xlu0 %5165
        %5167 = vrot.lane.b32.xlu0 %v5152, 127
        %v5168 = vpop.permute.xlu0 %5167
        %v5177 = vadd.f32 %v5051, %v5154
        %v5178 = vadd.f32 %v5052, %v5156
        %v5179 = vadd.f32 %v5053, %v5158
        %v5180 = vadd.f32 %v5054, %v5160
        %v5181 = vadd.f32 %v5055, %v5162
        %v5182 = vadd.f32 %v5056, %v5164
        %v5183 = vadd.f32 %v5057, %v5166
        %v5184 = vadd.f32 %v5058, %v5168
        %v5185 = vsub.f32 %v169, %v2324
        %v5186 = vsub.f32 %v170, %v2324
        %v5187 = vmul.f32 %v5185, 1.442695
        %v5188 = vpow.pop %v5187
        %v5189 = vmul.f32 %v5186, 1.442695
        %v5190 = vpow.pop %v5189
        %5191 = vset.pattern.permute.xlu0 42
        %5192 = vperm.xlu0 %5191, %v425
        %v5193 = vpop.permute.xlu0 %5192
        %5195 = vset.pattern.permute.xlu0 42
        %5196 = vperm.xlu0 %5195, %v426
        %v5197 = vpop.permute.xlu0 %5196
        %5199 = vset.pattern.permute.xlu0 42
        %5200 = vperm.xlu0 %5199, %v427
        %v5201 = vpop.permute.xlu0 %5200
        %5203 = vset.pattern.permute.xlu0 42
        %5204 = vperm.xlu0 %5203, %v428
        %v5205 = vpop.permute.xlu0 %5204
        %5207 = vset.pattern.permute.xlu0 42
        %5208 = vperm.xlu0 %5207, %v429
        %v5209 = vpop.permute.xlu0 %5208
        %5211 = vset.pattern.permute.xlu0 42
        %5212 = vperm.xlu0 %5211, %v430
        %v5213 = vpop.permute.xlu0 %5212
        %5215 = vset.pattern.permute.xlu0 42
        %5216 = vperm.xlu0 %5215, %v431
        %v5217 = vpop.permute.xlu0 %5216
        %5219 = vset.pattern.permute.xlu0 42
        %5220 = vperm.xlu0 %5219, %v432
        %v5221 = vpop.permute.xlu0 %5220
        %v5223 = vmul.f32 %v5193, %v5188
        %v5224 = vmul.f32 %v5193, %v5190
        %v5225 = vmul.f32 %v5197, %v5188
        %v5226 = vmul.f32 %v5197, %v5190
        %v5227 = vmul.f32 %v5201, %v5188
        %v5228 = vmul.f32 %v5201, %v5190
        %v5229 = vmul.f32 %v5205, %v5188
        %v5230 = vmul.f32 %v5205, %v5190
        %v5231 = vmul.f32 %v5209, %v5188
        %v5232 = vmul.f32 %v5209, %v5190
        %v5233 = vmul.f32 %v5213, %v5188
        %v5234 = vmul.f32 %v5213, %v5190
        %v5235 = vmul.f32 %v5217, %v5188
        %v5236 = vmul.f32 %v5217, %v5190
        %v5237 = vmul.f32 %v5221, %v5188
        %v5238 = vmul.f32 %v5221, %v5190
        %v5255 = vrot.slane %v5223, 3
        %v5256 = vrot.slane %v5224, 3
        %v5257 = vsel %vm361, %v5255, %v5256
        %v5258 = vrot.slane %v5225, 3
        %v5259 = vrot.slane %v5226, 3
        %v5260 = vsel %vm361, %v5258, %v5259
        %v5261 = vrot.slane %v5227, 3
        %v5262 = vrot.slane %v5228, 3
        %v5263 = vsel %vm361, %v5261, %v5262
        %v5264 = vrot.slane %v5229, 3
        %v5265 = vrot.slane %v5230, 3
        %v5266 = vsel %vm361, %v5264, %v5265
        %v5267 = vrot.slane %v5231, 3
        %v5268 = vrot.slane %v5232, 3
        %v5269 = vsel %vm361, %v5267, %v5268
        %v5270 = vrot.slane %v5233, 3
        %v5271 = vrot.slane %v5234, 3
        %v5272 = vsel %vm361, %v5270, %v5271
        %v5273 = vrot.slane %v5235, 3
        %v5274 = vrot.slane %v5236, 3
        %v5275 = vsel %vm361, %v5273, %v5274
        %v5276 = vrot.slane %v5237, 3
        %v5277 = vrot.slane %v5238, 3
        %v5278 = vsel %vm361, %v5276, %v5277
        %5279 = vrot.lane.b32.xlu0 %v5257, 126
        %v5280 = vpop.permute.xlu0 %5279
        %5281 = vrot.lane.b32.xlu0 %v5260, 126
        %v5282 = vpop.permute.xlu0 %5281
        %5283 = vrot.lane.b32.xlu0 %v5263, 126
        %v5284 = vpop.permute.xlu0 %5283
        %5285 = vrot.lane.b32.xlu0 %v5266, 126
        %v5286 = vpop.permute.xlu0 %5285
        %5287 = vrot.lane.b32.xlu0 %v5269, 126
        %v5288 = vpop.permute.xlu0 %5287
        %5289 = vrot.lane.b32.xlu0 %v5272, 126
        %v5290 = vpop.permute.xlu0 %5289
        %5291 = vrot.lane.b32.xlu0 %v5275, 126
        %v5292 = vpop.permute.xlu0 %5291
        %5293 = vrot.lane.b32.xlu0 %v5278, 126
        %v5294 = vpop.permute.xlu0 %5293
        %v5303 = vadd.f32 %v5177, %v5280
        %v5304 = vadd.f32 %v5178, %v5282
        %v5305 = vadd.f32 %v5179, %v5284
        %v5306 = vadd.f32 %v5180, %v5286
        %v5307 = vadd.f32 %v5181, %v5288
        %v5308 = vadd.f32 %v5182, %v5290
        %v5309 = vadd.f32 %v5183, %v5292
        %v5310 = vadd.f32 %v5184, %v5294
        %v5311 = vsub.f32 %v169, %v2453
        %v5312 = vsub.f32 %v170, %v2453
        %v5313 = vmul.f32 %v5311, 1.442695
        %v5314 = vpow.pop %v5313
        %v5315 = vmul.f32 %v5312, 1.442695
        %v5316 = vpow.pop %v5315
        %5317 = vset.pattern.permute.xlu0 43
        %5318 = vperm.xlu0 %5317, %v425
        %v5319 = vpop.permute.xlu0 %5318
        %5321 = vset.pattern.permute.xlu0 43
        %5322 = vperm.xlu0 %5321, %v426
        %v5323 = vpop.permute.xlu0 %5322
        %5325 = vset.pattern.permute.xlu0 43
        %5326 = vperm.xlu0 %5325, %v427
        %v5327 = vpop.permute.xlu0 %5326
        %5329 = vset.pattern.permute.xlu0 43
        %5330 = vperm.xlu0 %5329, %v428
        %v5331 = vpop.permute.xlu0 %5330
        %5333 = vset.pattern.permute.xlu0 43
        %5334 = vperm.xlu0 %5333, %v429
        %v5335 = vpop.permute.xlu0 %5334
        %5337 = vset.pattern.permute.xlu0 43
        %5338 = vperm.xlu0 %5337, %v430
        %v5339 = vpop.permute.xlu0 %5338
        %5341 = vset.pattern.permute.xlu0 43
        %5342 = vperm.xlu0 %5341, %v431
        %v5343 = vpop.permute.xlu0 %5342
        %5345 = vset.pattern.permute.xlu0 43
        %5346 = vperm.xlu0 %5345, %v432
        %v5347 = vpop.permute.xlu0 %5346
        %v5349 = vmul.f32 %v5319, %v5314
        %v5350 = vmul.f32 %v5319, %v5316
        %v5351 = vmul.f32 %v5323, %v5314
        %v5352 = vmul.f32 %v5323, %v5316
        %v5353 = vmul.f32 %v5327, %v5314
        %v5354 = vmul.f32 %v5327, %v5316
        %v5355 = vmul.f32 %v5331, %v5314
        %v5356 = vmul.f32 %v5331, %v5316
        %v5357 = vmul.f32 %v5335, %v5314
        %v5358 = vmul.f32 %v5335, %v5316
        %v5359 = vmul.f32 %v5339, %v5314
        %v5360 = vmul.f32 %v5339, %v5316
        %v5361 = vmul.f32 %v5343, %v5314
        %v5362 = vmul.f32 %v5343, %v5316
        %v5363 = vmul.f32 %v5347, %v5314
        %v5364 = vmul.f32 %v5347, %v5316
        %v5381 = vrot.slane %v5349, 3
        %v5382 = vrot.slane %v5350, 3
        %v5383 = vsel %vm361, %v5381, %v5382
        %v5384 = vrot.slane %v5351, 3
        %v5385 = vrot.slane %v5352, 3
        %v5386 = vsel %vm361, %v5384, %v5385
        %v5387 = vrot.slane %v5353, 3
        %v5388 = vrot.slane %v5354, 3
        %v5389 = vsel %vm361, %v5387, %v5388
        %v5390 = vrot.slane %v5355, 3
        %v5391 = vrot.slane %v5356, 3
        %v5392 = vsel %vm361, %v5390, %v5391
        %v5393 = vrot.slane %v5357, 3
        %v5394 = vrot.slane %v5358, 3
        %v5395 = vsel %vm361, %v5393, %v5394
        %v5396 = vrot.slane %v5359, 3
        %v5397 = vrot.slane %v5360, 3
        %v5398 = vsel %vm361, %v5396, %v5397
        %v5399 = vrot.slane %v5361, 3
        %v5400 = vrot.slane %v5362, 3
        %v5401 = vsel %vm361, %v5399, %v5400
        %v5402 = vrot.slane %v5363, 3
        %v5403 = vrot.slane %v5364, 3
        %v5404 = vsel %vm361, %v5402, %v5403
        %5405 = vrot.lane.b32.xlu0 %v5383, 125
        %v5406 = vpop.permute.xlu0 %5405
        %5407 = vrot.lane.b32.xlu0 %v5386, 125
        %v5408 = vpop.permute.xlu0 %5407
        %5409 = vrot.lane.b32.xlu0 %v5389, 125
        %v5410 = vpop.permute.xlu0 %5409
        %5411 = vrot.lane.b32.xlu0 %v5392, 125
        %v5412 = vpop.permute.xlu0 %5411
        %5413 = vrot.lane.b32.xlu0 %v5395, 125
        %v5414 = vpop.permute.xlu0 %5413
        %5415 = vrot.lane.b32.xlu0 %v5398, 125
        %v5416 = vpop.permute.xlu0 %5415
        %5417 = vrot.lane.b32.xlu0 %v5401, 125
        %v5418 = vpop.permute.xlu0 %5417
        %5419 = vrot.lane.b32.xlu0 %v5404, 125
        %v5420 = vpop.permute.xlu0 %5419
        %v5429 = vadd.f32 %v5303, %v5406
        %v5430 = vadd.f32 %v5304, %v5408
        %v5431 = vadd.f32 %v5305, %v5410
        %v5432 = vadd.f32 %v5306, %v5412
        %v5433 = vadd.f32 %v5307, %v5414
        %v5434 = vadd.f32 %v5308, %v5416
        %v5435 = vadd.f32 %v5309, %v5418
        %v5436 = vadd.f32 %v5310, %v5420
        %v5437 = vsub.f32 %v169, %v2582
        %v5438 = vsub.f32 %v170, %v2582
        %v5439 = vmul.f32 %v5437, 1.442695
        %v5440 = vpow.pop %v5439
        %v5441 = vmul.f32 %v5438, 1.442695
        %v5442 = vpow.pop %v5441
        %5443 = vset.pattern.permute.xlu0 44
        %5444 = vperm.xlu0 %5443, %v425
        %v5445 = vpop.permute.xlu0 %5444
        %5447 = vset.pattern.permute.xlu0 44
        %5448 = vperm.xlu0 %5447, %v426
        %v5449 = vpop.permute.xlu0 %5448
        %5451 = vset.pattern.permute.xlu0 44
        %5452 = vperm.xlu0 %5451, %v427
        %v5453 = vpop.permute.xlu0 %5452
        %5455 = vset.pattern.permute.xlu0 44
        %5456 = vperm.xlu0 %5455, %v428
        %v5457 = vpop.permute.xlu0 %5456
        %5459 = vset.pattern.permute.xlu0 44
        %5460 = vperm.xlu0 %5459, %v429
        %v5461 = vpop.permute.xlu0 %5460
        %5463 = vset.pattern.permute.xlu0 44
        %5464 = vperm.xlu0 %5463, %v430
        %v5465 = vpop.permute.xlu0 %5464
        %5467 = vset.pattern.permute.xlu0 44
        %5468 = vperm.xlu0 %5467, %v431
        %v5469 = vpop.permute.xlu0 %5468
        %5471 = vset.pattern.permute.xlu0 44
        %5472 = vperm.xlu0 %5471, %v432
        %v5473 = vpop.permute.xlu0 %5472
        %v5475 = vmul.f32 %v5445, %v5440
        %v5476 = vmul.f32 %v5445, %v5442
        %v5477 = vmul.f32 %v5449, %v5440
        %v5478 = vmul.f32 %v5449, %v5442
        %v5479 = vmul.f32 %v5453, %v5440
        %v5480 = vmul.f32 %v5453, %v5442
        %v5481 = vmul.f32 %v5457, %v5440
        %v5482 = vmul.f32 %v5457, %v5442
        %v5483 = vmul.f32 %v5461, %v5440
        %v5484 = vmul.f32 %v5461, %v5442
        %v5485 = vmul.f32 %v5465, %v5440
        %v5486 = vmul.f32 %v5465, %v5442
        %v5487 = vmul.f32 %v5469, %v5440
        %v5488 = vmul.f32 %v5469, %v5442
        %v5489 = vmul.f32 %v5473, %v5440
        %v5490 = vmul.f32 %v5473, %v5442
        %v5507 = vrot.slane %v5475, 3
        %v5508 = vrot.slane %v5476, 3
        %v5509 = vsel %vm361, %v5507, %v5508
        %v5510 = vrot.slane %v5477, 3
        %v5511 = vrot.slane %v5478, 3
        %v5512 = vsel %vm361, %v5510, %v5511
        %v5513 = vrot.slane %v5479, 3
        %v5514 = vrot.slane %v5480, 3
        %v5515 = vsel %vm361, %v5513, %v5514
        %v5516 = vrot.slane %v5481, 3
        %v5517 = vrot.slane %v5482, 3
        %v5518 = vsel %vm361, %v5516, %v5517
        %v5519 = vrot.slane %v5483, 3
        %v5520 = vrot.slane %v5484, 3
        %v5521 = vsel %vm361, %v5519, %v5520
        %v5522 = vrot.slane %v5485, 3
        %v5523 = vrot.slane %v5486, 3
        %v5524 = vsel %vm361, %v5522, %v5523
        %v5525 = vrot.slane %v5487, 3
        %v5526 = vrot.slane %v5488, 3
        %v5527 = vsel %vm361, %v5525, %v5526
        %v5528 = vrot.slane %v5489, 3
        %v5529 = vrot.slane %v5490, 3
        %v5530 = vsel %vm361, %v5528, %v5529
        %5531 = vrot.lane.b32.xlu0 %v5509, 124
        %v5532 = vpop.permute.xlu0 %5531
        %5533 = vrot.lane.b32.xlu0 %v5512, 124
        %v5534 = vpop.permute.xlu0 %5533
        %5535 = vrot.lane.b32.xlu0 %v5515, 124
        %v5536 = vpop.permute.xlu0 %5535
        %5537 = vrot.lane.b32.xlu0 %v5518, 124
        %v5538 = vpop.permute.xlu0 %5537
        %5539 = vrot.lane.b32.xlu0 %v5521, 124
        %v5540 = vpop.permute.xlu0 %5539
        %5541 = vrot.lane.b32.xlu0 %v5524, 124
        %v5542 = vpop.permute.xlu0 %5541
        %5543 = vrot.lane.b32.xlu0 %v5527, 124
        %v5544 = vpop.permute.xlu0 %5543
        %5545 = vrot.lane.b32.xlu0 %v5530, 124
        %v5546 = vpop.permute.xlu0 %5545
        %v5555 = vadd.f32 %v5429, %v5532
        %v5556 = vadd.f32 %v5430, %v5534
        %v5557 = vadd.f32 %v5431, %v5536
        %v5558 = vadd.f32 %v5432, %v5538
        %v5559 = vadd.f32 %v5433, %v5540
        %v5560 = vadd.f32 %v5434, %v5542
        %v5561 = vadd.f32 %v5435, %v5544
        %v5562 = vadd.f32 %v5436, %v5546
        %v5563 = vsub.f32 %v169, %v2710
        %v5564 = vsub.f32 %v170, %v2710
        %v5565 = vmul.f32 %v5563, 1.442695
        %v5566 = vpow.pop %v5565
        %v5567 = vmul.f32 %v5564, 1.442695
        %v5568 = vpow.pop %v5567
        %5569 = vset.pattern.permute.xlu0 45
        %5570 = vperm.xlu0 %5569, %v425
        %v5571 = vpop.permute.xlu0 %5570
        %5573 = vset.pattern.permute.xlu0 45
        %5574 = vperm.xlu0 %5573, %v426
        %v5575 = vpop.permute.xlu0 %5574
        %5577 = vset.pattern.permute.xlu0 45
        %5578 = vperm.xlu0 %5577, %v427
        %v5579 = vpop.permute.xlu0 %5578
        %5581 = vset.pattern.permute.xlu0 45
        %5582 = vperm.xlu0 %5581, %v428
        %v5583 = vpop.permute.xlu0 %5582
        %5585 = vset.pattern.permute.xlu0 45
        %5586 = vperm.xlu0 %5585, %v429
        %v5587 = vpop.permute.xlu0 %5586
        %5589 = vset.pattern.permute.xlu0 45
        %5590 = vperm.xlu0 %5589, %v430
        %v5591 = vpop.permute.xlu0 %5590
        %5593 = vset.pattern.permute.xlu0 45
        %5594 = vperm.xlu0 %5593, %v431
        %v5595 = vpop.permute.xlu0 %5594
        %5597 = vset.pattern.permute.xlu0 45
        %5598 = vperm.xlu0 %5597, %v432
        %v5599 = vpop.permute.xlu0 %5598
        %v5601 = vmul.f32 %v5571, %v5566
        %v5602 = vmul.f32 %v5571, %v5568
        %v5603 = vmul.f32 %v5575, %v5566
        %v5604 = vmul.f32 %v5575, %v5568
        %v5605 = vmul.f32 %v5579, %v5566
        %v5606 = vmul.f32 %v5579, %v5568
        %v5607 = vmul.f32 %v5583, %v5566
        %v5608 = vmul.f32 %v5583, %v5568
        %v5609 = vmul.f32 %v5587, %v5566
        %v5610 = vmul.f32 %v5587, %v5568
        %v5611 = vmul.f32 %v5591, %v5566
        %v5612 = vmul.f32 %v5591, %v5568
        %v5613 = vmul.f32 %v5595, %v5566
        %v5614 = vmul.f32 %v5595, %v5568
        %v5615 = vmul.f32 %v5599, %v5566
        %v5616 = vmul.f32 %v5599, %v5568
        %v5633 = vrot.slane %v5601, 4
        %v5634 = vrot.slane %v5602, 4
        %v5635 = vsel %vm382, %v5633, %v5634
        %v5636 = vrot.slane %v5603, 4
        %v5637 = vrot.slane %v5604, 4
        %v5638 = vsel %vm382, %v5636, %v5637
        %v5639 = vrot.slane %v5605, 4
        %v5640 = vrot.slane %v5606, 4
        %v5641 = vsel %vm382, %v5639, %v5640
        %v5642 = vrot.slane %v5607, 4
        %v5643 = vrot.slane %v5608, 4
        %v5644 = vsel %vm382, %v5642, %v5643
        %v5645 = vrot.slane %v5609, 4
        %v5646 = vrot.slane %v5610, 4
        %v5647 = vsel %vm382, %v5645, %v5646
        %v5648 = vrot.slane %v5611, 4
        %v5649 = vrot.slane %v5612, 4
        %v5650 = vsel %vm382, %v5648, %v5649
        %v5651 = vrot.slane %v5613, 4
        %v5652 = vrot.slane %v5614, 4
        %v5653 = vsel %vm382, %v5651, %v5652
        %v5654 = vrot.slane %v5615, 4
        %v5655 = vrot.slane %v5616, 4
        %v5656 = vsel %vm382, %v5654, %v5655
        %v5665 = vadd.f32 %v5555, %v5635
        %v5666 = vadd.f32 %v5556, %v5638
        %v5667 = vadd.f32 %v5557, %v5641
        %v5668 = vadd.f32 %v5558, %v5644
        %v5669 = vadd.f32 %v5559, %v5647
        %v5670 = vadd.f32 %v5560, %v5650
        %v5671 = vadd.f32 %v5561, %v5653
        %v5672 = vadd.f32 %v5562, %v5656
        %v5673 = vsub.f32 %v169, %v2823
        %v5674 = vsub.f32 %v170, %v2823
        %v5675 = vmul.f32 %v5673, 1.442695
        %v5676 = vpow.pop %v5675
        %v5677 = vmul.f32 %v5674, 1.442695
        %v5678 = vpow.pop %v5677
        %5679 = vset.pattern.permute.xlu0 46
        %5680 = vperm.xlu0 %5679, %v425
        %v5681 = vpop.permute.xlu0 %5680
        %5683 = vset.pattern.permute.xlu0 46
        %5684 = vperm.xlu0 %5683, %v426
        %v5685 = vpop.permute.xlu0 %5684
        %5687 = vset.pattern.permute.xlu0 46
        %5688 = vperm.xlu0 %5687, %v427
        %v5689 = vpop.permute.xlu0 %5688
        %5691 = vset.pattern.permute.xlu0 46
        %5692 = vperm.xlu0 %5691, %v428
        %v5693 = vpop.permute.xlu0 %5692
        %5695 = vset.pattern.permute.xlu0 46
        %5696 = vperm.xlu0 %5695, %v429
        %v5697 = vpop.permute.xlu0 %5696
        %5699 = vset.pattern.permute.xlu0 46
        %5700 = vperm.xlu0 %5699, %v430
        %v5701 = vpop.permute.xlu0 %5700
        %5703 = vset.pattern.permute.xlu0 46
        %5704 = vperm.xlu0 %5703, %v431
        %v5705 = vpop.permute.xlu0 %5704
        %5707 = vset.pattern.permute.xlu0 46
        %5708 = vperm.xlu0 %5707, %v432
        %v5709 = vpop.permute.xlu0 %5708
        %v5711 = vmul.f32 %v5681, %v5676
        %v5712 = vmul.f32 %v5681, %v5678
        %v5713 = vmul.f32 %v5685, %v5676
        %v5714 = vmul.f32 %v5685, %v5678
        %v5715 = vmul.f32 %v5689, %v5676
        %v5716 = vmul.f32 %v5689, %v5678
        %v5717 = vmul.f32 %v5693, %v5676
        %v5718 = vmul.f32 %v5693, %v5678
        %v5719 = vmul.f32 %v5697, %v5676
        %v5720 = vmul.f32 %v5697, %v5678
        %v5721 = vmul.f32 %v5701, %v5676
        %v5722 = vmul.f32 %v5701, %v5678
        %v5723 = vmul.f32 %v5705, %v5676
        %v5724 = vmul.f32 %v5705, %v5678
        %v5725 = vmul.f32 %v5709, %v5676
        %v5726 = vmul.f32 %v5709, %v5678
        %v5743 = vrot.slane %v5711, 4
        %v5744 = vrot.slane %v5712, 4
        %v5745 = vsel %vm382, %v5743, %v5744
        %v5746 = vrot.slane %v5713, 4
        %v5747 = vrot.slane %v5714, 4
        %v5748 = vsel %vm382, %v5746, %v5747
        %v5749 = vrot.slane %v5715, 4
        %v5750 = vrot.slane %v5716, 4
        %v5751 = vsel %vm382, %v5749, %v5750
        %v5752 = vrot.slane %v5717, 4
        %v5753 = vrot.slane %v5718, 4
        %v5754 = vsel %vm382, %v5752, %v5753
        %v5755 = vrot.slane %v5719, 4
        %v5756 = vrot.slane %v5720, 4
        %v5757 = vsel %vm382, %v5755, %v5756
        %v5758 = vrot.slane %v5721, 4
        %v5759 = vrot.slane %v5722, 4
        %v5760 = vsel %vm382, %v5758, %v5759
        %v5761 = vrot.slane %v5723, 4
        %v5762 = vrot.slane %v5724, 4
        %v5763 = vsel %vm382, %v5761, %v5762
        %v5764 = vrot.slane %v5725, 4
        %v5765 = vrot.slane %v5726, 4
        %v5766 = vsel %vm382, %v5764, %v5765
        %5767 = vrot.lane.b32.xlu0 %v5745, 127
        %v5768 = vpop.permute.xlu0 %5767
        %5769 = vrot.lane.b32.xlu0 %v5748, 127
        %v5770 = vpop.permute.xlu0 %5769
        %5771 = vrot.lane.b32.xlu0 %v5751, 127
        %v5772 = vpop.permute.xlu0 %5771
        %5773 = vrot.lane.b32.xlu0 %v5754, 127
        %v5774 = vpop.permute.xlu0 %5773
        %5775 = vrot.lane.b32.xlu0 %v5757, 127
        %v5776 = vpop.permute.xlu0 %5775
        %5777 = vrot.lane.b32.xlu0 %v5760, 127
        %v5778 = vpop.permute.xlu0 %5777
        %5779 = vrot.lane.b32.xlu0 %v5763, 127
        %v5780 = vpop.permute.xlu0 %5779
        %5781 = vrot.lane.b32.xlu0 %v5766, 127
        %v5782 = vpop.permute.xlu0 %5781
        %v5791 = vadd.f32 %v5665, %v5768
        %v5792 = vadd.f32 %v5666, %v5770
        %v5793 = vadd.f32 %v5667, %v5772
        %v5794 = vadd.f32 %v5668, %v5774
        %v5795 = vadd.f32 %v5669, %v5776
        %v5796 = vadd.f32 %v5670, %v5778
        %v5797 = vadd.f32 %v5671, %v5780
        %v5798 = vadd.f32 %v5672, %v5782
        %v5799 = vsub.f32 %v169, %v2952
        %v5800 = vsub.f32 %v170, %v2952
        %v5801 = vmul.f32 %v5799, 1.442695
        %v5802 = vpow.pop %v5801
        %v5803 = vmul.f32 %v5800, 1.442695
        %v5804 = vpow.pop %v5803
        %5805 = vset.pattern.permute.xlu0 47
        %5806 = vperm.xlu0 %5805, %v425
        %v5807 = vpop.permute.xlu0 %5806
        %5809 = vset.pattern.permute.xlu0 47
        %5810 = vperm.xlu0 %5809, %v426
        %v5811 = vpop.permute.xlu0 %5810
        %5813 = vset.pattern.permute.xlu0 47
        %5814 = vperm.xlu0 %5813, %v427
        %v5815 = vpop.permute.xlu0 %5814
        %5817 = vset.pattern.permute.xlu0 47
        %5818 = vperm.xlu0 %5817, %v428
        %v5819 = vpop.permute.xlu0 %5818
        %5821 = vset.pattern.permute.xlu0 47
        %5822 = vperm.xlu0 %5821, %v429
        %v5823 = vpop.permute.xlu0 %5822
        %5825 = vset.pattern.permute.xlu0 47
        %5826 = vperm.xlu0 %5825, %v430
        %v5827 = vpop.permute.xlu0 %5826
        %5829 = vset.pattern.permute.xlu0 47
        %5830 = vperm.xlu0 %5829, %v431
        %v5831 = vpop.permute.xlu0 %5830
        %5833 = vset.pattern.permute.xlu0 47
        %5834 = vperm.xlu0 %5833, %v432
        %v5835 = vpop.permute.xlu0 %5834
        %v5837 = vmul.f32 %v5807, %v5802
        %v5838 = vmul.f32 %v5807, %v5804
        %v5839 = vmul.f32 %v5811, %v5802
        %v5840 = vmul.f32 %v5811, %v5804
        %v5841 = vmul.f32 %v5815, %v5802
        %v5842 = vmul.f32 %v5815, %v5804
        %v5843 = vmul.f32 %v5819, %v5802
        %v5844 = vmul.f32 %v5819, %v5804
        %v5845 = vmul.f32 %v5823, %v5802
        %v5846 = vmul.f32 %v5823, %v5804
        %v5847 = vmul.f32 %v5827, %v5802
        %v5848 = vmul.f32 %v5827, %v5804
        %v5849 = vmul.f32 %v5831, %v5802
        %v5850 = vmul.f32 %v5831, %v5804
        %v5851 = vmul.f32 %v5835, %v5802
        %v5852 = vmul.f32 %v5835, %v5804
        %v5869 = vrot.slane %v5837, 4
        %v5870 = vrot.slane %v5838, 4
        %v5871 = vsel %vm382, %v5869, %v5870
        %v5872 = vrot.slane %v5839, 4
        %v5873 = vrot.slane %v5840, 4
        %v5874 = vsel %vm382, %v5872, %v5873
        %v5875 = vrot.slane %v5841, 4
        %v5876 = vrot.slane %v5842, 4
        %v5877 = vsel %vm382, %v5875, %v5876
        %v5878 = vrot.slane %v5843, 4
        %v5879 = vrot.slane %v5844, 4
        %v5880 = vsel %vm382, %v5878, %v5879
        %v5881 = vrot.slane %v5845, 4
        %v5882 = vrot.slane %v5846, 4
        %v5883 = vsel %vm382, %v5881, %v5882
        %v5884 = vrot.slane %v5847, 4
        %v5885 = vrot.slane %v5848, 4
        %v5886 = vsel %vm382, %v5884, %v5885
        %v5887 = vrot.slane %v5849, 4
        %v5888 = vrot.slane %v5850, 4
        %v5889 = vsel %vm382, %v5887, %v5888
        %v5890 = vrot.slane %v5851, 4
        %v5891 = vrot.slane %v5852, 4
        %v5892 = vsel %vm382, %v5890, %v5891
        %5893 = vrot.lane.b32.xlu0 %v5871, 126
        %v5894 = vpop.permute.xlu0 %5893
        %5895 = vrot.lane.b32.xlu0 %v5874, 126
        %v5896 = vpop.permute.xlu0 %5895
        %5897 = vrot.lane.b32.xlu0 %v5877, 126
        %v5898 = vpop.permute.xlu0 %5897
        %5899 = vrot.lane.b32.xlu0 %v5880, 126
        %v5900 = vpop.permute.xlu0 %5899
        %5901 = vrot.lane.b32.xlu0 %v5883, 126
        %v5902 = vpop.permute.xlu0 %5901
        %5903 = vrot.lane.b32.xlu0 %v5886, 126
        %v5904 = vpop.permute.xlu0 %5903
        %5905 = vrot.lane.b32.xlu0 %v5889, 126
        %v5906 = vpop.permute.xlu0 %5905
        %5907 = vrot.lane.b32.xlu0 %v5892, 126
        %v5908 = vpop.permute.xlu0 %5907
        %v5917 = vadd.f32 %v5791, %v5894
        %v5918 = vadd.f32 %v5792, %v5896
        %v5919 = vadd.f32 %v5793, %v5898
        %v5920 = vadd.f32 %v5794, %v5900
        %v5921 = vadd.f32 %v5795, %v5902
        %v5922 = vadd.f32 %v5796, %v5904
        %v5923 = vadd.f32 %v5797, %v5906
        %v5924 = vadd.f32 %v5798, %v5908
        %v5925 = vsub.f32 %v169, %v3081
        %v5926 = vsub.f32 %v170, %v3081
        %v5927 = vmul.f32 %v5925, 1.442695
        %v5928 = vpow.pop %v5927
        %v5929 = vmul.f32 %v5926, 1.442695
        %v5930 = vpow.pop %v5929
        %5931 = vset.pattern.permute.xlu0 48
        %5932 = vperm.xlu0 %5931, %v425
        %v5933 = vpop.permute.xlu0 %5932
        %5935 = vset.pattern.permute.xlu0 48
        %5936 = vperm.xlu0 %5935, %v426
        %v5937 = vpop.permute.xlu0 %5936
        %5939 = vset.pattern.permute.xlu0 48
        %5940 = vperm.xlu0 %5939, %v427
        %v5941 = vpop.permute.xlu0 %5940
        %5943 = vset.pattern.permute.xlu0 48
        %5944 = vperm.xlu0 %5943, %v428
        %v5945 = vpop.permute.xlu0 %5944
        %5947 = vset.pattern.permute.xlu0 48
        %5948 = vperm.xlu0 %5947, %v429
        %v5949 = vpop.permute.xlu0 %5948
        %5951 = vset.pattern.permute.xlu0 48
        %5952 = vperm.xlu0 %5951, %v430
        %v5953 = vpop.permute.xlu0 %5952
        %5955 = vset.pattern.permute.xlu0 48
        %5956 = vperm.xlu0 %5955, %v431
        %v5957 = vpop.permute.xlu0 %5956
        %5959 = vset.pattern.permute.xlu0 48
        %5960 = vperm.xlu0 %5959, %v432
        %v5961 = vpop.permute.xlu0 %5960
        %v5963 = vmul.f32 %v5933, %v5928
        %v5964 = vmul.f32 %v5933, %v5930
        %v5965 = vmul.f32 %v5937, %v5928
        %v5966 = vmul.f32 %v5937, %v5930
        %v5967 = vmul.f32 %v5941, %v5928
        %v5968 = vmul.f32 %v5941, %v5930
        %v5969 = vmul.f32 %v5945, %v5928
        %v5970 = vmul.f32 %v5945, %v5930
        %v5971 = vmul.f32 %v5949, %v5928
        %v5972 = vmul.f32 %v5949, %v5930
        %v5973 = vmul.f32 %v5953, %v5928
        %v5974 = vmul.f32 %v5953, %v5930
        %v5975 = vmul.f32 %v5957, %v5928
        %v5976 = vmul.f32 %v5957, %v5930
        %v5977 = vmul.f32 %v5961, %v5928
        %v5978 = vmul.f32 %v5961, %v5930
        %v5995 = vrot.slane %v5963, 4
        %v5996 = vrot.slane %v5964, 4
        %v5997 = vsel %vm382, %v5995, %v5996
        %v5998 = vrot.slane %v5965, 4
        %v5999 = vrot.slane %v5966, 4
        %v6000 = vsel %vm382, %v5998, %v5999
        %v6001 = vrot.slane %v5967, 4
        %v6002 = vrot.slane %v5968, 4
        %v6003 = vsel %vm382, %v6001, %v6002
        %v6004 = vrot.slane %v5969, 4
        %v6005 = vrot.slane %v5970, 4
        %v6006 = vsel %vm382, %v6004, %v6005
        %v6007 = vrot.slane %v5971, 4
        %v6008 = vrot.slane %v5972, 4
        %v6009 = vsel %vm382, %v6007, %v6008
        %v6010 = vrot.slane %v5973, 4
        %v6011 = vrot.slane %v5974, 4
        %v6012 = vsel %vm382, %v6010, %v6011
        %v6013 = vrot.slane %v5975, 4
        %v6014 = vrot.slane %v5976, 4
        %v6015 = vsel %vm382, %v6013, %v6014
        %v6016 = vrot.slane %v5977, 4
        %v6017 = vrot.slane %v5978, 4
        %v6018 = vsel %vm382, %v6016, %v6017
        %6019 = vrot.lane.b32.xlu0 %v5997, 125
        %v6020 = vpop.permute.xlu0 %6019
        %6021 = vrot.lane.b32.xlu0 %v6000, 125
        %v6022 = vpop.permute.xlu0 %6021
        %6023 = vrot.lane.b32.xlu0 %v6003, 125
        %v6024 = vpop.permute.xlu0 %6023
        %6025 = vrot.lane.b32.xlu0 %v6006, 125
        %v6026 = vpop.permute.xlu0 %6025
        %6027 = vrot.lane.b32.xlu0 %v6009, 125
        %v6028 = vpop.permute.xlu0 %6027
        %6029 = vrot.lane.b32.xlu0 %v6012, 125
        %v6030 = vpop.permute.xlu0 %6029
        %6031 = vrot.lane.b32.xlu0 %v6015, 125
        %v6032 = vpop.permute.xlu0 %6031
        %6033 = vrot.lane.b32.xlu0 %v6018, 125
        %v6034 = vpop.permute.xlu0 %6033
        %v6043 = vadd.f32 %v5917, %v6020
        %v6044 = vadd.f32 %v5918, %v6022
        %v6045 = vadd.f32 %v5919, %v6024
        %v6046 = vadd.f32 %v5920, %v6026
        %v6047 = vadd.f32 %v5921, %v6028
        %v6048 = vadd.f32 %v5922, %v6030
        %v6049 = vadd.f32 %v5923, %v6032
        %v6050 = vadd.f32 %v5924, %v6034
        %v6051 = vsub.f32 %v169, %v3210
        %v6052 = vsub.f32 %v170, %v3210
        %v6053 = vmul.f32 %v6051, 1.442695
        %v6054 = vpow.pop %v6053
        %v6055 = vmul.f32 %v6052, 1.442695
        %v6056 = vpow.pop %v6055
        %6057 = vset.pattern.permute.xlu0 49
        %6058 = vperm.xlu0 %6057, %v425
        %v6059 = vpop.permute.xlu0 %6058
        %6061 = vset.pattern.permute.xlu0 49
        %6062 = vperm.xlu0 %6061, %v426
        %v6063 = vpop.permute.xlu0 %6062
        %6065 = vset.pattern.permute.xlu0 49
        %6066 = vperm.xlu0 %6065, %v427
        %v6067 = vpop.permute.xlu0 %6066
        %6069 = vset.pattern.permute.xlu0 49
        %6070 = vperm.xlu0 %6069, %v428
        %v6071 = vpop.permute.xlu0 %6070
        %6073 = vset.pattern.permute.xlu0 49
        %6074 = vperm.xlu0 %6073, %v429
        %v6075 = vpop.permute.xlu0 %6074
        %6077 = vset.pattern.permute.xlu0 49
        %6078 = vperm.xlu0 %6077, %v430
        %v6079 = vpop.permute.xlu0 %6078
        %6081 = vset.pattern.permute.xlu0 49
        %6082 = vperm.xlu0 %6081, %v431
        %v6083 = vpop.permute.xlu0 %6082
        %6085 = vset.pattern.permute.xlu0 49
        %6086 = vperm.xlu0 %6085, %v432
        %v6087 = vpop.permute.xlu0 %6086
        %v6089 = vmul.f32 %v6059, %v6054
        %v6090 = vmul.f32 %v6059, %v6056
        %v6091 = vmul.f32 %v6063, %v6054
        %v6092 = vmul.f32 %v6063, %v6056
        %v6093 = vmul.f32 %v6067, %v6054
        %v6094 = vmul.f32 %v6067, %v6056
        %v6095 = vmul.f32 %v6071, %v6054
        %v6096 = vmul.f32 %v6071, %v6056
        %v6097 = vmul.f32 %v6075, %v6054
        %v6098 = vmul.f32 %v6075, %v6056
        %v6099 = vmul.f32 %v6079, %v6054
        %v6100 = vmul.f32 %v6079, %v6056
        %v6101 = vmul.f32 %v6083, %v6054
        %v6102 = vmul.f32 %v6083, %v6056
        %v6103 = vmul.f32 %v6087, %v6054
        %v6104 = vmul.f32 %v6087, %v6056
        %v6121 = vrot.slane %v6089, 4
        %v6122 = vrot.slane %v6090, 4
        %v6123 = vsel %vm382, %v6121, %v6122
        %v6124 = vrot.slane %v6091, 4
        %v6125 = vrot.slane %v6092, 4
        %v6126 = vsel %vm382, %v6124, %v6125
        %v6127 = vrot.slane %v6093, 4
        %v6128 = vrot.slane %v6094, 4
        %v6129 = vsel %vm382, %v6127, %v6128
        %v6130 = vrot.slane %v6095, 4
        %v6131 = vrot.slane %v6096, 4
        %v6132 = vsel %vm382, %v6130, %v6131
        %v6133 = vrot.slane %v6097, 4
        %v6134 = vrot.slane %v6098, 4
        %v6135 = vsel %vm382, %v6133, %v6134
        %v6136 = vrot.slane %v6099, 4
        %v6137 = vrot.slane %v6100, 4
        %v6138 = vsel %vm382, %v6136, %v6137
        %v6139 = vrot.slane %v6101, 4
        %v6140 = vrot.slane %v6102, 4
        %v6141 = vsel %vm382, %v6139, %v6140
        %v6142 = vrot.slane %v6103, 4
        %v6143 = vrot.slane %v6104, 4
        %v6144 = vsel %vm382, %v6142, %v6143
        %6145 = vrot.lane.b32.xlu0 %v6123, 124
        %v6146 = vpop.permute.xlu0 %6145
        %6147 = vrot.lane.b32.xlu0 %v6126, 124
        %v6148 = vpop.permute.xlu0 %6147
        %6149 = vrot.lane.b32.xlu0 %v6129, 124
        %v6150 = vpop.permute.xlu0 %6149
        %6151 = vrot.lane.b32.xlu0 %v6132, 124
        %v6152 = vpop.permute.xlu0 %6151
        %6153 = vrot.lane.b32.xlu0 %v6135, 124
        %v6154 = vpop.permute.xlu0 %6153
        %6155 = vrot.lane.b32.xlu0 %v6138, 124
        %v6156 = vpop.permute.xlu0 %6155
        %6157 = vrot.lane.b32.xlu0 %v6141, 124
        %v6158 = vpop.permute.xlu0 %6157
        %6159 = vrot.lane.b32.xlu0 %v6144, 124
        %v6160 = vpop.permute.xlu0 %6159
        %v6169 = vadd.f32 %v6043, %v6146
        %v6170 = vadd.f32 %v6044, %v6148
        %v6171 = vadd.f32 %v6045, %v6150
        %v6172 = vadd.f32 %v6046, %v6152
        %v6173 = vadd.f32 %v6047, %v6154
        %v6174 = vadd.f32 %v6048, %v6156
        %v6175 = vadd.f32 %v6049, %v6158
        %v6176 = vadd.f32 %v6050, %v6160
        %v6177 = vsub.f32 %v171, %v405
        %v6178 = vmul.f32 %v6177, 1.442695
        %v6179 = vpow.pop %v6178
        %6180 = vset.pattern.permute.xlu0 50
        %6181 = vperm.xlu0 %6180, %v425
        %v6182 = vpop.permute.xlu0 %6181
        %6184 = vset.pattern.permute.xlu0 50
        %6185 = vperm.xlu0 %6184, %v426
        %v6186 = vpop.permute.xlu0 %6185
        %6188 = vset.pattern.permute.xlu0 50
        %6189 = vperm.xlu0 %6188, %v427
        %v6190 = vpop.permute.xlu0 %6189
        %6192 = vset.pattern.permute.xlu0 50
        %6193 = vperm.xlu0 %6192, %v428
        %v6194 = vpop.permute.xlu0 %6193
        %6196 = vset.pattern.permute.xlu0 50
        %6197 = vperm.xlu0 %6196, %v429
        %v6198 = vpop.permute.xlu0 %6197
        %6200 = vset.pattern.permute.xlu0 50
        %6201 = vperm.xlu0 %6200, %v430
        %v6202 = vpop.permute.xlu0 %6201
        %6204 = vset.pattern.permute.xlu0 50
        %6205 = vperm.xlu0 %6204, %v431
        %v6206 = vpop.permute.xlu0 %6205
        %6208 = vset.pattern.permute.xlu0 50
        %6209 = vperm.xlu0 %6208, %v432
        %v6210 = vpop.permute.xlu0 %6209
        %v6212 = vmul.f32 %v6182, %v6179
        %v6213 = vmul.f32 %v6186, %v6179
        %v6214 = vmul.f32 %v6190, %v6179
        %v6215 = vmul.f32 %v6194, %v6179
        %v6216 = vmul.f32 %v6198, %v6179
        %v6217 = vmul.f32 %v6202, %v6179
        %v6218 = vmul.f32 %v6206, %v6179
        %v6219 = vmul.f32 %v6210, %v6179
        %v6220 = vadd.f32 %v6169, %v6212
        %v6221 = vadd.f32 %v6170, %v6213
        %v6222 = vadd.f32 %v6171, %v6214
        %v6223 = vadd.f32 %v6172, %v6215
        %v6224 = vadd.f32 %v6173, %v6216
        %v6225 = vadd.f32 %v6174, %v6217
        %v6226 = vadd.f32 %v6175, %v6218
        %v6227 = vadd.f32 %v6176, %v6219
        %v6228 = vsub.f32 %v171, %v483
        %v6229 = vmul.f32 %v6228, 1.442695
        %v6230 = vpow.pop %v6229
        %6231 = vset.pattern.permute.xlu0 51
        %6232 = vperm.xlu0 %6231, %v425
        %v6233 = vpop.permute.xlu0 %6232
        %6235 = vset.pattern.permute.xlu0 51
        %6236 = vperm.xlu0 %6235, %v426
        %v6237 = vpop.permute.xlu0 %6236
        %6239 = vset.pattern.permute.xlu0 51
        %6240 = vperm.xlu0 %6239, %v427
        %v6241 = vpop.permute.xlu0 %6240
        %6243 = vset.pattern.permute.xlu0 51
        %6244 = vperm.xlu0 %6243, %v428
        %v6245 = vpop.permute.xlu0 %6244
        %6247 = vset.pattern.permute.xlu0 51
        %6248 = vperm.xlu0 %6247, %v429
        %v6249 = vpop.permute.xlu0 %6248
        %6251 = vset.pattern.permute.xlu0 51
        %6252 = vperm.xlu0 %6251, %v430
        %v6253 = vpop.permute.xlu0 %6252
        %6255 = vset.pattern.permute.xlu0 51
        %6256 = vperm.xlu0 %6255, %v431
        %v6257 = vpop.permute.xlu0 %6256
        %6259 = vset.pattern.permute.xlu0 51
        %6260 = vperm.xlu0 %6259, %v432
        %v6261 = vpop.permute.xlu0 %6260
        %v6263 = vmul.f32 %v6233, %v6230
        %v6264 = vmul.f32 %v6237, %v6230
        %v6265 = vmul.f32 %v6241, %v6230
        %v6266 = vmul.f32 %v6245, %v6230
        %v6267 = vmul.f32 %v6249, %v6230
        %v6268 = vmul.f32 %v6253, %v6230
        %v6269 = vmul.f32 %v6257, %v6230
        %v6270 = vmul.f32 %v6261, %v6230
        %6279 = vrot.lane.b32.xlu0 %v6263, 127
        %v6280 = vpop.permute.xlu0 %6279
        %6281 = vrot.lane.b32.xlu0 %v6264, 127
        %v6282 = vpop.permute.xlu0 %6281
        %6283 = vrot.lane.b32.xlu0 %v6265, 127
        %v6284 = vpop.permute.xlu0 %6283
        %6285 = vrot.lane.b32.xlu0 %v6266, 127
        %v6286 = vpop.permute.xlu0 %6285
        %6287 = vrot.lane.b32.xlu0 %v6267, 127
        %v6288 = vpop.permute.xlu0 %6287
        %6289 = vrot.lane.b32.xlu0 %v6268, 127
        %v6290 = vpop.permute.xlu0 %6289
        %6291 = vrot.lane.b32.xlu0 %v6269, 127
        %v6292 = vpop.permute.xlu0 %6291
        %6293 = vrot.lane.b32.xlu0 %v6270, 127
        %v6294 = vpop.permute.xlu0 %6293
        %v6303 = vadd.f32 %v6220, %v6280
        %v6304 = vadd.f32 %v6221, %v6282
        %v6305 = vadd.f32 %v6222, %v6284
        %v6306 = vadd.f32 %v6223, %v6286
        %v6307 = vadd.f32 %v6224, %v6288
        %v6308 = vadd.f32 %v6225, %v6290
        %v6309 = vadd.f32 %v6226, %v6292
        %v6310 = vadd.f32 %v6227, %v6294
        %v6311 = vsub.f32 %v171, %v569
        %v6312 = vmul.f32 %v6311, 1.442695
        %v6313 = vpow.pop %v6312
        %6314 = vset.pattern.permute.xlu0 52
        %6315 = vperm.xlu0 %6314, %v425
        %v6316 = vpop.permute.xlu0 %6315
        %6318 = vset.pattern.permute.xlu0 52
        %6319 = vperm.xlu0 %6318, %v426
        %v6320 = vpop.permute.xlu0 %6319
        %6322 = vset.pattern.permute.xlu0 52
        %6323 = vperm.xlu0 %6322, %v427
        %v6324 = vpop.permute.xlu0 %6323
        %6326 = vset.pattern.permute.xlu0 52
        %6327 = vperm.xlu0 %6326, %v428
        %v6328 = vpop.permute.xlu0 %6327
        %6330 = vset.pattern.permute.xlu0 52
        %6331 = vperm.xlu0 %6330, %v429
        %v6332 = vpop.permute.xlu0 %6331
        %6334 = vset.pattern.permute.xlu0 52
        %6335 = vperm.xlu0 %6334, %v430
        %v6336 = vpop.permute.xlu0 %6335
        %6338 = vset.pattern.permute.xlu0 52
        %6339 = vperm.xlu0 %6338, %v431
        %v6340 = vpop.permute.xlu0 %6339
        %6342 = vset.pattern.permute.xlu0 52
        %6343 = vperm.xlu0 %6342, %v432
        %v6344 = vpop.permute.xlu0 %6343
        %v6346 = vmul.f32 %v6316, %v6313
        %v6347 = vmul.f32 %v6320, %v6313
        %v6348 = vmul.f32 %v6324, %v6313
        %v6349 = vmul.f32 %v6328, %v6313
        %v6350 = vmul.f32 %v6332, %v6313
        %v6351 = vmul.f32 %v6336, %v6313
        %v6352 = vmul.f32 %v6340, %v6313
        %v6353 = vmul.f32 %v6344, %v6313
        %6362 = vrot.lane.b32.xlu0 %v6346, 126
        %v6363 = vpop.permute.xlu0 %6362
        %6364 = vrot.lane.b32.xlu0 %v6347, 126
        %v6365 = vpop.permute.xlu0 %6364
        %6366 = vrot.lane.b32.xlu0 %v6348, 126
        %v6367 = vpop.permute.xlu0 %6366
        %6368 = vrot.lane.b32.xlu0 %v6349, 126
        %v6369 = vpop.permute.xlu0 %6368
        %6370 = vrot.lane.b32.xlu0 %v6350, 126
        %v6371 = vpop.permute.xlu0 %6370
        %6372 = vrot.lane.b32.xlu0 %v6351, 126
        %v6373 = vpop.permute.xlu0 %6372
        %6374 = vrot.lane.b32.xlu0 %v6352, 126
        %v6375 = vpop.permute.xlu0 %6374
        %6376 = vrot.lane.b32.xlu0 %v6353, 126
        %v6377 = vpop.permute.xlu0 %6376
        %v6386 = vadd.f32 %v6303, %v6363
        %v6387 = vadd.f32 %v6304, %v6365
        %v6388 = vadd.f32 %v6305, %v6367
        %v6389 = vadd.f32 %v6306, %v6369
        %v6390 = vadd.f32 %v6307, %v6371
        %v6391 = vadd.f32 %v6308, %v6373
        %v6392 = vadd.f32 %v6309, %v6375
        %v6393 = vadd.f32 %v6310, %v6377
        %v6394 = vsub.f32 %v171, %v655
        %v6395 = vmul.f32 %v6394, 1.442695
        %v6396 = vpow.pop %v6395
        %6397 = vset.pattern.permute.xlu0 53
        %6398 = vperm.xlu0 %6397, %v425
        %v6399 = vpop.permute.xlu0 %6398
        %6401 = vset.pattern.permute.xlu0 53
        %6402 = vperm.xlu0 %6401, %v426
        %v6403 = vpop.permute.xlu0 %6402
        %6405 = vset.pattern.permute.xlu0 53
        %6406 = vperm.xlu0 %6405, %v427
        %v6407 = vpop.permute.xlu0 %6406
        %6409 = vset.pattern.permute.xlu0 53
        %6410 = vperm.xlu0 %6409, %v428
        %v6411 = vpop.permute.xlu0 %6410
        %6413 = vset.pattern.permute.xlu0 53
        %6414 = vperm.xlu0 %6413, %v429
        %v6415 = vpop.permute.xlu0 %6414
        %6417 = vset.pattern.permute.xlu0 53
        %6418 = vperm.xlu0 %6417, %v430
        %v6419 = vpop.permute.xlu0 %6418
        %6421 = vset.pattern.permute.xlu0 53
        %6422 = vperm.xlu0 %6421, %v431
        %v6423 = vpop.permute.xlu0 %6422
        %6425 = vset.pattern.permute.xlu0 53
        %6426 = vperm.xlu0 %6425, %v432
        %v6427 = vpop.permute.xlu0 %6426
        %v6429 = vmul.f32 %v6399, %v6396
        %v6430 = vmul.f32 %v6403, %v6396
        %v6431 = vmul.f32 %v6407, %v6396
        %v6432 = vmul.f32 %v6411, %v6396
        %v6433 = vmul.f32 %v6415, %v6396
        %v6434 = vmul.f32 %v6419, %v6396
        %v6435 = vmul.f32 %v6423, %v6396
        %v6436 = vmul.f32 %v6427, %v6396
        %6445 = vrot.lane.b32.xlu0 %v6429, 125
        %v6446 = vpop.permute.xlu0 %6445
        %6447 = vrot.lane.b32.xlu0 %v6430, 125
        %v6448 = vpop.permute.xlu0 %6447
        %6449 = vrot.lane.b32.xlu0 %v6431, 125
        %v6450 = vpop.permute.xlu0 %6449
        %6451 = vrot.lane.b32.xlu0 %v6432, 125
        %v6452 = vpop.permute.xlu0 %6451
        %6453 = vrot.lane.b32.xlu0 %v6433, 125
        %v6454 = vpop.permute.xlu0 %6453
        %6455 = vrot.lane.b32.xlu0 %v6434, 125
        %v6456 = vpop.permute.xlu0 %6455
        %6457 = vrot.lane.b32.xlu0 %v6435, 125
        %v6458 = vpop.permute.xlu0 %6457
        %6459 = vrot.lane.b32.xlu0 %v6436, 125
        %v6460 = vpop.permute.xlu0 %6459
        %v6469 = vadd.f32 %v6386, %v6446
        %v6470 = vadd.f32 %v6387, %v6448
        %v6471 = vadd.f32 %v6388, %v6450
        %v6472 = vadd.f32 %v6389, %v6452
        %v6473 = vadd.f32 %v6390, %v6454
        %v6474 = vadd.f32 %v6391, %v6456
        %v6475 = vadd.f32 %v6392, %v6458
        %v6476 = vadd.f32 %v6393, %v6460
        %v6477 = vsub.f32 %v171, %v741
        %v6478 = vmul.f32 %v6477, 1.442695
        %v6479 = vpow.pop %v6478
        %6480 = vset.pattern.permute.xlu0 54
        %6481 = vperm.xlu0 %6480, %v425
        %v6482 = vpop.permute.xlu0 %6481
        %6484 = vset.pattern.permute.xlu0 54
        %6485 = vperm.xlu0 %6484, %v426
        %v6486 = vpop.permute.xlu0 %6485
        %6488 = vset.pattern.permute.xlu0 54
        %6489 = vperm.xlu0 %6488, %v427
        %v6490 = vpop.permute.xlu0 %6489
        %6492 = vset.pattern.permute.xlu0 54
        %6493 = vperm.xlu0 %6492, %v428
        %v6494 = vpop.permute.xlu0 %6493
        %6496 = vset.pattern.permute.xlu0 54
        %6497 = vperm.xlu0 %6496, %v429
        %v6498 = vpop.permute.xlu0 %6497
        %6500 = vset.pattern.permute.xlu0 54
        %6501 = vperm.xlu0 %6500, %v430
        %v6502 = vpop.permute.xlu0 %6501
        %6504 = vset.pattern.permute.xlu0 54
        %6505 = vperm.xlu0 %6504, %v431
        %v6506 = vpop.permute.xlu0 %6505
        %6508 = vset.pattern.permute.xlu0 54
        %6509 = vperm.xlu0 %6508, %v432
        %v6510 = vpop.permute.xlu0 %6509
        %v6512 = vmul.f32 %v6482, %v6479
        %v6513 = vmul.f32 %v6486, %v6479
        %v6514 = vmul.f32 %v6490, %v6479
        %v6515 = vmul.f32 %v6494, %v6479
        %v6516 = vmul.f32 %v6498, %v6479
        %v6517 = vmul.f32 %v6502, %v6479
        %v6518 = vmul.f32 %v6506, %v6479
        %v6519 = vmul.f32 %v6510, %v6479
        %6528 = vrot.lane.b32.xlu0 %v6512, 124
        %v6529 = vpop.permute.xlu0 %6528
        %6530 = vrot.lane.b32.xlu0 %v6513, 124
        %v6531 = vpop.permute.xlu0 %6530
        %6532 = vrot.lane.b32.xlu0 %v6514, 124
        %v6533 = vpop.permute.xlu0 %6532
        %6534 = vrot.lane.b32.xlu0 %v6515, 124
        %v6535 = vpop.permute.xlu0 %6534
        %6536 = vrot.lane.b32.xlu0 %v6516, 124
        %v6537 = vpop.permute.xlu0 %6536
        %6538 = vrot.lane.b32.xlu0 %v6517, 124
        %v6539 = vpop.permute.xlu0 %6538
        %6540 = vrot.lane.b32.xlu0 %v6518, 124
        %v6541 = vpop.permute.xlu0 %6540
        %6542 = vrot.lane.b32.xlu0 %v6519, 124
        %v6543 = vpop.permute.xlu0 %6542
        %v6552 = vadd.f32 %v6469, %v6529
        %v6553 = vadd.f32 %v6470, %v6531
        %v6554 = vadd.f32 %v6471, %v6533
        %v6555 = vadd.f32 %v6472, %v6535
        %v6556 = vadd.f32 %v6473, %v6537
        %v6557 = vadd.f32 %v6474, %v6539
        %v6558 = vadd.f32 %v6475, %v6541
        %v6559 = vadd.f32 %v6476, %v6543
        %v6560 = vsub.f32 %v171, %v826
        %v6561 = vsub.f32 %v172, %v826
        %v6562 = vmul.f32 %v6560, 1.442695
        %v6563 = vpow.pop %v6562
        %v6564 = vmul.f32 %v6561, 1.442695
        %v6565 = vpow.pop %v6564
        %6566 = vset.pattern.permute.xlu0 55
        %6567 = vperm.xlu0 %6566, %v425
        %v6568 = vpop.permute.xlu0 %6567
        %6570 = vset.pattern.permute.xlu0 55
        %6571 = vperm.xlu0 %6570, %v426
        %v6572 = vpop.permute.xlu0 %6571
        %6574 = vset.pattern.permute.xlu0 55
        %6575 = vperm.xlu0 %6574, %v427
        %v6576 = vpop.permute.xlu0 %6575
        %6578 = vset.pattern.permute.xlu0 55
        %6579 = vperm.xlu0 %6578, %v428
        %v6580 = vpop.permute.xlu0 %6579
        %6582 = vset.pattern.permute.xlu0 55
        %6583 = vperm.xlu0 %6582, %v429
        %v6584 = vpop.permute.xlu0 %6583
        %6586 = vset.pattern.permute.xlu0 55
        %6587 = vperm.xlu0 %6586, %v430
        %v6588 = vpop.permute.xlu0 %6587
        %6590 = vset.pattern.permute.xlu0 55
        %6591 = vperm.xlu0 %6590, %v431
        %v6592 = vpop.permute.xlu0 %6591
        %6594 = vset.pattern.permute.xlu0 55
        %6595 = vperm.xlu0 %6594, %v432
        %v6596 = vpop.permute.xlu0 %6595
        %v6598 = vmul.f32 %v6568, %v6563
        %v6599 = vmul.f32 %v6568, %v6565
        %v6600 = vmul.f32 %v6572, %v6563
        %v6601 = vmul.f32 %v6572, %v6565
        %v6602 = vmul.f32 %v6576, %v6563
        %v6603 = vmul.f32 %v6576, %v6565
        %v6604 = vmul.f32 %v6580, %v6563
        %v6605 = vmul.f32 %v6580, %v6565
        %v6606 = vmul.f32 %v6584, %v6563
        %v6607 = vmul.f32 %v6584, %v6565
        %v6608 = vmul.f32 %v6588, %v6563
        %v6609 = vmul.f32 %v6588, %v6565
        %v6610 = vmul.f32 %v6592, %v6563
        %v6611 = vmul.f32 %v6592, %v6565
        %v6612 = vmul.f32 %v6596, %v6563
        %v6613 = vmul.f32 %v6596, %v6565
        %v6630 = vrot.slane %v6598, 1
        %v6631 = vrot.slane %v6599, 1
        %v6632 = vsel %vm319, %v6630, %v6631
        %v6633 = vrot.slane %v6600, 1
        %v6634 = vrot.slane %v6601, 1
        %v6635 = vsel %vm319, %v6633, %v6634
        %v6636 = vrot.slane %v6602, 1
        %v6637 = vrot.slane %v6603, 1
        %v6638 = vsel %vm319, %v6636, %v6637
        %v6639 = vrot.slane %v6604, 1
        %v6640 = vrot.slane %v6605, 1
        %v6641 = vsel %vm319, %v6639, %v6640
        %v6642 = vrot.slane %v6606, 1
        %v6643 = vrot.slane %v6607, 1
        %v6644 = vsel %vm319, %v6642, %v6643
        %v6645 = vrot.slane %v6608, 1
        %v6646 = vrot.slane %v6609, 1
        %v6647 = vsel %vm319, %v6645, %v6646
        %v6648 = vrot.slane %v6610, 1
        %v6649 = vrot.slane %v6611, 1
        %v6650 = vsel %vm319, %v6648, %v6649
        %v6651 = vrot.slane %v6612, 1
        %v6652 = vrot.slane %v6613, 1
        %v6653 = vsel %vm319, %v6651, %v6652
        %v6662 = vadd.f32 %v6552, %v6632
        %v6663 = vadd.f32 %v6553, %v6635
        %v6664 = vadd.f32 %v6554, %v6638
        %v6665 = vadd.f32 %v6555, %v6641
        %v6666 = vadd.f32 %v6556, %v6644
        %v6667 = vadd.f32 %v6557, %v6647
        %v6668 = vadd.f32 %v6558, %v6650
        %v6669 = vadd.f32 %v6559, %v6653
        %v6670 = vsub.f32 %v171, %v939
        %v6671 = vsub.f32 %v172, %v939
        %v6672 = vmul.f32 %v6670, 1.442695
        %v6673 = vpow.pop %v6672
        %v6674 = vmul.f32 %v6671, 1.442695
        %v6675 = vpow.pop %v6674
        %6676 = vset.pattern.permute.xlu0 56
        %6677 = vperm.xlu0 %6676, %v425
        %v6678 = vpop.permute.xlu0 %6677
        %6680 = vset.pattern.permute.xlu0 56
        %6681 = vperm.xlu0 %6680, %v426
        %v6682 = vpop.permute.xlu0 %6681
        %6684 = vset.pattern.permute.xlu0 56
        %6685 = vperm.xlu0 %6684, %v427
        %v6686 = vpop.permute.xlu0 %6685
        %6688 = vset.pattern.permute.xlu0 56
        %6689 = vperm.xlu0 %6688, %v428
        %v6690 = vpop.permute.xlu0 %6689
        %6692 = vset.pattern.permute.xlu0 56
        %6693 = vperm.xlu0 %6692, %v429
        %v6694 = vpop.permute.xlu0 %6693
        %6696 = vset.pattern.permute.xlu0 56
        %6697 = vperm.xlu0 %6696, %v430
        %v6698 = vpop.permute.xlu0 %6697
        %6700 = vset.pattern.permute.xlu0 56
        %6701 = vperm.xlu0 %6700, %v431
        %v6702 = vpop.permute.xlu0 %6701
        %6704 = vset.pattern.permute.xlu0 56
        %6705 = vperm.xlu0 %6704, %v432
        %v6706 = vpop.permute.xlu0 %6705
        %v6708 = vmul.f32 %v6678, %v6673
        %v6709 = vmul.f32 %v6678, %v6675
        %v6710 = vmul.f32 %v6682, %v6673
        %v6711 = vmul.f32 %v6682, %v6675
        %v6712 = vmul.f32 %v6686, %v6673
        %v6713 = vmul.f32 %v6686, %v6675
        %v6714 = vmul.f32 %v6690, %v6673
        %v6715 = vmul.f32 %v6690, %v6675
        %v6716 = vmul.f32 %v6694, %v6673
        %v6717 = vmul.f32 %v6694, %v6675
        %v6718 = vmul.f32 %v6698, %v6673
        %v6719 = vmul.f32 %v6698, %v6675
        %v6720 = vmul.f32 %v6702, %v6673
        %v6721 = vmul.f32 %v6702, %v6675
        %v6722 = vmul.f32 %v6706, %v6673
        %v6723 = vmul.f32 %v6706, %v6675
        %v6740 = vrot.slane %v6708, 1
        %v6741 = vrot.slane %v6709, 1
        %v6742 = vsel %vm319, %v6740, %v6741
        %v6743 = vrot.slane %v6710, 1
        %v6744 = vrot.slane %v6711, 1
        %v6745 = vsel %vm319, %v6743, %v6744
        %v6746 = vrot.slane %v6712, 1
        %v6747 = vrot.slane %v6713, 1
        %v6748 = vsel %vm319, %v6746, %v6747
        %v6749 = vrot.slane %v6714, 1
        %v6750 = vrot.slane %v6715, 1
        %v6751 = vsel %vm319, %v6749, %v6750
        %v6752 = vrot.slane %v6716, 1
        %v6753 = vrot.slane %v6717, 1
        %v6754 = vsel %vm319, %v6752, %v6753
        %v6755 = vrot.slane %v6718, 1
        %v6756 = vrot.slane %v6719, 1
        %v6757 = vsel %vm319, %v6755, %v6756
        %v6758 = vrot.slane %v6720, 1
        %v6759 = vrot.slane %v6721, 1
        %v6760 = vsel %vm319, %v6758, %v6759
        %v6761 = vrot.slane %v6722, 1
        %v6762 = vrot.slane %v6723, 1
        %v6763 = vsel %vm319, %v6761, %v6762
        %6764 = vrot.lane.b32.xlu0 %v6742, 127
        %v6765 = vpop.permute.xlu0 %6764
        %6766 = vrot.lane.b32.xlu0 %v6745, 127
        %v6767 = vpop.permute.xlu0 %6766
        %6768 = vrot.lane.b32.xlu0 %v6748, 127
        %v6769 = vpop.permute.xlu0 %6768
        %6770 = vrot.lane.b32.xlu0 %v6751, 127
        %v6771 = vpop.permute.xlu0 %6770
        %6772 = vrot.lane.b32.xlu0 %v6754, 127
        %v6773 = vpop.permute.xlu0 %6772
        %6774 = vrot.lane.b32.xlu0 %v6757, 127
        %v6775 = vpop.permute.xlu0 %6774
        %6776 = vrot.lane.b32.xlu0 %v6760, 127
        %v6777 = vpop.permute.xlu0 %6776
        %6778 = vrot.lane.b32.xlu0 %v6763, 127
        %v6779 = vpop.permute.xlu0 %6778
        %v6788 = vadd.f32 %v6662, %v6765
        %v6789 = vadd.f32 %v6663, %v6767
        %v6790 = vadd.f32 %v6664, %v6769
        %v6791 = vadd.f32 %v6665, %v6771
        %v6792 = vadd.f32 %v6666, %v6773
        %v6793 = vadd.f32 %v6667, %v6775
        %v6794 = vadd.f32 %v6668, %v6777
        %v6795 = vadd.f32 %v6669, %v6779
        %v6796 = vsub.f32 %v171, %v1068
        %v6797 = vsub.f32 %v172, %v1068
        %v6798 = vmul.f32 %v6796, 1.442695
        %v6799 = vpow.pop %v6798
        %v6800 = vmul.f32 %v6797, 1.442695
        %v6801 = vpow.pop %v6800
        %6802 = vset.pattern.permute.xlu0 57
        %6803 = vperm.xlu0 %6802, %v425
        %v6804 = vpop.permute.xlu0 %6803
        %6806 = vset.pattern.permute.xlu0 57
        %6807 = vperm.xlu0 %6806, %v426
        %v6808 = vpop.permute.xlu0 %6807
        %6810 = vset.pattern.permute.xlu0 57
        %6811 = vperm.xlu0 %6810, %v427
        %v6812 = vpop.permute.xlu0 %6811
        %6814 = vset.pattern.permute.xlu0 57
        %6815 = vperm.xlu0 %6814, %v428
        %v6816 = vpop.permute.xlu0 %6815
        %6818 = vset.pattern.permute.xlu0 57
        %6819 = vperm.xlu0 %6818, %v429
        %v6820 = vpop.permute.xlu0 %6819
        %6822 = vset.pattern.permute.xlu0 57
        %6823 = vperm.xlu0 %6822, %v430
        %v6824 = vpop.permute.xlu0 %6823
        %6826 = vset.pattern.permute.xlu0 57
        %6827 = vperm.xlu0 %6826, %v431
        %v6828 = vpop.permute.xlu0 %6827
        %6830 = vset.pattern.permute.xlu0 57
        %6831 = vperm.xlu0 %6830, %v432
        %v6832 = vpop.permute.xlu0 %6831
        %v6834 = vmul.f32 %v6804, %v6799
        %v6835 = vmul.f32 %v6804, %v6801
        %v6836 = vmul.f32 %v6808, %v6799
        %v6837 = vmul.f32 %v6808, %v6801
        %v6838 = vmul.f32 %v6812, %v6799
        %v6839 = vmul.f32 %v6812, %v6801
        %v6840 = vmul.f32 %v6816, %v6799
        %v6841 = vmul.f32 %v6816, %v6801
        %v6842 = vmul.f32 %v6820, %v6799
        %v6843 = vmul.f32 %v6820, %v6801
        %v6844 = vmul.f32 %v6824, %v6799
        %v6845 = vmul.f32 %v6824, %v6801
        %v6846 = vmul.f32 %v6828, %v6799
        %v6847 = vmul.f32 %v6828, %v6801
        %v6848 = vmul.f32 %v6832, %v6799
        %v6849 = vmul.f32 %v6832, %v6801
        %v6866 = vrot.slane %v6834, 1
        %v6867 = vrot.slane %v6835, 1
        %v6868 = vsel %vm319, %v6866, %v6867
        %v6869 = vrot.slane %v6836, 1
        %v6870 = vrot.slane %v6837, 1
        %v6871 = vsel %vm319, %v6869, %v6870
        %v6872 = vrot.slane %v6838, 1
        %v6873 = vrot.slane %v6839, 1
        %v6874 = vsel %vm319, %v6872, %v6873
        %v6875 = vrot.slane %v6840, 1
        %v6876 = vrot.slane %v6841, 1
        %v6877 = vsel %vm319, %v6875, %v6876
        %v6878 = vrot.slane %v6842, 1
        %v6879 = vrot.slane %v6843, 1
        %v6880 = vsel %vm319, %v6878, %v6879
        %v6881 = vrot.slane %v6844, 1
        %v6882 = vrot.slane %v6845, 1
        %v6883 = vsel %vm319, %v6881, %v6882
        %v6884 = vrot.slane %v6846, 1
        %v6885 = vrot.slane %v6847, 1
        %v6886 = vsel %vm319, %v6884, %v6885
        %v6887 = vrot.slane %v6848, 1
        %v6888 = vrot.slane %v6849, 1
        %v6889 = vsel %vm319, %v6887, %v6888
        %6890 = vrot.lane.b32.xlu0 %v6868, 126
        %v6891 = vpop.permute.xlu0 %6890
        %6892 = vrot.lane.b32.xlu0 %v6871, 126
        %v6893 = vpop.permute.xlu0 %6892
        %6894 = vrot.lane.b32.xlu0 %v6874, 126
        %v6895 = vpop.permute.xlu0 %6894
        %6896 = vrot.lane.b32.xlu0 %v6877, 126
        %v6897 = vpop.permute.xlu0 %6896
        %6898 = vrot.lane.b32.xlu0 %v6880, 126
        %v6899 = vpop.permute.xlu0 %6898
        %6900 = vrot.lane.b32.xlu0 %v6883, 126
        %v6901 = vpop.permute.xlu0 %6900
        %6902 = vrot.lane.b32.xlu0 %v6886, 126
        %v6903 = vpop.permute.xlu0 %6902
        %6904 = vrot.lane.b32.xlu0 %v6889, 126
        %v6905 = vpop.permute.xlu0 %6904
        %v6914 = vadd.f32 %v6788, %v6891
        %v6915 = vadd.f32 %v6789, %v6893
        %v6916 = vadd.f32 %v6790, %v6895
        %v6917 = vadd.f32 %v6791, %v6897
        %v6918 = vadd.f32 %v6792, %v6899
        %v6919 = vadd.f32 %v6793, %v6901
        %v6920 = vadd.f32 %v6794, %v6903
        %v6921 = vadd.f32 %v6795, %v6905
        %v6922 = vsub.f32 %v171, %v1197
        %v6923 = vsub.f32 %v172, %v1197
        %v6924 = vmul.f32 %v6922, 1.442695
        %v6925 = vpow.pop %v6924
        %v6926 = vmul.f32 %v6923, 1.442695
        %v6927 = vpow.pop %v6926
        %6928 = vset.pattern.permute.xlu0 58
        %6929 = vperm.xlu0 %6928, %v425
        %v6930 = vpop.permute.xlu0 %6929
        %6932 = vset.pattern.permute.xlu0 58
        %6933 = vperm.xlu0 %6932, %v426
        %v6934 = vpop.permute.xlu0 %6933
        %6936 = vset.pattern.permute.xlu0 58
        %6937 = vperm.xlu0 %6936, %v427
        %v6938 = vpop.permute.xlu0 %6937
        %6940 = vset.pattern.permute.xlu0 58
        %6941 = vperm.xlu0 %6940, %v428
        %v6942 = vpop.permute.xlu0 %6941
        %6944 = vset.pattern.permute.xlu0 58
        %6945 = vperm.xlu0 %6944, %v429
        %v6946 = vpop.permute.xlu0 %6945
        %6948 = vset.pattern.permute.xlu0 58
        %6949 = vperm.xlu0 %6948, %v430
        %v6950 = vpop.permute.xlu0 %6949
        %6952 = vset.pattern.permute.xlu0 58
        %6953 = vperm.xlu0 %6952, %v431
        %v6954 = vpop.permute.xlu0 %6953
        %6956 = vset.pattern.permute.xlu0 58
        %6957 = vperm.xlu0 %6956, %v432
        %v6958 = vpop.permute.xlu0 %6957
        %v6960 = vmul.f32 %v6930, %v6925
        %v6961 = vmul.f32 %v6930, %v6927
        %v6962 = vmul.f32 %v6934, %v6925
        %v6963 = vmul.f32 %v6934, %v6927
        %v6964 = vmul.f32 %v6938, %v6925
        %v6965 = vmul.f32 %v6938, %v6927
        %v6966 = vmul.f32 %v6942, %v6925
        %v6967 = vmul.f32 %v6942, %v6927
        %v6968 = vmul.f32 %v6946, %v6925
        %v6969 = vmul.f32 %v6946, %v6927
        %v6970 = vmul.f32 %v6950, %v6925
        %v6971 = vmul.f32 %v6950, %v6927
        %v6972 = vmul.f32 %v6954, %v6925
        %v6973 = vmul.f32 %v6954, %v6927
        %v6974 = vmul.f32 %v6958, %v6925
        %v6975 = vmul.f32 %v6958, %v6927
        %v6992 = vrot.slane %v6960, 1
        %v6993 = vrot.slane %v6961, 1
        %v6994 = vsel %vm319, %v6992, %v6993
        %v6995 = vrot.slane %v6962, 1
        %v6996 = vrot.slane %v6963, 1
        %v6997 = vsel %vm319, %v6995, %v6996
        %v6998 = vrot.slane %v6964, 1
        %v6999 = vrot.slane %v6965, 1
        %v7000 = vsel %vm319, %v6998, %v6999
        %v7001 = vrot.slane %v6966, 1
        %v7002 = vrot.slane %v6967, 1
        %v7003 = vsel %vm319, %v7001, %v7002
        %v7004 = vrot.slane %v6968, 1
        %v7005 = vrot.slane %v6969, 1
        %v7006 = vsel %vm319, %v7004, %v7005
        %v7007 = vrot.slane %v6970, 1
        %v7008 = vrot.slane %v6971, 1
        %v7009 = vsel %vm319, %v7007, %v7008
        %v7010 = vrot.slane %v6972, 1
        %v7011 = vrot.slane %v6973, 1
        %v7012 = vsel %vm319, %v7010, %v7011
        %v7013 = vrot.slane %v6974, 1
        %v7014 = vrot.slane %v6975, 1
        %v7015 = vsel %vm319, %v7013, %v7014
        %7016 = vrot.lane.b32.xlu0 %v6994, 125
        %v7017 = vpop.permute.xlu0 %7016
        %7018 = vrot.lane.b32.xlu0 %v6997, 125
        %v7019 = vpop.permute.xlu0 %7018
        %7020 = vrot.lane.b32.xlu0 %v7000, 125
        %v7021 = vpop.permute.xlu0 %7020
        %7022 = vrot.lane.b32.xlu0 %v7003, 125
        %v7023 = vpop.permute.xlu0 %7022
        %7024 = vrot.lane.b32.xlu0 %v7006, 125
        %v7025 = vpop.permute.xlu0 %7024
        %7026 = vrot.lane.b32.xlu0 %v7009, 125
        %v7027 = vpop.permute.xlu0 %7026
        %7028 = vrot.lane.b32.xlu0 %v7012, 125
        %v7029 = vpop.permute.xlu0 %7028
        %7030 = vrot.lane.b32.xlu0 %v7015, 125
        %v7031 = vpop.permute.xlu0 %7030
        %v7040 = vadd.f32 %v6914, %v7017
        %v7041 = vadd.f32 %v6915, %v7019
        %v7042 = vadd.f32 %v6916, %v7021
        %v7043 = vadd.f32 %v6917, %v7023
        %v7044 = vadd.f32 %v6918, %v7025
        %v7045 = vadd.f32 %v6919, %v7027
        %v7046 = vadd.f32 %v6920, %v7029
        %v7047 = vadd.f32 %v6921, %v7031
        %v7048 = vsub.f32 %v171, %v1326
        %v7049 = vsub.f32 %v172, %v1326
        %v7050 = vmul.f32 %v7048, 1.442695
        %v7051 = vpow.pop %v7050
        %v7052 = vmul.f32 %v7049, 1.442695
        %v7053 = vpow.pop %v7052
        %7054 = vset.pattern.permute.xlu0 59
        %7055 = vperm.xlu0 %7054, %v425
        %v7056 = vpop.permute.xlu0 %7055
        %7058 = vset.pattern.permute.xlu0 59
        %7059 = vperm.xlu0 %7058, %v426
        %v7060 = vpop.permute.xlu0 %7059
        %7062 = vset.pattern.permute.xlu0 59
        %7063 = vperm.xlu0 %7062, %v427
        %v7064 = vpop.permute.xlu0 %7063
        %7066 = vset.pattern.permute.xlu0 59
        %7067 = vperm.xlu0 %7066, %v428
        %v7068 = vpop.permute.xlu0 %7067
        %7070 = vset.pattern.permute.xlu0 59
        %7071 = vperm.xlu0 %7070, %v429
        %v7072 = vpop.permute.xlu0 %7071
        %7074 = vset.pattern.permute.xlu0 59
        %7075 = vperm.xlu0 %7074, %v430
        %v7076 = vpop.permute.xlu0 %7075
        %7078 = vset.pattern.permute.xlu0 59
        %7079 = vperm.xlu0 %7078, %v431
        %v7080 = vpop.permute.xlu0 %7079
        %7082 = vset.pattern.permute.xlu0 59
        %7083 = vperm.xlu0 %7082, %v432
        %v7084 = vpop.permute.xlu0 %7083
        %v7086 = vmul.f32 %v7056, %v7051
        %v7087 = vmul.f32 %v7056, %v7053
        %v7088 = vmul.f32 %v7060, %v7051
        %v7089 = vmul.f32 %v7060, %v7053
        %v7090 = vmul.f32 %v7064, %v7051
        %v7091 = vmul.f32 %v7064, %v7053
        %v7092 = vmul.f32 %v7068, %v7051
        %v7093 = vmul.f32 %v7068, %v7053
        %v7094 = vmul.f32 %v7072, %v7051
        %v7095 = vmul.f32 %v7072, %v7053
        %v7096 = vmul.f32 %v7076, %v7051
        %v7097 = vmul.f32 %v7076, %v7053
        %v7098 = vmul.f32 %v7080, %v7051
        %v7099 = vmul.f32 %v7080, %v7053
        %v7100 = vmul.f32 %v7084, %v7051
        %v7101 = vmul.f32 %v7084, %v7053
        %v7118 = vrot.slane %v7086, 1
        %v7119 = vrot.slane %v7087, 1
        %v7120 = vsel %vm319, %v7118, %v7119
        %v7121 = vrot.slane %v7088, 1
        %v7122 = vrot.slane %v7089, 1
        %v7123 = vsel %vm319, %v7121, %v7122
        %v7124 = vrot.slane %v7090, 1
        %v7125 = vrot.slane %v7091, 1
        %v7126 = vsel %vm319, %v7124, %v7125
        %v7127 = vrot.slane %v7092, 1
        %v7128 = vrot.slane %v7093, 1
        %v7129 = vsel %vm319, %v7127, %v7128
        %v7130 = vrot.slane %v7094, 1
        %v7131 = vrot.slane %v7095, 1
        %v7132 = vsel %vm319, %v7130, %v7131
        %v7133 = vrot.slane %v7096, 1
        %v7134 = vrot.slane %v7097, 1
        %v7135 = vsel %vm319, %v7133, %v7134
        %v7136 = vrot.slane %v7098, 1
        %v7137 = vrot.slane %v7099, 1
        %v7138 = vsel %vm319, %v7136, %v7137
        %v7139 = vrot.slane %v7100, 1
        %v7140 = vrot.slane %v7101, 1
        %v7141 = vsel %vm319, %v7139, %v7140
        %7142 = vrot.lane.b32.xlu0 %v7120, 124
        %v7143 = vpop.permute.xlu0 %7142
        %7144 = vrot.lane.b32.xlu0 %v7123, 124
        %v7145 = vpop.permute.xlu0 %7144
        %7146 = vrot.lane.b32.xlu0 %v7126, 124
        %v7147 = vpop.permute.xlu0 %7146
        %7148 = vrot.lane.b32.xlu0 %v7129, 124
        %v7149 = vpop.permute.xlu0 %7148
        %7150 = vrot.lane.b32.xlu0 %v7132, 124
        %v7151 = vpop.permute.xlu0 %7150
        %7152 = vrot.lane.b32.xlu0 %v7135, 124
        %v7153 = vpop.permute.xlu0 %7152
        %7154 = vrot.lane.b32.xlu0 %v7138, 124
        %v7155 = vpop.permute.xlu0 %7154
        %7156 = vrot.lane.b32.xlu0 %v7141, 124
        %v7157 = vpop.permute.xlu0 %7156
        %v7166 = vadd.f32 %v7040, %v7143
        %v7167 = vadd.f32 %v7041, %v7145
        %v7168 = vadd.f32 %v7042, %v7147
        %v7169 = vadd.f32 %v7043, %v7149
        %v7170 = vadd.f32 %v7044, %v7151
        %v7171 = vadd.f32 %v7045, %v7153
        %v7172 = vadd.f32 %v7046, %v7155
        %v7173 = vadd.f32 %v7047, %v7157
        %v7174 = vsub.f32 %v171, %v1454
        %v7175 = vsub.f32 %v172, %v1454
        %v7176 = vmul.f32 %v7174, 1.442695
        %v7177 = vpow.pop %v7176
        %v7178 = vmul.f32 %v7175, 1.442695
        %v7179 = vpow.pop %v7178
        %7180 = vset.pattern.permute.xlu0 60
        %7181 = vperm.xlu0 %7180, %v425
        %v7182 = vpop.permute.xlu0 %7181
        %7184 = vset.pattern.permute.xlu0 60
        %7185 = vperm.xlu0 %7184, %v426
        %v7186 = vpop.permute.xlu0 %7185
        %7188 = vset.pattern.permute.xlu0 60
        %7189 = vperm.xlu0 %7188, %v427
        %v7190 = vpop.permute.xlu0 %7189
        %7192 = vset.pattern.permute.xlu0 60
        %7193 = vperm.xlu0 %7192, %v428
        %v7194 = vpop.permute.xlu0 %7193
        %7196 = vset.pattern.permute.xlu0 60
        %7197 = vperm.xlu0 %7196, %v429
        %v7198 = vpop.permute.xlu0 %7197
        %7200 = vset.pattern.permute.xlu0 60
        %7201 = vperm.xlu0 %7200, %v430
        %v7202 = vpop.permute.xlu0 %7201
        %7204 = vset.pattern.permute.xlu0 60
        %7205 = vperm.xlu0 %7204, %v431
        %v7206 = vpop.permute.xlu0 %7205
        %7208 = vset.pattern.permute.xlu0 60
        %7209 = vperm.xlu0 %7208, %v432
        %v7210 = vpop.permute.xlu0 %7209
        %v7212 = vmul.f32 %v7182, %v7177
        %v7213 = vmul.f32 %v7182, %v7179
        %v7214 = vmul.f32 %v7186, %v7177
        %v7215 = vmul.f32 %v7186, %v7179
        %v7216 = vmul.f32 %v7190, %v7177
        %v7217 = vmul.f32 %v7190, %v7179
        %v7218 = vmul.f32 %v7194, %v7177
        %v7219 = vmul.f32 %v7194, %v7179
        %v7220 = vmul.f32 %v7198, %v7177
        %v7221 = vmul.f32 %v7198, %v7179
        %v7222 = vmul.f32 %v7202, %v7177
        %v7223 = vmul.f32 %v7202, %v7179
        %v7224 = vmul.f32 %v7206, %v7177
        %v7225 = vmul.f32 %v7206, %v7179
        %v7226 = vmul.f32 %v7210, %v7177
        %v7227 = vmul.f32 %v7210, %v7179
        %v7244 = vrot.slane %v7212, 2
        %v7245 = vrot.slane %v7213, 2
        %v7246 = vsel %vm340, %v7244, %v7245
        %v7247 = vrot.slane %v7214, 2
        %v7248 = vrot.slane %v7215, 2
        %v7249 = vsel %vm340, %v7247, %v7248
        %v7250 = vrot.slane %v7216, 2
        %v7251 = vrot.slane %v7217, 2
        %v7252 = vsel %vm340, %v7250, %v7251
        %v7253 = vrot.slane %v7218, 2
        %v7254 = vrot.slane %v7219, 2
        %v7255 = vsel %vm340, %v7253, %v7254
        %v7256 = vrot.slane %v7220, 2
        %v7257 = vrot.slane %v7221, 2
        %v7258 = vsel %vm340, %v7256, %v7257
        %v7259 = vrot.slane %v7222, 2
        %v7260 = vrot.slane %v7223, 2
        %v7261 = vsel %vm340, %v7259, %v7260
        %v7262 = vrot.slane %v7224, 2
        %v7263 = vrot.slane %v7225, 2
        %v7264 = vsel %vm340, %v7262, %v7263
        %v7265 = vrot.slane %v7226, 2
        %v7266 = vrot.slane %v7227, 2
        %v7267 = vsel %vm340, %v7265, %v7266
        %v7276 = vadd.f32 %v7166, %v7246
        %v7277 = vadd.f32 %v7167, %v7249
        %v7278 = vadd.f32 %v7168, %v7252
        %v7279 = vadd.f32 %v7169, %v7255
        %v7280 = vadd.f32 %v7170, %v7258
        %v7281 = vadd.f32 %v7171, %v7261
        %v7282 = vadd.f32 %v7172, %v7264
        %v7283 = vadd.f32 %v7173, %v7267
        %v7284 = vsub.f32 %v171, %v1567
        %v7285 = vsub.f32 %v172, %v1567
        %v7286 = vmul.f32 %v7284, 1.442695
        %v7287 = vpow.pop %v7286
        %v7288 = vmul.f32 %v7285, 1.442695
        %v7289 = vpow.pop %v7288
        %7290 = vset.pattern.permute.xlu0 61
        %7291 = vperm.xlu0 %7290, %v425
        %v7292 = vpop.permute.xlu0 %7291
        %7294 = vset.pattern.permute.xlu0 61
        %7295 = vperm.xlu0 %7294, %v426
        %v7296 = vpop.permute.xlu0 %7295
        %7298 = vset.pattern.permute.xlu0 61
        %7299 = vperm.xlu0 %7298, %v427
        %v7300 = vpop.permute.xlu0 %7299
        %7302 = vset.pattern.permute.xlu0 61
        %7303 = vperm.xlu0 %7302, %v428
        %v7304 = vpop.permute.xlu0 %7303
        %7306 = vset.pattern.permute.xlu0 61
        %7307 = vperm.xlu0 %7306, %v429
        %v7308 = vpop.permute.xlu0 %7307
        %7310 = vset.pattern.permute.xlu0 61
        %7311 = vperm.xlu0 %7310, %v430
        %v7312 = vpop.permute.xlu0 %7311
        %7314 = vset.pattern.permute.xlu0 61
        %7315 = vperm.xlu0 %7314, %v431
        %v7316 = vpop.permute.xlu0 %7315
        %7318 = vset.pattern.permute.xlu0 61
        %7319 = vperm.xlu0 %7318, %v432
        %v7320 = vpop.permute.xlu0 %7319
        %v7322 = vmul.f32 %v7292, %v7287
        %v7323 = vmul.f32 %v7292, %v7289
        %v7324 = vmul.f32 %v7296, %v7287
        %v7325 = vmul.f32 %v7296, %v7289
        %v7326 = vmul.f32 %v7300, %v7287
        %v7327 = vmul.f32 %v7300, %v7289
        %v7328 = vmul.f32 %v7304, %v7287
        %v7329 = vmul.f32 %v7304, %v7289
        %v7330 = vmul.f32 %v7308, %v7287
        %v7331 = vmul.f32 %v7308, %v7289
        %v7332 = vmul.f32 %v7312, %v7287
        %v7333 = vmul.f32 %v7312, %v7289
        %v7334 = vmul.f32 %v7316, %v7287
        %v7335 = vmul.f32 %v7316, %v7289
        %v7336 = vmul.f32 %v7320, %v7287
        %v7337 = vmul.f32 %v7320, %v7289
        %v7354 = vrot.slane %v7322, 2
        %v7355 = vrot.slane %v7323, 2
        %v7356 = vsel %vm340, %v7354, %v7355
        %v7357 = vrot.slane %v7324, 2
        %v7358 = vrot.slane %v7325, 2
        %v7359 = vsel %vm340, %v7357, %v7358
        %v7360 = vrot.slane %v7326, 2
        %v7361 = vrot.slane %v7327, 2
        %v7362 = vsel %vm340, %v7360, %v7361
        %v7363 = vrot.slane %v7328, 2
        %v7364 = vrot.slane %v7329, 2
        %v7365 = vsel %vm340, %v7363, %v7364
        %v7366 = vrot.slane %v7330, 2
        %v7367 = vrot.slane %v7331, 2
        %v7368 = vsel %vm340, %v7366, %v7367
        %v7369 = vrot.slane %v7332, 2
        %v7370 = vrot.slane %v7333, 2
        %v7371 = vsel %vm340, %v7369, %v7370
        %v7372 = vrot.slane %v7334, 2
        %v7373 = vrot.slane %v7335, 2
        %v7374 = vsel %vm340, %v7372, %v7373
        %v7375 = vrot.slane %v7336, 2
        %v7376 = vrot.slane %v7337, 2
        %v7377 = vsel %vm340, %v7375, %v7376
        %7378 = vrot.lane.b32.xlu0 %v7356, 127
        %v7379 = vpop.permute.xlu0 %7378
        %7380 = vrot.lane.b32.xlu0 %v7359, 127
        %v7381 = vpop.permute.xlu0 %7380
        %7382 = vrot.lane.b32.xlu0 %v7362, 127
        %v7383 = vpop.permute.xlu0 %7382
        %7384 = vrot.lane.b32.xlu0 %v7365, 127
        %v7385 = vpop.permute.xlu0 %7384
        %7386 = vrot.lane.b32.xlu0 %v7368, 127
        %v7387 = vpop.permute.xlu0 %7386
        %7388 = vrot.lane.b32.xlu0 %v7371, 127
        %v7389 = vpop.permute.xlu0 %7388
        %7390 = vrot.lane.b32.xlu0 %v7374, 127
        %v7391 = vpop.permute.xlu0 %7390
        %7392 = vrot.lane.b32.xlu0 %v7377, 127
        %v7393 = vpop.permute.xlu0 %7392
        %v7402 = vadd.f32 %v7276, %v7379
        %v7403 = vadd.f32 %v7277, %v7381
        %v7404 = vadd.f32 %v7278, %v7383
        %v7405 = vadd.f32 %v7279, %v7385
        %v7406 = vadd.f32 %v7280, %v7387
        %v7407 = vadd.f32 %v7281, %v7389
        %v7408 = vadd.f32 %v7282, %v7391
        %v7409 = vadd.f32 %v7283, %v7393
        %v7410 = vsub.f32 %v171, %v1696
        %v7411 = vsub.f32 %v172, %v1696
        %v7412 = vmul.f32 %v7410, 1.442695
        %v7413 = vpow.pop %v7412
        %v7414 = vmul.f32 %v7411, 1.442695
        %v7415 = vpow.pop %v7414
        %7416 = vset.pattern.permute.xlu0 62
        %7417 = vperm.xlu0 %7416, %v425
        %v7418 = vpop.permute.xlu0 %7417
        %7420 = vset.pattern.permute.xlu0 62
        %7421 = vperm.xlu0 %7420, %v426
        %v7422 = vpop.permute.xlu0 %7421
        %7424 = vset.pattern.permute.xlu0 62
        %7425 = vperm.xlu0 %7424, %v427
        %v7426 = vpop.permute.xlu0 %7425
        %7428 = vset.pattern.permute.xlu0 62
        %7429 = vperm.xlu0 %7428, %v428
        %v7430 = vpop.permute.xlu0 %7429
        %7432 = vset.pattern.permute.xlu0 62
        %7433 = vperm.xlu0 %7432, %v429
        %v7434 = vpop.permute.xlu0 %7433
        %7436 = vset.pattern.permute.xlu0 62
        %7437 = vperm.xlu0 %7436, %v430
        %v7438 = vpop.permute.xlu0 %7437
        %7440 = vset.pattern.permute.xlu0 62
        %7441 = vperm.xlu0 %7440, %v431
        %v7442 = vpop.permute.xlu0 %7441
        %7444 = vset.pattern.permute.xlu0 62
        %7445 = vperm.xlu0 %7444, %v432
        %v7446 = vpop.permute.xlu0 %7445
        %v7448 = vmul.f32 %v7418, %v7413
        %v7449 = vmul.f32 %v7418, %v7415
        %v7450 = vmul.f32 %v7422, %v7413
        %v7451 = vmul.f32 %v7422, %v7415
        %v7452 = vmul.f32 %v7426, %v7413
        %v7453 = vmul.f32 %v7426, %v7415
        %v7454 = vmul.f32 %v7430, %v7413
        %v7455 = vmul.f32 %v7430, %v7415
        %v7456 = vmul.f32 %v7434, %v7413
        %v7457 = vmul.f32 %v7434, %v7415
        %v7458 = vmul.f32 %v7438, %v7413
        %v7459 = vmul.f32 %v7438, %v7415
        %v7460 = vmul.f32 %v7442, %v7413
        %v7461 = vmul.f32 %v7442, %v7415
        %v7462 = vmul.f32 %v7446, %v7413
        %v7463 = vmul.f32 %v7446, %v7415
        %v7480 = vrot.slane %v7448, 2
        %v7481 = vrot.slane %v7449, 2
        %v7482 = vsel %vm340, %v7480, %v7481
        %v7483 = vrot.slane %v7450, 2
        %v7484 = vrot.slane %v7451, 2
        %v7485 = vsel %vm340, %v7483, %v7484
        %v7486 = vrot.slane %v7452, 2
        %v7487 = vrot.slane %v7453, 2
        %v7488 = vsel %vm340, %v7486, %v7487
        %v7489 = vrot.slane %v7454, 2
        %v7490 = vrot.slane %v7455, 2
        %v7491 = vsel %vm340, %v7489, %v7490
        %v7492 = vrot.slane %v7456, 2
        %v7493 = vrot.slane %v7457, 2
        %v7494 = vsel %vm340, %v7492, %v7493
        %v7495 = vrot.slane %v7458, 2
        %v7496 = vrot.slane %v7459, 2
        %v7497 = vsel %vm340, %v7495, %v7496
        %v7498 = vrot.slane %v7460, 2
        %v7499 = vrot.slane %v7461, 2
        %v7500 = vsel %vm340, %v7498, %v7499
        %v7501 = vrot.slane %v7462, 2
        %v7502 = vrot.slane %v7463, 2
        %v7503 = vsel %vm340, %v7501, %v7502
        %7504 = vrot.lane.b32.xlu0 %v7482, 126
        %v7505 = vpop.permute.xlu0 %7504
        %7506 = vrot.lane.b32.xlu0 %v7485, 126
        %v7507 = vpop.permute.xlu0 %7506
        %7508 = vrot.lane.b32.xlu0 %v7488, 126
        %v7509 = vpop.permute.xlu0 %7508
        %7510 = vrot.lane.b32.xlu0 %v7491, 126
        %v7511 = vpop.permute.xlu0 %7510
        %7512 = vrot.lane.b32.xlu0 %v7494, 126
        %v7513 = vpop.permute.xlu0 %7512
        %7514 = vrot.lane.b32.xlu0 %v7497, 126
        %v7515 = vpop.permute.xlu0 %7514
        %7516 = vrot.lane.b32.xlu0 %v7500, 126
        %v7517 = vpop.permute.xlu0 %7516
        %7518 = vrot.lane.b32.xlu0 %v7503, 126
        %v7519 = vpop.permute.xlu0 %7518
        %v7528 = vadd.f32 %v7402, %v7505
        %v7529 = vadd.f32 %v7403, %v7507
        %v7530 = vadd.f32 %v7404, %v7509
        %v7531 = vadd.f32 %v7405, %v7511
        %v7532 = vadd.f32 %v7406, %v7513
        %v7533 = vadd.f32 %v7407, %v7515
        %v7534 = vadd.f32 %v7408, %v7517
        %v7535 = vadd.f32 %v7409, %v7519
        %v7536 = vsub.f32 %v171, %v1825
        %v7537 = vsub.f32 %v172, %v1825
        %v7538 = vmul.f32 %v7536, 1.442695
        %v7539 = vpow.pop %v7538
        %v7540 = vmul.f32 %v7537, 1.442695
        %v7541 = vpow.pop %v7540
        %7542 = vset.pattern.permute.xlu0 63
        %7543 = vperm.xlu0 %7542, %v425
        %v7544 = vpop.permute.xlu0 %7543
        %7546 = vset.pattern.permute.xlu0 63
        %7547 = vperm.xlu0 %7546, %v426
        %v7548 = vpop.permute.xlu0 %7547
        %7550 = vset.pattern.permute.xlu0 63
        %7551 = vperm.xlu0 %7550, %v427
        %v7552 = vpop.permute.xlu0 %7551
        %7554 = vset.pattern.permute.xlu0 63
        %7555 = vperm.xlu0 %7554, %v428
        %v7556 = vpop.permute.xlu0 %7555
        %7558 = vset.pattern.permute.xlu0 63
        %7559 = vperm.xlu0 %7558, %v429
        %v7560 = vpop.permute.xlu0 %7559
        %7562 = vset.pattern.permute.xlu0 63
        %7563 = vperm.xlu0 %7562, %v430
        %v7564 = vpop.permute.xlu0 %7563
        %7566 = vset.pattern.permute.xlu0 63
        %7567 = vperm.xlu0 %7566, %v431
        %v7568 = vpop.permute.xlu0 %7567
        %7570 = vset.pattern.permute.xlu0 63
        %7571 = vperm.xlu0 %7570, %v432
        %v7572 = vpop.permute.xlu0 %7571
        %v7574 = vmul.f32 %v7544, %v7539
        %v7575 = vmul.f32 %v7544, %v7541
        %v7576 = vmul.f32 %v7548, %v7539
        %v7577 = vmul.f32 %v7548, %v7541
        %v7578 = vmul.f32 %v7552, %v7539
        %v7579 = vmul.f32 %v7552, %v7541
        %v7580 = vmul.f32 %v7556, %v7539
        %v7581 = vmul.f32 %v7556, %v7541
        %v7582 = vmul.f32 %v7560, %v7539
        %v7583 = vmul.f32 %v7560, %v7541
        %v7584 = vmul.f32 %v7564, %v7539
        %v7585 = vmul.f32 %v7564, %v7541
        %v7586 = vmul.f32 %v7568, %v7539
        %v7587 = vmul.f32 %v7568, %v7541
        %v7588 = vmul.f32 %v7572, %v7539
        %v7589 = vmul.f32 %v7572, %v7541
        %v7606 = vrot.slane %v7574, 2
        %v7607 = vrot.slane %v7575, 2
        %v7608 = vsel %vm340, %v7606, %v7607
        %v7609 = vrot.slane %v7576, 2
        %v7610 = vrot.slane %v7577, 2
        %v7611 = vsel %vm340, %v7609, %v7610
        %v7612 = vrot.slane %v7578, 2
        %v7613 = vrot.slane %v7579, 2
        %v7614 = vsel %vm340, %v7612, %v7613
        %v7615 = vrot.slane %v7580, 2
        %v7616 = vrot.slane %v7581, 2
        %v7617 = vsel %vm340, %v7615, %v7616
        %v7618 = vrot.slane %v7582, 2
        %v7619 = vrot.slane %v7583, 2
        %v7620 = vsel %vm340, %v7618, %v7619
        %v7621 = vrot.slane %v7584, 2
        %v7622 = vrot.slane %v7585, 2
        %v7623 = vsel %vm340, %v7621, %v7622
        %v7624 = vrot.slane %v7586, 2
        %v7625 = vrot.slane %v7587, 2
        %v7626 = vsel %vm340, %v7624, %v7625
        %v7627 = vrot.slane %v7588, 2
        %v7628 = vrot.slane %v7589, 2
        %v7629 = vsel %vm340, %v7627, %v7628
        %7630 = vrot.lane.b32.xlu0 %v7608, 125
        %v7631 = vpop.permute.xlu0 %7630
        %7632 = vrot.lane.b32.xlu0 %v7611, 125
        %v7633 = vpop.permute.xlu0 %7632
        %7634 = vrot.lane.b32.xlu0 %v7614, 125
        %v7635 = vpop.permute.xlu0 %7634
        %7636 = vrot.lane.b32.xlu0 %v7617, 125
        %v7637 = vpop.permute.xlu0 %7636
        %7638 = vrot.lane.b32.xlu0 %v7620, 125
        %v7639 = vpop.permute.xlu0 %7638
        %7640 = vrot.lane.b32.xlu0 %v7623, 125
        %v7641 = vpop.permute.xlu0 %7640
        %7642 = vrot.lane.b32.xlu0 %v7626, 125
        %v7643 = vpop.permute.xlu0 %7642
        %7644 = vrot.lane.b32.xlu0 %v7629, 125
        %v7645 = vpop.permute.xlu0 %7644
        %v7654 = vadd.f32 %v7528, %v7631
        %v7655 = vadd.f32 %v7529, %v7633
        %v7656 = vadd.f32 %v7530, %v7635
        %v7657 = vadd.f32 %v7531, %v7637
        %v7658 = vadd.f32 %v7532, %v7639
        %v7659 = vadd.f32 %v7533, %v7641
        %v7660 = vadd.f32 %v7534, %v7643
        %v7661 = vadd.f32 %v7535, %v7645
        %v7662 = vsub.f32 %v171, %v1954
        %v7663 = vsub.f32 %v172, %v1954
        %v7664 = vmul.f32 %v7662, 1.442695
        %v7665 = vpow.pop %v7664
        %v7666 = vmul.f32 %v7663, 1.442695
        %v7667 = vpow.pop %v7666
        %7668 = vset.pattern.permute.xlu0 64
        %7669 = vperm.xlu0 %7668, %v425
        %v7670 = vpop.permute.xlu0 %7669
        %7672 = vset.pattern.permute.xlu0 64
        %7673 = vperm.xlu0 %7672, %v426
        %v7674 = vpop.permute.xlu0 %7673
        %7676 = vset.pattern.permute.xlu0 64
        %7677 = vperm.xlu0 %7676, %v427
        %v7678 = vpop.permute.xlu0 %7677
        %7680 = vset.pattern.permute.xlu0 64
        %7681 = vperm.xlu0 %7680, %v428
        %v7682 = vpop.permute.xlu0 %7681
        %7684 = vset.pattern.permute.xlu0 64
        %7685 = vperm.xlu0 %7684, %v429
        %v7686 = vpop.permute.xlu0 %7685
        %7688 = vset.pattern.permute.xlu0 64
        %7689 = vperm.xlu0 %7688, %v430
        %v7690 = vpop.permute.xlu0 %7689
        %7692 = vset.pattern.permute.xlu0 64
        %7693 = vperm.xlu0 %7692, %v431
        %v7694 = vpop.permute.xlu0 %7693
        %7696 = vset.pattern.permute.xlu0 64
        %7697 = vperm.xlu0 %7696, %v432
        %v7698 = vpop.permute.xlu0 %7697
        %v7700 = vmul.f32 %v7670, %v7665
        %v7701 = vmul.f32 %v7670, %v7667
        %v7702 = vmul.f32 %v7674, %v7665
        %v7703 = vmul.f32 %v7674, %v7667
        %v7704 = vmul.f32 %v7678, %v7665
        %v7705 = vmul.f32 %v7678, %v7667
        %v7706 = vmul.f32 %v7682, %v7665
        %v7707 = vmul.f32 %v7682, %v7667
        %v7708 = vmul.f32 %v7686, %v7665
        %v7709 = vmul.f32 %v7686, %v7667
        %v7710 = vmul.f32 %v7690, %v7665
        %v7711 = vmul.f32 %v7690, %v7667
        %v7712 = vmul.f32 %v7694, %v7665
        %v7713 = vmul.f32 %v7694, %v7667
        %v7714 = vmul.f32 %v7698, %v7665
        %v7715 = vmul.f32 %v7698, %v7667
        %v7732 = vrot.slane %v7700, 2
        %v7733 = vrot.slane %v7701, 2
        %v7734 = vsel %vm340, %v7732, %v7733
        %v7735 = vrot.slane %v7702, 2
        %v7736 = vrot.slane %v7703, 2
        %v7737 = vsel %vm340, %v7735, %v7736
        %v7738 = vrot.slane %v7704, 2
        %v7739 = vrot.slane %v7705, 2
        %v7740 = vsel %vm340, %v7738, %v7739
        %v7741 = vrot.slane %v7706, 2
        %v7742 = vrot.slane %v7707, 2
        %v7743 = vsel %vm340, %v7741, %v7742
        %v7744 = vrot.slane %v7708, 2
        %v7745 = vrot.slane %v7709, 2
        %v7746 = vsel %vm340, %v7744, %v7745
        %v7747 = vrot.slane %v7710, 2
        %v7748 = vrot.slane %v7711, 2
        %v7749 = vsel %vm340, %v7747, %v7748
        %v7750 = vrot.slane %v7712, 2
        %v7751 = vrot.slane %v7713, 2
        %v7752 = vsel %vm340, %v7750, %v7751
        %v7753 = vrot.slane %v7714, 2
        %v7754 = vrot.slane %v7715, 2
        %v7755 = vsel %vm340, %v7753, %v7754
        %7756 = vrot.lane.b32.xlu0 %v7734, 124
        %v7757 = vpop.permute.xlu0 %7756
        %7758 = vrot.lane.b32.xlu0 %v7737, 124
        %v7759 = vpop.permute.xlu0 %7758
        %7760 = vrot.lane.b32.xlu0 %v7740, 124
        %v7761 = vpop.permute.xlu0 %7760
        %7762 = vrot.lane.b32.xlu0 %v7743, 124
        %v7763 = vpop.permute.xlu0 %7762
        %7764 = vrot.lane.b32.xlu0 %v7746, 124
        %v7765 = vpop.permute.xlu0 %7764
        %7766 = vrot.lane.b32.xlu0 %v7749, 124
        %v7767 = vpop.permute.xlu0 %7766
        %7768 = vrot.lane.b32.xlu0 %v7752, 124
        %v7769 = vpop.permute.xlu0 %7768
        %7770 = vrot.lane.b32.xlu0 %v7755, 124
        %v7771 = vpop.permute.xlu0 %7770
        %v7780 = vadd.f32 %v7654, %v7757
        %v7781 = vadd.f32 %v7655, %v7759
        %v7782 = vadd.f32 %v7656, %v7761
        %v7783 = vadd.f32 %v7657, %v7763
        %v7784 = vadd.f32 %v7658, %v7765
        %v7785 = vadd.f32 %v7659, %v7767
        %v7786 = vadd.f32 %v7660, %v7769
        %v7787 = vadd.f32 %v7661, %v7771
        %v7788 = vsub.f32 %v171, %v2082
        %v7789 = vsub.f32 %v172, %v2082
        %v7790 = vmul.f32 %v7788, 1.442695
        %v7791 = vpow.pop %v7790
        %v7792 = vmul.f32 %v7789, 1.442695
        %v7793 = vpow.pop %v7792
        %7794 = vset.pattern.permute.xlu0 65
        %7795 = vperm.xlu0 %7794, %v425
        %v7796 = vpop.permute.xlu0 %7795
        %7798 = vset.pattern.permute.xlu0 65
        %7799 = vperm.xlu0 %7798, %v426
        %v7800 = vpop.permute.xlu0 %7799
        %7802 = vset.pattern.permute.xlu0 65
        %7803 = vperm.xlu0 %7802, %v427
        %v7804 = vpop.permute.xlu0 %7803
        %7806 = vset.pattern.permute.xlu0 65
        %7807 = vperm.xlu0 %7806, %v428
        %v7808 = vpop.permute.xlu0 %7807
        %7810 = vset.pattern.permute.xlu0 65
        %7811 = vperm.xlu0 %7810, %v429
        %v7812 = vpop.permute.xlu0 %7811
        %7814 = vset.pattern.permute.xlu0 65
        %7815 = vperm.xlu0 %7814, %v430
        %v7816 = vpop.permute.xlu0 %7815
        %7818 = vset.pattern.permute.xlu0 65
        %7819 = vperm.xlu0 %7818, %v431
        %v7820 = vpop.permute.xlu0 %7819
        %7822 = vset.pattern.permute.xlu0 65
        %7823 = vperm.xlu0 %7822, %v432
        %v7824 = vpop.permute.xlu0 %7823
        %v7826 = vmul.f32 %v7796, %v7791
        %v7827 = vmul.f32 %v7796, %v7793
        %v7828 = vmul.f32 %v7800, %v7791
        %v7829 = vmul.f32 %v7800, %v7793
        %v7830 = vmul.f32 %v7804, %v7791
        %v7831 = vmul.f32 %v7804, %v7793
        %v7832 = vmul.f32 %v7808, %v7791
        %v7833 = vmul.f32 %v7808, %v7793
        %v7834 = vmul.f32 %v7812, %v7791
        %v7835 = vmul.f32 %v7812, %v7793
        %v7836 = vmul.f32 %v7816, %v7791
        %v7837 = vmul.f32 %v7816, %v7793
        %v7838 = vmul.f32 %v7820, %v7791
        %v7839 = vmul.f32 %v7820, %v7793
        %v7840 = vmul.f32 %v7824, %v7791
        %v7841 = vmul.f32 %v7824, %v7793
        %v7858 = vrot.slane %v7826, 3
        %v7859 = vrot.slane %v7827, 3
        %v7860 = vsel %vm361, %v7858, %v7859
        %v7861 = vrot.slane %v7828, 3
        %v7862 = vrot.slane %v7829, 3
        %v7863 = vsel %vm361, %v7861, %v7862
        %v7864 = vrot.slane %v7830, 3
        %v7865 = vrot.slane %v7831, 3
        %v7866 = vsel %vm361, %v7864, %v7865
        %v7867 = vrot.slane %v7832, 3
        %v7868 = vrot.slane %v7833, 3
        %v7869 = vsel %vm361, %v7867, %v7868
        %v7870 = vrot.slane %v7834, 3
        %v7871 = vrot.slane %v7835, 3
        %v7872 = vsel %vm361, %v7870, %v7871
        %v7873 = vrot.slane %v7836, 3
        %v7874 = vrot.slane %v7837, 3
        %v7875 = vsel %vm361, %v7873, %v7874
        %v7876 = vrot.slane %v7838, 3
        %v7877 = vrot.slane %v7839, 3
        %v7878 = vsel %vm361, %v7876, %v7877
        %v7879 = vrot.slane %v7840, 3
        %v7880 = vrot.slane %v7841, 3
        %v7881 = vsel %vm361, %v7879, %v7880
        %v7890 = vadd.f32 %v7780, %v7860
        %v7891 = vadd.f32 %v7781, %v7863
        %v7892 = vadd.f32 %v7782, %v7866
        %v7893 = vadd.f32 %v7783, %v7869
        %v7894 = vadd.f32 %v7784, %v7872
        %v7895 = vadd.f32 %v7785, %v7875
        %v7896 = vadd.f32 %v7786, %v7878
        %v7897 = vadd.f32 %v7787, %v7881
        %v7898 = vsub.f32 %v171, %v2195
        %v7899 = vsub.f32 %v172, %v2195
        %v7900 = vmul.f32 %v7898, 1.442695
        %v7901 = vpow.pop %v7900
        %v7902 = vmul.f32 %v7899, 1.442695
        %v7903 = vpow.pop %v7902
        %7904 = vset.pattern.permute.xlu0 66
        %7905 = vperm.xlu0 %7904, %v425
        %v7906 = vpop.permute.xlu0 %7905
        %7908 = vset.pattern.permute.xlu0 66
        %7909 = vperm.xlu0 %7908, %v426
        %v7910 = vpop.permute.xlu0 %7909
        %7912 = vset.pattern.permute.xlu0 66
        %7913 = vperm.xlu0 %7912, %v427
        %v7914 = vpop.permute.xlu0 %7913
        %7916 = vset.pattern.permute.xlu0 66
        %7917 = vperm.xlu0 %7916, %v428
        %v7918 = vpop.permute.xlu0 %7917
        %7920 = vset.pattern.permute.xlu0 66
        %7921 = vperm.xlu0 %7920, %v429
        %v7922 = vpop.permute.xlu0 %7921
        %7924 = vset.pattern.permute.xlu0 66
        %7925 = vperm.xlu0 %7924, %v430
        %v7926 = vpop.permute.xlu0 %7925
        %7928 = vset.pattern.permute.xlu0 66
        %7929 = vperm.xlu0 %7928, %v431
        %v7930 = vpop.permute.xlu0 %7929
        %7932 = vset.pattern.permute.xlu0 66
        %7933 = vperm.xlu0 %7932, %v432
        %v7934 = vpop.permute.xlu0 %7933
        %v7936 = vmul.f32 %v7906, %v7901
        %v7937 = vmul.f32 %v7906, %v7903
        %v7938 = vmul.f32 %v7910, %v7901
        %v7939 = vmul.f32 %v7910, %v7903
        %v7940 = vmul.f32 %v7914, %v7901
        %v7941 = vmul.f32 %v7914, %v7903
        %v7942 = vmul.f32 %v7918, %v7901
        %v7943 = vmul.f32 %v7918, %v7903
        %v7944 = vmul.f32 %v7922, %v7901
        %v7945 = vmul.f32 %v7922, %v7903
        %v7946 = vmul.f32 %v7926, %v7901
        %v7947 = vmul.f32 %v7926, %v7903
        %v7948 = vmul.f32 %v7930, %v7901
        %v7949 = vmul.f32 %v7930, %v7903
        %v7950 = vmul.f32 %v7934, %v7901
        %v7951 = vmul.f32 %v7934, %v7903
        %v7968 = vrot.slane %v7936, 3
        %v7969 = vrot.slane %v7937, 3
        %v7970 = vsel %vm361, %v7968, %v7969
        %v7971 = vrot.slane %v7938, 3
        %v7972 = vrot.slane %v7939, 3
        %v7973 = vsel %vm361, %v7971, %v7972
        %v7974 = vrot.slane %v7940, 3
        %v7975 = vrot.slane %v7941, 3
        %v7976 = vsel %vm361, %v7974, %v7975
        %v7977 = vrot.slane %v7942, 3
        %v7978 = vrot.slane %v7943, 3
        %v7979 = vsel %vm361, %v7977, %v7978
        %v7980 = vrot.slane %v7944, 3
        %v7981 = vrot.slane %v7945, 3
        %v7982 = vsel %vm361, %v7980, %v7981
        %v7983 = vrot.slane %v7946, 3
        %v7984 = vrot.slane %v7947, 3
        %v7985 = vsel %vm361, %v7983, %v7984
        %v7986 = vrot.slane %v7948, 3
        %v7987 = vrot.slane %v7949, 3
        %v7988 = vsel %vm361, %v7986, %v7987
        %v7989 = vrot.slane %v7950, 3
        %v7990 = vrot.slane %v7951, 3
        %v7991 = vsel %vm361, %v7989, %v7990
        %7992 = vrot.lane.b32.xlu0 %v7970, 127
        %v7993 = vpop.permute.xlu0 %7992
        %7994 = vrot.lane.b32.xlu0 %v7973, 127
        %v7995 = vpop.permute.xlu0 %7994
        %7996 = vrot.lane.b32.xlu0 %v7976, 127
        %v7997 = vpop.permute.xlu0 %7996
        %7998 = vrot.lane.b32.xlu0 %v7979, 127
        %v7999 = vpop.permute.xlu0 %7998
        %8000 = vrot.lane.b32.xlu0 %v7982, 127
        %v8001 = vpop.permute.xlu0 %8000
        %8002 = vrot.lane.b32.xlu0 %v7985, 127
        %v8003 = vpop.permute.xlu0 %8002
        %8004 = vrot.lane.b32.xlu0 %v7988, 127
        %v8005 = vpop.permute.xlu0 %8004
        %8006 = vrot.lane.b32.xlu0 %v7991, 127
        %v8007 = vpop.permute.xlu0 %8006
        %v8016 = vadd.f32 %v7890, %v7993
        %v8017 = vadd.f32 %v7891, %v7995
        %v8018 = vadd.f32 %v7892, %v7997
        %v8019 = vadd.f32 %v7893, %v7999
        %v8020 = vadd.f32 %v7894, %v8001
        %v8021 = vadd.f32 %v7895, %v8003
        %v8022 = vadd.f32 %v7896, %v8005
        %v8023 = vadd.f32 %v7897, %v8007
        %v8024 = vsub.f32 %v171, %v2324
        %v8025 = vsub.f32 %v172, %v2324
        %v8026 = vmul.f32 %v8024, 1.442695
        %v8027 = vpow.pop %v8026
        %v8028 = vmul.f32 %v8025, 1.442695
        %v8029 = vpow.pop %v8028
        %8030 = vset.pattern.permute.xlu0 67
        %8031 = vperm.xlu0 %8030, %v425
        %v8032 = vpop.permute.xlu0 %8031
        %8034 = vset.pattern.permute.xlu0 67
        %8035 = vperm.xlu0 %8034, %v426
        %v8036 = vpop.permute.xlu0 %8035
        %8038 = vset.pattern.permute.xlu0 67
        %8039 = vperm.xlu0 %8038, %v427
        %v8040 = vpop.permute.xlu0 %8039
        %8042 = vset.pattern.permute.xlu0 67
        %8043 = vperm.xlu0 %8042, %v428
        %v8044 = vpop.permute.xlu0 %8043
        %8046 = vset.pattern.permute.xlu0 67
        %8047 = vperm.xlu0 %8046, %v429
        %v8048 = vpop.permute.xlu0 %8047
        %8050 = vset.pattern.permute.xlu0 67
        %8051 = vperm.xlu0 %8050, %v430
        %v8052 = vpop.permute.xlu0 %8051
        %8054 = vset.pattern.permute.xlu0 67
        %8055 = vperm.xlu0 %8054, %v431
        %v8056 = vpop.permute.xlu0 %8055
        %8058 = vset.pattern.permute.xlu0 67
        %8059 = vperm.xlu0 %8058, %v432
        %v8060 = vpop.permute.xlu0 %8059
        %v8062 = vmul.f32 %v8032, %v8027
        %v8063 = vmul.f32 %v8032, %v8029
        %v8064 = vmul.f32 %v8036, %v8027
        %v8065 = vmul.f32 %v8036, %v8029
        %v8066 = vmul.f32 %v8040, %v8027
        %v8067 = vmul.f32 %v8040, %v8029
        %v8068 = vmul.f32 %v8044, %v8027
        %v8069 = vmul.f32 %v8044, %v8029
        %v8070 = vmul.f32 %v8048, %v8027
        %v8071 = vmul.f32 %v8048, %v8029
        %v8072 = vmul.f32 %v8052, %v8027
        %v8073 = vmul.f32 %v8052, %v8029
        %v8074 = vmul.f32 %v8056, %v8027
        %v8075 = vmul.f32 %v8056, %v8029
        %v8076 = vmul.f32 %v8060, %v8027
        %v8077 = vmul.f32 %v8060, %v8029
        %v8094 = vrot.slane %v8062, 3
        %v8095 = vrot.slane %v8063, 3
        %v8096 = vsel %vm361, %v8094, %v8095
        %v8097 = vrot.slane %v8064, 3
        %v8098 = vrot.slane %v8065, 3
        %v8099 = vsel %vm361, %v8097, %v8098
        %v8100 = vrot.slane %v8066, 3
        %v8101 = vrot.slane %v8067, 3
        %v8102 = vsel %vm361, %v8100, %v8101
        %v8103 = vrot.slane %v8068, 3
        %v8104 = vrot.slane %v8069, 3
        %v8105 = vsel %vm361, %v8103, %v8104
        %v8106 = vrot.slane %v8070, 3
        %v8107 = vrot.slane %v8071, 3
        %v8108 = vsel %vm361, %v8106, %v8107
        %v8109 = vrot.slane %v8072, 3
        %v8110 = vrot.slane %v8073, 3
        %v8111 = vsel %vm361, %v8109, %v8110
        %v8112 = vrot.slane %v8074, 3
        %v8113 = vrot.slane %v8075, 3
        %v8114 = vsel %vm361, %v8112, %v8113
        %v8115 = vrot.slane %v8076, 3
        %v8116 = vrot.slane %v8077, 3
        %v8117 = vsel %vm361, %v8115, %v8116
        %8118 = vrot.lane.b32.xlu0 %v8096, 126
        %v8119 = vpop.permute.xlu0 %8118
        %8120 = vrot.lane.b32.xlu0 %v8099, 126
        %v8121 = vpop.permute.xlu0 %8120
        %8122 = vrot.lane.b32.xlu0 %v8102, 126
        %v8123 = vpop.permute.xlu0 %8122
        %8124 = vrot.lane.b32.xlu0 %v8105, 126
        %v8125 = vpop.permute.xlu0 %8124
        %8126 = vrot.lane.b32.xlu0 %v8108, 126
        %v8127 = vpop.permute.xlu0 %8126
        %8128 = vrot.lane.b32.xlu0 %v8111, 126
        %v8129 = vpop.permute.xlu0 %8128
        %8130 = vrot.lane.b32.xlu0 %v8114, 126
        %v8131 = vpop.permute.xlu0 %8130
        %8132 = vrot.lane.b32.xlu0 %v8117, 126
        %v8133 = vpop.permute.xlu0 %8132
        %v8142 = vadd.f32 %v8016, %v8119
        %v8143 = vadd.f32 %v8017, %v8121
        %v8144 = vadd.f32 %v8018, %v8123
        %v8145 = vadd.f32 %v8019, %v8125
        %v8146 = vadd.f32 %v8020, %v8127
        %v8147 = vadd.f32 %v8021, %v8129
        %v8148 = vadd.f32 %v8022, %v8131
        %v8149 = vadd.f32 %v8023, %v8133
        %v8150 = vsub.f32 %v171, %v2453
        %v8151 = vsub.f32 %v172, %v2453
        %v8152 = vmul.f32 %v8150, 1.442695
        %v8153 = vpow.pop %v8152
        %v8154 = vmul.f32 %v8151, 1.442695
        %v8155 = vpow.pop %v8154
        %8156 = vset.pattern.permute.xlu0 68
        %8157 = vperm.xlu0 %8156, %v425
        %v8158 = vpop.permute.xlu0 %8157
        %8160 = vset.pattern.permute.xlu0 68
        %8161 = vperm.xlu0 %8160, %v426
        %v8162 = vpop.permute.xlu0 %8161
        %8164 = vset.pattern.permute.xlu0 68
        %8165 = vperm.xlu0 %8164, %v427
        %v8166 = vpop.permute.xlu0 %8165
        %8168 = vset.pattern.permute.xlu0 68
        %8169 = vperm.xlu0 %8168, %v428
        %v8170 = vpop.permute.xlu0 %8169
        %8172 = vset.pattern.permute.xlu0 68
        %8173 = vperm.xlu0 %8172, %v429
        %v8174 = vpop.permute.xlu0 %8173
        %8176 = vset.pattern.permute.xlu0 68
        %8177 = vperm.xlu0 %8176, %v430
        %v8178 = vpop.permute.xlu0 %8177
        %8180 = vset.pattern.permute.xlu0 68
        %8181 = vperm.xlu0 %8180, %v431
        %v8182 = vpop.permute.xlu0 %8181
        %8184 = vset.pattern.permute.xlu0 68
        %8185 = vperm.xlu0 %8184, %v432
        %v8186 = vpop.permute.xlu0 %8185
        %v8188 = vmul.f32 %v8158, %v8153
        %v8189 = vmul.f32 %v8158, %v8155
        %v8190 = vmul.f32 %v8162, %v8153
        %v8191 = vmul.f32 %v8162, %v8155
        %v8192 = vmul.f32 %v8166, %v8153
        %v8193 = vmul.f32 %v8166, %v8155
        %v8194 = vmul.f32 %v8170, %v8153
        %v8195 = vmul.f32 %v8170, %v8155
        %v8196 = vmul.f32 %v8174, %v8153
        %v8197 = vmul.f32 %v8174, %v8155
        %v8198 = vmul.f32 %v8178, %v8153
        %v8199 = vmul.f32 %v8178, %v8155
        %v8200 = vmul.f32 %v8182, %v8153
        %v8201 = vmul.f32 %v8182, %v8155
        %v8202 = vmul.f32 %v8186, %v8153
        %v8203 = vmul.f32 %v8186, %v8155
        %v8220 = vrot.slane %v8188, 3
        %v8221 = vrot.slane %v8189, 3
        %v8222 = vsel %vm361, %v8220, %v8221
        %v8223 = vrot.slane %v8190, 3
        %v8224 = vrot.slane %v8191, 3
        %v8225 = vsel %vm361, %v8223, %v8224
        %v8226 = vrot.slane %v8192, 3
        %v8227 = vrot.slane %v8193, 3
        %v8228 = vsel %vm361, %v8226, %v8227
        %v8229 = vrot.slane %v8194, 3
        %v8230 = vrot.slane %v8195, 3
        %v8231 = vsel %vm361, %v8229, %v8230
        %v8232 = vrot.slane %v8196, 3
        %v8233 = vrot.slane %v8197, 3
        %v8234 = vsel %vm361, %v8232, %v8233
        %v8235 = vrot.slane %v8198, 3
        %v8236 = vrot.slane %v8199, 3
        %v8237 = vsel %vm361, %v8235, %v8236
        %v8238 = vrot.slane %v8200, 3
        %v8239 = vrot.slane %v8201, 3
        %v8240 = vsel %vm361, %v8238, %v8239
        %v8241 = vrot.slane %v8202, 3
        %v8242 = vrot.slane %v8203, 3
        %v8243 = vsel %vm361, %v8241, %v8242
        %8244 = vrot.lane.b32.xlu0 %v8222, 125
        %v8245 = vpop.permute.xlu0 %8244
        %8246 = vrot.lane.b32.xlu0 %v8225, 125
        %v8247 = vpop.permute.xlu0 %8246
        %8248 = vrot.lane.b32.xlu0 %v8228, 125
        %v8249 = vpop.permute.xlu0 %8248
        %8250 = vrot.lane.b32.xlu0 %v8231, 125
        %v8251 = vpop.permute.xlu0 %8250
        %8252 = vrot.lane.b32.xlu0 %v8234, 125
        %v8253 = vpop.permute.xlu0 %8252
        %8254 = vrot.lane.b32.xlu0 %v8237, 125
        %v8255 = vpop.permute.xlu0 %8254
        %8256 = vrot.lane.b32.xlu0 %v8240, 125
        %v8257 = vpop.permute.xlu0 %8256
        %8258 = vrot.lane.b32.xlu0 %v8243, 125
        %v8259 = vpop.permute.xlu0 %8258
        %v8268 = vadd.f32 %v8142, %v8245
        %v8269 = vadd.f32 %v8143, %v8247
        %v8270 = vadd.f32 %v8144, %v8249
        %v8271 = vadd.f32 %v8145, %v8251
        %v8272 = vadd.f32 %v8146, %v8253
        %v8273 = vadd.f32 %v8147, %v8255
        %v8274 = vadd.f32 %v8148, %v8257
        %v8275 = vadd.f32 %v8149, %v8259
        %v8276 = vsub.f32 %v171, %v2582
        %v8277 = vsub.f32 %v172, %v2582
        %v8278 = vmul.f32 %v8276, 1.442695
        %v8279 = vpow.pop %v8278
        %v8280 = vmul.f32 %v8277, 1.442695
        %v8281 = vpow.pop %v8280
        %8282 = vset.pattern.permute.xlu0 69
        %8283 = vperm.xlu0 %8282, %v425
        %v8284 = vpop.permute.xlu0 %8283
        %8286 = vset.pattern.permute.xlu0 69
        %8287 = vperm.xlu0 %8286, %v426
        %v8288 = vpop.permute.xlu0 %8287
        %8290 = vset.pattern.permute.xlu0 69
        %8291 = vperm.xlu0 %8290, %v427
        %v8292 = vpop.permute.xlu0 %8291
        %8294 = vset.pattern.permute.xlu0 69
        %8295 = vperm.xlu0 %8294, %v428
        %v8296 = vpop.permute.xlu0 %8295
        %8298 = vset.pattern.permute.xlu0 69
        %8299 = vperm.xlu0 %8298, %v429
        %v8300 = vpop.permute.xlu0 %8299
        %8302 = vset.pattern.permute.xlu0 69
        %8303 = vperm.xlu0 %8302, %v430
        %v8304 = vpop.permute.xlu0 %8303
        %8306 = vset.pattern.permute.xlu0 69
        %8307 = vperm.xlu0 %8306, %v431
        %v8308 = vpop.permute.xlu0 %8307
        %8310 = vset.pattern.permute.xlu0 69
        %8311 = vperm.xlu0 %8310, %v432
        %v8312 = vpop.permute.xlu0 %8311
        %v8314 = vmul.f32 %v8284, %v8279
        %v8315 = vmul.f32 %v8284, %v8281
        %v8316 = vmul.f32 %v8288, %v8279
        %v8317 = vmul.f32 %v8288, %v8281
        %v8318 = vmul.f32 %v8292, %v8279
        %v8319 = vmul.f32 %v8292, %v8281
        %v8320 = vmul.f32 %v8296, %v8279
        %v8321 = vmul.f32 %v8296, %v8281
        %v8322 = vmul.f32 %v8300, %v8279
        %v8323 = vmul.f32 %v8300, %v8281
        %v8324 = vmul.f32 %v8304, %v8279
        %v8325 = vmul.f32 %v8304, %v8281
        %v8326 = vmul.f32 %v8308, %v8279
        %v8327 = vmul.f32 %v8308, %v8281
        %v8328 = vmul.f32 %v8312, %v8279
        %v8329 = vmul.f32 %v8312, %v8281
        %v8346 = vrot.slane %v8314, 3
        %v8347 = vrot.slane %v8315, 3
        %v8348 = vsel %vm361, %v8346, %v8347
        %v8349 = vrot.slane %v8316, 3
        %v8350 = vrot.slane %v8317, 3
        %v8351 = vsel %vm361, %v8349, %v8350
        %v8352 = vrot.slane %v8318, 3
        %v8353 = vrot.slane %v8319, 3
        %v8354 = vsel %vm361, %v8352, %v8353
        %v8355 = vrot.slane %v8320, 3
        %v8356 = vrot.slane %v8321, 3
        %v8357 = vsel %vm361, %v8355, %v8356
        %v8358 = vrot.slane %v8322, 3
        %v8359 = vrot.slane %v8323, 3
        %v8360 = vsel %vm361, %v8358, %v8359
        %v8361 = vrot.slane %v8324, 3
        %v8362 = vrot.slane %v8325, 3
        %v8363 = vsel %vm361, %v8361, %v8362
        %v8364 = vrot.slane %v8326, 3
        %v8365 = vrot.slane %v8327, 3
        %v8366 = vsel %vm361, %v8364, %v8365
        %v8367 = vrot.slane %v8328, 3
        %v8368 = vrot.slane %v8329, 3
        %v8369 = vsel %vm361, %v8367, %v8368
        %8370 = vrot.lane.b32.xlu0 %v8348, 124
        %v8371 = vpop.permute.xlu0 %8370
        %8372 = vrot.lane.b32.xlu0 %v8351, 124
        %v8373 = vpop.permute.xlu0 %8372
        %8374 = vrot.lane.b32.xlu0 %v8354, 124
        %v8375 = vpop.permute.xlu0 %8374
        %8376 = vrot.lane.b32.xlu0 %v8357, 124
        %v8377 = vpop.permute.xlu0 %8376
        %8378 = vrot.lane.b32.xlu0 %v8360, 124
        %v8379 = vpop.permute.xlu0 %8378
        %8380 = vrot.lane.b32.xlu0 %v8363, 124
        %v8381 = vpop.permute.xlu0 %8380
        %8382 = vrot.lane.b32.xlu0 %v8366, 124
        %v8383 = vpop.permute.xlu0 %8382
        %8384 = vrot.lane.b32.xlu0 %v8369, 124
        %v8385 = vpop.permute.xlu0 %8384
        %v8394 = vadd.f32 %v8268, %v8371
        %v8395 = vadd.f32 %v8269, %v8373
        %v8396 = vadd.f32 %v8270, %v8375
        %v8397 = vadd.f32 %v8271, %v8377
        %v8398 = vadd.f32 %v8272, %v8379
        %v8399 = vadd.f32 %v8273, %v8381
        %v8400 = vadd.f32 %v8274, %v8383
        %v8401 = vadd.f32 %v8275, %v8385
        %v8402 = vsub.f32 %v171, %v2710
        %v8403 = vsub.f32 %v172, %v2710
        %v8404 = vmul.f32 %v8402, 1.442695
        %v8405 = vpow.pop %v8404
        %v8406 = vmul.f32 %v8403, 1.442695
        %v8407 = vpow.pop %v8406
        %8408 = vset.pattern.permute.xlu0 70
        %8409 = vperm.xlu0 %8408, %v425
        %v8410 = vpop.permute.xlu0 %8409
        %8412 = vset.pattern.permute.xlu0 70
        %8413 = vperm.xlu0 %8412, %v426
        %v8414 = vpop.permute.xlu0 %8413
        %8416 = vset.pattern.permute.xlu0 70
        %8417 = vperm.xlu0 %8416, %v427
        %v8418 = vpop.permute.xlu0 %8417
        %8420 = vset.pattern.permute.xlu0 70
        %8421 = vperm.xlu0 %8420, %v428
        %v8422 = vpop.permute.xlu0 %8421
        %8424 = vset.pattern.permute.xlu0 70
        %8425 = vperm.xlu0 %8424, %v429
        %v8426 = vpop.permute.xlu0 %8425
        %8428 = vset.pattern.permute.xlu0 70
        %8429 = vperm.xlu0 %8428, %v430
        %v8430 = vpop.permute.xlu0 %8429
        %8432 = vset.pattern.permute.xlu0 70
        %8433 = vperm.xlu0 %8432, %v431
        %v8434 = vpop.permute.xlu0 %8433
        %8436 = vset.pattern.permute.xlu0 70
        %8437 = vperm.xlu0 %8436, %v432
        %v8438 = vpop.permute.xlu0 %8437
        %v8440 = vmul.f32 %v8410, %v8405
        %v8441 = vmul.f32 %v8410, %v8407
        %v8442 = vmul.f32 %v8414, %v8405
        %v8443 = vmul.f32 %v8414, %v8407
        %v8444 = vmul.f32 %v8418, %v8405
        %v8445 = vmul.f32 %v8418, %v8407
        %v8446 = vmul.f32 %v8422, %v8405
        %v8447 = vmul.f32 %v8422, %v8407
        %v8448 = vmul.f32 %v8426, %v8405
        %v8449 = vmul.f32 %v8426, %v8407
        %v8450 = vmul.f32 %v8430, %v8405
        %v8451 = vmul.f32 %v8430, %v8407
        %v8452 = vmul.f32 %v8434, %v8405
        %v8453 = vmul.f32 %v8434, %v8407
        %v8454 = vmul.f32 %v8438, %v8405
        %v8455 = vmul.f32 %v8438, %v8407
        %v8472 = vrot.slane %v8440, 4
        %v8473 = vrot.slane %v8441, 4
        %v8474 = vsel %vm382, %v8472, %v8473
        %v8475 = vrot.slane %v8442, 4
        %v8476 = vrot.slane %v8443, 4
        %v8477 = vsel %vm382, %v8475, %v8476
        %v8478 = vrot.slane %v8444, 4
        %v8479 = vrot.slane %v8445, 4
        %v8480 = vsel %vm382, %v8478, %v8479
        %v8481 = vrot.slane %v8446, 4
        %v8482 = vrot.slane %v8447, 4
        %v8483 = vsel %vm382, %v8481, %v8482
        %v8484 = vrot.slane %v8448, 4
        %v8485 = vrot.slane %v8449, 4
        %v8486 = vsel %vm382, %v8484, %v8485
        %v8487 = vrot.slane %v8450, 4
        %v8488 = vrot.slane %v8451, 4
        %v8489 = vsel %vm382, %v8487, %v8488
        %v8490 = vrot.slane %v8452, 4
        %v8491 = vrot.slane %v8453, 4
        %v8492 = vsel %vm382, %v8490, %v8491
        %v8493 = vrot.slane %v8454, 4
        %v8494 = vrot.slane %v8455, 4
        %v8495 = vsel %vm382, %v8493, %v8494
        %v8504 = vadd.f32 %v8394, %v8474
        %v8505 = vadd.f32 %v8395, %v8477
        %v8506 = vadd.f32 %v8396, %v8480
        %v8507 = vadd.f32 %v8397, %v8483
        %v8508 = vadd.f32 %v8398, %v8486
        %v8509 = vadd.f32 %v8399, %v8489
        %v8510 = vadd.f32 %v8400, %v8492
        %v8511 = vadd.f32 %v8401, %v8495
        %v8512 = vsub.f32 %v171, %v2823
        %v8513 = vsub.f32 %v172, %v2823
        %v8514 = vmul.f32 %v8512, 1.442695
        %v8515 = vpow.pop %v8514
        %v8516 = vmul.f32 %v8513, 1.442695
        %v8517 = vpow.pop %v8516
        %8518 = vset.pattern.permute.xlu0 71
        %8519 = vperm.xlu0 %8518, %v425
        %v8520 = vpop.permute.xlu0 %8519
        %8522 = vset.pattern.permute.xlu0 71
        %8523 = vperm.xlu0 %8522, %v426
        %v8524 = vpop.permute.xlu0 %8523
        %8526 = vset.pattern.permute.xlu0 71
        %8527 = vperm.xlu0 %8526, %v427
        %v8528 = vpop.permute.xlu0 %8527
        %8530 = vset.pattern.permute.xlu0 71
        %8531 = vperm.xlu0 %8530, %v428
        %v8532 = vpop.permute.xlu0 %8531
        %8534 = vset.pattern.permute.xlu0 71
        %8535 = vperm.xlu0 %8534, %v429
        %v8536 = vpop.permute.xlu0 %8535
        %8538 = vset.pattern.permute.xlu0 71
        %8539 = vperm.xlu0 %8538, %v430
        %v8540 = vpop.permute.xlu0 %8539
        %8542 = vset.pattern.permute.xlu0 71
        %8543 = vperm.xlu0 %8542, %v431
        %v8544 = vpop.permute.xlu0 %8543
        %8546 = vset.pattern.permute.xlu0 71
        %8547 = vperm.xlu0 %8546, %v432
        %v8548 = vpop.permute.xlu0 %8547
        %v8550 = vmul.f32 %v8520, %v8515
        %v8551 = vmul.f32 %v8520, %v8517
        %v8552 = vmul.f32 %v8524, %v8515
        %v8553 = vmul.f32 %v8524, %v8517
        %v8554 = vmul.f32 %v8528, %v8515
        %v8555 = vmul.f32 %v8528, %v8517
        %v8556 = vmul.f32 %v8532, %v8515
        %v8557 = vmul.f32 %v8532, %v8517
        %v8558 = vmul.f32 %v8536, %v8515
        %v8559 = vmul.f32 %v8536, %v8517
        %v8560 = vmul.f32 %v8540, %v8515
        %v8561 = vmul.f32 %v8540, %v8517
        %v8562 = vmul.f32 %v8544, %v8515
        %v8563 = vmul.f32 %v8544, %v8517
        %v8564 = vmul.f32 %v8548, %v8515
        %v8565 = vmul.f32 %v8548, %v8517
        %v8582 = vrot.slane %v8550, 4
        %v8583 = vrot.slane %v8551, 4
        %v8584 = vsel %vm382, %v8582, %v8583
        %v8585 = vrot.slane %v8552, 4
        %v8586 = vrot.slane %v8553, 4
        %v8587 = vsel %vm382, %v8585, %v8586
        %v8588 = vrot.slane %v8554, 4
        %v8589 = vrot.slane %v8555, 4
        %v8590 = vsel %vm382, %v8588, %v8589
        %v8591 = vrot.slane %v8556, 4
        %v8592 = vrot.slane %v8557, 4
        %v8593 = vsel %vm382, %v8591, %v8592
        %v8594 = vrot.slane %v8558, 4
        %v8595 = vrot.slane %v8559, 4
        %v8596 = vsel %vm382, %v8594, %v8595
        %v8597 = vrot.slane %v8560, 4
        %v8598 = vrot.slane %v8561, 4
        %v8599 = vsel %vm382, %v8597, %v8598
        %v8600 = vrot.slane %v8562, 4
        %v8601 = vrot.slane %v8563, 4
        %v8602 = vsel %vm382, %v8600, %v8601
        %v8603 = vrot.slane %v8564, 4
        %v8604 = vrot.slane %v8565, 4
        %v8605 = vsel %vm382, %v8603, %v8604
        %8606 = vrot.lane.b32.xlu0 %v8584, 127
        %v8607 = vpop.permute.xlu0 %8606
        %8608 = vrot.lane.b32.xlu0 %v8587, 127
        %v8609 = vpop.permute.xlu0 %8608
        %8610 = vrot.lane.b32.xlu0 %v8590, 127
        %v8611 = vpop.permute.xlu0 %8610
        %8612 = vrot.lane.b32.xlu0 %v8593, 127
        %v8613 = vpop.permute.xlu0 %8612
        %8614 = vrot.lane.b32.xlu0 %v8596, 127
        %v8615 = vpop.permute.xlu0 %8614
        %8616 = vrot.lane.b32.xlu0 %v8599, 127
        %v8617 = vpop.permute.xlu0 %8616
        %8618 = vrot.lane.b32.xlu0 %v8602, 127
        %v8619 = vpop.permute.xlu0 %8618
        %8620 = vrot.lane.b32.xlu0 %v8605, 127
        %v8621 = vpop.permute.xlu0 %8620
        %v8630 = vadd.f32 %v8504, %v8607
        %v8631 = vadd.f32 %v8505, %v8609
        %v8632 = vadd.f32 %v8506, %v8611
        %v8633 = vadd.f32 %v8507, %v8613
        %v8634 = vadd.f32 %v8508, %v8615
        %v8635 = vadd.f32 %v8509, %v8617
        %v8636 = vadd.f32 %v8510, %v8619
        %v8637 = vadd.f32 %v8511, %v8621
        %v8638 = vsub.f32 %v171, %v2952
        %v8639 = vsub.f32 %v172, %v2952
        %v8640 = vmul.f32 %v8638, 1.442695
        %v8641 = vpow.pop %v8640
        %v8642 = vmul.f32 %v8639, 1.442695
        %v8643 = vpow.pop %v8642
        %8644 = vset.pattern.permute.xlu0 72
        %8645 = vperm.xlu0 %8644, %v425
        %v8646 = vpop.permute.xlu0 %8645
        %8648 = vset.pattern.permute.xlu0 72
        %8649 = vperm.xlu0 %8648, %v426
        %v8650 = vpop.permute.xlu0 %8649
        %8652 = vset.pattern.permute.xlu0 72
        %8653 = vperm.xlu0 %8652, %v427
        %v8654 = vpop.permute.xlu0 %8653
        %8656 = vset.pattern.permute.xlu0 72
        %8657 = vperm.xlu0 %8656, %v428
        %v8658 = vpop.permute.xlu0 %8657
        %8660 = vset.pattern.permute.xlu0 72
        %8661 = vperm.xlu0 %8660, %v429
        %v8662 = vpop.permute.xlu0 %8661
        %8664 = vset.pattern.permute.xlu0 72
        %8665 = vperm.xlu0 %8664, %v430
        %v8666 = vpop.permute.xlu0 %8665
        %8668 = vset.pattern.permute.xlu0 72
        %8669 = vperm.xlu0 %8668, %v431
        %v8670 = vpop.permute.xlu0 %8669
        %8672 = vset.pattern.permute.xlu0 72
        %8673 = vperm.xlu0 %8672, %v432
        %v8674 = vpop.permute.xlu0 %8673
        %v8676 = vmul.f32 %v8646, %v8641
        %v8677 = vmul.f32 %v8646, %v8643
        %v8678 = vmul.f32 %v8650, %v8641
        %v8679 = vmul.f32 %v8650, %v8643
        %v8680 = vmul.f32 %v8654, %v8641
        %v8681 = vmul.f32 %v8654, %v8643
        %v8682 = vmul.f32 %v8658, %v8641
        %v8683 = vmul.f32 %v8658, %v8643
        %v8684 = vmul.f32 %v8662, %v8641
        %v8685 = vmul.f32 %v8662, %v8643
        %v8686 = vmul.f32 %v8666, %v8641
        %v8687 = vmul.f32 %v8666, %v8643
        %v8688 = vmul.f32 %v8670, %v8641
        %v8689 = vmul.f32 %v8670, %v8643
        %v8690 = vmul.f32 %v8674, %v8641
        %v8691 = vmul.f32 %v8674, %v8643
        %v8708 = vrot.slane %v8676, 4
        %v8709 = vrot.slane %v8677, 4
        %v8710 = vsel %vm382, %v8708, %v8709
        %v8711 = vrot.slane %v8678, 4
        %v8712 = vrot.slane %v8679, 4
        %v8713 = vsel %vm382, %v8711, %v8712
        %v8714 = vrot.slane %v8680, 4
        %v8715 = vrot.slane %v8681, 4
        %v8716 = vsel %vm382, %v8714, %v8715
        %v8717 = vrot.slane %v8682, 4
        %v8718 = vrot.slane %v8683, 4
        %v8719 = vsel %vm382, %v8717, %v8718
        %v8720 = vrot.slane %v8684, 4
        %v8721 = vrot.slane %v8685, 4
        %v8722 = vsel %vm382, %v8720, %v8721
        %v8723 = vrot.slane %v8686, 4
        %v8724 = vrot.slane %v8687, 4
        %v8725 = vsel %vm382, %v8723, %v8724
        %v8726 = vrot.slane %v8688, 4
        %v8727 = vrot.slane %v8689, 4
        %v8728 = vsel %vm382, %v8726, %v8727
        %v8729 = vrot.slane %v8690, 4
        %v8730 = vrot.slane %v8691, 4
        %v8731 = vsel %vm382, %v8729, %v8730
        %8732 = vrot.lane.b32.xlu0 %v8710, 126
        %v8733 = vpop.permute.xlu0 %8732
        %8734 = vrot.lane.b32.xlu0 %v8713, 126
        %v8735 = vpop.permute.xlu0 %8734
        %8736 = vrot.lane.b32.xlu0 %v8716, 126
        %v8737 = vpop.permute.xlu0 %8736
        %8738 = vrot.lane.b32.xlu0 %v8719, 126
        %v8739 = vpop.permute.xlu0 %8738
        %8740 = vrot.lane.b32.xlu0 %v8722, 126
        %v8741 = vpop.permute.xlu0 %8740
        %8742 = vrot.lane.b32.xlu0 %v8725, 126
        %v8743 = vpop.permute.xlu0 %8742
        %8744 = vrot.lane.b32.xlu0 %v8728, 126
        %v8745 = vpop.permute.xlu0 %8744
        %8746 = vrot.lane.b32.xlu0 %v8731, 126
        %v8747 = vpop.permute.xlu0 %8746
        %v8756 = vadd.f32 %v8630, %v8733
        %v8757 = vadd.f32 %v8631, %v8735
        %v8758 = vadd.f32 %v8632, %v8737
        %v8759 = vadd.f32 %v8633, %v8739
        %v8760 = vadd.f32 %v8634, %v8741
        %v8761 = vadd.f32 %v8635, %v8743
        %v8762 = vadd.f32 %v8636, %v8745
        %v8763 = vadd.f32 %v8637, %v8747
        %v8764 = vsub.f32 %v171, %v3081
        %v8765 = vsub.f32 %v172, %v3081
        %v8766 = vmul.f32 %v8764, 1.442695
        %v8767 = vpow.pop %v8766
        %v8768 = vmul.f32 %v8765, 1.442695
        %v8769 = vpow.pop %v8768
        %8770 = vset.pattern.permute.xlu0 73
        %8771 = vperm.xlu0 %8770, %v425
        %v8772 = vpop.permute.xlu0 %8771
        %8774 = vset.pattern.permute.xlu0 73
        %8775 = vperm.xlu0 %8774, %v426
        %v8776 = vpop.permute.xlu0 %8775
        %8778 = vset.pattern.permute.xlu0 73
        %8779 = vperm.xlu0 %8778, %v427
        %v8780 = vpop.permute.xlu0 %8779
        %8782 = vset.pattern.permute.xlu0 73
        %8783 = vperm.xlu0 %8782, %v428
        %v8784 = vpop.permute.xlu0 %8783
        %8786 = vset.pattern.permute.xlu0 73
        %8787 = vperm.xlu0 %8786, %v429
        %v8788 = vpop.permute.xlu0 %8787
        %8790 = vset.pattern.permute.xlu0 73
        %8791 = vperm.xlu0 %8790, %v430
        %v8792 = vpop.permute.xlu0 %8791
        %8794 = vset.pattern.permute.xlu0 73
        %8795 = vperm.xlu0 %8794, %v431
        %v8796 = vpop.permute.xlu0 %8795
        %8798 = vset.pattern.permute.xlu0 73
        %8799 = vperm.xlu0 %8798, %v432
        %v8800 = vpop.permute.xlu0 %8799
        %v8802 = vmul.f32 %v8772, %v8767
        %v8803 = vmul.f32 %v8772, %v8769
        %v8804 = vmul.f32 %v8776, %v8767
        %v8805 = vmul.f32 %v8776, %v8769
        %v8806 = vmul.f32 %v8780, %v8767
        %v8807 = vmul.f32 %v8780, %v8769
        %v8808 = vmul.f32 %v8784, %v8767
        %v8809 = vmul.f32 %v8784, %v8769
        %v8810 = vmul.f32 %v8788, %v8767
        %v8811 = vmul.f32 %v8788, %v8769
        %v8812 = vmul.f32 %v8792, %v8767
        %v8813 = vmul.f32 %v8792, %v8769
        %v8814 = vmul.f32 %v8796, %v8767
        %v8815 = vmul.f32 %v8796, %v8769
        %v8816 = vmul.f32 %v8800, %v8767
        %v8817 = vmul.f32 %v8800, %v8769
        %v8834 = vrot.slane %v8802, 4
        %v8835 = vrot.slane %v8803, 4
        %v8836 = vsel %vm382, %v8834, %v8835
        %v8837 = vrot.slane %v8804, 4
        %v8838 = vrot.slane %v8805, 4
        %v8839 = vsel %vm382, %v8837, %v8838
        %v8840 = vrot.slane %v8806, 4
        %v8841 = vrot.slane %v8807, 4
        %v8842 = vsel %vm382, %v8840, %v8841
        %v8843 = vrot.slane %v8808, 4
        %v8844 = vrot.slane %v8809, 4
        %v8845 = vsel %vm382, %v8843, %v8844
        %v8846 = vrot.slane %v8810, 4
        %v8847 = vrot.slane %v8811, 4
        %v8848 = vsel %vm382, %v8846, %v8847
        %v8849 = vrot.slane %v8812, 4
        %v8850 = vrot.slane %v8813, 4
        %v8851 = vsel %vm382, %v8849, %v8850
        %v8852 = vrot.slane %v8814, 4
        %v8853 = vrot.slane %v8815, 4
        %v8854 = vsel %vm382, %v8852, %v8853
        %v8855 = vrot.slane %v8816, 4
        %v8856 = vrot.slane %v8817, 4
        %v8857 = vsel %vm382, %v8855, %v8856
        %8858 = vrot.lane.b32.xlu0 %v8836, 125
        %v8859 = vpop.permute.xlu0 %8858
        %8860 = vrot.lane.b32.xlu0 %v8839, 125
        %v8861 = vpop.permute.xlu0 %8860
        %8862 = vrot.lane.b32.xlu0 %v8842, 125
        %v8863 = vpop.permute.xlu0 %8862
        %8864 = vrot.lane.b32.xlu0 %v8845, 125
        %v8865 = vpop.permute.xlu0 %8864
        %8866 = vrot.lane.b32.xlu0 %v8848, 125
        %v8867 = vpop.permute.xlu0 %8866
        %8868 = vrot.lane.b32.xlu0 %v8851, 125
        %v8869 = vpop.permute.xlu0 %8868
        %8870 = vrot.lane.b32.xlu0 %v8854, 125
        %v8871 = vpop.permute.xlu0 %8870
        %8872 = vrot.lane.b32.xlu0 %v8857, 125
        %v8873 = vpop.permute.xlu0 %8872
        %v8882 = vadd.f32 %v8756, %v8859
        %v8883 = vadd.f32 %v8757, %v8861
        %v8884 = vadd.f32 %v8758, %v8863
        %v8885 = vadd.f32 %v8759, %v8865
        %v8886 = vadd.f32 %v8760, %v8867
        %v8887 = vadd.f32 %v8761, %v8869
        %v8888 = vadd.f32 %v8762, %v8871
        %v8889 = vadd.f32 %v8763, %v8873
        %v8890 = vsub.f32 %v171, %v3210
        %v8891 = vsub.f32 %v172, %v3210
        %v8892 = vmul.f32 %v8890, 1.442695
        %v8893 = vpow.pop %v8892
        %v8894 = vmul.f32 %v8891, 1.442695
        %v8895 = vpow.pop %v8894
        %8896 = vset.pattern.permute.xlu0 74
        %8897 = vperm.xlu0 %8896, %v425
        %v8898 = vpop.permute.xlu0 %8897
        %8900 = vset.pattern.permute.xlu0 74
        %8901 = vperm.xlu0 %8900, %v426
        %v8902 = vpop.permute.xlu0 %8901
        %8904 = vset.pattern.permute.xlu0 74
        %8905 = vperm.xlu0 %8904, %v427
        %v8906 = vpop.permute.xlu0 %8905
        %8908 = vset.pattern.permute.xlu0 74
        %8909 = vperm.xlu0 %8908, %v428
        %v8910 = vpop.permute.xlu0 %8909
        %8912 = vset.pattern.permute.xlu0 74
        %8913 = vperm.xlu0 %8912, %v429
        %v8914 = vpop.permute.xlu0 %8913
        %8916 = vset.pattern.permute.xlu0 74
        %8917 = vperm.xlu0 %8916, %v430
        %v8918 = vpop.permute.xlu0 %8917
        %8920 = vset.pattern.permute.xlu0 74
        %8921 = vperm.xlu0 %8920, %v431
        %v8922 = vpop.permute.xlu0 %8921
        %8924 = vset.pattern.permute.xlu0 74
        %8925 = vperm.xlu0 %8924, %v432
        %v8926 = vpop.permute.xlu0 %8925
        %v8928 = vmul.f32 %v8898, %v8893
        %v8929 = vmul.f32 %v8898, %v8895
        %v8930 = vmul.f32 %v8902, %v8893
        %v8931 = vmul.f32 %v8902, %v8895
        %v8932 = vmul.f32 %v8906, %v8893
        %v8933 = vmul.f32 %v8906, %v8895
        %v8934 = vmul.f32 %v8910, %v8893
        %v8935 = vmul.f32 %v8910, %v8895
        %v8936 = vmul.f32 %v8914, %v8893
        %v8937 = vmul.f32 %v8914, %v8895
        %v8938 = vmul.f32 %v8918, %v8893
        %v8939 = vmul.f32 %v8918, %v8895
        %v8940 = vmul.f32 %v8922, %v8893
        %v8941 = vmul.f32 %v8922, %v8895
        %v8942 = vmul.f32 %v8926, %v8893
        %v8943 = vmul.f32 %v8926, %v8895
        %v8960 = vrot.slane %v8928, 4
        %v8961 = vrot.slane %v8929, 4
        %v8962 = vsel %vm382, %v8960, %v8961
        %v8963 = vrot.slane %v8930, 4
        %v8964 = vrot.slane %v8931, 4
        %v8965 = vsel %vm382, %v8963, %v8964
        %v8966 = vrot.slane %v8932, 4
        %v8967 = vrot.slane %v8933, 4
        %v8968 = vsel %vm382, %v8966, %v8967
        %v8969 = vrot.slane %v8934, 4
        %v8970 = vrot.slane %v8935, 4
        %v8971 = vsel %vm382, %v8969, %v8970
        %v8972 = vrot.slane %v8936, 4
        %v8973 = vrot.slane %v8937, 4
        %v8974 = vsel %vm382, %v8972, %v8973
        %v8975 = vrot.slane %v8938, 4
        %v8976 = vrot.slane %v8939, 4
        %v8977 = vsel %vm382, %v8975, %v8976
        %v8978 = vrot.slane %v8940, 4
        %v8979 = vrot.slane %v8941, 4
        %v8980 = vsel %vm382, %v8978, %v8979
        %v8981 = vrot.slane %v8942, 4
        %v8982 = vrot.slane %v8943, 4
        %v8983 = vsel %vm382, %v8981, %v8982
        %8984 = vrot.lane.b32.xlu0 %v8962, 124
        %v8985 = vpop.permute.xlu0 %8984
        %8986 = vrot.lane.b32.xlu0 %v8965, 124
        %v8987 = vpop.permute.xlu0 %8986
        %8988 = vrot.lane.b32.xlu0 %v8968, 124
        %v8989 = vpop.permute.xlu0 %8988
        %8990 = vrot.lane.b32.xlu0 %v8971, 124
        %v8991 = vpop.permute.xlu0 %8990
        %8992 = vrot.lane.b32.xlu0 %v8974, 124
        %v8993 = vpop.permute.xlu0 %8992
        %8994 = vrot.lane.b32.xlu0 %v8977, 124
        %v8995 = vpop.permute.xlu0 %8994
        %8996 = vrot.lane.b32.xlu0 %v8980, 124
        %v8997 = vpop.permute.xlu0 %8996
        %8998 = vrot.lane.b32.xlu0 %v8983, 124
        %v8999 = vpop.permute.xlu0 %8998
        %v9008 = vadd.f32 %v8882, %v8985
        %v9009 = vadd.f32 %v8883, %v8987
        %v9010 = vadd.f32 %v8884, %v8989
        %v9011 = vadd.f32 %v8885, %v8991
        %v9012 = vadd.f32 %v8886, %v8993
        %v9013 = vadd.f32 %v8887, %v8995
        %v9014 = vadd.f32 %v8888, %v8997
        %v9015 = vadd.f32 %v8889, %v8999
        %v9016 = vsub.f32 %v173, %v405
        %v9017 = vmul.f32 %v9016, 1.442695
        %v9018 = vpow.pop %v9017
        %9019 = vset.pattern.permute.xlu0 75
        %9020 = vperm.xlu0 %9019, %v425
        %v9021 = vpop.permute.xlu0 %9020
        %9023 = vset.pattern.permute.xlu0 75
        %9024 = vperm.xlu0 %9023, %v426
        %v9025 = vpop.permute.xlu0 %9024
        %9027 = vset.pattern.permute.xlu0 75
        %9028 = vperm.xlu0 %9027, %v427
        %v9029 = vpop.permute.xlu0 %9028
        %9031 = vset.pattern.permute.xlu0 75
        %9032 = vperm.xlu0 %9031, %v428
        %v9033 = vpop.permute.xlu0 %9032
        %9035 = vset.pattern.permute.xlu0 75
        %9036 = vperm.xlu0 %9035, %v429
        %v9037 = vpop.permute.xlu0 %9036
        %9039 = vset.pattern.permute.xlu0 75
        %9040 = vperm.xlu0 %9039, %v430
        %v9041 = vpop.permute.xlu0 %9040
        %9043 = vset.pattern.permute.xlu0 75
        %9044 = vperm.xlu0 %9043, %v431
        %v9045 = vpop.permute.xlu0 %9044
        %9047 = vset.pattern.permute.xlu0 75
        %9048 = vperm.xlu0 %9047, %v432
        %v9049 = vpop.permute.xlu0 %9048
        %v9051 = vmul.f32 %v9021, %v9018
        %v9052 = vmul.f32 %v9025, %v9018
        %v9053 = vmul.f32 %v9029, %v9018
        %v9054 = vmul.f32 %v9033, %v9018
        %v9055 = vmul.f32 %v9037, %v9018
        %v9056 = vmul.f32 %v9041, %v9018
        %v9057 = vmul.f32 %v9045, %v9018
        %v9058 = vmul.f32 %v9049, %v9018
        %v9059 = vadd.f32 %v9008, %v9051
        %v9060 = vadd.f32 %v9009, %v9052
        %v9061 = vadd.f32 %v9010, %v9053
        %v9062 = vadd.f32 %v9011, %v9054
        %v9063 = vadd.f32 %v9012, %v9055
        %v9064 = vadd.f32 %v9013, %v9056
        %v9065 = vadd.f32 %v9014, %v9057
        %v9066 = vadd.f32 %v9015, %v9058
        %v9067 = vsub.f32 %v173, %v483
        %v9068 = vmul.f32 %v9067, 1.442695
        %v9069 = vpow.pop %v9068
        %9070 = vset.pattern.permute.xlu0 76
        %9071 = vperm.xlu0 %9070, %v425
        %v9072 = vpop.permute.xlu0 %9071
        %9074 = vset.pattern.permute.xlu0 76
        %9075 = vperm.xlu0 %9074, %v426
        %v9076 = vpop.permute.xlu0 %9075
        %9078 = vset.pattern.permute.xlu0 76
        %9079 = vperm.xlu0 %9078, %v427
        %v9080 = vpop.permute.xlu0 %9079
        %9082 = vset.pattern.permute.xlu0 76
        %9083 = vperm.xlu0 %9082, %v428
        %v9084 = vpop.permute.xlu0 %9083
        %9086 = vset.pattern.permute.xlu0 76
        %9087 = vperm.xlu0 %9086, %v429
        %v9088 = vpop.permute.xlu0 %9087
        %9090 = vset.pattern.permute.xlu0 76
        %9091 = vperm.xlu0 %9090, %v430
        %v9092 = vpop.permute.xlu0 %9091
        %9094 = vset.pattern.permute.xlu0 76
        %9095 = vperm.xlu0 %9094, %v431
        %v9096 = vpop.permute.xlu0 %9095
        %9098 = vset.pattern.permute.xlu0 76
        %9099 = vperm.xlu0 %9098, %v432
        %v9100 = vpop.permute.xlu0 %9099
        %v9102 = vmul.f32 %v9072, %v9069
        %v9103 = vmul.f32 %v9076, %v9069
        %v9104 = vmul.f32 %v9080, %v9069
        %v9105 = vmul.f32 %v9084, %v9069
        %v9106 = vmul.f32 %v9088, %v9069
        %v9107 = vmul.f32 %v9092, %v9069
        %v9108 = vmul.f32 %v9096, %v9069
        %v9109 = vmul.f32 %v9100, %v9069
        %9118 = vrot.lane.b32.xlu0 %v9102, 127
        %v9119 = vpop.permute.xlu0 %9118
        %9120 = vrot.lane.b32.xlu0 %v9103, 127
        %v9121 = vpop.permute.xlu0 %9120
        %9122 = vrot.lane.b32.xlu0 %v9104, 127
        %v9123 = vpop.permute.xlu0 %9122
        %9124 = vrot.lane.b32.xlu0 %v9105, 127
        %v9125 = vpop.permute.xlu0 %9124
        %9126 = vrot.lane.b32.xlu0 %v9106, 127
        %v9127 = vpop.permute.xlu0 %9126
        %9128 = vrot.lane.b32.xlu0 %v9107, 127
        %v9129 = vpop.permute.xlu0 %9128
        %9130 = vrot.lane.b32.xlu0 %v9108, 127
        %v9131 = vpop.permute.xlu0 %9130
        %9132 = vrot.lane.b32.xlu0 %v9109, 127
        %v9133 = vpop.permute.xlu0 %9132
        %v9142 = vadd.f32 %v9059, %v9119
        %v9143 = vadd.f32 %v9060, %v9121
        %v9144 = vadd.f32 %v9061, %v9123
        %v9145 = vadd.f32 %v9062, %v9125
        %v9146 = vadd.f32 %v9063, %v9127
        %v9147 = vadd.f32 %v9064, %v9129
        %v9148 = vadd.f32 %v9065, %v9131
        %v9149 = vadd.f32 %v9066, %v9133
        %v9150 = vsub.f32 %v173, %v569
        %v9151 = vmul.f32 %v9150, 1.442695
        %v9152 = vpow.pop %v9151
        %9153 = vset.pattern.permute.xlu0 77
        %9154 = vperm.xlu0 %9153, %v425
        %v9155 = vpop.permute.xlu0 %9154
        %9157 = vset.pattern.permute.xlu0 77
        %9158 = vperm.xlu0 %9157, %v426
        %v9159 = vpop.permute.xlu0 %9158
        %9161 = vset.pattern.permute.xlu0 77
        %9162 = vperm.xlu0 %9161, %v427
        %v9163 = vpop.permute.xlu0 %9162
        %9165 = vset.pattern.permute.xlu0 77
        %9166 = vperm.xlu0 %9165, %v428
        %v9167 = vpop.permute.xlu0 %9166
        %9169 = vset.pattern.permute.xlu0 77
        %9170 = vperm.xlu0 %9169, %v429
        %v9171 = vpop.permute.xlu0 %9170
        %9173 = vset.pattern.permute.xlu0 77
        %9174 = vperm.xlu0 %9173, %v430
        %v9175 = vpop.permute.xlu0 %9174
        %9177 = vset.pattern.permute.xlu0 77
        %9178 = vperm.xlu0 %9177, %v431
        %v9179 = vpop.permute.xlu0 %9178
        %9181 = vset.pattern.permute.xlu0 77
        %9182 = vperm.xlu0 %9181, %v432
        %v9183 = vpop.permute.xlu0 %9182
        %v9185 = vmul.f32 %v9155, %v9152
        %v9186 = vmul.f32 %v9159, %v9152
        %v9187 = vmul.f32 %v9163, %v9152
        %v9188 = vmul.f32 %v9167, %v9152
        %v9189 = vmul.f32 %v9171, %v9152
        %v9190 = vmul.f32 %v9175, %v9152
        %v9191 = vmul.f32 %v9179, %v9152
        %v9192 = vmul.f32 %v9183, %v9152
        %9201 = vrot.lane.b32.xlu0 %v9185, 126
        %v9202 = vpop.permute.xlu0 %9201
        %9203 = vrot.lane.b32.xlu0 %v9186, 126
        %v9204 = vpop.permute.xlu0 %9203
        %9205 = vrot.lane.b32.xlu0 %v9187, 126
        %v9206 = vpop.permute.xlu0 %9205
        %9207 = vrot.lane.b32.xlu0 %v9188, 126
        %v9208 = vpop.permute.xlu0 %9207
        %9209 = vrot.lane.b32.xlu0 %v9189, 126
        %v9210 = vpop.permute.xlu0 %9209
        %9211 = vrot.lane.b32.xlu0 %v9190, 126
        %v9212 = vpop.permute.xlu0 %9211
        %9213 = vrot.lane.b32.xlu0 %v9191, 126
        %v9214 = vpop.permute.xlu0 %9213
        %9215 = vrot.lane.b32.xlu0 %v9192, 126
        %v9216 = vpop.permute.xlu0 %9215
        %v9225 = vadd.f32 %v9142, %v9202
        %v9226 = vadd.f32 %v9143, %v9204
        %v9227 = vadd.f32 %v9144, %v9206
        %v9228 = vadd.f32 %v9145, %v9208
        %v9229 = vadd.f32 %v9146, %v9210
        %v9230 = vadd.f32 %v9147, %v9212
        %v9231 = vadd.f32 %v9148, %v9214
        %v9232 = vadd.f32 %v9149, %v9216
        %v9233 = vsub.f32 %v173, %v655
        %v9234 = vmul.f32 %v9233, 1.442695
        %v9235 = vpow.pop %v9234
        %9236 = vset.pattern.permute.xlu0 78
        %9237 = vperm.xlu0 %9236, %v425
        %v9238 = vpop.permute.xlu0 %9237
        %9240 = vset.pattern.permute.xlu0 78
        %9241 = vperm.xlu0 %9240, %v426
        %v9242 = vpop.permute.xlu0 %9241
        %9244 = vset.pattern.permute.xlu0 78
        %9245 = vperm.xlu0 %9244, %v427
        %v9246 = vpop.permute.xlu0 %9245
        %9248 = vset.pattern.permute.xlu0 78
        %9249 = vperm.xlu0 %9248, %v428
        %v9250 = vpop.permute.xlu0 %9249
        %9252 = vset.pattern.permute.xlu0 78
        %9253 = vperm.xlu0 %9252, %v429
        %v9254 = vpop.permute.xlu0 %9253
        %9256 = vset.pattern.permute.xlu0 78
        %9257 = vperm.xlu0 %9256, %v430
        %v9258 = vpop.permute.xlu0 %9257
        %9260 = vset.pattern.permute.xlu0 78
        %9261 = vperm.xlu0 %9260, %v431
        %v9262 = vpop.permute.xlu0 %9261
        %9264 = vset.pattern.permute.xlu0 78
        %9265 = vperm.xlu0 %9264, %v432
        %v9266 = vpop.permute.xlu0 %9265
        %v9268 = vmul.f32 %v9238, %v9235
        %v9269 = vmul.f32 %v9242, %v9235
        %v9270 = vmul.f32 %v9246, %v9235
        %v9271 = vmul.f32 %v9250, %v9235
        %v9272 = vmul.f32 %v9254, %v9235
        %v9273 = vmul.f32 %v9258, %v9235
        %v9274 = vmul.f32 %v9262, %v9235
        %v9275 = vmul.f32 %v9266, %v9235
        %9284 = vrot.lane.b32.xlu0 %v9268, 125
        %v9285 = vpop.permute.xlu0 %9284
        %9286 = vrot.lane.b32.xlu0 %v9269, 125
        %v9287 = vpop.permute.xlu0 %9286
        %9288 = vrot.lane.b32.xlu0 %v9270, 125
        %v9289 = vpop.permute.xlu0 %9288
        %9290 = vrot.lane.b32.xlu0 %v9271, 125
        %v9291 = vpop.permute.xlu0 %9290
        %9292 = vrot.lane.b32.xlu0 %v9272, 125
        %v9293 = vpop.permute.xlu0 %9292
        %9294 = vrot.lane.b32.xlu0 %v9273, 125
        %v9295 = vpop.permute.xlu0 %9294
        %9296 = vrot.lane.b32.xlu0 %v9274, 125
        %v9297 = vpop.permute.xlu0 %9296
        %9298 = vrot.lane.b32.xlu0 %v9275, 125
        %v9299 = vpop.permute.xlu0 %9298
        %v9308 = vadd.f32 %v9225, %v9285
        %v9309 = vadd.f32 %v9226, %v9287
        %v9310 = vadd.f32 %v9227, %v9289
        %v9311 = vadd.f32 %v9228, %v9291
        %v9312 = vadd.f32 %v9229, %v9293
        %v9313 = vadd.f32 %v9230, %v9295
        %v9314 = vadd.f32 %v9231, %v9297
        %v9315 = vadd.f32 %v9232, %v9299
        %v9316 = vsub.f32 %v173, %v741
        %v9317 = vmul.f32 %v9316, 1.442695
        %v9318 = vpow.pop %v9317
        %9319 = vset.pattern.permute.xlu0 79
        %9320 = vperm.xlu0 %9319, %v425
        %v9321 = vpop.permute.xlu0 %9320
        %9323 = vset.pattern.permute.xlu0 79
        %9324 = vperm.xlu0 %9323, %v426
        %v9325 = vpop.permute.xlu0 %9324
        %9327 = vset.pattern.permute.xlu0 79
        %9328 = vperm.xlu0 %9327, %v427
        %v9329 = vpop.permute.xlu0 %9328
        %9331 = vset.pattern.permute.xlu0 79
        %9332 = vperm.xlu0 %9331, %v428
        %v9333 = vpop.permute.xlu0 %9332
        %9335 = vset.pattern.permute.xlu0 79
        %9336 = vperm.xlu0 %9335, %v429
        %v9337 = vpop.permute.xlu0 %9336
        %9339 = vset.pattern.permute.xlu0 79
        %9340 = vperm.xlu0 %9339, %v430
        %v9341 = vpop.permute.xlu0 %9340
        %9343 = vset.pattern.permute.xlu0 79
        %9344 = vperm.xlu0 %9343, %v431
        %v9345 = vpop.permute.xlu0 %9344
        %9347 = vset.pattern.permute.xlu0 79
        %9348 = vperm.xlu0 %9347, %v432
        %v9349 = vpop.permute.xlu0 %9348
        %v9351 = vmul.f32 %v9321, %v9318
        %v9352 = vmul.f32 %v9325, %v9318
        %v9353 = vmul.f32 %v9329, %v9318
        %v9354 = vmul.f32 %v9333, %v9318
        %v9355 = vmul.f32 %v9337, %v9318
        %v9356 = vmul.f32 %v9341, %v9318
        %v9357 = vmul.f32 %v9345, %v9318
        %v9358 = vmul.f32 %v9349, %v9318
        %9367 = vrot.lane.b32.xlu0 %v9351, 124
        %v9368 = vpop.permute.xlu0 %9367
        %9369 = vrot.lane.b32.xlu0 %v9352, 124
        %v9370 = vpop.permute.xlu0 %9369
        %9371 = vrot.lane.b32.xlu0 %v9353, 124
        %v9372 = vpop.permute.xlu0 %9371
        %9373 = vrot.lane.b32.xlu0 %v9354, 124
        %v9374 = vpop.permute.xlu0 %9373
        %9375 = vrot.lane.b32.xlu0 %v9355, 124
        %v9376 = vpop.permute.xlu0 %9375
        %9377 = vrot.lane.b32.xlu0 %v9356, 124
        %v9378 = vpop.permute.xlu0 %9377
        %9379 = vrot.lane.b32.xlu0 %v9357, 124
        %v9380 = vpop.permute.xlu0 %9379
        %9381 = vrot.lane.b32.xlu0 %v9358, 124
        %v9382 = vpop.permute.xlu0 %9381
        %v9391 = vadd.f32 %v9308, %v9368
        %v9392 = vadd.f32 %v9309, %v9370
        %v9393 = vadd.f32 %v9310, %v9372
        %v9394 = vadd.f32 %v9311, %v9374
        %v9395 = vadd.f32 %v9312, %v9376
        %v9396 = vadd.f32 %v9313, %v9378
        %v9397 = vadd.f32 %v9314, %v9380
        %v9398 = vadd.f32 %v9315, %v9382
        %v9399 = vsub.f32 %v173, %v826
        %v9400 = vsub.f32 %v174, %v826
        %v9401 = vmul.f32 %v9399, 1.442695
        %v9402 = vpow.pop %v9401
        %v9403 = vmul.f32 %v9400, 1.442695
        %v9404 = vpow.pop %v9403
        %9405 = vset.pattern.permute.xlu0 80
        %9406 = vperm.xlu0 %9405, %v425
        %v9407 = vpop.permute.xlu0 %9406
        %9409 = vset.pattern.permute.xlu0 80
        %9410 = vperm.xlu0 %9409, %v426
        %v9411 = vpop.permute.xlu0 %9410
        %9413 = vset.pattern.permute.xlu0 80
        %9414 = vperm.xlu0 %9413, %v427
        %v9415 = vpop.permute.xlu0 %9414
        %9417 = vset.pattern.permute.xlu0 80
        %9418 = vperm.xlu0 %9417, %v428
        %v9419 = vpop.permute.xlu0 %9418
        %9421 = vset.pattern.permute.xlu0 80
        %9422 = vperm.xlu0 %9421, %v429
        %v9423 = vpop.permute.xlu0 %9422
        %9425 = vset.pattern.permute.xlu0 80
        %9426 = vperm.xlu0 %9425, %v430
        %v9427 = vpop.permute.xlu0 %9426
        %9429 = vset.pattern.permute.xlu0 80
        %9430 = vperm.xlu0 %9429, %v431
        %v9431 = vpop.permute.xlu0 %9430
        %9433 = vset.pattern.permute.xlu0 80
        %9434 = vperm.xlu0 %9433, %v432
        %v9435 = vpop.permute.xlu0 %9434
        %v9437 = vmul.f32 %v9407, %v9402
        %v9438 = vmul.f32 %v9407, %v9404
        %v9439 = vmul.f32 %v9411, %v9402
        %v9440 = vmul.f32 %v9411, %v9404
        %v9441 = vmul.f32 %v9415, %v9402
        %v9442 = vmul.f32 %v9415, %v9404
        %v9443 = vmul.f32 %v9419, %v9402
        %v9444 = vmul.f32 %v9419, %v9404
        %v9445 = vmul.f32 %v9423, %v9402
        %v9446 = vmul.f32 %v9423, %v9404
        %v9447 = vmul.f32 %v9427, %v9402
        %v9448 = vmul.f32 %v9427, %v9404
        %v9449 = vmul.f32 %v9431, %v9402
        %v9450 = vmul.f32 %v9431, %v9404
        %v9451 = vmul.f32 %v9435, %v9402
        %v9452 = vmul.f32 %v9435, %v9404
        %v9469 = vrot.slane %v9437, 1
        %v9470 = vrot.slane %v9438, 1
        %v9471 = vsel %vm319, %v9469, %v9470
        %v9472 = vrot.slane %v9439, 1
        %v9473 = vrot.slane %v9440, 1
        %v9474 = vsel %vm319, %v9472, %v9473
        %v9475 = vrot.slane %v9441, 1
        %v9476 = vrot.slane %v9442, 1
        %v9477 = vsel %vm319, %v9475, %v9476
        %v9478 = vrot.slane %v9443, 1
        %v9479 = vrot.slane %v9444, 1
        %v9480 = vsel %vm319, %v9478, %v9479
        %v9481 = vrot.slane %v9445, 1
        %v9482 = vrot.slane %v9446, 1
        %v9483 = vsel %vm319, %v9481, %v9482
        %v9484 = vrot.slane %v9447, 1
        %v9485 = vrot.slane %v9448, 1
        %v9486 = vsel %vm319, %v9484, %v9485
        %v9487 = vrot.slane %v9449, 1
        %v9488 = vrot.slane %v9450, 1
        %v9489 = vsel %vm319, %v9487, %v9488
        %v9490 = vrot.slane %v9451, 1
        %v9491 = vrot.slane %v9452, 1
        %v9492 = vsel %vm319, %v9490, %v9491
        %v9501 = vadd.f32 %v9391, %v9471
        %v9502 = vadd.f32 %v9392, %v9474
        %v9503 = vadd.f32 %v9393, %v9477
        %v9504 = vadd.f32 %v9394, %v9480
        %v9505 = vadd.f32 %v9395, %v9483
        %v9506 = vadd.f32 %v9396, %v9486
        %v9507 = vadd.f32 %v9397, %v9489
        %v9508 = vadd.f32 %v9398, %v9492
        %v9509 = vsub.f32 %v173, %v939
        %v9510 = vsub.f32 %v174, %v939
        %v9511 = vmul.f32 %v9509, 1.442695
        %v9512 = vpow.pop %v9511
        %v9513 = vmul.f32 %v9510, 1.442695
        %v9514 = vpow.pop %v9513
        %9515 = vset.pattern.permute.xlu0 81
        %9516 = vperm.xlu0 %9515, %v425
        %v9517 = vpop.permute.xlu0 %9516
        %9519 = vset.pattern.permute.xlu0 81
        %9520 = vperm.xlu0 %9519, %v426
        %v9521 = vpop.permute.xlu0 %9520
        %9523 = vset.pattern.permute.xlu0 81
        %9524 = vperm.xlu0 %9523, %v427
        %v9525 = vpop.permute.xlu0 %9524
        %9527 = vset.pattern.permute.xlu0 81
        %9528 = vperm.xlu0 %9527, %v428
        %v9529 = vpop.permute.xlu0 %9528
        %9531 = vset.pattern.permute.xlu0 81
        %9532 = vperm.xlu0 %9531, %v429
        %v9533 = vpop.permute.xlu0 %9532
        %9535 = vset.pattern.permute.xlu0 81
        %9536 = vperm.xlu0 %9535, %v430
        %v9537 = vpop.permute.xlu0 %9536
        %9539 = vset.pattern.permute.xlu0 81
        %9540 = vperm.xlu0 %9539, %v431
        %v9541 = vpop.permute.xlu0 %9540
        %9543 = vset.pattern.permute.xlu0 81
        %9544 = vperm.xlu0 %9543, %v432
        %v9545 = vpop.permute.xlu0 %9544
        %v9547 = vmul.f32 %v9517, %v9512
        %v9548 = vmul.f32 %v9517, %v9514
        %v9549 = vmul.f32 %v9521, %v9512
        %v9550 = vmul.f32 %v9521, %v9514
        %v9551 = vmul.f32 %v9525, %v9512
        %v9552 = vmul.f32 %v9525, %v9514
        %v9553 = vmul.f32 %v9529, %v9512
        %v9554 = vmul.f32 %v9529, %v9514
        %v9555 = vmul.f32 %v9533, %v9512
        %v9556 = vmul.f32 %v9533, %v9514
        %v9557 = vmul.f32 %v9537, %v9512
        %v9558 = vmul.f32 %v9537, %v9514
        %v9559 = vmul.f32 %v9541, %v9512
        %v9560 = vmul.f32 %v9541, %v9514
        %v9561 = vmul.f32 %v9545, %v9512
        %v9562 = vmul.f32 %v9545, %v9514
        %v9579 = vrot.slane %v9547, 1
        %v9580 = vrot.slane %v9548, 1
        %v9581 = vsel %vm319, %v9579, %v9580
        %v9582 = vrot.slane %v9549, 1
        %v9583 = vrot.slane %v9550, 1
        %v9584 = vsel %vm319, %v9582, %v9583
        %v9585 = vrot.slane %v9551, 1
        %v9586 = vrot.slane %v9552, 1
        %v9587 = vsel %vm319, %v9585, %v9586
        %v9588 = vrot.slane %v9553, 1
        %v9589 = vrot.slane %v9554, 1
        %v9590 = vsel %vm319, %v9588, %v9589
        %v9591 = vrot.slane %v9555, 1
        %v9592 = vrot.slane %v9556, 1
        %v9593 = vsel %vm319, %v9591, %v9592
        %v9594 = vrot.slane %v9557, 1
        %v9595 = vrot.slane %v9558, 1
        %v9596 = vsel %vm319, %v9594, %v9595
        %v9597 = vrot.slane %v9559, 1
        %v9598 = vrot.slane %v9560, 1
        %v9599 = vsel %vm319, %v9597, %v9598
        %v9600 = vrot.slane %v9561, 1
        %v9601 = vrot.slane %v9562, 1
        %v9602 = vsel %vm319, %v9600, %v9601
        %9603 = vrot.lane.b32.xlu0 %v9581, 127
        %v9604 = vpop.permute.xlu0 %9603
        %9605 = vrot.lane.b32.xlu0 %v9584, 127
        %v9606 = vpop.permute.xlu0 %9605
        %9607 = vrot.lane.b32.xlu0 %v9587, 127
        %v9608 = vpop.permute.xlu0 %9607
        %9609 = vrot.lane.b32.xlu0 %v9590, 127
        %v9610 = vpop.permute.xlu0 %9609
        %9611 = vrot.lane.b32.xlu0 %v9593, 127
        %v9612 = vpop.permute.xlu0 %9611
        %9613 = vrot.lane.b32.xlu0 %v9596, 127
        %v9614 = vpop.permute.xlu0 %9613
        %9615 = vrot.lane.b32.xlu0 %v9599, 127
        %v9616 = vpop.permute.xlu0 %9615
        %9617 = vrot.lane.b32.xlu0 %v9602, 127
        %v9618 = vpop.permute.xlu0 %9617
        %v9627 = vadd.f32 %v9501, %v9604
        %v9628 = vadd.f32 %v9502, %v9606
        %v9629 = vadd.f32 %v9503, %v9608
        %v9630 = vadd.f32 %v9504, %v9610
        %v9631 = vadd.f32 %v9505, %v9612
        %v9632 = vadd.f32 %v9506, %v9614
        %v9633 = vadd.f32 %v9507, %v9616
        %v9634 = vadd.f32 %v9508, %v9618
        %v9635 = vsub.f32 %v173, %v1068
        %v9636 = vsub.f32 %v174, %v1068
        %v9637 = vmul.f32 %v9635, 1.442695
        %v9638 = vpow.pop %v9637
        %v9639 = vmul.f32 %v9636, 1.442695
        %v9640 = vpow.pop %v9639
        %9641 = vset.pattern.permute.xlu0 82
        %9642 = vperm.xlu0 %9641, %v425
        %v9643 = vpop.permute.xlu0 %9642
        %9645 = vset.pattern.permute.xlu0 82
        %9646 = vperm.xlu0 %9645, %v426
        %v9647 = vpop.permute.xlu0 %9646
        %9649 = vset.pattern.permute.xlu0 82
        %9650 = vperm.xlu0 %9649, %v427
        %v9651 = vpop.permute.xlu0 %9650
        %9653 = vset.pattern.permute.xlu0 82
        %9654 = vperm.xlu0 %9653, %v428
        %v9655 = vpop.permute.xlu0 %9654
        %9657 = vset.pattern.permute.xlu0 82
        %9658 = vperm.xlu0 %9657, %v429
        %v9659 = vpop.permute.xlu0 %9658
        %9661 = vset.pattern.permute.xlu0 82
        %9662 = vperm.xlu0 %9661, %v430
        %v9663 = vpop.permute.xlu0 %9662
        %9665 = vset.pattern.permute.xlu0 82
        %9666 = vperm.xlu0 %9665, %v431
        %v9667 = vpop.permute.xlu0 %9666
        %9669 = vset.pattern.permute.xlu0 82
        %9670 = vperm.xlu0 %9669, %v432
        %v9671 = vpop.permute.xlu0 %9670
        %v9673 = vmul.f32 %v9643, %v9638
        %v9674 = vmul.f32 %v9643, %v9640
        %v9675 = vmul.f32 %v9647, %v9638
        %v9676 = vmul.f32 %v9647, %v9640
        %v9677 = vmul.f32 %v9651, %v9638
        %v9678 = vmul.f32 %v9651, %v9640
        %v9679 = vmul.f32 %v9655, %v9638
        %v9680 = vmul.f32 %v9655, %v9640
        %v9681 = vmul.f32 %v9659, %v9638
        %v9682 = vmul.f32 %v9659, %v9640
        %v9683 = vmul.f32 %v9663, %v9638
        %v9684 = vmul.f32 %v9663, %v9640
        %v9685 = vmul.f32 %v9667, %v9638
        %v9686 = vmul.f32 %v9667, %v9640
        %v9687 = vmul.f32 %v9671, %v9638
        %v9688 = vmul.f32 %v9671, %v9640
        %v9705 = vrot.slane %v9673, 1
        %v9706 = vrot.slane %v9674, 1
        %v9707 = vsel %vm319, %v9705, %v9706
        %v9708 = vrot.slane %v9675, 1
        %v9709 = vrot.slane %v9676, 1
        %v9710 = vsel %vm319, %v9708, %v9709
        %v9711 = vrot.slane %v9677, 1
        %v9712 = vrot.slane %v9678, 1
        %v9713 = vsel %vm319, %v9711, %v9712
        %v9714 = vrot.slane %v9679, 1
        %v9715 = vrot.slane %v9680, 1
        %v9716 = vsel %vm319, %v9714, %v9715
        %v9717 = vrot.slane %v9681, 1
        %v9718 = vrot.slane %v9682, 1
        %v9719 = vsel %vm319, %v9717, %v9718
        %v9720 = vrot.slane %v9683, 1
        %v9721 = vrot.slane %v9684, 1
        %v9722 = vsel %vm319, %v9720, %v9721
        %v9723 = vrot.slane %v9685, 1
        %v9724 = vrot.slane %v9686, 1
        %v9725 = vsel %vm319, %v9723, %v9724
        %v9726 = vrot.slane %v9687, 1
        %v9727 = vrot.slane %v9688, 1
        %v9728 = vsel %vm319, %v9726, %v9727
        %9729 = vrot.lane.b32.xlu0 %v9707, 126
        %v9730 = vpop.permute.xlu0 %9729
        %9731 = vrot.lane.b32.xlu0 %v9710, 126
        %v9732 = vpop.permute.xlu0 %9731
        %9733 = vrot.lane.b32.xlu0 %v9713, 126
        %v9734 = vpop.permute.xlu0 %9733
        %9735 = vrot.lane.b32.xlu0 %v9716, 126
        %v9736 = vpop.permute.xlu0 %9735
        %9737 = vrot.lane.b32.xlu0 %v9719, 126
        %v9738 = vpop.permute.xlu0 %9737
        %9739 = vrot.lane.b32.xlu0 %v9722, 126
        %v9740 = vpop.permute.xlu0 %9739
        %9741 = vrot.lane.b32.xlu0 %v9725, 126
        %v9742 = vpop.permute.xlu0 %9741
        %9743 = vrot.lane.b32.xlu0 %v9728, 126
        %v9744 = vpop.permute.xlu0 %9743
        %v9753 = vadd.f32 %v9627, %v9730
        %v9754 = vadd.f32 %v9628, %v9732
        %v9755 = vadd.f32 %v9629, %v9734
        %v9756 = vadd.f32 %v9630, %v9736
        %v9757 = vadd.f32 %v9631, %v9738
        %v9758 = vadd.f32 %v9632, %v9740
        %v9759 = vadd.f32 %v9633, %v9742
        %v9760 = vadd.f32 %v9634, %v9744
        %v9761 = vsub.f32 %v173, %v1197
        %v9762 = vsub.f32 %v174, %v1197
        %v9763 = vmul.f32 %v9761, 1.442695
        %v9764 = vpow.pop %v9763
        %v9765 = vmul.f32 %v9762, 1.442695
        %v9766 = vpow.pop %v9765
        %9767 = vset.pattern.permute.xlu0 83
        %9768 = vperm.xlu0 %9767, %v425
        %v9769 = vpop.permute.xlu0 %9768
        %9771 = vset.pattern.permute.xlu0 83
        %9772 = vperm.xlu0 %9771, %v426
        %v9773 = vpop.permute.xlu0 %9772
        %9775 = vset.pattern.permute.xlu0 83
        %9776 = vperm.xlu0 %9775, %v427
        %v9777 = vpop.permute.xlu0 %9776
        %9779 = vset.pattern.permute.xlu0 83
        %9780 = vperm.xlu0 %9779, %v428
        %v9781 = vpop.permute.xlu0 %9780
        %9783 = vset.pattern.permute.xlu0 83
        %9784 = vperm.xlu0 %9783, %v429
        %v9785 = vpop.permute.xlu0 %9784
        %9787 = vset.pattern.permute.xlu0 83
        %9788 = vperm.xlu0 %9787, %v430
        %v9789 = vpop.permute.xlu0 %9788
        %9791 = vset.pattern.permute.xlu0 83
        %9792 = vperm.xlu0 %9791, %v431
        %v9793 = vpop.permute.xlu0 %9792
        %9795 = vset.pattern.permute.xlu0 83
        %9796 = vperm.xlu0 %9795, %v432
        %v9797 = vpop.permute.xlu0 %9796
        %v9799 = vmul.f32 %v9769, %v9764
        %v9800 = vmul.f32 %v9769, %v9766
        %v9801 = vmul.f32 %v9773, %v9764
        %v9802 = vmul.f32 %v9773, %v9766
        %v9803 = vmul.f32 %v9777, %v9764
        %v9804 = vmul.f32 %v9777, %v9766
        %v9805 = vmul.f32 %v9781, %v9764
        %v9806 = vmul.f32 %v9781, %v9766
        %v9807 = vmul.f32 %v9785, %v9764
        %v9808 = vmul.f32 %v9785, %v9766
        %v9809 = vmul.f32 %v9789, %v9764
        %v9810 = vmul.f32 %v9789, %v9766
        %v9811 = vmul.f32 %v9793, %v9764
        %v9812 = vmul.f32 %v9793, %v9766
        %v9813 = vmul.f32 %v9797, %v9764
        %v9814 = vmul.f32 %v9797, %v9766
        %v9831 = vrot.slane %v9799, 1
        %v9832 = vrot.slane %v9800, 1
        %v9833 = vsel %vm319, %v9831, %v9832
        %v9834 = vrot.slane %v9801, 1
        %v9835 = vrot.slane %v9802, 1
        %v9836 = vsel %vm319, %v9834, %v9835
        %v9837 = vrot.slane %v9803, 1
        %v9838 = vrot.slane %v9804, 1
        %v9839 = vsel %vm319, %v9837, %v9838
        %v9840 = vrot.slane %v9805, 1
        %v9841 = vrot.slane %v9806, 1
        %v9842 = vsel %vm319, %v9840, %v9841
        %v9843 = vrot.slane %v9807, 1
        %v9844 = vrot.slane %v9808, 1
        %v9845 = vsel %vm319, %v9843, %v9844
        %v9846 = vrot.slane %v9809, 1
        %v9847 = vrot.slane %v9810, 1
        %v9848 = vsel %vm319, %v9846, %v9847
        %v9849 = vrot.slane %v9811, 1
        %v9850 = vrot.slane %v9812, 1
        %v9851 = vsel %vm319, %v9849, %v9850
        %v9852 = vrot.slane %v9813, 1
        %v9853 = vrot.slane %v9814, 1
        %v9854 = vsel %vm319, %v9852, %v9853
        %9855 = vrot.lane.b32.xlu0 %v9833, 125
        %v9856 = vpop.permute.xlu0 %9855
        %9857 = vrot.lane.b32.xlu0 %v9836, 125
        %v9858 = vpop.permute.xlu0 %9857
        %9859 = vrot.lane.b32.xlu0 %v9839, 125
        %v9860 = vpop.permute.xlu0 %9859
        %9861 = vrot.lane.b32.xlu0 %v9842, 125
        %v9862 = vpop.permute.xlu0 %9861
        %9863 = vrot.lane.b32.xlu0 %v9845, 125
        %v9864 = vpop.permute.xlu0 %9863
        %9865 = vrot.lane.b32.xlu0 %v9848, 125
        %v9866 = vpop.permute.xlu0 %9865
        %9867 = vrot.lane.b32.xlu0 %v9851, 125
        %v9868 = vpop.permute.xlu0 %9867
        %9869 = vrot.lane.b32.xlu0 %v9854, 125
        %v9870 = vpop.permute.xlu0 %9869
        %v9879 = vadd.f32 %v9753, %v9856
        %v9880 = vadd.f32 %v9754, %v9858
        %v9881 = vadd.f32 %v9755, %v9860
        %v9882 = vadd.f32 %v9756, %v9862
        %v9883 = vadd.f32 %v9757, %v9864
        %v9884 = vadd.f32 %v9758, %v9866
        %v9885 = vadd.f32 %v9759, %v9868
        %v9886 = vadd.f32 %v9760, %v9870
        %v9887 = vsub.f32 %v173, %v1326
        %v9888 = vsub.f32 %v174, %v1326
        %v9889 = vmul.f32 %v9887, 1.442695
        %v9890 = vpow.pop %v9889
        %v9891 = vmul.f32 %v9888, 1.442695
        %v9892 = vpow.pop %v9891
        %9893 = vset.pattern.permute.xlu0 84
        %9894 = vperm.xlu0 %9893, %v425
        %v9895 = vpop.permute.xlu0 %9894
        %9897 = vset.pattern.permute.xlu0 84
        %9898 = vperm.xlu0 %9897, %v426
        %v9899 = vpop.permute.xlu0 %9898
        %9901 = vset.pattern.permute.xlu0 84
        %9902 = vperm.xlu0 %9901, %v427
        %v9903 = vpop.permute.xlu0 %9902
        %9905 = vset.pattern.permute.xlu0 84
        %9906 = vperm.xlu0 %9905, %v428
        %v9907 = vpop.permute.xlu0 %9906
        %9909 = vset.pattern.permute.xlu0 84
        %9910 = vperm.xlu0 %9909, %v429
        %v9911 = vpop.permute.xlu0 %9910
        %9913 = vset.pattern.permute.xlu0 84
        %9914 = vperm.xlu0 %9913, %v430
        %v9915 = vpop.permute.xlu0 %9914
        %9917 = vset.pattern.permute.xlu0 84
        %9918 = vperm.xlu0 %9917, %v431
        %v9919 = vpop.permute.xlu0 %9918
        %9921 = vset.pattern.permute.xlu0 84
        %9922 = vperm.xlu0 %9921, %v432
        %v9923 = vpop.permute.xlu0 %9922
        %v9925 = vmul.f32 %v9895, %v9890
        %v9926 = vmul.f32 %v9895, %v9892
        %v9927 = vmul.f32 %v9899, %v9890
        %v9928 = vmul.f32 %v9899, %v9892
        %v9929 = vmul.f32 %v9903, %v9890
        %v9930 = vmul.f32 %v9903, %v9892
        %v9931 = vmul.f32 %v9907, %v9890
        %v9932 = vmul.f32 %v9907, %v9892
        %v9933 = vmul.f32 %v9911, %v9890
        %v9934 = vmul.f32 %v9911, %v9892
        %v9935 = vmul.f32 %v9915, %v9890
        %v9936 = vmul.f32 %v9915, %v9892
        %v9937 = vmul.f32 %v9919, %v9890
        %v9938 = vmul.f32 %v9919, %v9892
        %v9939 = vmul.f32 %v9923, %v9890
        %v9940 = vmul.f32 %v9923, %v9892
        %v9957 = vrot.slane %v9925, 1
        %v9958 = vrot.slane %v9926, 1
        %v9959 = vsel %vm319, %v9957, %v9958
        %v9960 = vrot.slane %v9927, 1
        %v9961 = vrot.slane %v9928, 1
        %v9962 = vsel %vm319, %v9960, %v9961
        %v9963 = vrot.slane %v9929, 1
        %v9964 = vrot.slane %v9930, 1
        %v9965 = vsel %vm319, %v9963, %v9964
        %v9966 = vrot.slane %v9931, 1
        %v9967 = vrot.slane %v9932, 1
        %v9968 = vsel %vm319, %v9966, %v9967
        %v9969 = vrot.slane %v9933, 1
        %v9970 = vrot.slane %v9934, 1
        %v9971 = vsel %vm319, %v9969, %v9970
        %v9972 = vrot.slane %v9935, 1
        %v9973 = vrot.slane %v9936, 1
        %v9974 = vsel %vm319, %v9972, %v9973
        %v9975 = vrot.slane %v9937, 1
        %v9976 = vrot.slane %v9938, 1
        %v9977 = vsel %vm319, %v9975, %v9976
        %v9978 = vrot.slane %v9939, 1
        %v9979 = vrot.slane %v9940, 1
        %v9980 = vsel %vm319, %v9978, %v9979
        %9981 = vrot.lane.b32.xlu0 %v9959, 124
        %v9982 = vpop.permute.xlu0 %9981
        %9983 = vrot.lane.b32.xlu0 %v9962, 124
        %v9984 = vpop.permute.xlu0 %9983
        %9985 = vrot.lane.b32.xlu0 %v9965, 124
        %v9986 = vpop.permute.xlu0 %9985
        %9987 = vrot.lane.b32.xlu0 %v9968, 124
        %v9988 = vpop.permute.xlu0 %9987
        %9989 = vrot.lane.b32.xlu0 %v9971, 124
        %v9990 = vpop.permute.xlu0 %9989
        %9991 = vrot.lane.b32.xlu0 %v9974, 124
        %v9992 = vpop.permute.xlu0 %9991
        %9993 = vrot.lane.b32.xlu0 %v9977, 124
        %v9994 = vpop.permute.xlu0 %9993
        %9995 = vrot.lane.b32.xlu0 %v9980, 124
        %v9996 = vpop.permute.xlu0 %9995
        %v10005 = vadd.f32 %v9879, %v9982
        %v10006 = vadd.f32 %v9880, %v9984
        %v10007 = vadd.f32 %v9881, %v9986
        %v10008 = vadd.f32 %v9882, %v9988
        %v10009 = vadd.f32 %v9883, %v9990
        %v10010 = vadd.f32 %v9884, %v9992
        %v10011 = vadd.f32 %v9885, %v9994
        %v10012 = vadd.f32 %v9886, %v9996
        %v10013 = vsub.f32 %v173, %v1454
        %v10014 = vsub.f32 %v174, %v1454
        %v10015 = vmul.f32 %v10013, 1.442695
        %v10016 = vpow.pop %v10015
        %v10017 = vmul.f32 %v10014, 1.442695
        %v10018 = vpow.pop %v10017
        %10019 = vset.pattern.permute.xlu0 85
        %10020 = vperm.xlu0 %10019, %v425
        %v10021 = vpop.permute.xlu0 %10020
        %10023 = vset.pattern.permute.xlu0 85
        %10024 = vperm.xlu0 %10023, %v426
        %v10025 = vpop.permute.xlu0 %10024
        %10027 = vset.pattern.permute.xlu0 85
        %10028 = vperm.xlu0 %10027, %v427
        %v10029 = vpop.permute.xlu0 %10028
        %10031 = vset.pattern.permute.xlu0 85
        %10032 = vperm.xlu0 %10031, %v428
        %v10033 = vpop.permute.xlu0 %10032
        %10035 = vset.pattern.permute.xlu0 85
        %10036 = vperm.xlu0 %10035, %v429
        %v10037 = vpop.permute.xlu0 %10036
        %10039 = vset.pattern.permute.xlu0 85
        %10040 = vperm.xlu0 %10039, %v430
        %v10041 = vpop.permute.xlu0 %10040
        %10043 = vset.pattern.permute.xlu0 85
        %10044 = vperm.xlu0 %10043, %v431
        %v10045 = vpop.permute.xlu0 %10044
        %10047 = vset.pattern.permute.xlu0 85
        %10048 = vperm.xlu0 %10047, %v432
        %v10049 = vpop.permute.xlu0 %10048
        %v10051 = vmul.f32 %v10021, %v10016
        %v10052 = vmul.f32 %v10021, %v10018
        %v10053 = vmul.f32 %v10025, %v10016
        %v10054 = vmul.f32 %v10025, %v10018
        %v10055 = vmul.f32 %v10029, %v10016
        %v10056 = vmul.f32 %v10029, %v10018
        %v10057 = vmul.f32 %v10033, %v10016
        %v10058 = vmul.f32 %v10033, %v10018
        %v10059 = vmul.f32 %v10037, %v10016
        %v10060 = vmul.f32 %v10037, %v10018
        %v10061 = vmul.f32 %v10041, %v10016
        %v10062 = vmul.f32 %v10041, %v10018
        %v10063 = vmul.f32 %v10045, %v10016
        %v10064 = vmul.f32 %v10045, %v10018
        %v10065 = vmul.f32 %v10049, %v10016
        %v10066 = vmul.f32 %v10049, %v10018
        %v10083 = vrot.slane %v10051, 2
        %v10084 = vrot.slane %v10052, 2
        %v10085 = vsel %vm340, %v10083, %v10084
        %v10086 = vrot.slane %v10053, 2
        %v10087 = vrot.slane %v10054, 2
        %v10088 = vsel %vm340, %v10086, %v10087
        %v10089 = vrot.slane %v10055, 2
        %v10090 = vrot.slane %v10056, 2
        %v10091 = vsel %vm340, %v10089, %v10090
        %v10092 = vrot.slane %v10057, 2
        %v10093 = vrot.slane %v10058, 2
        %v10094 = vsel %vm340, %v10092, %v10093
        %v10095 = vrot.slane %v10059, 2
        %v10096 = vrot.slane %v10060, 2
        %v10097 = vsel %vm340, %v10095, %v10096
        %v10098 = vrot.slane %v10061, 2
        %v10099 = vrot.slane %v10062, 2
        %v10100 = vsel %vm340, %v10098, %v10099
        %v10101 = vrot.slane %v10063, 2
        %v10102 = vrot.slane %v10064, 2
        %v10103 = vsel %vm340, %v10101, %v10102
        %v10104 = vrot.slane %v10065, 2
        %v10105 = vrot.slane %v10066, 2
        %v10106 = vsel %vm340, %v10104, %v10105
        %v10115 = vadd.f32 %v10005, %v10085
        %v10116 = vadd.f32 %v10006, %v10088
        %v10117 = vadd.f32 %v10007, %v10091
        %v10118 = vadd.f32 %v10008, %v10094
        %v10119 = vadd.f32 %v10009, %v10097
        %v10120 = vadd.f32 %v10010, %v10100
        %v10121 = vadd.f32 %v10011, %v10103
        %v10122 = vadd.f32 %v10012, %v10106
        %v10123 = vsub.f32 %v173, %v1567
        %v10124 = vsub.f32 %v174, %v1567
        %v10125 = vmul.f32 %v10123, 1.442695
        %v10126 = vpow.pop %v10125
        %v10127 = vmul.f32 %v10124, 1.442695
        %v10128 = vpow.pop %v10127
        %10129 = vset.pattern.permute.xlu0 86
        %10130 = vperm.xlu0 %10129, %v425
        %v10131 = vpop.permute.xlu0 %10130
        %10133 = vset.pattern.permute.xlu0 86
        %10134 = vperm.xlu0 %10133, %v426
        %v10135 = vpop.permute.xlu0 %10134
        %10137 = vset.pattern.permute.xlu0 86
        %10138 = vperm.xlu0 %10137, %v427
        %v10139 = vpop.permute.xlu0 %10138
        %10141 = vset.pattern.permute.xlu0 86
        %10142 = vperm.xlu0 %10141, %v428
        %v10143 = vpop.permute.xlu0 %10142
        %10145 = vset.pattern.permute.xlu0 86
        %10146 = vperm.xlu0 %10145, %v429
        %v10147 = vpop.permute.xlu0 %10146
        %10149 = vset.pattern.permute.xlu0 86
        %10150 = vperm.xlu0 %10149, %v430
        %v10151 = vpop.permute.xlu0 %10150
        %10153 = vset.pattern.permute.xlu0 86
        %10154 = vperm.xlu0 %10153, %v431
        %v10155 = vpop.permute.xlu0 %10154
        %10157 = vset.pattern.permute.xlu0 86
        %10158 = vperm.xlu0 %10157, %v432
        %v10159 = vpop.permute.xlu0 %10158
        %v10161 = vmul.f32 %v10131, %v10126
        %v10162 = vmul.f32 %v10131, %v10128
        %v10163 = vmul.f32 %v10135, %v10126
        %v10164 = vmul.f32 %v10135, %v10128
        %v10165 = vmul.f32 %v10139, %v10126
        %v10166 = vmul.f32 %v10139, %v10128
        %v10167 = vmul.f32 %v10143, %v10126
        %v10168 = vmul.f32 %v10143, %v10128
        %v10169 = vmul.f32 %v10147, %v10126
        %v10170 = vmul.f32 %v10147, %v10128
        %v10171 = vmul.f32 %v10151, %v10126
        %v10172 = vmul.f32 %v10151, %v10128
        %v10173 = vmul.f32 %v10155, %v10126
        %v10174 = vmul.f32 %v10155, %v10128
        %v10175 = vmul.f32 %v10159, %v10126
        %v10176 = vmul.f32 %v10159, %v10128
        %v10193 = vrot.slane %v10161, 2
        %v10194 = vrot.slane %v10162, 2
        %v10195 = vsel %vm340, %v10193, %v10194
        %v10196 = vrot.slane %v10163, 2
        %v10197 = vrot.slane %v10164, 2
        %v10198 = vsel %vm340, %v10196, %v10197
        %v10199 = vrot.slane %v10165, 2
        %v10200 = vrot.slane %v10166, 2
        %v10201 = vsel %vm340, %v10199, %v10200
        %v10202 = vrot.slane %v10167, 2
        %v10203 = vrot.slane %v10168, 2
        %v10204 = vsel %vm340, %v10202, %v10203
        %v10205 = vrot.slane %v10169, 2
        %v10206 = vrot.slane %v10170, 2
        %v10207 = vsel %vm340, %v10205, %v10206
        %v10208 = vrot.slane %v10171, 2
        %v10209 = vrot.slane %v10172, 2
        %v10210 = vsel %vm340, %v10208, %v10209
        %v10211 = vrot.slane %v10173, 2
        %v10212 = vrot.slane %v10174, 2
        %v10213 = vsel %vm340, %v10211, %v10212
        %v10214 = vrot.slane %v10175, 2
        %v10215 = vrot.slane %v10176, 2
        %v10216 = vsel %vm340, %v10214, %v10215
        %10217 = vrot.lane.b32.xlu0 %v10195, 127
        %v10218 = vpop.permute.xlu0 %10217
        %10219 = vrot.lane.b32.xlu0 %v10198, 127
        %v10220 = vpop.permute.xlu0 %10219
        %10221 = vrot.lane.b32.xlu0 %v10201, 127
        %v10222 = vpop.permute.xlu0 %10221
        %10223 = vrot.lane.b32.xlu0 %v10204, 127
        %v10224 = vpop.permute.xlu0 %10223
        %10225 = vrot.lane.b32.xlu0 %v10207, 127
        %v10226 = vpop.permute.xlu0 %10225
        %10227 = vrot.lane.b32.xlu0 %v10210, 127
        %v10228 = vpop.permute.xlu0 %10227
        %10229 = vrot.lane.b32.xlu0 %v10213, 127
        %v10230 = vpop.permute.xlu0 %10229
        %10231 = vrot.lane.b32.xlu0 %v10216, 127
        %v10232 = vpop.permute.xlu0 %10231
        %v10241 = vadd.f32 %v10115, %v10218
        %v10242 = vadd.f32 %v10116, %v10220
        %v10243 = vadd.f32 %v10117, %v10222
        %v10244 = vadd.f32 %v10118, %v10224
        %v10245 = vadd.f32 %v10119, %v10226
        %v10246 = vadd.f32 %v10120, %v10228
        %v10247 = vadd.f32 %v10121, %v10230
        %v10248 = vadd.f32 %v10122, %v10232
        %v10249 = vsub.f32 %v173, %v1696
        %v10250 = vsub.f32 %v174, %v1696
        %v10251 = vmul.f32 %v10249, 1.442695
        %v10252 = vpow.pop %v10251
        %v10253 = vmul.f32 %v10250, 1.442695
        %v10254 = vpow.pop %v10253
        %10255 = vset.pattern.permute.xlu0 87
        %10256 = vperm.xlu0 %10255, %v425
        %v10257 = vpop.permute.xlu0 %10256
        %10259 = vset.pattern.permute.xlu0 87
        %10260 = vperm.xlu0 %10259, %v426
        %v10261 = vpop.permute.xlu0 %10260
        %10263 = vset.pattern.permute.xlu0 87
        %10264 = vperm.xlu0 %10263, %v427
        %v10265 = vpop.permute.xlu0 %10264
        %10267 = vset.pattern.permute.xlu0 87
        %10268 = vperm.xlu0 %10267, %v428
        %v10269 = vpop.permute.xlu0 %10268
        %10271 = vset.pattern.permute.xlu0 87
        %10272 = vperm.xlu0 %10271, %v429
        %v10273 = vpop.permute.xlu0 %10272
        %10275 = vset.pattern.permute.xlu0 87
        %10276 = vperm.xlu0 %10275, %v430
        %v10277 = vpop.permute.xlu0 %10276
        %10279 = vset.pattern.permute.xlu0 87
        %10280 = vperm.xlu0 %10279, %v431
        %v10281 = vpop.permute.xlu0 %10280
        %10283 = vset.pattern.permute.xlu0 87
        %10284 = vperm.xlu0 %10283, %v432
        %v10285 = vpop.permute.xlu0 %10284
        %v10287 = vmul.f32 %v10257, %v10252
        %v10288 = vmul.f32 %v10257, %v10254
        %v10289 = vmul.f32 %v10261, %v10252
        %v10290 = vmul.f32 %v10261, %v10254
        %v10291 = vmul.f32 %v10265, %v10252
        %v10292 = vmul.f32 %v10265, %v10254
        %v10293 = vmul.f32 %v10269, %v10252
        %v10294 = vmul.f32 %v10269, %v10254
        %v10295 = vmul.f32 %v10273, %v10252
        %v10296 = vmul.f32 %v10273, %v10254
        %v10297 = vmul.f32 %v10277, %v10252
        %v10298 = vmul.f32 %v10277, %v10254
        %v10299 = vmul.f32 %v10281, %v10252
        %v10300 = vmul.f32 %v10281, %v10254
        %v10301 = vmul.f32 %v10285, %v10252
        %v10302 = vmul.f32 %v10285, %v10254
        %v10319 = vrot.slane %v10287, 2
        %v10320 = vrot.slane %v10288, 2
        %v10321 = vsel %vm340, %v10319, %v10320
        %v10322 = vrot.slane %v10289, 2
        %v10323 = vrot.slane %v10290, 2
        %v10324 = vsel %vm340, %v10322, %v10323
        %v10325 = vrot.slane %v10291, 2
        %v10326 = vrot.slane %v10292, 2
        %v10327 = vsel %vm340, %v10325, %v10326
        %v10328 = vrot.slane %v10293, 2
        %v10329 = vrot.slane %v10294, 2
        %v10330 = vsel %vm340, %v10328, %v10329
        %v10331 = vrot.slane %v10295, 2
        %v10332 = vrot.slane %v10296, 2
        %v10333 = vsel %vm340, %v10331, %v10332
        %v10334 = vrot.slane %v10297, 2
        %v10335 = vrot.slane %v10298, 2
        %v10336 = vsel %vm340, %v10334, %v10335
        %v10337 = vrot.slane %v10299, 2
        %v10338 = vrot.slane %v10300, 2
        %v10339 = vsel %vm340, %v10337, %v10338
        %v10340 = vrot.slane %v10301, 2
        %v10341 = vrot.slane %v10302, 2
        %v10342 = vsel %vm340, %v10340, %v10341
        %10343 = vrot.lane.b32.xlu0 %v10321, 126
        %v10344 = vpop.permute.xlu0 %10343
        %10345 = vrot.lane.b32.xlu0 %v10324, 126
        %v10346 = vpop.permute.xlu0 %10345
        %10347 = vrot.lane.b32.xlu0 %v10327, 126
        %v10348 = vpop.permute.xlu0 %10347
        %10349 = vrot.lane.b32.xlu0 %v10330, 126
        %v10350 = vpop.permute.xlu0 %10349
        %10351 = vrot.lane.b32.xlu0 %v10333, 126
        %v10352 = vpop.permute.xlu0 %10351
        %10353 = vrot.lane.b32.xlu0 %v10336, 126
        %v10354 = vpop.permute.xlu0 %10353
        %10355 = vrot.lane.b32.xlu0 %v10339, 126
        %v10356 = vpop.permute.xlu0 %10355
        %10357 = vrot.lane.b32.xlu0 %v10342, 126
        %v10358 = vpop.permute.xlu0 %10357
        %v10367 = vadd.f32 %v10241, %v10344
        %v10368 = vadd.f32 %v10242, %v10346
        %v10369 = vadd.f32 %v10243, %v10348
        %v10370 = vadd.f32 %v10244, %v10350
        %v10371 = vadd.f32 %v10245, %v10352
        %v10372 = vadd.f32 %v10246, %v10354
        %v10373 = vadd.f32 %v10247, %v10356
        %v10374 = vadd.f32 %v10248, %v10358
        %v10375 = vsub.f32 %v173, %v1825
        %v10376 = vsub.f32 %v174, %v1825
        %v10377 = vmul.f32 %v10375, 1.442695
        %v10378 = vpow.pop %v10377
        %v10379 = vmul.f32 %v10376, 1.442695
        %v10380 = vpow.pop %v10379
        %10381 = vset.pattern.permute.xlu0 88
        %10382 = vperm.xlu0 %10381, %v425
        %v10383 = vpop.permute.xlu0 %10382
        %10385 = vset.pattern.permute.xlu0 88
        %10386 = vperm.xlu0 %10385, %v426
        %v10387 = vpop.permute.xlu0 %10386
        %10389 = vset.pattern.permute.xlu0 88
        %10390 = vperm.xlu0 %10389, %v427
        %v10391 = vpop.permute.xlu0 %10390
        %10393 = vset.pattern.permute.xlu0 88
        %10394 = vperm.xlu0 %10393, %v428
        %v10395 = vpop.permute.xlu0 %10394
        %10397 = vset.pattern.permute.xlu0 88
        %10398 = vperm.xlu0 %10397, %v429
        %v10399 = vpop.permute.xlu0 %10398
        %10401 = vset.pattern.permute.xlu0 88
        %10402 = vperm.xlu0 %10401, %v430
        %v10403 = vpop.permute.xlu0 %10402
        %10405 = vset.pattern.permute.xlu0 88
        %10406 = vperm.xlu0 %10405, %v431
        %v10407 = vpop.permute.xlu0 %10406
        %10409 = vset.pattern.permute.xlu0 88
        %10410 = vperm.xlu0 %10409, %v432
        %v10411 = vpop.permute.xlu0 %10410
        %v10413 = vmul.f32 %v10383, %v10378
        %v10414 = vmul.f32 %v10383, %v10380
        %v10415 = vmul.f32 %v10387, %v10378
        %v10416 = vmul.f32 %v10387, %v10380
        %v10417 = vmul.f32 %v10391, %v10378
        %v10418 = vmul.f32 %v10391, %v10380
        %v10419 = vmul.f32 %v10395, %v10378
        %v10420 = vmul.f32 %v10395, %v10380
        %v10421 = vmul.f32 %v10399, %v10378
        %v10422 = vmul.f32 %v10399, %v10380
        %v10423 = vmul.f32 %v10403, %v10378
        %v10424 = vmul.f32 %v10403, %v10380
        %v10425 = vmul.f32 %v10407, %v10378
        %v10426 = vmul.f32 %v10407, %v10380
        %v10427 = vmul.f32 %v10411, %v10378
        %v10428 = vmul.f32 %v10411, %v10380
        %v10445 = vrot.slane %v10413, 2
        %v10446 = vrot.slane %v10414, 2
        %v10447 = vsel %vm340, %v10445, %v10446
        %v10448 = vrot.slane %v10415, 2
        %v10449 = vrot.slane %v10416, 2
        %v10450 = vsel %vm340, %v10448, %v10449
        %v10451 = vrot.slane %v10417, 2
        %v10452 = vrot.slane %v10418, 2
        %v10453 = vsel %vm340, %v10451, %v10452
        %v10454 = vrot.slane %v10419, 2
        %v10455 = vrot.slane %v10420, 2
        %v10456 = vsel %vm340, %v10454, %v10455
        %v10457 = vrot.slane %v10421, 2
        %v10458 = vrot.slane %v10422, 2
        %v10459 = vsel %vm340, %v10457, %v10458
        %v10460 = vrot.slane %v10423, 2
        %v10461 = vrot.slane %v10424, 2
        %v10462 = vsel %vm340, %v10460, %v10461
        %v10463 = vrot.slane %v10425, 2
        %v10464 = vrot.slane %v10426, 2
        %v10465 = vsel %vm340, %v10463, %v10464
        %v10466 = vrot.slane %v10427, 2
        %v10467 = vrot.slane %v10428, 2
        %v10468 = vsel %vm340, %v10466, %v10467
        %10469 = vrot.lane.b32.xlu0 %v10447, 125
        %v10470 = vpop.permute.xlu0 %10469
        %10471 = vrot.lane.b32.xlu0 %v10450, 125
        %v10472 = vpop.permute.xlu0 %10471
        %10473 = vrot.lane.b32.xlu0 %v10453, 125
        %v10474 = vpop.permute.xlu0 %10473
        %10475 = vrot.lane.b32.xlu0 %v10456, 125
        %v10476 = vpop.permute.xlu0 %10475
        %10477 = vrot.lane.b32.xlu0 %v10459, 125
        %v10478 = vpop.permute.xlu0 %10477
        %10479 = vrot.lane.b32.xlu0 %v10462, 125
        %v10480 = vpop.permute.xlu0 %10479
        %10481 = vrot.lane.b32.xlu0 %v10465, 125
        %v10482 = vpop.permute.xlu0 %10481
        %10483 = vrot.lane.b32.xlu0 %v10468, 125
        %v10484 = vpop.permute.xlu0 %10483
        %v10493 = vadd.f32 %v10367, %v10470
        %v10494 = vadd.f32 %v10368, %v10472
        %v10495 = vadd.f32 %v10369, %v10474
        %v10496 = vadd.f32 %v10370, %v10476
        %v10497 = vadd.f32 %v10371, %v10478
        %v10498 = vadd.f32 %v10372, %v10480
        %v10499 = vadd.f32 %v10373, %v10482
        %v10500 = vadd.f32 %v10374, %v10484
        %v10501 = vsub.f32 %v173, %v1954
        %v10502 = vsub.f32 %v174, %v1954
        %v10503 = vmul.f32 %v10501, 1.442695
        %v10504 = vpow.pop %v10503
        %v10505 = vmul.f32 %v10502, 1.442695
        %v10506 = vpow.pop %v10505
        %10507 = vset.pattern.permute.xlu0 89
        %10508 = vperm.xlu0 %10507, %v425
        %v10509 = vpop.permute.xlu0 %10508
        %10511 = vset.pattern.permute.xlu0 89
        %10512 = vperm.xlu0 %10511, %v426
        %v10513 = vpop.permute.xlu0 %10512
        %10515 = vset.pattern.permute.xlu0 89
        %10516 = vperm.xlu0 %10515, %v427
        %v10517 = vpop.permute.xlu0 %10516
        %10519 = vset.pattern.permute.xlu0 89
        %10520 = vperm.xlu0 %10519, %v428
        %v10521 = vpop.permute.xlu0 %10520
        %10523 = vset.pattern.permute.xlu0 89
        %10524 = vperm.xlu0 %10523, %v429
        %v10525 = vpop.permute.xlu0 %10524
        %10527 = vset.pattern.permute.xlu0 89
        %10528 = vperm.xlu0 %10527, %v430
        %v10529 = vpop.permute.xlu0 %10528
        %10531 = vset.pattern.permute.xlu0 89
        %10532 = vperm.xlu0 %10531, %v431
        %v10533 = vpop.permute.xlu0 %10532
        %10535 = vset.pattern.permute.xlu0 89
        %10536 = vperm.xlu0 %10535, %v432
        %v10537 = vpop.permute.xlu0 %10536
        %v10539 = vmul.f32 %v10509, %v10504
        %v10540 = vmul.f32 %v10509, %v10506
        %v10541 = vmul.f32 %v10513, %v10504
        %v10542 = vmul.f32 %v10513, %v10506
        %v10543 = vmul.f32 %v10517, %v10504
        %v10544 = vmul.f32 %v10517, %v10506
        %v10545 = vmul.f32 %v10521, %v10504
        %v10546 = vmul.f32 %v10521, %v10506
        %v10547 = vmul.f32 %v10525, %v10504
        %v10548 = vmul.f32 %v10525, %v10506
        %v10549 = vmul.f32 %v10529, %v10504
        %v10550 = vmul.f32 %v10529, %v10506
        %v10551 = vmul.f32 %v10533, %v10504
        %v10552 = vmul.f32 %v10533, %v10506
        %v10553 = vmul.f32 %v10537, %v10504
        %v10554 = vmul.f32 %v10537, %v10506
        %v10571 = vrot.slane %v10539, 2
        %v10572 = vrot.slane %v10540, 2
        %v10573 = vsel %vm340, %v10571, %v10572
        %v10574 = vrot.slane %v10541, 2
        %v10575 = vrot.slane %v10542, 2
        %v10576 = vsel %vm340, %v10574, %v10575
        %v10577 = vrot.slane %v10543, 2
        %v10578 = vrot.slane %v10544, 2
        %v10579 = vsel %vm340, %v10577, %v10578
        %v10580 = vrot.slane %v10545, 2
        %v10581 = vrot.slane %v10546, 2
        %v10582 = vsel %vm340, %v10580, %v10581
        %v10583 = vrot.slane %v10547, 2
        %v10584 = vrot.slane %v10548, 2
        %v10585 = vsel %vm340, %v10583, %v10584
        %v10586 = vrot.slane %v10549, 2
        %v10587 = vrot.slane %v10550, 2
        %v10588 = vsel %vm340, %v10586, %v10587
        %v10589 = vrot.slane %v10551, 2
        %v10590 = vrot.slane %v10552, 2
        %v10591 = vsel %vm340, %v10589, %v10590
        %v10592 = vrot.slane %v10553, 2
        %v10593 = vrot.slane %v10554, 2
        %v10594 = vsel %vm340, %v10592, %v10593
        %10595 = vrot.lane.b32.xlu0 %v10573, 124
        %v10596 = vpop.permute.xlu0 %10595
        %10597 = vrot.lane.b32.xlu0 %v10576, 124
        %v10598 = vpop.permute.xlu0 %10597
        %10599 = vrot.lane.b32.xlu0 %v10579, 124
        %v10600 = vpop.permute.xlu0 %10599
        %10601 = vrot.lane.b32.xlu0 %v10582, 124
        %v10602 = vpop.permute.xlu0 %10601
        %10603 = vrot.lane.b32.xlu0 %v10585, 124
        %v10604 = vpop.permute.xlu0 %10603
        %10605 = vrot.lane.b32.xlu0 %v10588, 124
        %v10606 = vpop.permute.xlu0 %10605
        %10607 = vrot.lane.b32.xlu0 %v10591, 124
        %v10608 = vpop.permute.xlu0 %10607
        %10609 = vrot.lane.b32.xlu0 %v10594, 124
        %v10610 = vpop.permute.xlu0 %10609
        %v10619 = vadd.f32 %v10493, %v10596
        %v10620 = vadd.f32 %v10494, %v10598
        %v10621 = vadd.f32 %v10495, %v10600
        %v10622 = vadd.f32 %v10496, %v10602
        %v10623 = vadd.f32 %v10497, %v10604
        %v10624 = vadd.f32 %v10498, %v10606
        %v10625 = vadd.f32 %v10499, %v10608
        %v10626 = vadd.f32 %v10500, %v10610
        %v10627 = vsub.f32 %v173, %v2082
        %v10628 = vsub.f32 %v174, %v2082
        %v10629 = vmul.f32 %v10627, 1.442695
        %v10630 = vpow.pop %v10629
        %v10631 = vmul.f32 %v10628, 1.442695
        %v10632 = vpow.pop %v10631
        %10633 = vset.pattern.permute.xlu0 90
        %10634 = vperm.xlu0 %10633, %v425
        %v10635 = vpop.permute.xlu0 %10634
        %10637 = vset.pattern.permute.xlu0 90
        %10638 = vperm.xlu0 %10637, %v426
        %v10639 = vpop.permute.xlu0 %10638
        %10641 = vset.pattern.permute.xlu0 90
        %10642 = vperm.xlu0 %10641, %v427
        %v10643 = vpop.permute.xlu0 %10642
        %10645 = vset.pattern.permute.xlu0 90
        %10646 = vperm.xlu0 %10645, %v428
        %v10647 = vpop.permute.xlu0 %10646
        %10649 = vset.pattern.permute.xlu0 90
        %10650 = vperm.xlu0 %10649, %v429
        %v10651 = vpop.permute.xlu0 %10650
        %10653 = vset.pattern.permute.xlu0 90
        %10654 = vperm.xlu0 %10653, %v430
        %v10655 = vpop.permute.xlu0 %10654
        %10657 = vset.pattern.permute.xlu0 90
        %10658 = vperm.xlu0 %10657, %v431
        %v10659 = vpop.permute.xlu0 %10658
        %10661 = vset.pattern.permute.xlu0 90
        %10662 = vperm.xlu0 %10661, %v432
        %v10663 = vpop.permute.xlu0 %10662
        %v10665 = vmul.f32 %v10635, %v10630
        %v10666 = vmul.f32 %v10635, %v10632
        %v10667 = vmul.f32 %v10639, %v10630
        %v10668 = vmul.f32 %v10639, %v10632
        %v10669 = vmul.f32 %v10643, %v10630
        %v10670 = vmul.f32 %v10643, %v10632
        %v10671 = vmul.f32 %v10647, %v10630
        %v10672 = vmul.f32 %v10647, %v10632
        %v10673 = vmul.f32 %v10651, %v10630
        %v10674 = vmul.f32 %v10651, %v10632
        %v10675 = vmul.f32 %v10655, %v10630
        %v10676 = vmul.f32 %v10655, %v10632
        %v10677 = vmul.f32 %v10659, %v10630
        %v10678 = vmul.f32 %v10659, %v10632
        %v10679 = vmul.f32 %v10663, %v10630
        %v10680 = vmul.f32 %v10663, %v10632
        %v10697 = vrot.slane %v10665, 3
        %v10698 = vrot.slane %v10666, 3
        %v10699 = vsel %vm361, %v10697, %v10698
        %v10700 = vrot.slane %v10667, 3
        %v10701 = vrot.slane %v10668, 3
        %v10702 = vsel %vm361, %v10700, %v10701
        %v10703 = vrot.slane %v10669, 3
        %v10704 = vrot.slane %v10670, 3
        %v10705 = vsel %vm361, %v10703, %v10704
        %v10706 = vrot.slane %v10671, 3
        %v10707 = vrot.slane %v10672, 3
        %v10708 = vsel %vm361, %v10706, %v10707
        %v10709 = vrot.slane %v10673, 3
        %v10710 = vrot.slane %v10674, 3
        %v10711 = vsel %vm361, %v10709, %v10710
        %v10712 = vrot.slane %v10675, 3
        %v10713 = vrot.slane %v10676, 3
        %v10714 = vsel %vm361, %v10712, %v10713
        %v10715 = vrot.slane %v10677, 3
        %v10716 = vrot.slane %v10678, 3
        %v10717 = vsel %vm361, %v10715, %v10716
        %v10718 = vrot.slane %v10679, 3
        %v10719 = vrot.slane %v10680, 3
        %v10720 = vsel %vm361, %v10718, %v10719
        %v10729 = vadd.f32 %v10619, %v10699
        %v10730 = vadd.f32 %v10620, %v10702
        %v10731 = vadd.f32 %v10621, %v10705
        %v10732 = vadd.f32 %v10622, %v10708
        %v10733 = vadd.f32 %v10623, %v10711
        %v10734 = vadd.f32 %v10624, %v10714
        %v10735 = vadd.f32 %v10625, %v10717
        %v10736 = vadd.f32 %v10626, %v10720
        %v10737 = vsub.f32 %v173, %v2195
        %v10738 = vsub.f32 %v174, %v2195
        %v10739 = vmul.f32 %v10737, 1.442695
        %v10740 = vpow.pop %v10739
        %v10741 = vmul.f32 %v10738, 1.442695
        %v10742 = vpow.pop %v10741
        %10743 = vset.pattern.permute.xlu0 91
        %10744 = vperm.xlu0 %10743, %v425
        %v10745 = vpop.permute.xlu0 %10744
        %10747 = vset.pattern.permute.xlu0 91
        %10748 = vperm.xlu0 %10747, %v426
        %v10749 = vpop.permute.xlu0 %10748
        %10751 = vset.pattern.permute.xlu0 91
        %10752 = vperm.xlu0 %10751, %v427
        %v10753 = vpop.permute.xlu0 %10752
        %10755 = vset.pattern.permute.xlu0 91
        %10756 = vperm.xlu0 %10755, %v428
        %v10757 = vpop.permute.xlu0 %10756
        %10759 = vset.pattern.permute.xlu0 91
        %10760 = vperm.xlu0 %10759, %v429
        %v10761 = vpop.permute.xlu0 %10760
        %10763 = vset.pattern.permute.xlu0 91
        %10764 = vperm.xlu0 %10763, %v430
        %v10765 = vpop.permute.xlu0 %10764
        %10767 = vset.pattern.permute.xlu0 91
        %10768 = vperm.xlu0 %10767, %v431
        %v10769 = vpop.permute.xlu0 %10768
        %10771 = vset.pattern.permute.xlu0 91
        %10772 = vperm.xlu0 %10771, %v432
        %v10773 = vpop.permute.xlu0 %10772
        %v10775 = vmul.f32 %v10745, %v10740
        %v10776 = vmul.f32 %v10745, %v10742
        %v10777 = vmul.f32 %v10749, %v10740
        %v10778 = vmul.f32 %v10749, %v10742
        %v10779 = vmul.f32 %v10753, %v10740
        %v10780 = vmul.f32 %v10753, %v10742
        %v10781 = vmul.f32 %v10757, %v10740
        %v10782 = vmul.f32 %v10757, %v10742
        %v10783 = vmul.f32 %v10761, %v10740
        %v10784 = vmul.f32 %v10761, %v10742
        %v10785 = vmul.f32 %v10765, %v10740
        %v10786 = vmul.f32 %v10765, %v10742
        %v10787 = vmul.f32 %v10769, %v10740
        %v10788 = vmul.f32 %v10769, %v10742
        %v10789 = vmul.f32 %v10773, %v10740
        %v10790 = vmul.f32 %v10773, %v10742
        %v10807 = vrot.slane %v10775, 3
        %v10808 = vrot.slane %v10776, 3
        %v10809 = vsel %vm361, %v10807, %v10808
        %v10810 = vrot.slane %v10777, 3
        %v10811 = vrot.slane %v10778, 3
        %v10812 = vsel %vm361, %v10810, %v10811
        %v10813 = vrot.slane %v10779, 3
        %v10814 = vrot.slane %v10780, 3
        %v10815 = vsel %vm361, %v10813, %v10814
        %v10816 = vrot.slane %v10781, 3
        %v10817 = vrot.slane %v10782, 3
        %v10818 = vsel %vm361, %v10816, %v10817
        %v10819 = vrot.slane %v10783, 3
        %v10820 = vrot.slane %v10784, 3
        %v10821 = vsel %vm361, %v10819, %v10820
        %v10822 = vrot.slane %v10785, 3
        %v10823 = vrot.slane %v10786, 3
        %v10824 = vsel %vm361, %v10822, %v10823
        %v10825 = vrot.slane %v10787, 3
        %v10826 = vrot.slane %v10788, 3
        %v10827 = vsel %vm361, %v10825, %v10826
        %v10828 = vrot.slane %v10789, 3
        %v10829 = vrot.slane %v10790, 3
        %v10830 = vsel %vm361, %v10828, %v10829
        %10831 = vrot.lane.b32.xlu0 %v10809, 127
        %v10832 = vpop.permute.xlu0 %10831
        %10833 = vrot.lane.b32.xlu0 %v10812, 127
        %v10834 = vpop.permute.xlu0 %10833
        %10835 = vrot.lane.b32.xlu0 %v10815, 127
        %v10836 = vpop.permute.xlu0 %10835
        %10837 = vrot.lane.b32.xlu0 %v10818, 127
        %v10838 = vpop.permute.xlu0 %10837
        %10839 = vrot.lane.b32.xlu0 %v10821, 127
        %v10840 = vpop.permute.xlu0 %10839
        %10841 = vrot.lane.b32.xlu0 %v10824, 127
        %v10842 = vpop.permute.xlu0 %10841
        %10843 = vrot.lane.b32.xlu0 %v10827, 127
        %v10844 = vpop.permute.xlu0 %10843
        %10845 = vrot.lane.b32.xlu0 %v10830, 127
        %v10846 = vpop.permute.xlu0 %10845
        %v10855 = vadd.f32 %v10729, %v10832
        %v10856 = vadd.f32 %v10730, %v10834
        %v10857 = vadd.f32 %v10731, %v10836
        %v10858 = vadd.f32 %v10732, %v10838
        %v10859 = vadd.f32 %v10733, %v10840
        %v10860 = vadd.f32 %v10734, %v10842
        %v10861 = vadd.f32 %v10735, %v10844
        %v10862 = vadd.f32 %v10736, %v10846
        %v10863 = vsub.f32 %v173, %v2324
        %v10864 = vsub.f32 %v174, %v2324
        %v10865 = vmul.f32 %v10863, 1.442695
        %v10866 = vpow.pop %v10865
        %v10867 = vmul.f32 %v10864, 1.442695
        %v10868 = vpow.pop %v10867
        %10869 = vset.pattern.permute.xlu0 92
        %10870 = vperm.xlu0 %10869, %v425
        %v10871 = vpop.permute.xlu0 %10870
        %10873 = vset.pattern.permute.xlu0 92
        %10874 = vperm.xlu0 %10873, %v426
        %v10875 = vpop.permute.xlu0 %10874
        %10877 = vset.pattern.permute.xlu0 92
        %10878 = vperm.xlu0 %10877, %v427
        %v10879 = vpop.permute.xlu0 %10878
        %10881 = vset.pattern.permute.xlu0 92
        %10882 = vperm.xlu0 %10881, %v428
        %v10883 = vpop.permute.xlu0 %10882
        %10885 = vset.pattern.permute.xlu0 92
        %10886 = vperm.xlu0 %10885, %v429
        %v10887 = vpop.permute.xlu0 %10886
        %10889 = vset.pattern.permute.xlu0 92
        %10890 = vperm.xlu0 %10889, %v430
        %v10891 = vpop.permute.xlu0 %10890
        %10893 = vset.pattern.permute.xlu0 92
        %10894 = vperm.xlu0 %10893, %v431
        %v10895 = vpop.permute.xlu0 %10894
        %10897 = vset.pattern.permute.xlu0 92
        %10898 = vperm.xlu0 %10897, %v432
        %v10899 = vpop.permute.xlu0 %10898
        %v10901 = vmul.f32 %v10871, %v10866
        %v10902 = vmul.f32 %v10871, %v10868
        %v10903 = vmul.f32 %v10875, %v10866
        %v10904 = vmul.f32 %v10875, %v10868
        %v10905 = vmul.f32 %v10879, %v10866
        %v10906 = vmul.f32 %v10879, %v10868
        %v10907 = vmul.f32 %v10883, %v10866
        %v10908 = vmul.f32 %v10883, %v10868
        %v10909 = vmul.f32 %v10887, %v10866
        %v10910 = vmul.f32 %v10887, %v10868
        %v10911 = vmul.f32 %v10891, %v10866
        %v10912 = vmul.f32 %v10891, %v10868
        %v10913 = vmul.f32 %v10895, %v10866
        %v10914 = vmul.f32 %v10895, %v10868
        %v10915 = vmul.f32 %v10899, %v10866
        %v10916 = vmul.f32 %v10899, %v10868
        %v10933 = vrot.slane %v10901, 3
        %v10934 = vrot.slane %v10902, 3
        %v10935 = vsel %vm361, %v10933, %v10934
        %v10936 = vrot.slane %v10903, 3
        %v10937 = vrot.slane %v10904, 3
        %v10938 = vsel %vm361, %v10936, %v10937
        %v10939 = vrot.slane %v10905, 3
        %v10940 = vrot.slane %v10906, 3
        %v10941 = vsel %vm361, %v10939, %v10940
        %v10942 = vrot.slane %v10907, 3
        %v10943 = vrot.slane %v10908, 3
        %v10944 = vsel %vm361, %v10942, %v10943
        %v10945 = vrot.slane %v10909, 3
        %v10946 = vrot.slane %v10910, 3
        %v10947 = vsel %vm361, %v10945, %v10946
        %v10948 = vrot.slane %v10911, 3
        %v10949 = vrot.slane %v10912, 3
        %v10950 = vsel %vm361, %v10948, %v10949
        %v10951 = vrot.slane %v10913, 3
        %v10952 = vrot.slane %v10914, 3
        %v10953 = vsel %vm361, %v10951, %v10952
        %v10954 = vrot.slane %v10915, 3
        %v10955 = vrot.slane %v10916, 3
        %v10956 = vsel %vm361, %v10954, %v10955
        %10957 = vrot.lane.b32.xlu0 %v10935, 126
        %v10958 = vpop.permute.xlu0 %10957
        %10959 = vrot.lane.b32.xlu0 %v10938, 126
        %v10960 = vpop.permute.xlu0 %10959
        %10961 = vrot.lane.b32.xlu0 %v10941, 126
        %v10962 = vpop.permute.xlu0 %10961
        %10963 = vrot.lane.b32.xlu0 %v10944, 126
        %v10964 = vpop.permute.xlu0 %10963
        %10965 = vrot.lane.b32.xlu0 %v10947, 126
        %v10966 = vpop.permute.xlu0 %10965
        %10967 = vrot.lane.b32.xlu0 %v10950, 126
        %v10968 = vpop.permute.xlu0 %10967
        %10969 = vrot.lane.b32.xlu0 %v10953, 126
        %v10970 = vpop.permute.xlu0 %10969
        %10971 = vrot.lane.b32.xlu0 %v10956, 126
        %v10972 = vpop.permute.xlu0 %10971
        %v10981 = vadd.f32 %v10855, %v10958
        %v10982 = vadd.f32 %v10856, %v10960
        %v10983 = vadd.f32 %v10857, %v10962
        %v10984 = vadd.f32 %v10858, %v10964
        %v10985 = vadd.f32 %v10859, %v10966
        %v10986 = vadd.f32 %v10860, %v10968
        %v10987 = vadd.f32 %v10861, %v10970
        %v10988 = vadd.f32 %v10862, %v10972
        %v10989 = vsub.f32 %v173, %v2453
        %v10990 = vsub.f32 %v174, %v2453
        %v10991 = vmul.f32 %v10989, 1.442695
        %v10992 = vpow.pop %v10991
        %v10993 = vmul.f32 %v10990, 1.442695
        %v10994 = vpow.pop %v10993
        %10995 = vset.pattern.permute.xlu0 93
        %10996 = vperm.xlu0 %10995, %v425
        %v10997 = vpop.permute.xlu0 %10996
        %10999 = vset.pattern.permute.xlu0 93
        %11000 = vperm.xlu0 %10999, %v426
        %v11001 = vpop.permute.xlu0 %11000
        %11003 = vset.pattern.permute.xlu0 93
        %11004 = vperm.xlu0 %11003, %v427
        %v11005 = vpop.permute.xlu0 %11004
        %11007 = vset.pattern.permute.xlu0 93
        %11008 = vperm.xlu0 %11007, %v428
        %v11009 = vpop.permute.xlu0 %11008
        %11011 = vset.pattern.permute.xlu0 93
        %11012 = vperm.xlu0 %11011, %v429
        %v11013 = vpop.permute.xlu0 %11012
        %11015 = vset.pattern.permute.xlu0 93
        %11016 = vperm.xlu0 %11015, %v430
        %v11017 = vpop.permute.xlu0 %11016
        %11019 = vset.pattern.permute.xlu0 93
        %11020 = vperm.xlu0 %11019, %v431
        %v11021 = vpop.permute.xlu0 %11020
        %11023 = vset.pattern.permute.xlu0 93
        %11024 = vperm.xlu0 %11023, %v432
        %v11025 = vpop.permute.xlu0 %11024
        %v11027 = vmul.f32 %v10997, %v10992
        %v11028 = vmul.f32 %v10997, %v10994
        %v11029 = vmul.f32 %v11001, %v10992
        %v11030 = vmul.f32 %v11001, %v10994
        %v11031 = vmul.f32 %v11005, %v10992
        %v11032 = vmul.f32 %v11005, %v10994
        %v11033 = vmul.f32 %v11009, %v10992
        %v11034 = vmul.f32 %v11009, %v10994
        %v11035 = vmul.f32 %v11013, %v10992
        %v11036 = vmul.f32 %v11013, %v10994
        %v11037 = vmul.f32 %v11017, %v10992
        %v11038 = vmul.f32 %v11017, %v10994
        %v11039 = vmul.f32 %v11021, %v10992
        %v11040 = vmul.f32 %v11021, %v10994
        %v11041 = vmul.f32 %v11025, %v10992
        %v11042 = vmul.f32 %v11025, %v10994
        %v11059 = vrot.slane %v11027, 3
        %v11060 = vrot.slane %v11028, 3
        %v11061 = vsel %vm361, %v11059, %v11060
        %v11062 = vrot.slane %v11029, 3
        %v11063 = vrot.slane %v11030, 3
        %v11064 = vsel %vm361, %v11062, %v11063
        %v11065 = vrot.slane %v11031, 3
        %v11066 = vrot.slane %v11032, 3
        %v11067 = vsel %vm361, %v11065, %v11066
        %v11068 = vrot.slane %v11033, 3
        %v11069 = vrot.slane %v11034, 3
        %v11070 = vsel %vm361, %v11068, %v11069
        %v11071 = vrot.slane %v11035, 3
        %v11072 = vrot.slane %v11036, 3
        %v11073 = vsel %vm361, %v11071, %v11072
        %v11074 = vrot.slane %v11037, 3
        %v11075 = vrot.slane %v11038, 3
        %v11076 = vsel %vm361, %v11074, %v11075
        %v11077 = vrot.slane %v11039, 3
        %v11078 = vrot.slane %v11040, 3
        %v11079 = vsel %vm361, %v11077, %v11078
        %v11080 = vrot.slane %v11041, 3
        %v11081 = vrot.slane %v11042, 3
        %v11082 = vsel %vm361, %v11080, %v11081
        %11083 = vrot.lane.b32.xlu0 %v11061, 125
        %v11084 = vpop.permute.xlu0 %11083
        %11085 = vrot.lane.b32.xlu0 %v11064, 125
        %v11086 = vpop.permute.xlu0 %11085
        %11087 = vrot.lane.b32.xlu0 %v11067, 125
        %v11088 = vpop.permute.xlu0 %11087
        %11089 = vrot.lane.b32.xlu0 %v11070, 125
        %v11090 = vpop.permute.xlu0 %11089
        %11091 = vrot.lane.b32.xlu0 %v11073, 125
        %v11092 = vpop.permute.xlu0 %11091
        %11093 = vrot.lane.b32.xlu0 %v11076, 125
        %v11094 = vpop.permute.xlu0 %11093
        %11095 = vrot.lane.b32.xlu0 %v11079, 125
        %v11096 = vpop.permute.xlu0 %11095
        %11097 = vrot.lane.b32.xlu0 %v11082, 125
        %v11098 = vpop.permute.xlu0 %11097
        %v11107 = vadd.f32 %v10981, %v11084
        %v11108 = vadd.f32 %v10982, %v11086
        %v11109 = vadd.f32 %v10983, %v11088
        %v11110 = vadd.f32 %v10984, %v11090
        %v11111 = vadd.f32 %v10985, %v11092
        %v11112 = vadd.f32 %v10986, %v11094
        %v11113 = vadd.f32 %v10987, %v11096
        %v11114 = vadd.f32 %v10988, %v11098
        %v11115 = vsub.f32 %v173, %v2582
        %v11116 = vsub.f32 %v174, %v2582
        %v11117 = vmul.f32 %v11115, 1.442695
        %v11118 = vpow.pop %v11117
        %v11119 = vmul.f32 %v11116, 1.442695
        %v11120 = vpow.pop %v11119
        %11121 = vset.pattern.permute.xlu0 94
        %11122 = vperm.xlu0 %11121, %v425
        %v11123 = vpop.permute.xlu0 %11122
        %11125 = vset.pattern.permute.xlu0 94
        %11126 = vperm.xlu0 %11125, %v426
        %v11127 = vpop.permute.xlu0 %11126
        %11129 = vset.pattern.permute.xlu0 94
        %11130 = vperm.xlu0 %11129, %v427
        %v11131 = vpop.permute.xlu0 %11130
        %11133 = vset.pattern.permute.xlu0 94
        %11134 = vperm.xlu0 %11133, %v428
        %v11135 = vpop.permute.xlu0 %11134
        %11137 = vset.pattern.permute.xlu0 94
        %11138 = vperm.xlu0 %11137, %v429
        %v11139 = vpop.permute.xlu0 %11138
        %11141 = vset.pattern.permute.xlu0 94
        %11142 = vperm.xlu0 %11141, %v430
        %v11143 = vpop.permute.xlu0 %11142
        %11145 = vset.pattern.permute.xlu0 94
        %11146 = vperm.xlu0 %11145, %v431
        %v11147 = vpop.permute.xlu0 %11146
        %11149 = vset.pattern.permute.xlu0 94
        %11150 = vperm.xlu0 %11149, %v432
        %v11151 = vpop.permute.xlu0 %11150
        %v11153 = vmul.f32 %v11123, %v11118
        %v11154 = vmul.f32 %v11123, %v11120
        %v11155 = vmul.f32 %v11127, %v11118
        %v11156 = vmul.f32 %v11127, %v11120
        %v11157 = vmul.f32 %v11131, %v11118
        %v11158 = vmul.f32 %v11131, %v11120
        %v11159 = vmul.f32 %v11135, %v11118
        %v11160 = vmul.f32 %v11135, %v11120
        %v11161 = vmul.f32 %v11139, %v11118
        %v11162 = vmul.f32 %v11139, %v11120
        %v11163 = vmul.f32 %v11143, %v11118
        %v11164 = vmul.f32 %v11143, %v11120
        %v11165 = vmul.f32 %v11147, %v11118
        %v11166 = vmul.f32 %v11147, %v11120
        %v11167 = vmul.f32 %v11151, %v11118
        %v11168 = vmul.f32 %v11151, %v11120
        %v11185 = vrot.slane %v11153, 3
        %v11186 = vrot.slane %v11154, 3
        %v11187 = vsel %vm361, %v11185, %v11186
        %v11188 = vrot.slane %v11155, 3
        %v11189 = vrot.slane %v11156, 3
        %v11190 = vsel %vm361, %v11188, %v11189
        %v11191 = vrot.slane %v11157, 3
        %v11192 = vrot.slane %v11158, 3
        %v11193 = vsel %vm361, %v11191, %v11192
        %v11194 = vrot.slane %v11159, 3
        %v11195 = vrot.slane %v11160, 3
        %v11196 = vsel %vm361, %v11194, %v11195
        %v11197 = vrot.slane %v11161, 3
        %v11198 = vrot.slane %v11162, 3
        %v11199 = vsel %vm361, %v11197, %v11198
        %v11200 = vrot.slane %v11163, 3
        %v11201 = vrot.slane %v11164, 3
        %v11202 = vsel %vm361, %v11200, %v11201
        %v11203 = vrot.slane %v11165, 3
        %v11204 = vrot.slane %v11166, 3
        %v11205 = vsel %vm361, %v11203, %v11204
        %v11206 = vrot.slane %v11167, 3
        %v11207 = vrot.slane %v11168, 3
        %v11208 = vsel %vm361, %v11206, %v11207
        %11209 = vrot.lane.b32.xlu0 %v11187, 124
        %v11210 = vpop.permute.xlu0 %11209
        %11211 = vrot.lane.b32.xlu0 %v11190, 124
        %v11212 = vpop.permute.xlu0 %11211
        %11213 = vrot.lane.b32.xlu0 %v11193, 124
        %v11214 = vpop.permute.xlu0 %11213
        %11215 = vrot.lane.b32.xlu0 %v11196, 124
        %v11216 = vpop.permute.xlu0 %11215
        %11217 = vrot.lane.b32.xlu0 %v11199, 124
        %v11218 = vpop.permute.xlu0 %11217
        %11219 = vrot.lane.b32.xlu0 %v11202, 124
        %v11220 = vpop.permute.xlu0 %11219
        %11221 = vrot.lane.b32.xlu0 %v11205, 124
        %v11222 = vpop.permute.xlu0 %11221
        %11223 = vrot.lane.b32.xlu0 %v11208, 124
        %v11224 = vpop.permute.xlu0 %11223
        %v11233 = vadd.f32 %v11107, %v11210
        %v11234 = vadd.f32 %v11108, %v11212
        %v11235 = vadd.f32 %v11109, %v11214
        %v11236 = vadd.f32 %v11110, %v11216
        %v11237 = vadd.f32 %v11111, %v11218
        %v11238 = vadd.f32 %v11112, %v11220
        %v11239 = vadd.f32 %v11113, %v11222
        %v11240 = vadd.f32 %v11114, %v11224
        %v11241 = vsub.f32 %v173, %v2710
        %v11242 = vsub.f32 %v174, %v2710
        %v11243 = vmul.f32 %v11241, 1.442695
        %v11244 = vpow.pop %v11243
        %v11245 = vmul.f32 %v11242, 1.442695
        %v11246 = vpow.pop %v11245
        %11247 = vset.pattern.permute.xlu0 95
        %11248 = vperm.xlu0 %11247, %v425
        %v11249 = vpop.permute.xlu0 %11248
        %11251 = vset.pattern.permute.xlu0 95
        %11252 = vperm.xlu0 %11251, %v426
        %v11253 = vpop.permute.xlu0 %11252
        %11255 = vset.pattern.permute.xlu0 95
        %11256 = vperm.xlu0 %11255, %v427
        %v11257 = vpop.permute.xlu0 %11256
        %11259 = vset.pattern.permute.xlu0 95
        %11260 = vperm.xlu0 %11259, %v428
        %v11261 = vpop.permute.xlu0 %11260
        %11263 = vset.pattern.permute.xlu0 95
        %11264 = vperm.xlu0 %11263, %v429
        %v11265 = vpop.permute.xlu0 %11264
        %11267 = vset.pattern.permute.xlu0 95
        %11268 = vperm.xlu0 %11267, %v430
        %v11269 = vpop.permute.xlu0 %11268
        %11271 = vset.pattern.permute.xlu0 95
        %11272 = vperm.xlu0 %11271, %v431
        %v11273 = vpop.permute.xlu0 %11272
        %11275 = vset.pattern.permute.xlu0 95
        %11276 = vperm.xlu0 %11275, %v432
        %v11277 = vpop.permute.xlu0 %11276
        %v11279 = vmul.f32 %v11249, %v11244
        %v11280 = vmul.f32 %v11249, %v11246
        %v11281 = vmul.f32 %v11253, %v11244
        %v11282 = vmul.f32 %v11253, %v11246
        %v11283 = vmul.f32 %v11257, %v11244
        %v11284 = vmul.f32 %v11257, %v11246
        %v11285 = vmul.f32 %v11261, %v11244
        %v11286 = vmul.f32 %v11261, %v11246
        %v11287 = vmul.f32 %v11265, %v11244
        %v11288 = vmul.f32 %v11265, %v11246
        %v11289 = vmul.f32 %v11269, %v11244
        %v11290 = vmul.f32 %v11269, %v11246
        %v11291 = vmul.f32 %v11273, %v11244
        %v11292 = vmul.f32 %v11273, %v11246
        %v11293 = vmul.f32 %v11277, %v11244
        %v11294 = vmul.f32 %v11277, %v11246
        %v11311 = vrot.slane %v11279, 4
        %v11312 = vrot.slane %v11280, 4
        %v11313 = vsel %vm382, %v11311, %v11312
        %v11314 = vrot.slane %v11281, 4
        %v11315 = vrot.slane %v11282, 4
        %v11316 = vsel %vm382, %v11314, %v11315
        %v11317 = vrot.slane %v11283, 4
        %v11318 = vrot.slane %v11284, 4
        %v11319 = vsel %vm382, %v11317, %v11318
        %v11320 = vrot.slane %v11285, 4
        %v11321 = vrot.slane %v11286, 4
        %v11322 = vsel %vm382, %v11320, %v11321
        %v11323 = vrot.slane %v11287, 4
        %v11324 = vrot.slane %v11288, 4
        %v11325 = vsel %vm382, %v11323, %v11324
        %v11326 = vrot.slane %v11289, 4
        %v11327 = vrot.slane %v11290, 4
        %v11328 = vsel %vm382, %v11326, %v11327
        %v11329 = vrot.slane %v11291, 4
        %v11330 = vrot.slane %v11292, 4
        %v11331 = vsel %vm382, %v11329, %v11330
        %v11332 = vrot.slane %v11293, 4
        %v11333 = vrot.slane %v11294, 4
        %v11334 = vsel %vm382, %v11332, %v11333
        %v11343 = vadd.f32 %v11233, %v11313
        %v11344 = vadd.f32 %v11234, %v11316
        %v11345 = vadd.f32 %v11235, %v11319
        %v11346 = vadd.f32 %v11236, %v11322
        %v11347 = vadd.f32 %v11237, %v11325
        %v11348 = vadd.f32 %v11238, %v11328
        %v11349 = vadd.f32 %v11239, %v11331
        %v11350 = vadd.f32 %v11240, %v11334
        %v11351 = vsub.f32 %v173, %v2823
        %v11352 = vsub.f32 %v174, %v2823
        %v11353 = vmul.f32 %v11351, 1.442695
        %v11354 = vpow.pop %v11353
        %v11355 = vmul.f32 %v11352, 1.442695
        %v11356 = vpow.pop %v11355
        %11357 = vset.pattern.permute.xlu0 96
        %11358 = vperm.xlu0 %11357, %v425
        %v11359 = vpop.permute.xlu0 %11358
        %11361 = vset.pattern.permute.xlu0 96
        %11362 = vperm.xlu0 %11361, %v426
        %v11363 = vpop.permute.xlu0 %11362
        %11365 = vset.pattern.permute.xlu0 96
        %11366 = vperm.xlu0 %11365, %v427
        %v11367 = vpop.permute.xlu0 %11366
        %11369 = vset.pattern.permute.xlu0 96
        %11370 = vperm.xlu0 %11369, %v428
        %v11371 = vpop.permute.xlu0 %11370
        %11373 = vset.pattern.permute.xlu0 96
        %11374 = vperm.xlu0 %11373, %v429
        %v11375 = vpop.permute.xlu0 %11374
        %11377 = vset.pattern.permute.xlu0 96
        %11378 = vperm.xlu0 %11377, %v430
        %v11379 = vpop.permute.xlu0 %11378
        %11381 = vset.pattern.permute.xlu0 96
        %11382 = vperm.xlu0 %11381, %v431
        %v11383 = vpop.permute.xlu0 %11382
        %11385 = vset.pattern.permute.xlu0 96
        %11386 = vperm.xlu0 %11385, %v432
        %v11387 = vpop.permute.xlu0 %11386
        %v11389 = vmul.f32 %v11359, %v11354
        %v11390 = vmul.f32 %v11359, %v11356
        %v11391 = vmul.f32 %v11363, %v11354
        %v11392 = vmul.f32 %v11363, %v11356
        %v11393 = vmul.f32 %v11367, %v11354
        %v11394 = vmul.f32 %v11367, %v11356
        %v11395 = vmul.f32 %v11371, %v11354
        %v11396 = vmul.f32 %v11371, %v11356
        %v11397 = vmul.f32 %v11375, %v11354
        %v11398 = vmul.f32 %v11375, %v11356
        %v11399 = vmul.f32 %v11379, %v11354
        %v11400 = vmul.f32 %v11379, %v11356
        %v11401 = vmul.f32 %v11383, %v11354
        %v11402 = vmul.f32 %v11383, %v11356
        %v11403 = vmul.f32 %v11387, %v11354
        %v11404 = vmul.f32 %v11387, %v11356
        %v11421 = vrot.slane %v11389, 4
        %v11422 = vrot.slane %v11390, 4
        %v11423 = vsel %vm382, %v11421, %v11422
        %v11424 = vrot.slane %v11391, 4
        %v11425 = vrot.slane %v11392, 4
        %v11426 = vsel %vm382, %v11424, %v11425
        %v11427 = vrot.slane %v11393, 4
        %v11428 = vrot.slane %v11394, 4
        %v11429 = vsel %vm382, %v11427, %v11428
        %v11430 = vrot.slane %v11395, 4
        %v11431 = vrot.slane %v11396, 4
        %v11432 = vsel %vm382, %v11430, %v11431
        %v11433 = vrot.slane %v11397, 4
        %v11434 = vrot.slane %v11398, 4
        %v11435 = vsel %vm382, %v11433, %v11434
        %v11436 = vrot.slane %v11399, 4
        %v11437 = vrot.slane %v11400, 4
        %v11438 = vsel %vm382, %v11436, %v11437
        %v11439 = vrot.slane %v11401, 4
        %v11440 = vrot.slane %v11402, 4
        %v11441 = vsel %vm382, %v11439, %v11440
        %v11442 = vrot.slane %v11403, 4
        %v11443 = vrot.slane %v11404, 4
        %v11444 = vsel %vm382, %v11442, %v11443
        %11445 = vrot.lane.b32.xlu0 %v11423, 127
        %v11446 = vpop.permute.xlu0 %11445
        %11447 = vrot.lane.b32.xlu0 %v11426, 127
        %v11448 = vpop.permute.xlu0 %11447
        %11449 = vrot.lane.b32.xlu0 %v11429, 127
        %v11450 = vpop.permute.xlu0 %11449
        %11451 = vrot.lane.b32.xlu0 %v11432, 127
        %v11452 = vpop.permute.xlu0 %11451
        %11453 = vrot.lane.b32.xlu0 %v11435, 127
        %v11454 = vpop.permute.xlu0 %11453
        %11455 = vrot.lane.b32.xlu0 %v11438, 127
        %v11456 = vpop.permute.xlu0 %11455
        %11457 = vrot.lane.b32.xlu0 %v11441, 127
        %v11458 = vpop.permute.xlu0 %11457
        %11459 = vrot.lane.b32.xlu0 %v11444, 127
        %v11460 = vpop.permute.xlu0 %11459
        %v11469 = vadd.f32 %v11343, %v11446
        %v11470 = vadd.f32 %v11344, %v11448
        %v11471 = vadd.f32 %v11345, %v11450
        %v11472 = vadd.f32 %v11346, %v11452
        %v11473 = vadd.f32 %v11347, %v11454
        %v11474 = vadd.f32 %v11348, %v11456
        %v11475 = vadd.f32 %v11349, %v11458
        %v11476 = vadd.f32 %v11350, %v11460
        %v11477 = vsub.f32 %v173, %v2952
        %v11478 = vsub.f32 %v174, %v2952
        %v11479 = vmul.f32 %v11477, 1.442695
        %v11480 = vpow.pop %v11479
        %v11481 = vmul.f32 %v11478, 1.442695
        %v11482 = vpow.pop %v11481
        %11483 = vset.pattern.permute.xlu0 97
        %11484 = vperm.xlu0 %11483, %v425
        %v11485 = vpop.permute.xlu0 %11484
        %11487 = vset.pattern.permute.xlu0 97
        %11488 = vperm.xlu0 %11487, %v426
        %v11489 = vpop.permute.xlu0 %11488
        %11491 = vset.pattern.permute.xlu0 97
        %11492 = vperm.xlu0 %11491, %v427
        %v11493 = vpop.permute.xlu0 %11492
        %11495 = vset.pattern.permute.xlu0 97
        %11496 = vperm.xlu0 %11495, %v428
        %v11497 = vpop.permute.xlu0 %11496
        %11499 = vset.pattern.permute.xlu0 97
        %11500 = vperm.xlu0 %11499, %v429
        %v11501 = vpop.permute.xlu0 %11500
        %11503 = vset.pattern.permute.xlu0 97
        %11504 = vperm.xlu0 %11503, %v430
        %v11505 = vpop.permute.xlu0 %11504
        %11507 = vset.pattern.permute.xlu0 97
        %11508 = vperm.xlu0 %11507, %v431
        %v11509 = vpop.permute.xlu0 %11508
        %11511 = vset.pattern.permute.xlu0 97
        %11512 = vperm.xlu0 %11511, %v432
        %v11513 = vpop.permute.xlu0 %11512
        %v11515 = vmul.f32 %v11485, %v11480
        %v11516 = vmul.f32 %v11485, %v11482
        %v11517 = vmul.f32 %v11489, %v11480
        %v11518 = vmul.f32 %v11489, %v11482
        %v11519 = vmul.f32 %v11493, %v11480
        %v11520 = vmul.f32 %v11493, %v11482
        %v11521 = vmul.f32 %v11497, %v11480
        %v11522 = vmul.f32 %v11497, %v11482
        %v11523 = vmul.f32 %v11501, %v11480
        %v11524 = vmul.f32 %v11501, %v11482
        %v11525 = vmul.f32 %v11505, %v11480
        %v11526 = vmul.f32 %v11505, %v11482
        %v11527 = vmul.f32 %v11509, %v11480
        %v11528 = vmul.f32 %v11509, %v11482
        %v11529 = vmul.f32 %v11513, %v11480
        %v11530 = vmul.f32 %v11513, %v11482
        %v11547 = vrot.slane %v11515, 4
        %v11548 = vrot.slane %v11516, 4
        %v11549 = vsel %vm382, %v11547, %v11548
        %v11550 = vrot.slane %v11517, 4
        %v11551 = vrot.slane %v11518, 4
        %v11552 = vsel %vm382, %v11550, %v11551
        %v11553 = vrot.slane %v11519, 4
        %v11554 = vrot.slane %v11520, 4
        %v11555 = vsel %vm382, %v11553, %v11554
        %v11556 = vrot.slane %v11521, 4
        %v11557 = vrot.slane %v11522, 4
        %v11558 = vsel %vm382, %v11556, %v11557
        %v11559 = vrot.slane %v11523, 4
        %v11560 = vrot.slane %v11524, 4
        %v11561 = vsel %vm382, %v11559, %v11560
        %v11562 = vrot.slane %v11525, 4
        %v11563 = vrot.slane %v11526, 4
        %v11564 = vsel %vm382, %v11562, %v11563
        %v11565 = vrot.slane %v11527, 4
        %v11566 = vrot.slane %v11528, 4
        %v11567 = vsel %vm382, %v11565, %v11566
        %v11568 = vrot.slane %v11529, 4
        %v11569 = vrot.slane %v11530, 4
        %v11570 = vsel %vm382, %v11568, %v11569
        %11571 = vrot.lane.b32.xlu0 %v11549, 126
        %v11572 = vpop.permute.xlu0 %11571
        %11573 = vrot.lane.b32.xlu0 %v11552, 126
        %v11574 = vpop.permute.xlu0 %11573
        %11575 = vrot.lane.b32.xlu0 %v11555, 126
        %v11576 = vpop.permute.xlu0 %11575
        %11577 = vrot.lane.b32.xlu0 %v11558, 126
        %v11578 = vpop.permute.xlu0 %11577
        %11579 = vrot.lane.b32.xlu0 %v11561, 126
        %v11580 = vpop.permute.xlu0 %11579
        %11581 = vrot.lane.b32.xlu0 %v11564, 126
        %v11582 = vpop.permute.xlu0 %11581
        %11583 = vrot.lane.b32.xlu0 %v11567, 126
        %v11584 = vpop.permute.xlu0 %11583
        %11585 = vrot.lane.b32.xlu0 %v11570, 126
        %v11586 = vpop.permute.xlu0 %11585
        %v11595 = vadd.f32 %v11469, %v11572
        %v11596 = vadd.f32 %v11470, %v11574
        %v11597 = vadd.f32 %v11471, %v11576
        %v11598 = vadd.f32 %v11472, %v11578
        %v11599 = vadd.f32 %v11473, %v11580
        %v11600 = vadd.f32 %v11474, %v11582
        %v11601 = vadd.f32 %v11475, %v11584
        %v11602 = vadd.f32 %v11476, %v11586
        %v11603 = vsub.f32 %v173, %v3081
        %v11604 = vsub.f32 %v174, %v3081
        %v11605 = vmul.f32 %v11603, 1.442695
        %v11606 = vpow.pop %v11605
        %v11607 = vmul.f32 %v11604, 1.442695
        %v11608 = vpow.pop %v11607
        %11609 = vset.pattern.permute.xlu0 98
        %11610 = vperm.xlu0 %11609, %v425
        %v11611 = vpop.permute.xlu0 %11610
        %11613 = vset.pattern.permute.xlu0 98
        %11614 = vperm.xlu0 %11613, %v426
        %v11615 = vpop.permute.xlu0 %11614
        %11617 = vset.pattern.permute.xlu0 98
        %11618 = vperm.xlu0 %11617, %v427
        %v11619 = vpop.permute.xlu0 %11618
        %11621 = vset.pattern.permute.xlu0 98
        %11622 = vperm.xlu0 %11621, %v428
        %v11623 = vpop.permute.xlu0 %11622
        %11625 = vset.pattern.permute.xlu0 98
        %11626 = vperm.xlu0 %11625, %v429
        %v11627 = vpop.permute.xlu0 %11626
        %11629 = vset.pattern.permute.xlu0 98
        %11630 = vperm.xlu0 %11629, %v430
        %v11631 = vpop.permute.xlu0 %11630
        %11633 = vset.pattern.permute.xlu0 98
        %11634 = vperm.xlu0 %11633, %v431
        %v11635 = vpop.permute.xlu0 %11634
        %11637 = vset.pattern.permute.xlu0 98
        %11638 = vperm.xlu0 %11637, %v432
        %v11639 = vpop.permute.xlu0 %11638
        %v11641 = vmul.f32 %v11611, %v11606
        %v11642 = vmul.f32 %v11611, %v11608
        %v11643 = vmul.f32 %v11615, %v11606
        %v11644 = vmul.f32 %v11615, %v11608
        %v11645 = vmul.f32 %v11619, %v11606
        %v11646 = vmul.f32 %v11619, %v11608
        %v11647 = vmul.f32 %v11623, %v11606
        %v11648 = vmul.f32 %v11623, %v11608
        %v11649 = vmul.f32 %v11627, %v11606
        %v11650 = vmul.f32 %v11627, %v11608
        %v11651 = vmul.f32 %v11631, %v11606
        %v11652 = vmul.f32 %v11631, %v11608
        %v11653 = vmul.f32 %v11635, %v11606
        %v11654 = vmul.f32 %v11635, %v11608
        %v11655 = vmul.f32 %v11639, %v11606
        %v11656 = vmul.f32 %v11639, %v11608
        %v11673 = vrot.slane %v11641, 4
        %v11674 = vrot.slane %v11642, 4
        %v11675 = vsel %vm382, %v11673, %v11674
        %v11676 = vrot.slane %v11643, 4
        %v11677 = vrot.slane %v11644, 4
        %v11678 = vsel %vm382, %v11676, %v11677
        %v11679 = vrot.slane %v11645, 4
        %v11680 = vrot.slane %v11646, 4
        %v11681 = vsel %vm382, %v11679, %v11680
        %v11682 = vrot.slane %v11647, 4
        %v11683 = vrot.slane %v11648, 4
        %v11684 = vsel %vm382, %v11682, %v11683
        %v11685 = vrot.slane %v11649, 4
        %v11686 = vrot.slane %v11650, 4
        %v11687 = vsel %vm382, %v11685, %v11686
        %v11688 = vrot.slane %v11651, 4
        %v11689 = vrot.slane %v11652, 4
        %v11690 = vsel %vm382, %v11688, %v11689
        %v11691 = vrot.slane %v11653, 4
        %v11692 = vrot.slane %v11654, 4
        %v11693 = vsel %vm382, %v11691, %v11692
        %v11694 = vrot.slane %v11655, 4
        %v11695 = vrot.slane %v11656, 4
        %v11696 = vsel %vm382, %v11694, %v11695
        %11697 = vrot.lane.b32.xlu0 %v11675, 125
        %v11698 = vpop.permute.xlu0 %11697
        %11699 = vrot.lane.b32.xlu0 %v11678, 125
        %v11700 = vpop.permute.xlu0 %11699
        %11701 = vrot.lane.b32.xlu0 %v11681, 125
        %v11702 = vpop.permute.xlu0 %11701
        %11703 = vrot.lane.b32.xlu0 %v11684, 125
        %v11704 = vpop.permute.xlu0 %11703
        %11705 = vrot.lane.b32.xlu0 %v11687, 125
        %v11706 = vpop.permute.xlu0 %11705
        %11707 = vrot.lane.b32.xlu0 %v11690, 125
        %v11708 = vpop.permute.xlu0 %11707
        %11709 = vrot.lane.b32.xlu0 %v11693, 125
        %v11710 = vpop.permute.xlu0 %11709
        %11711 = vrot.lane.b32.xlu0 %v11696, 125
        %v11712 = vpop.permute.xlu0 %11711
        %v11721 = vadd.f32 %v11595, %v11698
        %v11722 = vadd.f32 %v11596, %v11700
        %v11723 = vadd.f32 %v11597, %v11702
        %v11724 = vadd.f32 %v11598, %v11704
        %v11725 = vadd.f32 %v11599, %v11706
        %v11726 = vadd.f32 %v11600, %v11708
        %v11727 = vadd.f32 %v11601, %v11710
        %v11728 = vadd.f32 %v11602, %v11712
        %v11729 = vsub.f32 %v173, %v3210
        %v11730 = vsub.f32 %v174, %v3210
        %v11731 = vmul.f32 %v11729, 1.442695
        %v11732 = vpow.pop %v11731
        %v11733 = vmul.f32 %v11730, 1.442695
        %v11734 = vpow.pop %v11733
        %11735 = vset.pattern.permute.xlu0 99
        %11736 = vperm.xlu0 %11735, %v425
        %v11737 = vpop.permute.xlu0 %11736
        %11739 = vset.pattern.permute.xlu0 99
        %11740 = vperm.xlu0 %11739, %v426
        %v11741 = vpop.permute.xlu0 %11740
        %11743 = vset.pattern.permute.xlu0 99
        %11744 = vperm.xlu0 %11743, %v427
        %v11745 = vpop.permute.xlu0 %11744
        %11747 = vset.pattern.permute.xlu0 99
        %11748 = vperm.xlu0 %11747, %v428
        %v11749 = vpop.permute.xlu0 %11748
        %11751 = vset.pattern.permute.xlu0 99
        %11752 = vperm.xlu0 %11751, %v429
        %v11753 = vpop.permute.xlu0 %11752
        %11755 = vset.pattern.permute.xlu0 99
        %11756 = vperm.xlu0 %11755, %v430
        %v11757 = vpop.permute.xlu0 %11756
        %11759 = vset.pattern.permute.xlu0 99
        %11760 = vperm.xlu0 %11759, %v431
        %v11761 = vpop.permute.xlu0 %11760
        %11763 = vset.pattern.permute.xlu0 99
        %11764 = vperm.xlu0 %11763, %v432
        %v11765 = vpop.permute.xlu0 %11764
        %v11767 = vmul.f32 %v11737, %v11732
        %v11768 = vmul.f32 %v11737, %v11734
        %v11769 = vmul.f32 %v11741, %v11732
        %v11770 = vmul.f32 %v11741, %v11734
        %v11771 = vmul.f32 %v11745, %v11732
        %v11772 = vmul.f32 %v11745, %v11734
        %v11773 = vmul.f32 %v11749, %v11732
        %v11774 = vmul.f32 %v11749, %v11734
        %v11775 = vmul.f32 %v11753, %v11732
        %v11776 = vmul.f32 %v11753, %v11734
        %v11777 = vmul.f32 %v11757, %v11732
        %v11778 = vmul.f32 %v11757, %v11734
        %v11779 = vmul.f32 %v11761, %v11732
        %v11780 = vmul.f32 %v11761, %v11734
        %v11781 = vmul.f32 %v11765, %v11732
        %v11782 = vmul.f32 %v11765, %v11734
        %v11799 = vrot.slane %v11767, 4
        %v11800 = vrot.slane %v11768, 4
        %v11801 = vsel %vm382, %v11799, %v11800
        %v11802 = vrot.slane %v11769, 4
        %v11803 = vrot.slane %v11770, 4
        %v11804 = vsel %vm382, %v11802, %v11803
        %v11805 = vrot.slane %v11771, 4
        %v11806 = vrot.slane %v11772, 4
        %v11807 = vsel %vm382, %v11805, %v11806
        %v11808 = vrot.slane %v11773, 4
        %v11809 = vrot.slane %v11774, 4
        %v11810 = vsel %vm382, %v11808, %v11809
        %v11811 = vrot.slane %v11775, 4
        %v11812 = vrot.slane %v11776, 4
        %v11813 = vsel %vm382, %v11811, %v11812
        %v11814 = vrot.slane %v11777, 4
        %v11815 = vrot.slane %v11778, 4
        %v11816 = vsel %vm382, %v11814, %v11815
        %v11817 = vrot.slane %v11779, 4
        %v11818 = vrot.slane %v11780, 4
        %v11819 = vsel %vm382, %v11817, %v11818
        %v11820 = vrot.slane %v11781, 4
        %v11821 = vrot.slane %v11782, 4
        %v11822 = vsel %vm382, %v11820, %v11821
        %11823 = vrot.lane.b32.xlu0 %v11801, 124
        %v11824 = vpop.permute.xlu0 %11823
        %11825 = vrot.lane.b32.xlu0 %v11804, 124
        %v11826 = vpop.permute.xlu0 %11825
        %11827 = vrot.lane.b32.xlu0 %v11807, 124
        %v11828 = vpop.permute.xlu0 %11827
        %11829 = vrot.lane.b32.xlu0 %v11810, 124
        %v11830 = vpop.permute.xlu0 %11829
        %11831 = vrot.lane.b32.xlu0 %v11813, 124
        %v11832 = vpop.permute.xlu0 %11831
        %11833 = vrot.lane.b32.xlu0 %v11816, 124
        %v11834 = vpop.permute.xlu0 %11833
        %11835 = vrot.lane.b32.xlu0 %v11819, 124
        %v11836 = vpop.permute.xlu0 %11835
        %11837 = vrot.lane.b32.xlu0 %v11822, 124
        %v11838 = vpop.permute.xlu0 %11837
        %v11847 = vadd.f32 %v11721, %v11824
        %v11848 = vadd.f32 %v11722, %v11826
        %v11849 = vadd.f32 %v11723, %v11828
        %v11850 = vadd.f32 %v11724, %v11830
        %v11851 = vadd.f32 %v11725, %v11832
        %v11852 = vadd.f32 %v11726, %v11834
        %v11853 = vadd.f32 %v11727, %v11836
        %v11854 = vadd.f32 %v11728, %v11838
        %v11856 = vperm.slane %v410, 0
        %v11857 = vperm.slane %v410, 1
        %v11858 = vperm.slane %v410, 2
        %v11859 = vperm.slane %v410, 3
        %v11860 = vperm.slane %v410, 4
        %v11861 = vperm.slane %v410, 5
        %v11862 = vperm.slane %v410, 6
        %v11863 = vperm.slane %v410, 7
        %v11872 = vadd.f32 %v11856, %v405
        %v11873 = vadd.f32 %v11857, %v405
        %v11874 = vadd.f32 %v11858, %v405
        %v11875 = vadd.f32 %v11859, %v405
        %v11876 = vadd.f32 %v11860, %v405
        %v11877 = vadd.f32 %v11861, %v405
        %v11878 = vadd.f32 %v11862, %v405
        %v11879 = vadd.f32 %v11863, %v405
        %v11880 = vlog2.pop %v11847
        %v11881 = vmul.f32 %v11880, 0.6931472
        %v11882 = vlog2.pop %v11848
        %v11883 = vmul.f32 %v11882, 0.6931472
        %v11884 = vlog2.pop %v11849
        %v11885 = vmul.f32 %v11884, 0.6931472
        %v11886 = vlog2.pop %v11850
        %v11887 = vmul.f32 %v11886, 0.6931472
        %v11888 = vlog2.pop %v11851
        %v11889 = vmul.f32 %v11888, 0.6931472
        %v11890 = vlog2.pop %v11852
        %v11891 = vmul.f32 %v11890, 0.6931472
        %v11892 = vlog2.pop %v11853
        %v11893 = vmul.f32 %v11892, 0.6931472
        %v11894 = vlog2.pop %v11854
        %v11895 = vmul.f32 %v11894, 0.6931472
        %v11896 = vadd.f32 %v11872, %v11881
        %v11897 = vadd.f32 %v11873, %v11883
        %v11898 = vadd.f32 %v11874, %v11885
        %v11899 = vadd.f32 %v11875, %v11887
        %v11900 = vadd.f32 %v11876, %v11889
        %v11901 = vadd.f32 %v11877, %v11891
        %v11902 = vadd.f32 %v11878, %v11893
        %v11903 = vadd.f32 %v11879, %v11895
        %v11904 = vmul.f32 %v11896, 0.06666667
        %v11905 = vmul.f32 %v11897, 0.06666667
        %v11906 = vmul.f32 %v11898, 0.06666667
        %v11907 = vmul.f32 %v11899, 0.06666667
        %v11908 = vmul.f32 %v11900, 0.06666667
        %v11909 = vmul.f32 %v11901, 0.06666667
        %v11910 = vmul.f32 %v11902, 0.06666667
        %v11911 = vmul.f32 %v11903, 0.06666667
        %vm11912 = vcmask 130048
        %11913 = vst.msk [vmem:[%s150] sm:$0xff] %vm11912, %v11904
        %11914 = vst.msk [vmem:[%s150 + $0x8] sm:$0xff] %vm11912, %v11905
        %11915 = vst.msk [vmem:[%s150 + $0x10] sm:$0xff] %vm11912, %v11906
        %11916 = vst.msk [vmem:[%s150 + $0x18] sm:$0xff] %vm11912, %v11907
        %11917 = vst.msk [vmem:[%s150 + $0x20] sm:$0xff] %vm11912, %v11908
        %11918 = vst.msk [vmem:[%s150 + $0x28] sm:$0xff] %vm11912, %v11909
        %11919 = vst.msk [vmem:[%s150 + $0x30] sm:$0xff] %vm11912, %v11910
        %11920 = vst.msk [vmem:[%s150 + $0x38] sm:$0xff] %vm11912, %v11911
        %s11921 = sand.u32 %s85, 1
        %s11922 = scalar_lea.sflag [#allocation3], %s11921
        %s11923 = sand.u32 %s85, 1
        %s11924 = smul.addr %s11923, 64
        %s11925 = scalar_lea.vmem [#allocation2], %s11924
        // Predicated region
        $region29: #{tpu_custom_call.1} parent=27 // pred_check
          %p11926 = pneg %p95
        $region30: #{tpu_custom_call.1} parent=27 // pred_check_branch
          %11928 = sbr.rel (%p11926) target = $region32
        $region31: #{tpu_custom_call.1} parent=27 // pred_region
          %11930 = vsyncadd %s11922, 0
          %s11931 = smul.addr %s20, 16
          %s11932 = sadd.s32 %s21, %s11931
          %s11933 = smul.addr %s11932, 8
          %s11934 = scalar_lea.hbm %s2, %s11933
          %s11935 = sshll.u32 %s11925, 4
          %s11936 = int_to_ptr.vmem [resolvable:$true] %s11935
          %s11937 = sshll.u32 %s11934, 4
          %s11938 = int_to_ptr.hbm [resolvable:$true] %s11937
          %11943 = dma.vmem_to_hbm [thread:$0]  %s11936, 1024, %s11938, %s11922, 128, 256, 8
        $region32: #{tpu_custom_call.1} parent=27 // pred_fallthru
          _
      $region28: #{tpu_custom_call.1} parent=5 // pred_fallthru
        _
      %p11944 = scmp.le.s32.totalorder 2, %s11
      // Predicated region
      $region33: #{tpu_custom_call.1} parent=5 // pred_check
        %p11945 = pneg %p11944
      $region34: #{tpu_custom_call.1} parent=5 // pred_check_branch
        %11947 = sbr.rel (%p11945) target = $region36
      $region35: #{tpu_custom_call.1} parent=5 // pred_region
        %s11948 = ssub.s32 %s11, 2
        // Predicated region
        $region37: #{tpu_custom_call.1} parent=35 // pred_check
          %p11949 = pneg %p101
        $region38: #{tpu_custom_call.1} parent=35 // pred_check_branch
          %11951 = sbr.rel (%p11949) target = $region40
        $region39: #{tpu_custom_call.1} parent=35 // pred_region
          %s11952 = sand.u32 %s86, 1
          %s11953 = scalar_lea.sflag [#allocation3], %s11952
          %s11954 = sand.u32 %s86, 1
          %s11955 = smul.addr %s11954, 64
          %s11956 = scalar_lea.vmem [#allocation2], %s11955
          %11958 = dma.done %s11953, 1024
        $region40: #{tpu_custom_call.1} parent=35 // pred_fallthru
          _
      $region36: #{tpu_custom_call.1} parent=5 // pred_fallthru
        _
    $region6: #{tpu_custom_call.1} parent=1 // loop_footer
      %s15 = sadd.s32 1, %s11
    $region7: #{tpu_custom_call.1} parent=1 // loop_footer_branch
      %10 = sbr.rel target = $region3
    $region8: #{tpu_custom_call.1} parent=1 // loop_exit
      _
    %11959 = vsyncpa [#allocation3], 1
    %s11960 = scalar_lea.sflag [#allocation3], 1
    %11961 = vsyncpa %s11960, 1

</llo_original>
